<compile_context>
chip_gen: v7x
topology: tpu7x:2x2x1
jax: 0.10.0
libtpu: 0.0.40
codegen_flags: <defaults>
</compile_context>

<pallas_src>
import functools

import jax
import jax.numpy as jnp
from jax.experimental import pallas as pl
from jax.experimental.pallas import tpu as pltpu


# ----------------------------- helpers -----------------------------

_VMEM_LIMIT = None


def _vmem_limit_bytes():
    """min(physical VMEM / 2, 64 MiB): 64 MiB on v5e/v6e (128 MiB chips), 32 MiB on v7x."""
    global _VMEM_LIMIT
    if _VMEM_LIMIT is None:
        try:
            cap = int(pltpu.get_tpu_info().vmem_capacity_bytes)
        except Exception:
            cap = 128 * 1024 * 1024
        _VMEM_LIMIT = int(min(cap // 2, 64 * 1024 * 1024))
    return _VMEM_LIMIT


def _pick_tile(dim, target, base):
    """Largest multiple of `base` that divides `dim` and is <= target, else full dim."""
    if dim <= target:
        return dim
    t = (target // base) * base
    while t >= base:
        if dim % t == 0:
            return t
        t -= base
    return dim


def _gelu_exact(x):
    # Exact erf-GELU via Abramowitz & Stegun 7.1.26 (max abs err ~1.5e-7).
    z = x * 0.7071067811865476
    a = jnp.abs(z)
    t = 1.0 / (1.0 + 0.3275911 * a)
    poly = ((((1.061405429 * t - 1.453152027) * t + 1.421413741) * t
             - 0.284496736) * t + 0.254829592) * t
    e = 1.0 - poly * jnp.exp(-a * a)
    erf = jnp.where(z >= 0.0, e, -e)
    return 0.5 * x * (1.0 + erf)


# --------------- tiled linear (LN / bias / GELU / residual fused) ---------------

def _linear_kernel(*refs, nk, activation, fuse_ln, fuse_res, eps):
    x_ref, w_ref, b_ref = refs[0], refs[1], refs[2]
    pos = 3
    if fuse_ln:
        g_ref, bt_ref = refs[pos], refs[pos + 1]
        pos += 2
    if fuse_res:
        r_ref = refs[pos]
        pos += 1
    o_ref = refs[pos]
    acc_ref = refs[pos + 1]
    xln_ref = refs[pos + 2] if fuse_ln else None

    j = pl.program_id(1)
    k_idx = pl.program_id(2)

    @pl.when(k_idx == 0)
    def _():
        acc_ref[...] = jnp.zeros_like(acc_ref)

    if fuse_ln:
        # tk == K (full row).  LayerNorm is computed once per row tile (j == 0)
        # and cached in VMEM across the output-column (j) grid axis.
        @pl.when(j == 0)
        def _():
            xf = x_ref[...].astype(jnp.float32)
            mu = jnp.mean(xf, axis=-1, keepdims=True)
            xc = xf - mu
            var = jnp.mean(xc * xc, axis=-1, keepdims=True)
            xn = xc * jax.lax.rsqrt(var + eps)
            xn = xn * g_ref[...].astype(jnp.float32) + bt_ref[...].astype(jnp.float32)
            xln_ref[...] = xn.astype(xln_ref.dtype)
        a = xln_ref[...]                                  # bf16 MXU operand
    else:
        a = x_ref[...].astype(jnp.bfloat16)

    acc_ref[...] += jnp.dot(a, w_ref[...].astype(jnp.bfloat16),
                            preferred_element_type=jnp.float32)

    @pl.when(k_idx == nk - 1)
    def _():
        out = acc_ref[...] + b_ref[...].astype(jnp.float32)
        if activation == "gelu":
            out = _gelu_exact(out)
        if fuse_res:
            out = out + r_ref[...].astype(jnp.float32)
        o_ref[...] = out.astype(o_ref.dtype)


def linear(x, w, b, *, ln=None, activation=None, residual=None):
    """y = [LN(x)] @ w + b, optional GELU, optional (+ residual).  x:(M,K) w:(K,N)."""
    M, K = x.shape
    Kw, Nout = w.shape
    assert Kw == K
    tm = _pick_tile(M, 1024, 8)
    tn = _pick_tile(Nout, 512, 128)
    tk = K if ln is not None else _pick_tile(K, 512, 128)  # LN needs the full row
    nk = K // tk
    grid = (M // tm, Nout // tn, nk)

    in_specs = [
        pl.BlockSpec((tm, tk), lambda i, j, k: (i, k)),
        pl.BlockSpec((tk, tn), lambda i, j, k: (k, j)),
        pl.BlockSpec((1, tn), lambda i, j, k: (0, j)),
    ]
    args = [x, w, b.reshape(1, Nout)]
    if ln is not None:
        g, be = ln
        in_specs += [pl.BlockSpec((1, tk), lambda i, j, k: (0, k)),
                     pl.BlockSpec((1, tk), lambda i, j, k: (0, k))]
        args += [g.reshape(1, K), be.reshape(1, K)]
    if residual is not None:
        in_specs.append(pl.BlockSpec((tm, tn), lambda i, j, k: (i, j)))
        args.append(residual)

    scratch = [pltpu.VMEM((tm, tn), jnp.float32)]
    if ln is not None:
        scratch.append(pltpu.VMEM((tm, tk), jnp.bfloat16))   # cached LN(x) row tile

    # The j==0 LN-cache gate needs a per-core j/k visit order starting at j=0 for
    # every row tile, so only the row axis is "parallel" when LN is fused.
    dims = (("parallel", "arbitrary", "arbitrary") if ln is not None
            else ("parallel", "parallel", "arbitrary"))

    kern = functools.partial(_linear_kernel, nk=nk, activation=activation,
                             fuse_ln=ln is not None, fuse_res=residual is not None,
                             eps=1e-6)  # PyTorch MHCABlock: LayerNorm(eps=1e-6)
    return pl.pallas_call(
        kern,
        out_shape=jax.ShapeDtypeStruct((M, Nout), x.dtype),
        grid=grid,
        in_specs=in_specs,
        out_specs=pl.BlockSpec((tm, tn), lambda i, j, k: (i, j)),
        scratch_shapes=scratch,
        compiler_params=pltpu.CompilerParams(
            dimension_semantics=dims,
            vmem_limit_bytes=_vmem_limit_bytes()),
        cost_estimate=pl.CostEstimate(
            flops=2 * M * Nout * K,
            transcendentals=M * Nout if activation == "gelu" else 0,
            bytes_accessed=4 * (M * K + K * Nout + 2 * M * Nout)),
    )(*args)


# --------------- depthwise conv (padding + residual + channel-offset fused) -----

def _dwconv_kernel(x_ref, w_ref, b_ref, o_ref, pad_ref, *, K, H, W, P, C, ch_start,
                   add_residual):
    # Channel slice of the (possibly wider, fused-qkv) input block — a static
    # in-kernel slice, so no wrapper-side HBM slice copy is needed.
    x = x_ref[0].astype(jnp.float32)[:, :, ch_start:ch_start + C]     # (H, W, C)

    # Border handling in VMEM: zero ONLY the border stripes — the interior is
    # fully overwritten every grid step, so no full-buffer memset per image.
    if P > 0:
        pad_ref[0:P, :, :] = jnp.zeros((P, W + 2 * P, C), jnp.float32)
        pad_ref[P + H:P + H + P, :, :] = jnp.zeros((P, W + 2 * P, C), jnp.float32)
        pad_ref[P:P + H, 0:P, :] = jnp.zeros((H, P, C), jnp.float32)
        pad_ref[P:P + H, P + W:P + W + P, :] = jnp.zeros((H, P, C), jnp.float32)
    pad_ref[P:P + H, P:P + W, :] = x
    xp = pad_ref[...]                                                 # (H+2P, W+2P, C)

    w = w_ref[...].astype(jnp.float32)                                # (K, K, C)
    acc = jnp.zeros((H, W, C), jnp.float32)
    # TODO(synk): the dx (W-axis) shifts could use pltpu.roll (XLU slot) instead
    # of unaligned value slices; kept as slices for lowering simplicity.
    for dy in range(K):                                               # static taps
        for dx in range(K):
            acc = acc + xp[dy:dy + H, dx:dx + W, :] * w[dy:dy + 1, dx:dx + 1, :]
    y = acc + b_ref[...].reshape(1, 1, C)
    if add_residual:
        y = y + x
    o_ref[0] = y.astype(o_ref.dtype)


def depthwise_conv2d(x_nhwc, w, b, *, add_residual=False, ch_start=0, ch_count=None):
    """Depthwise KxK 'same' conv on channels [ch_start, ch_start+C) of x_nhwc."""
    B, H, W, Ctot = x_nhwc.shape
    K = int(w.shape[0])                    # static even under jit (weight shape)
    P = K // 2
    C = int(w.shape[-1]) if ch_count is None else int(ch_count)
    assert int(w.shape[-1]) == C and ch_start + C <= Ctot
    # TODO(synk): for large feature maps on v7x (64 MiB VMEM), row-band tile H
    # with a 2P halo and add a second parallel grid axis for the 2 TensorCores.
    return pl.pallas_call(
        functools.partial(_dwconv_kernel, K=K, H=H, W=W, P=P, C=C,
                          ch_start=ch_start, add_residual=add_residual),
        out_shape=jax.ShapeDtypeStruct((B, H, W, C), x_nhwc.dtype),
        grid=(B,),
        in_specs=[pl.BlockSpec((1, H, W, Ctot), lambda i: (i, 0, 0, 0)),
                  pl.BlockSpec((K, K, C), lambda i: (0, 0, 0)),
                  pl.BlockSpec((1, C), lambda i: (0, 0))],
        out_specs=pl.BlockSpec((1, H, W, C), lambda i: (i, 0, 0, 0)),
        scratch_shapes=[pltpu.VMEM((H + 2 * P, W + 2 * P, C), jnp.float32)],
        compiler_params=pltpu.CompilerParams(
            dimension_semantics=("parallel",),
            vmem_limit_bytes=_vmem_limit_bytes()),
    )(x_nhwc, w, b.reshape(1, C))


# --------------- factorized attention (all heads per program) --------------------

def _factor_att_kernel(qkv_ref, cv_ref, m_ref, o_ref):
    C = o_ref.shape[-1]
    qkv = qkv_ref[0].astype(jnp.float32)               # (N, 3C), layout [q | k | v]
    q = qkv[:, 0:C]
    k = qkv[:, C:2 * C]
    v = qkv[:, 2 * C:3 * C]
    cv = cv_ref[0].astype(jnp.float32)                 # (N, C)

    # softmax over the token axis (k.softmax(dim=2) per head/channel); the 1/sum
    # normalisation is deferred to the small (C,C) result below (C*C VPU work
    # instead of N*C).
    ke = jnp.exp(k - jnp.max(k, axis=0, keepdims=True))                      # (N, C)
    rs = pl.reciprocal(jnp.sum(ke, axis=0, keepdims=True), approx=True)      # (1, C)

    # vtk = (k_exp^T v)^T so the per-k-channel scaling is a row-vector broadcast.
    # m_ref is the symmetric per-head block-diagonal mask pre-multiplied by scale.
    # TODO(synk): for Ch >= 128 switch to per-head contractions (the full-C
    # masked matmul over-computes by num_heads x on both MXU passes).
    vtk = jax.lax.dot_general(v.astype(jnp.bfloat16), ke.astype(jnp.bfloat16),
                              (((0,), (0,)), ((), ())),
                              preferred_element_type=jnp.float32)            # (C, C)
    vtk = vtk * (m_ref[...].astype(jnp.float32) * rs)

    # fa[n, c_out] = sum_{c_k} q[n, c_k] * ktv[c_k, c_out]  (contract last axes).
    fa = jax.lax.dot_general(q.astype(jnp.bfloat16), vtk.astype(jnp.bfloat16),
                             (((1,), (1,)), ((), ())),
                             preferred_element_type=jnp.float32)             # (N, C)
    o_ref[0] = (fa + q * cv).astype(o_ref.dtype)


def factor_att(qkv, conv_v, scale, num_heads):
    """scale * q @ (softmax_N(k)^T v) per head  +  q * conv_v, from fused qkv."""
    B, N, C3 = qkv.shape
    C = C3 // 3
    Ch = C // num_heads
    hid = jnp.arange(C, dtype=jnp.int32) // Ch
    scale_mask = (hid[:, None] == hid[None, :]).astype(jnp.float32) * scale   # (C,C)
    # TODO(synk): for very long sequences on v7x, tile N with a streamed (C,C)
    # accumulator instead of whole-(N,3C) blocks.
    blk_nc = pl.BlockSpec((1, N, C), lambda b: (b, 0, 0))
    return pl.pallas_call(
        _factor_att_kernel,
        out_shape=jax.ShapeDtypeStruct((B, N, C), qkv.dtype),
        grid=(B,),
        in_specs=[pl.BlockSpec((1, N, 3 * C), lambda b: (b, 0, 0)),
                  blk_nc,
                  pl.BlockSpec((C, C), lambda b: (0, 0))],
        out_specs=blk_nc,
        compiler_params=pltpu.CompilerParams(
            dimension_semantics=("parallel",),
            vmem_limit_bytes=_vmem_limit_bytes()),
    )(qkv, conv_v, scale_mask)


# ----------------------------- parameters -----------------------------

def init_params(key, dim, num_heads, num_layers, mlp_ratio=3,
                crpe_window={3: 2, 5: 3, 7: 3}):
    Ch = dim // num_heads
    assert sum(crpe_window.values()) == num_heads
    keys = iter(jax.random.split(key, 64 + 16 * num_layers))

    def nrm(shape, scale=0.02):
        return (scale * jax.random.normal(next(keys), shape)).astype(jnp.float32)

    # ConvPosEnc: depthwise 3x3.
    shared = {"w_cpe": nrm((3, 3, dim)), "b_cpe": nrm((dim,))}

    # ConvRelPosEnc: per-window depthwise kernels embedded (centre-aligned, zero
    # padded) into one (Kmax, Kmax, dim) weight so the whole thing runs as a
    # single full-C depthwise conv.  Channel order matches PyTorch's split order.
    k_max = max(crpe_window.keys())
    w_parts, b_parts = [], []
    for k_sz, hs in crpe_window.items():
        cs = hs * Ch
        wk = nrm((k_sz, k_sz, cs))
        off = (k_max - k_sz) // 2
        wk_full = jnp.zeros((k_max, k_max, cs), jnp.float32)
        wk_full = wk_full.at[off:off + k_sz, off:off + k_sz, :].set(wk)
        w_parts.append(wk_full)
        b_parts.append(nrm((cs,)))
    shared["w_crpe"] = jnp.concatenate(w_parts, axis=-1)      # (Kmax, Kmax, dim)
    shared["b_crpe"] = jnp.concatenate(b_parts, axis=-1)      # (dim,)

    layers = []
    for _ in range(num_layers):
        layers.append({
            "g1": jnp.ones((dim,), jnp.float32), "b1": jnp.zeros((dim,), jnp.float32),
            # fused q|k|v projection — identical to PyTorch nn.Linear(dim, 3*dim).
            "w_qkv": nrm((dim, 3 * dim)), "b_qkv": nrm((3 * dim,)),
            "w_proj": nrm((dim, dim)), "b_proj": nrm((dim,)),
            "g2": jnp.ones((dim,), jnp.float32), "b2": jnp.zeros((dim,), jnp.float32),
            "w_fc1": nrm((dim, mlp_ratio * dim)), "b_fc1": nrm((mlp_ratio * dim,)),
            "w_fc2": nrm((mlp_ratio * dim, dim)), "b_fc2": nrm((dim,)),
        })
    return shared, layers


# ----------------------------- model glue -----------------------------

def mhca_block(x, lp, shared, H, W, num_heads):
    B, N, C = x.shape
    Ch = C // num_heads

    # ConvPosEnc: depthwise 3x3 + residual (residual fused in the conv kernel).
    x = depthwise_conv2d(x.reshape(B, H, W, C), shared["w_cpe"], shared["b_cpe"],
                         add_residual=True).reshape(B, N, C)
    xm = x.reshape(B * N, C)

    # norm1 fused into one fused q|k|v projection (single read of x, one LN,
    # lane-dense 3C output).  Channel layout of each third stays (head, Ch).
    qkv = linear(xm, lp["w_qkv"], lp["b_qkv"], ln=(lp["g1"], lp["b1"]))   # (B*N, 3C)

    # ConvRelPosEnc: single full-C depthwise conv over the v channels of qkv
    # (static channel offset inside the kernel; no wrapper slice or concat).
    conv_v = depthwise_conv2d(qkv.reshape(B, H, W, 3 * C), shared["w_crpe"],
                              shared["b_crpe"], ch_start=2 * C, ch_count=C)
    conv_v = conv_v.reshape(B, N, C)

    # Factorized attention: scale * q @ (softmax_N(k)^T v) + q * conv_v.
    att = factor_att(qkv.reshape(B, N, 3 * C), conv_v, float(Ch) ** -0.5, num_heads)

    # Output projection with the residual add fused into the matmul epilogue.
    x = linear(att.reshape(B * N, C), lp["w_proj"], lp["b_proj"], residual=xm)

    # norm2 + MLP: LN & exact GELU fused into fc1, residual fused into fc2.
    # TODO(synk): Dropout / DropPath are identity (rate 0 / eval) and omitted.
    h1 = linear(x, lp["w_fc1"], lp["b_fc1"], ln=(lp["g2"], lp["b2"]), activation="gelu")
    x = linear(h1, lp["w_fc2"], lp["b_fc2"], residual=x)
    return x.reshape(B, N, C)


def mhca_encoder(x, size, shared, layers, num_heads):
    H, W = size
    B, N, C = x.shape
    for lp in layers:
        x = mhca_block(x, lp, shared, H, W, num_heads)
    # (B, N, C) -> (B, H, W, C) -> NCHW, matching the PyTorch module output.
    return x.reshape(B, H, W, C).transpose(0, 3, 1, 2)


if __name__ == "__main__":
    B, H, W = 2, 8, 8
    dim, num_heads, num_layers = 32, 8, 2
    N = H * W

    key = jax.random.PRNGKey(0)
    kx, kp = jax.random.split(key)
    x = jax.random.normal(kx, (B, N, dim), jnp.float32)
    shared, layers = init_params(kp, dim, num_heads, num_layers)

    fwd = jax.jit(functools.partial(mhca_encoder, size=(H, W), num_heads=num_heads))
    out = fwd(x, shared=shared, layers=layers)
    out = jax.block_until_ready(out)

    assert out.shape == (B, dim, H, W), out.shape
    assert bool(jnp.all(jnp.isfinite(out)))
    print("KERNEL_OK")
</pallas_src>

<mosaic_0001>
module attributes {stable_mosaic.version = 11 : i64} {
  func.func @_dwconv_kernel(%arg0: i32, %arg1: memref<1x8x8x32xf32, #tpu.memory_space<vmem>>, %arg2: memref<3x3x32xf32, #tpu.memory_space<vmem>>, %arg3: memref<1x32xf32, #tpu.memory_space<vmem>>, %arg4: memref<1x8x8x32xf32, #tpu.memory_space<vmem>>, %arg5: memref<10x10x32xf32, #tpu.memory_space<vmem>>) attributes {dimension_semantics = [#tpu.dimension_semantics<parallel>], iteration_bounds = array<i64: 2>, scalar_prefetch = 0 : i64, scratch_operands = 1 : i64, tpu.core_type = #tpu.core_type<tc>, window_params = [{transform_indices = @transform_0, window_bounds = array<i64: 1, 8, 8, 32>}, {pipeline_mode = #tpu.pipeline_mode<synchronous>, transform_indices = @transform_1, window_bounds = array<i64: 3, 3, 32>}, {pipeline_mode = #tpu.pipeline_mode<synchronous>, transform_indices = @transform_2, window_bounds = array<i64: 1, 32>}, {transform_indices = @transform_3, window_bounds = array<i64: 1, 8, 8, 32>}]} {
    %c0 = arith.constant 0 : index
    %c0_0 = arith.constant 0 : index
    %c0_1 = arith.constant 0 : index
    %c0_2 = arith.constant 0 : index
    %0 = vector.load %arg1[%c0, %c0_0, %c0_1, %c0_2] : memref<1x8x8x32xf32, #tpu.memory_space<vmem>>, vector<1x8x8x32xf32>
    %1 = vector.shape_cast %0 : vector<1x8x8x32xf32> to vector<8x8x32xf32>
    %cst = arith.constant 0.000000e+00 : f32
    %2 = vector.broadcast %cst : f32 to vector<1x10x32xf32>
    %c0_3 = arith.constant 0 : index
    %c0_4 = arith.constant 0 : index
    %c0_5 = arith.constant 0 : index
    %3 = vector.load %arg5[%c0_3, %c0_4, %c0_5] : memref<10x10x32xf32, #tpu.memory_space<vmem>>, vector<1x10x32xf32>
    tpu.vector_store %arg5[%c0_3, %c0_4, %c0_5], %2 {strides = array<i32>} : memref<10x10x32xf32, #tpu.memory_space<vmem>>, vector<1x10x32xf32>,
    %cst_6 = arith.constant 0.000000e+00 : f32
    %4 = vector.broadcast %cst_6 : f32 to vector<1x10x32xf32>
    %c9 = arith.constant 9 : index
    %c0_7 = arith.constant 0 : index
    %c0_8 = arith.constant 0 : index
    %5 = vector.load %arg5[%c9, %c0_7, %c0_8] : memref<10x10x32xf32, #tpu.memory_space<vmem>>, vector<1x10x32xf32>
    tpu.vector_store %arg5[%c9, %c0_7, %c0_8], %4 {strides = array<i32>} : memref<10x10x32xf32, #tpu.memory_space<vmem>>, vector<1x10x32xf32>,
    %cst_9 = arith.constant 0.000000e+00 : f32
    %6 = vector.broadcast %cst_9 : f32 to vector<8x1x32xf32>
    %c1 = arith.constant 1 : index
    %c0_10 = arith.constant 0 : index
    %c0_11 = arith.constant 0 : index
    %7 = vector.load %arg5[%c1, %c0_10, %c0_11] : memref<10x10x32xf32, #tpu.memory_space<vmem>>, vector<8x1x32xf32>
    tpu.vector_store %arg5[%c1, %c0_10, %c0_11], %6 {strides = array<i32>} : memref<10x10x32xf32, #tpu.memory_space<vmem>>, vector<8x1x32xf32>,
    %cst_12 = arith.constant 0.000000e+00 : f32
    %8 = vector.broadcast %cst_12 : f32 to vector<8x1x32xf32>
    %c1_13 = arith.constant 1 : index
    %c9_14 = arith.constant 9 : index
    %c0_15 = arith.constant 0 : index
    %9 = vector.load %arg5[%c1_13, %c9_14, %c0_15] : memref<10x10x32xf32, #tpu.memory_space<vmem>>, vector<8x1x32xf32>
    tpu.vector_store %arg5[%c1_13, %c9_14, %c0_15], %8 {strides = array<i32>} : memref<10x10x32xf32, #tpu.memory_space<vmem>>, vector<8x1x32xf32>,
    %c1_16 = arith.constant 1 : index
    %c1_17 = arith.constant 1 : index
    %c0_18 = arith.constant 0 : index
    %10 = vector.load %arg5[%c1_16, %c1_17, %c0_18] : memref<10x10x32xf32, #tpu.memory_space<vmem>>, vector<8x8x32xf32>
    tpu.vector_store %arg5[%c1_16, %c1_17, %c0_18], %1 {strides = array<i32>} : memref<10x10x32xf32, #tpu.memory_space<vmem>>, vector<8x8x32xf32>,
    %c0_19 = arith.constant 0 : index
    %c0_20 = arith.constant 0 : index
    %c0_21 = arith.constant 0 : index
    %11 = vector.load %arg5[%c0_19, %c0_20, %c0_21] : memref<10x10x32xf32, #tpu.memory_space<vmem>>, vector<10x10x32xf32>
    %c0_22 = arith.constant 0 : index
    %c0_23 = arith.constant 0 : index
    %c0_24 = arith.constant 0 : index
    %12 = vector.load %arg2[%c0_22, %c0_23, %c0_24] : memref<3x3x32xf32, #tpu.memory_space<vmem>>, vector<3x3x32xf32>
    %cst_25 = arith.constant 0.000000e+00 : f32
    %13 = vector.broadcast %cst_25 : f32 to vector<8x8x32xf32>
    %14 = vector.extract_strided_slice %11 {offsets = [0, 0, 0], sizes = [8, 8, 32], strides = [1, 1, 1]} : vector<10x10x32xf32> to vector<8x8x32xf32>
    %15 = vector.extract_strided_slice %12 {offsets = [0, 0, 0], sizes = [1, 1, 32], strides = [1, 1, 1]} : vector<3x3x32xf32> to vector<1x1x32xf32>
    %16 = vector.broadcast %15 : vector<1x1x32xf32> to vector<8x8x32xf32>
    %17 = arith.mulf %14, %16 : vector<8x8x32xf32>
    %18 = arith.addf %13, %17 : vector<8x8x32xf32>
    %19 = vector.extract_strided_slice %11 {offsets = [0, 1, 0], sizes = [8, 8, 32], strides = [1, 1, 1]} : vector<10x10x32xf32> to vector<8x8x32xf32>
    %20 = vector.extract_strided_slice %12 {offsets = [0, 1, 0], sizes = [1, 1, 32], strides = [1, 1, 1]} : vector<3x3x32xf32> to vector<1x1x32xf32>
    %21 = vector.broadcast %20 : vector<1x1x32xf32> to vector<8x8x32xf32>
    %22 = arith.mulf %19, %21 : vector<8x8x32xf32>
    %23 = arith.addf %18, %22 : vector<8x8x32xf32>
    %24 = vector.extract_strided_slice %11 {offsets = [0, 2, 0], sizes = [8, 8, 32], strides = [1, 1, 1]} : vector<10x10x32xf32> to vector<8x8x32xf32>
    %25 = vector.extract_strided_slice %12 {offsets = [0, 2, 0], sizes = [1, 1, 32], strides = [1, 1, 1]} : vector<3x3x32xf32> to vector<1x1x32xf32>
    %26 = vector.broadcast %25 : vector<1x1x32xf32> to vector<8x8x32xf32>
    %27 = arith.mulf %24, %26 : vector<8x8x32xf32>
    %28 = arith.addf %23, %27 : vector<8x8x32xf32>
    %29 = vector.extract_strided_slice %11 {offsets = [1, 0, 0], sizes = [8, 8, 32], strides = [1, 1, 1]} : vector<10x10x32xf32> to vector<8x8x32xf32>
    %30 = vector.extract_strided_slice %12 {offsets = [1, 0, 0], sizes = [1, 1, 32], strides = [1, 1, 1]} : vector<3x3x32xf32> to vector<1x1x32xf32>
    %31 = vector.broadcast %30 : vector<1x1x32xf32> to vector<8x8x32xf32>
    %32 = arith.mulf %29, %31 : vector<8x8x32xf32>
    %33 = arith.addf %28, %32 : vector<8x8x32xf32>
    %34 = vector.extract_strided_slice %11 {offsets = [1, 1, 0], sizes = [8, 8, 32], strides = [1, 1, 1]} : vector<10x10x32xf32> to vector<8x8x32xf32>
    %35 = vector.extract_strided_slice %12 {offsets = [1, 1, 0], sizes = [1, 1, 32], strides = [1, 1, 1]} : vector<3x3x32xf32> to vector<1x1x32xf32>
    %36 = vector.broadcast %35 : vector<1x1x32xf32> to vector<8x8x32xf32>
    %37 = arith.mulf %34, %36 : vector<8x8x32xf32>
    %38 = arith.addf %33, %37 : vector<8x8x32xf32>
    %39 = vector.extract_strided_slice %11 {offsets = [1, 2, 0], sizes = [8, 8, 32], strides = [1, 1, 1]} : vector<10x10x32xf32> to vector<8x8x32xf32>
    %40 = vector.extract_strided_slice %12 {offsets = [1, 2, 0], sizes = [1, 1, 32], strides = [1, 1, 1]} : vector<3x3x32xf32> to vector<1x1x32xf32>
    %41 = vector.broadcast %40 : vector<1x1x32xf32> to vector<8x8x32xf32>
    %42 = arith.mulf %39, %41 : vector<8x8x32xf32>
    %43 = arith.addf %38, %42 : vector<8x8x32xf32>
    %44 = vector.extract_strided_slice %11 {offsets = [2, 0, 0], sizes = [8, 8, 32], strides = [1, 1, 1]} : vector<10x10x32xf32> to vector<8x8x32xf32>
    %45 = vector.extract_strided_slice %12 {offsets = [2, 0, 0], sizes = [1, 1, 32], strides = [1, 1, 1]} : vector<3x3x32xf32> to vector<1x1x32xf32>
    %46 = vector.broadcast %45 : vector<1x1x32xf32> to vector<8x8x32xf32>
    %47 = arith.mulf %44, %46 : vector<8x8x32xf32>
    %48 = arith.addf %43, %47 : vector<8x8x32xf32>
    %49 = vector.extract_strided_slice %11 {offsets = [2, 1, 0], sizes = [8, 8, 32], strides = [1, 1, 1]} : vector<10x10x32xf32> to vector<8x8x32xf32>
    %50 = vector.extract_strided_slice %12 {offsets = [2, 1, 0], sizes = [1, 1, 32], strides = [1, 1, 1]} : vector<3x3x32xf32> to vector<1x1x32xf32>
    %51 = vector.broadcast %50 : vector<1x1x32xf32> to vector<8x8x32xf32>
    %52 = arith.mulf %49, %51 : vector<8x8x32xf32>
    %53 = arith.addf %48, %52 : vector<8x8x32xf32>
    %54 = vector.extract_strided_slice %11 {offsets = [2, 2, 0], sizes = [8, 8, 32], strides = [1, 1, 1]} : vector<10x10x32xf32> to vector<8x8x32xf32>
    %55 = vector.extract_strided_slice %12 {offsets = [2, 2, 0], sizes = [1, 1, 32], strides = [1, 1, 1]} : vector<3x3x32xf32> to vector<1x1x32xf32>
    %56 = vector.broadcast %55 : vector<1x1x32xf32> to vector<8x8x32xf32>
    %57 = arith.mulf %54, %56 : vector<8x8x32xf32>
    %58 = arith.addf %53, %57 : vector<8x8x32xf32>
    %c0_26 = arith.constant 0 : index
    %c0_27 = arith.constant 0 : index
    %59 = vector.load %arg3[%c0_26, %c0_27] : memref<1x32xf32, #tpu.memory_space<vmem>>, vector<1x32xf32>
    %60 = vector.shape_cast %59 : vector<1x32xf32> to vector<1x1x32xf32>
    %61 = vector.broadcast %60 : vector<1x1x32xf32> to vector<8x8x32xf32>
    %62 = arith.addf %58, %61 : vector<8x8x32xf32>
    %63 = arith.addf %62, %1 : vector<8x8x32xf32>
    %c0_28 = arith.constant 0 : index
    %c0_29 = arith.constant 0 : index
    %c0_30 = arith.constant 0 : index
    %c0_31 = arith.constant 0 : index
    %64 = vector.load %arg4[%c0_28, %c0_29, %c0_30, %c0_31] : memref<1x8x8x32xf32, #tpu.memory_space<vmem>>, vector<1x8x8x32xf32>
    %65 = vector.shape_cast %64 : vector<1x8x8x32xf32> to vector<8x8x32xf32>
    %66 = vector.shape_cast %63 : vector<8x8x32xf32> to vector<1x8x8x32xf32>
    tpu.vector_store %arg4[%c0_28, %c0_29, %c0_30, %c0_31], %66 {strides = array<i32>} : memref<1x8x8x32xf32, #tpu.memory_space<vmem>>, vector<1x8x8x32xf32>,
    return
  }
  func.func @transform_0(%arg0: i32) -> (i32, i32, i32, i32) {
    %c0_i32 = arith.constant 0 : i32
    %c0_i32_0 = arith.constant 0 : i32
    %c0_i32_1 = arith.constant 0 : i32
    %c0_i32_2 = arith.constant 0 : i32
    return %arg0, %c0_i32, %c0_i32_0, %c0_i32_1 : i32, i32, i32, i32
  }
  func.func @transform_1(%arg0: i32) -> (i32, i32, i32) {
    %c0_i32 = arith.constant 0 : i32
    %c0_i32_0 = arith.constant 0 : i32
    %c0_i32_1 = arith.constant 0 : i32
    %c0_i32_2 = arith.constant 0 : i32
    return %c0_i32, %c0_i32_0, %c0_i32_1 : i32, i32, i32
  }
  func.func @transform_2(%arg0: i32) -> (i32, i32) {
    %c0_i32 = arith.constant 0 : i32
    %c0_i32_0 = arith.constant 0 : i32
    %c0_i32_1 = arith.constant 0 : i32
    return %c0_i32, %c0_i32_0 : i32, i32
  }
  func.func @transform_3(%arg0: i32) -> (i32, i32, i32, i32) {
    %c0_i32 = arith.constant 0 : i32
    %c0_i32_0 = arith.constant 0 : i32
    %c0_i32_1 = arith.constant 0 : i32
    %c0_i32_2 = arith.constant 0 : i32
    return %arg0, %c0_i32, %c0_i32_0, %c0_i32_1 : i32, i32, i32, i32
  }
}

module attributes {stable_mosaic.version = 11 : i64} {
  func.func @_linear_kernel(%arg0: i32, %arg1: i32, %arg2: i32, %arg3: memref<128x32xf32, #tpu.memory_space<vmem>>, %arg4: memref<32x96xf32, #tpu.memory_space<vmem>>, %arg5: memref<1x96xf32, #tpu.memory_space<vmem>>, %arg6: memref<1x32xf32, #tpu.memory_space<vmem>>, %arg7: memref<1x32xf32, #tpu.memory_space<vmem>>, %arg8: memref<128x96xf32, #tpu.memory_space<vmem>>, %arg9: memref<128x96xf32, #tpu.memory_space<vmem>>, %arg10: memref<128x32xbf16, #tpu.memory_space<vmem>>) attributes {dimension_semantics = [#tpu.dimension_semantics<parallel>, #tpu.dimension_semantics<arbitrary>, #tpu.dimension_semantics<arbitrary>], iteration_bounds = array<i64: 1, 1, 1>, scalar_prefetch = 0 : i64, scratch_operands = 2 : i64, tpu.core_type = #tpu.core_type<tc>, window_params = [{transform_indices = @transform_0, window_bounds = array<i64: 128, 32>}, {transform_indices = @transform_1, window_bounds = array<i64: 32, 96>}, {transform_indices = @transform_2, window_bounds = array<i64: 1, 96>}, {transform_indices = @transform_3, window_bounds = array<i64: 1, 32>}, {transform_indices = @transform_4, window_bounds = array<i64: 1, 32>}, {transform_indices = @transform_5, window_bounds = array<i64: 128, 96>}]} {
    %c0_i32 = arith.constant 0 : i32
    %0 = arith.cmpi eq, %arg2, %c0_i32 : i32
    %1 = arith.extui %0 : i1 to i32
    %c0_i32_0 = arith.constant 0 : i32
    %2 = arith.cmpi ne, %1, %c0_i32_0 : i32
    scf.if %2 {
      %cst_12 = arith.constant 0.000000e+00 : f32
      %16 = vector.broadcast %cst_12 : f32 to vector<128x96xf32>
      %c0_13 = arith.constant 0 : index
      %c0_14 = arith.constant 0 : index
      %17 = vector.load %arg9[%c0_13, %c0_14] : memref<128x96xf32, #tpu.memory_space<vmem>>, vector<128x96xf32>
      tpu.vector_store %arg9[%c0_13, %c0_14], %16 {strides = array<i32>} : memref<128x96xf32, #tpu.memory_space<vmem>>, vector<128x96xf32>,
    } else {
    }
    %c0_i32_1 = arith.constant 0 : i32
    %3 = arith.cmpi eq, %arg1, %c0_i32_1 : i32
    %4 = arith.extui %3 : i1 to i32
    %c0_i32_2 = arith.constant 0 : i32
    %5 = arith.cmpi ne, %4, %c0_i32_2 : i32
    scf.if %5 {
      %c0_12 = arith.constant 0 : index
      %c0_13 = arith.constant 0 : index
      %16 = vector.load %arg3[%c0_12, %c0_13] : memref<128x32xf32, #tpu.memory_space<vmem>>, vector<128x32xf32>
      %cst_14 = arith.constant dense<0.000000e+00> : vector<128xf32>
      %17 = vector.multi_reduction <add>, %16, %cst_14 [1] : vector<128x32xf32> to vector<128xf32>
      %18 = vector.shape_cast %17 : vector<128xf32> to vector<128x1xf32>
      %cst_15 = arith.constant 3.200000e+01 : f32
      %19 = vector.broadcast %cst_15 : f32 to vector<128x1xf32>
      %20 = arith.divf %18, %19 : vector<128x1xf32>
      %21 = vector.broadcast %20 : vector<128x1xf32> to vector<128x32xf32>
      %22 = arith.subf %16, %21 : vector<128x32xf32>
      %23 = arith.mulf %22, %22 : vector<128x32xf32>
      %cst_16 = arith.constant dense<0.000000e+00> : vector<128xf32>
      %24 = vector.multi_reduction <add>, %23, %cst_16 [1] : vector<128x32xf32> to vector<128xf32>
      %25 = vector.shape_cast %24 : vector<128xf32> to vector<128x1xf32>
      %cst_17 = arith.constant 3.200000e+01 : f32
      %26 = vector.broadcast %cst_17 : f32 to vector<128x1xf32>
      %27 = arith.divf %25, %26 : vector<128x1xf32>
      %cst_18 = arith.constant 9.99999997E-7 : f32
      %28 = vector.broadcast %cst_18 : f32 to vector<128x1xf32>
      %29 = arith.addf %27, %28 : vector<128x1xf32>
      %30 = math.rsqrt %29 : vector<128x1xf32>
      %31 = vector.broadcast %30 : vector<128x1xf32> to vector<128x32xf32>
      %32 = arith.mulf %22, %31 : vector<128x32xf32>
      %c0_19 = arith.constant 0 : index
      %c0_20 = arith.constant 0 : index
      %33 = vector.load %arg6[%c0_19, %c0_20] : memref<1x32xf32, #tpu.memory_space<vmem>>, vector<1x32xf32>
      %34 = vector.broadcast %33 : vector<1x32xf32> to vector<128x32xf32>
      %35 = arith.mulf %32, %34 : vector<128x32xf32>
      %c0_21 = arith.constant 0 : index
      %c0_22 = arith.constant 0 : index
      %36 = vector.load %arg7[%c0_21, %c0_22] : memref<1x32xf32, #tpu.memory_space<vmem>>, vector<1x32xf32>
      %37 = vector.broadcast %36 : vector<1x32xf32> to vector<128x32xf32>
      %38 = arith.addf %35, %37 : vector<128x32xf32>
      %39 = arith.truncf %38 : vector<128x32xf32> to vector<128x32xbf16>
      %c0_23 = arith.constant 0 : index
      %c0_24 = arith.constant 0 : index
      %40 = vector.load %arg10[%c0_23, %c0_24] : memref<128x32xbf16, #tpu.memory_space<vmem>>, vector<128x32xbf16>
      tpu.vector_store %arg10[%c0_23, %c0_24], %39 {strides = array<i32>} : memref<128x32xbf16, #tpu.memory_space<vmem>>, vector<128x32xbf16>,
    } else {
    }
    %c0 = arith.constant 0 : index
    %c0_3 = arith.constant 0 : index
    %6 = vector.load %arg10[%c0, %c0_3] : memref<128x32xbf16, #tpu.memory_space<vmem>>, vector<128x32xbf16>
    %c0_4 = arith.constant 0 : index
    %c0_5 = arith.constant 0 : index
    %7 = vector.load %arg9[%c0_4, %c0_5] : memref<128x96xf32, #tpu.memory_space<vmem>>, vector<128x96xf32>
    %c0_6 = arith.constant 0 : index
    %c0_7 = arith.constant 0 : index
    %8 = vector.load %arg4[%c0_6, %c0_7] : memref<32x96xf32, #tpu.memory_space<vmem>>, vector<32x96xf32>
    %9 = arith.truncf %8 : vector<32x96xf32> to vector<32x96xbf16>
    %cst = arith.constant dense<0.000000e+00> : vector<128x96xf32>
    %10 = tpu.matmul %6, %9, %cst {dimension_numbers = #tpu.dot_dimension_numbers<[1], [0], [0], [1], [0, 0, 1, 1], [], []>} : vector<128x32xbf16>, vector<32x96xbf16>, vector<128x96xf32> -> vector<128x96xf32>
    %11 = arith.addf %7, %10 : vector<128x96xf32>
    %c0_8 = arith.constant 0 : index
    %c0_9 = arith.constant 0 : index
    %12 = vector.load %arg9[%c0_8, %c0_9] : memref<128x96xf32, #tpu.memory_space<vmem>>, vector<128x96xf32>
    tpu.vector_store %arg9[%c0_8, %c0_9], %11 {strides = array<i32>} : memref<128x96xf32, #tpu.memory_space<vmem>>, vector<128x96xf32>,
    %c0_i32_10 = arith.constant 0 : i32
    %13 = arith.cmpi eq, %arg2, %c0_i32_10 : i32
    %14 = arith.extui %13 : i1 to i32
    %c0_i32_11 = arith.constant 0 : i32
    %15 = arith.cmpi ne, %14, %c0_i32_11 : i32
    scf.if %15 {
      %c0_12 = arith.constant 0 : index
      %c0_13 = arith.constant 0 : index
      %16 = vector.load %arg9[%c0_12, %c0_13] : memref<128x96xf32, #tpu.memory_space<vmem>>, vector<128x96xf32>
      %c0_14 = arith.constant 0 : index
      %c0_15 = arith.constant 0 : index
      %17 = vector.load %arg5[%c0_14, %c0_15] : memref<1x96xf32, #tpu.memory_space<vmem>>, vector<1x96xf32>
      %18 = vector.broadcast %17 : vector<1x96xf32> to vector<128x96xf32>
      %19 = arith.addf %16, %18 : vector<128x96xf32>
      %c0_16 = arith.constant 0 : index
      %c0_17 = arith.constant 0 : index
      %20 = vector.load %arg8[%c0_16, %c0_17] : memref<128x96xf32, #tpu.memory_space<vmem>>, vector<128x96xf32>
      tpu.vector_store %arg8[%c0_16, %c0_17], %19 {strides = array<i32>} : memref<128x96xf32, #tpu.memory_space<vmem>>, vector<128x96xf32>,
    } else {
    }
    return
  }
  func.func @transform_0(%arg0: i32, %arg1: i32, %arg2: i32) -> (i32, i32) {
    %c0_i32 = arith.constant 0 : i32
    return %arg0, %arg2 : i32, i32
  }
  func.func @transform_1(%arg0: i32, %arg1: i32, %arg2: i32) -> (i32, i32) {
    %c0_i32 = arith.constant 0 : i32
    return %arg2, %arg1 : i32, i32
  }
  func.func @transform_2(%arg0: i32, %arg1: i32, %arg2: i32) -> (i32, i32) {
    %c0_i32 = arith.constant 0 : i32
    %c0_i32_0 = arith.constant 0 : i32
    return %c0_i32, %arg1 : i32, i32
  }
  func.func @transform_3(%arg0: i32, %arg1: i32, %arg2: i32) -> (i32, i32) {
    %c0_i32 = arith.constant 0 : i32
    %c0_i32_0 = arith.constant 0 : i32
    return %c0_i32, %arg2 : i32, i32
  }
  func.func @transform_4(%arg0: i32, %arg1: i32, %arg2: i32) -> (i32, i32) {
    %c0_i32 = arith.constant 0 : i32
    %c0_i32_0 = arith.constant 0 : i32
    return %c0_i32, %arg2 : i32, i32
  }
  func.func @transform_5(%arg0: i32, %arg1: i32, %arg2: i32) -> (i32, i32) {
    %c0_i32 = arith.constant 0 : i32
    return %arg0, %arg1 : i32, i32
  }
}

module attributes {stable_mosaic.version = 11 : i64} {
  func.func @_dwconv_kernel(%arg0: i32, %arg1: memref<1x8x8x96xf32, #tpu.memory_space<vmem>>, %arg2: memref<7x7x32xf32, #tpu.memory_space<vmem>>, %arg3: memref<1x32xf32, #tpu.memory_space<vmem>>, %arg4: memref<1x8x8x32xf32, #tpu.memory_space<vmem>>, %arg5: memref<14x14x32xf32, #tpu.memory_space<vmem>>) attributes {dimension_semantics = [#tpu.dimension_semantics<parallel>], iteration_bounds = array<i64: 2>, scalar_prefetch = 0 : i64, scratch_operands = 1 : i64, tpu.core_type = #tpu.core_type<tc>, window_params = [{transform_indices = @transform_0, window_bounds = array<i64: 1, 8, 8, 96>}, {pipeline_mode = #tpu.pipeline_mode<synchronous>, transform_indices = @transform_1, window_bounds = array<i64: 7, 7, 32>}, {pipeline_mode = #tpu.pipeline_mode<synchronous>, transform_indices = @transform_2, window_bounds = array<i64: 1, 32>}, {transform_indices = @transform_3, window_bounds = array<i64: 1, 8, 8, 32>}]} {
    %c0 = arith.constant 0 : index
    %c0_0 = arith.constant 0 : index
    %c0_1 = arith.constant 0 : index
    %c0_2 = arith.constant 0 : index
    %0 = vector.load %arg1[%c0, %c0_0, %c0_1, %c0_2] : memref<1x8x8x96xf32, #tpu.memory_space<vmem>>, vector<1x8x8x96xf32>
    %1 = vector.shape_cast %0 : vector<1x8x8x96xf32> to vector<8x8x96xf32>
    %2 = vector.extract_strided_slice %1 {offsets = [0, 0, 64], sizes = [8, 8, 32], strides = [1, 1, 1]} : vector<8x8x96xf32> to vector<8x8x32xf32>
    %cst = arith.constant 0.000000e+00 : f32
    %3 = vector.broadcast %cst : f32 to vector<3x14x32xf32>
    %c0_3 = arith.constant 0 : index
    %c0_4 = arith.constant 0 : index
    %c0_5 = arith.constant 0 : index
    %4 = vector.load %arg5[%c0_3, %c0_4, %c0_5] : memref<14x14x32xf32, #tpu.memory_space<vmem>>, vector<3x14x32xf32>
    tpu.vector_store %arg5[%c0_3, %c0_4, %c0_5], %3 {strides = array<i32>} : memref<14x14x32xf32, #tpu.memory_space<vmem>>, vector<3x14x32xf32>,
    %cst_6 = arith.constant 0.000000e+00 : f32
    %5 = vector.broadcast %cst_6 : f32 to vector<3x14x32xf32>
    %c11 = arith.constant 11 : index
    %c0_7 = arith.constant 0 : index
    %c0_8 = arith.constant 0 : index
    %6 = vector.load %arg5[%c11, %c0_7, %c0_8] : memref<14x14x32xf32, #tpu.memory_space<vmem>>, vector<3x14x32xf32>
    tpu.vector_store %arg5[%c11, %c0_7, %c0_8], %5 {strides = array<i32>} : memref<14x14x32xf32, #tpu.memory_space<vmem>>, vector<3x14x32xf32>,
    %cst_9 = arith.constant 0.000000e+00 : f32
    %7 = vector.broadcast %cst_9 : f32 to vector<8x3x32xf32>
    %c3 = arith.constant 3 : index
    %c0_10 = arith.constant 0 : index
    %c0_11 = arith.constant 0 : index
    %8 = vector.load %arg5[%c3, %c0_10, %c0_11] : memref<14x14x32xf32, #tpu.memory_space<vmem>>, vector<8x3x32xf32>
    tpu.vector_store %arg5[%c3, %c0_10, %c0_11], %7 {strides = array<i32>} : memref<14x14x32xf32, #tpu.memory_space<vmem>>, vector<8x3x32xf32>,
    %cst_12 = arith.constant 0.000000e+00 : f32
    %9 = vector.broadcast %cst_12 : f32 to vector<8x3x32xf32>
    %c3_13 = arith.constant 3 : index
    %c11_14 = arith.constant 11 : index
    %c0_15 = arith.constant 0 : index
    %10 = vector.load %arg5[%c3_13, %c11_14, %c0_15] : memref<14x14x32xf32, #tpu.memory_space<vmem>>, vector<8x3x32xf32>
    tpu.vector_store %arg5[%c3_13, %c11_14, %c0_15], %9 {strides = array<i32>} : memref<14x14x32xf32, #tpu.memory_space<vmem>>, vector<8x3x32xf32>,
    %c3_16 = arith.constant 3 : index
    %c3_17 = arith.constant 3 : index
    %c0_18 = arith.constant 0 : index
    %11 = vector.load %arg5[%c3_16, %c3_17, %c0_18] : memref<14x14x32xf32, #tpu.memory_space<vmem>>, vector<8x8x32xf32>
    tpu.vector_store %arg5[%c3_16, %c3_17, %c0_18], %2 {strides = array<i32>} : memref<14x14x32xf32, #tpu.memory_space<vmem>>, vector<8x8x32xf32>,
    %c0_19 = arith.constant 0 : index
    %c0_20 = arith.constant 0 : index
    %c0_21 = arith.constant 0 : index
    %12 = vector.load %arg5[%c0_19, %c0_20, %c0_21] : memref<14x14x32xf32, #tpu.memory_space<vmem>>, vector<14x14x32xf32>
    %c0_22 = arith.constant 0 : index
    %c0_23 = arith.constant 0 : index
    %c0_24 = arith.constant 0 : index
    %13 = vector.load %arg2[%c0_22, %c0_23, %c0_24] : memref<7x7x32xf32, #tpu.memory_space<vmem>>, vector<7x7x32xf32>
    %cst_25 = arith.constant 0.000000e+00 : f32
    %14 = vector.broadcast %cst_25 : f32 to vector<8x8x32xf32>
    %15 = vector.extract_strided_slice %12 {offsets = [0, 0, 0], sizes = [8, 8, 32], strides = [1, 1, 1]} : vector<14x14x32xf32> to vector<8x8x32xf32>
    %16 = vector.extract_strided_slice %13 {offsets = [0, 0, 0], sizes = [1, 1, 32], strides = [1, 1, 1]} : vector<7x7x32xf32> to vector<1x1x32xf32>
    %17 = vector.broadcast %16 : vector<1x1x32xf32> to vector<8x8x32xf32>
    %18 = arith.mulf %15, %17 : vector<8x8x32xf32>
    %19 = arith.addf %14, %18 : vector<8x8x32xf32>
    %20 = vector.extract_strided_slice %12 {offsets = [0, 1, 0], sizes = [8, 8, 32], strides = [1, 1, 1]} : vector<14x14x32xf32> to vector<8x8x32xf32>
    %21 = vector.extract_strided_slice %13 {offsets = [0, 1, 0], sizes = [1, 1, 32], strides = [1, 1, 1]} : vector<7x7x32xf32> to vector<1x1x32xf32>
    %22 = vector.broadcast %21 : vector<1x1x32xf32> to vector<8x8x32xf32>
    %23 = arith.mulf %20, %22 : vector<8x8x32xf32>
    %24 = arith.addf %19, %23 : vector<8x8x32xf32>
    %25 = vector.extract_strided_slice %12 {offsets = [0, 2, 0], sizes = [8, 8, 32], strides = [1, 1, 1]} : vector<14x14x32xf32> to vector<8x8x32xf32>
    %26 = vector.extract_strided_slice %13 {offsets = [0, 2, 0], sizes = [1, 1, 32], strides = [1, 1, 1]} : vector<7x7x32xf32> to vector<1x1x32xf32>
    %27 = vector.broadcast %26 : vector<1x1x32xf32> to vector<8x8x32xf32>
    %28 = arith.mulf %25, %27 : vector<8x8x32xf32>
    %29 = arith.addf %24, %28 : vector<8x8x32xf32>
    %30 = vector.extract_strided_slice %12 {offsets = [0, 3, 0], sizes = [8, 8, 32], strides = [1, 1, 1]} : vector<14x14x32xf32> to vector<8x8x32xf32>
    %31 = vector.extract_strided_slice %13 {offsets = [0, 3, 0], sizes = [1, 1, 32], strides = [1, 1, 1]} : vector<7x7x32xf32> to vector<1x1x32xf32>
    %32 = vector.broadcast %31 : vector<1x1x32xf32> to vector<8x8x32xf32>
    %33 = arith.mulf %30, %32 : vector<8x8x32xf32>
    %34 = arith.addf %29, %33 : vector<8x8x32xf32>
    %35 = vector.extract_strided_slice %12 {offsets = [0, 4, 0], sizes = [8, 8, 32], strides = [1, 1, 1]} : vector<14x14x32xf32> to vector<8x8x32xf32>
    %36 = vector.extract_strided_slice %13 {offsets = [0, 4, 0], sizes = [1, 1, 32], strides = [1, 1, 1]} : vector<7x7x32xf32> to vector<1x1x32xf32>
    %37 = vector.broadcast %36 : vector<1x1x32xf32> to vector<8x8x32xf32>
    %38 = arith.mulf %35, %37 : vector<8x8x32xf32>
    %39 = arith.addf %34, %38 : vector<8x8x32xf32>
    %40 = vector.extract_strided_slice %12 {offsets = [0, 5, 0], sizes = [8, 8, 32], strides = [1, 1, 1]} : vector<14x14x32xf32> to vector<8x8x32xf32>
    %41 = vector.extract_strided_slice %13 {offsets = [0, 5, 0], sizes = [1, 1, 32], strides = [1, 1, 1]} : vector<7x7x32xf32> to vector<1x1x32xf32>
    %42 = vector.broadcast %41 : vector<1x1x32xf32> to vector<8x8x32xf32>
    %43 = arith.mulf %40, %42 : vector<8x8x32xf32>
    %44 = arith.addf %39, %43 : vector<8x8x32xf32>
    %45 = vector.extract_strided_slice %12 {offsets = [0, 6, 0], sizes = [8, 8, 32], strides = [1, 1, 1]} : vector<14x14x32xf32> to vector<8x8x32xf32>
    %46 = vector.extract_strided_slice %13 {offsets = [0, 6, 0], sizes = [1, 1, 32], strides = [1, 1, 1]} : vector<7x7x32xf32> to vector<1x1x32xf32>
    %47 = vector.broadcast %46 : vector<1x1x32xf32> to vector<8x8x32xf32>
    %48 = arith.mulf %45, %47 : vector<8x8x32xf32>
    %49 = arith.addf %44, %48 : vector<8x8x32xf32>
    %50 = vector.extract_strided_slice %12 {offsets = [1, 0, 0], sizes = [8, 8, 32], strides = [1, 1, 1]} : vector<14x14x32xf32> to vector<8x8x32xf32>
    %51 = vector.extract_strided_slice %13 {offsets = [1, 0, 0], sizes = [1, 1, 32], strides = [1, 1, 1]} : vector<7x7x32xf32> to vector<1x1x32xf32>
    %52 = vector.broadcast %51 : vector<1x1x32xf32> to vector<8x8x32xf32>
    %53 = arith.mulf %50, %52 : vector<8x8x32xf32>
    %54 = arith.addf %49, %53 : vector<8x8x32xf32>
    %55 = vector.extract_strided_slice %12 {offsets = [1, 1, 0], sizes = [8, 8, 32], strides = [1, 1, 1]} : vector<14x14x32xf32> to vector<8x8x32xf32>
    %56 = vector.extract_strided_slice %13 {offsets = [1, 1, 0], sizes = [1, 1, 32], strides = [1, 1, 1]} : vector<7x7x32xf32> to vector<1x1x32xf32>
    %57 = vector.broadcast %56 : vector<1x1x32xf32> to vector<8x8x32xf32>
    %58 = arith.mulf %55, %57 : vector<8x8x32xf32>
    %59 = arith.addf %54, %58 : vector<8x8x32xf32>
    %60 = vector.extract_strided_slice %12 {offsets = [1, 2, 0], sizes = [8, 8, 32], strides = [1, 1, 1]} : vector<14x14x32xf32> to vector<8x8x32xf32>
    %61 = vector.extract_strided_slice %13 {offsets = [1, 2, 0], sizes = [1, 1, 32], strides = [1, 1, 1]} : vector<7x7x32xf32> to vector<1x1x32xf32>
    %62 = vector.broadcast %61 : vector<1x1x32xf32> to vector<8x8x32xf32>
    %63 = arith.mulf %60, %62 : vector<8x8x32xf32>
    %64 = arith.addf %59, %63 : vector<8x8x32xf32>
    %65 = vector.extract_strided_slice %12 {offsets = [1, 3, 0], sizes = [8, 8, 32], strides = [1, 1, 1]} : vector<14x14x32xf32> to vector<8x8x32xf32>
    %66 = vector.extract_strided_slice %13 {offsets = [1, 3, 0], sizes = [1, 1, 32], strides = [1, 1, 1]} : vector<7x7x32xf32> to vector<1x1x32xf32>
    %67 = vector.broadcast %66 : vector<1x1x32xf32> to vector<8x8x32xf32>
    %68 = arith.mulf %65, %67 : vector<8x8x32xf32>
    %69 = arith.addf %64, %68 : vector<8x8x32xf32>
    %70 = vector.extract_strided_slice %12 {offsets = [1, 4, 0], sizes = [8, 8, 32], strides = [1, 1, 1]} : vector<14x14x32xf32> to vector<8x8x32xf32>
    %71 = vector.extract_strided_slice %13 {offsets = [1, 4, 0], sizes = [1, 1, 32], strides = [1, 1, 1]} : vector<7x7x32xf32> to vector<1x1x32xf32>
    %72 = vector.broadcast %71 : vector<1x1x32xf32> to vector<8x8x32xf32>
    %73 = arith.mulf %70, %72 : vector<8x8x32xf32>
    %74 = arith.addf %69, %73 : vector<8x8x32xf32>
    %75 = vector.extract_strided_slice %12 {offsets = [1, 5, 0], sizes = [8, 8, 32], strides = [1, 1, 1]} : vector<14x14x32xf32> to vector<8x8x32xf32>
    %76 = vector.extract_strided_slice %13 {offsets = [1, 5, 0], sizes = [1, 1, 32], strides = [1, 1, 1]} : vector<7x7x32xf32> to vector<1x1x32xf32>
    %77 = vector.broadcast %76 : vector<1x1x32xf32> to vector<8x8x32xf32>
    %78 = arith.mulf %75, %77 : vector<8x8x32xf32>
    %79 = arith.addf %74, %78 : vector<8x8x32xf32>
    %80 = vector.extract_strided_slice %12 {offsets = [1, 6, 0], sizes = [8, 8, 32], strides = [1, 1, 1]} : vector<14x14x32xf32> to vector<8x8x32xf32>
    %81 = vector.extract_strided_slice %13 {offsets = [1, 6, 0], sizes = [1, 1, 32], strides = [1, 1, 1]} : vector<7x7x32xf32> to vector<1x1x32xf32>
    %82 = vector.broadcast %81 : vector<1x1x32xf32> to vector<8x8x32xf32>
    %83 = arith.mulf %80, %82 : vector<8x8x32xf32>
    %84 = arith.addf %79, %83 : vector<8x8x32xf32>
    %85 = vector.extract_strided_slice %12 {offsets = [2, 0, 0], sizes = [8, 8, 32], strides = [1, 1, 1]} : vector<14x14x32xf32> to vector<8x8x32xf32>
    %86 = vector.extract_strided_slice %13 {offsets = [2, 0, 0], sizes = [1, 1, 32], strides = [1, 1, 1]} : vector<7x7x32xf32> to vector<1x1x32xf32>
    %87 = vector.broadcast %86 : vector<1x1x32xf32> to vector<8x8x32xf32>
    %88 = arith.mulf %85, %87 : vector<8x8x32xf32>
    %89 = arith.addf %84, %88 : vector<8x8x32xf32>
    %90 = vector.extract_strided_slice %12 {offsets = [2, 1, 0], sizes = [8, 8, 32], strides = [1, 1, 1]} : vector<14x14x32xf32> to vector<8x8x32xf32>
    %91 = vector.extract_strided_slice %13 {offsets = [2, 1, 0], sizes = [1, 1, 32], strides = [1, 1, 1]} : vector<7x7x32xf32> to vector<1x1x32xf32>
    %92 = vector.broadcast %91 : vector<1x1x32xf32> to vector<8x8x32xf32>
    %93 = arith.mulf %90, %92 : vector<8x8x32xf32>
    %94 = arith.addf %89, %93 : vector<8x8x32xf32>
    %95 = vector.extract_strided_slice %12 {offsets = [2, 2, 0], sizes = [8, 8, 32], strides = [1, 1, 1]} : vector<14x14x32xf32> to vector<8x8x32xf32>
    %96 = vector.extract_strided_slice %13 {offsets = [2, 2, 0], sizes = [1, 1, 32], strides = [1, 1, 1]} : vector<7x7x32xf32> to vector<1x1x32xf32>
    %97 = vector.broadcast %96 : vector<1x1x32xf32> to vector<8x8x32xf32>
    %98 = arith.mulf %95, %97 : vector<8x8x32xf32>
    %99 = arith.addf %94, %98 : vector<8x8x32xf32>
    %100 = vector.extract_strided_slice %12 {offsets = [2, 3, 0], sizes = [8, 8, 32], strides = [1, 1, 1]} : vector<14x14x32xf32> to vector<8x8x32xf32>
    %101 = vector.extract_strided_slice %13 {offsets = [2, 3, 0], sizes = [1, 1, 32], strides = [1, 1, 1]} : vector<7x7x32xf32> to vector<1x1x32xf32>
    %102 = vector.broadcast %101 : vector<1x1x32xf32> to vector<8x8x32xf32>
    %103 = arith.mulf %100, %102 : vector<8x8x32xf32>
    %104 = arith.addf %99, %103 : vector<8x8x32xf32>
    %105 = vector.extract_strided_slice %12 {offsets = [2, 4, 0], sizes = [8, 8, 32], strides = [1, 1, 1]} : vector<14x14x32xf32> to vector<8x8x32xf32>
    %106 = vector.extract_strided_slice %13 {offsets = [2, 4, 0], sizes = [1, 1, 32], strides = [1, 1, 1]} : vector<7x7x32xf32> to vector<1x1x32xf32>
    %107 = vector.broadcast %106 : vector<1x1x32xf32> to vector<8x8x32xf32>
    %108 = arith.mulf %105, %107 : vector<8x8x32xf32>
    %109 = arith.addf %104, %108 : vector<8x8x32xf32>
    %110 = vector.extract_strided_slice %12 {offsets = [2, 5, 0], sizes = [8, 8, 32], strides = [1, 1, 1]} : vector<14x14x32xf32> to vector<8x8x32xf32>
    %111 = vector.extract_strided_slice %13 {offsets = [2, 5, 0], sizes = [1, 1, 32], strides = [1, 1, 1]} : vector<7x7x32xf32> to vector<1x1x32xf32>
    %112 = vector.broadcast %111 : vector<1x1x32xf32> to vector<8x8x32xf32>
    %113 = arith.mulf %110, %112 : vector<8x8x32xf32>
    %114 = arith.addf %109, %113 : vector<8x8x32xf32>
    %115 = vector.extract_strided_slice %12 {offsets = [2, 6, 0], sizes = [8, 8, 32], strides = [1, 1, 1]} : vector<14x14x32xf32> to vector<8x8x32xf32>
    %116 = vector.extract_strided_slice %13 {offsets = [2, 6, 0], sizes = [1, 1, 32], strides = [1, 1, 1]} : vector<7x7x32xf32> to vector<1x1x32xf32>
    %117 = vector.broadcast %116 : vector<1x1x32xf32> to vector<8x8x32xf32>
    %118 = arith.mulf %115, %117 : vector<8x8x32xf32>
    %119 = arith.addf %114, %118 : vector<8x8x32xf32>
    %120 = vector.extract_strided_slice %12 {offsets = [3, 0, 0], sizes = [8, 8, 32], strides = [1, 1, 1]} : vector<14x14x32xf32> to vector<8x8x32xf32>
    %121 = vector.extract_strided_slice %13 {offsets = [3, 0, 0], sizes = [1, 1, 32], strides = [1, 1, 1]} : vector<7x7x32xf32> to vector<1x1x32xf32>
    %122 = vector.broadcast %121 : vector<1x1x32xf32> to vector<8x8x32xf32>
    %123 = arith.mulf %120, %122 : vector<8x8x32xf32>
    %124 = arith.addf %119, %123 : vector<8x8x32xf32>
    %125 = vector.extract_strided_slice %12 {offsets = [3, 1, 0], sizes = [8, 8, 32], strides = [1, 1, 1]} : vector<14x14x32xf32> to vector<8x8x32xf32>
    %126 = vector.extract_strided_slice %13 {offsets = [3, 1, 0], sizes = [1, 1, 32], strides = [1, 1, 1]} : vector<7x7x32xf32> to vector<1x1x32xf32>
    %127 = vector.broadcast %126 : vector<1x1x32xf32> to vector<8x8x32xf32>
    %128 = arith.mulf %125, %127 : vector<8x8x32xf32>
    %129 = arith.addf %124, %128 : vector<8x8x32xf32>
    %130 = vector.extract_strided_slice %12 {offsets = [3, 2, 0], sizes = [8, 8, 32], strides = [1, 1, 1]} : vector<14x14x32xf32> to vector<8x8x32xf32>
    %131 = vector.extract_strided_slice %13 {offsets = [3, 2, 0], sizes = [1, 1, 32], strides = [1, 1, 1]} : vector<7x7x32xf32> to vector<1x1x32xf32>
    %132 = vector.broadcast %131 : vector<1x1x32xf32> to vector<8x8x32xf32>
    %133 = arith.mulf %130, %132 : vector<8x8x32xf32>
    %134 = arith.addf %129, %133 : vector<8x8x32xf32>
    %135 = vector.extract_strided_slice %12 {offsets = [3, 3, 0], sizes = [8, 8, 32], strides = [1, 1, 1]} : vector<14x14x32xf32> to vector<8x8x32xf32>
    %136 = vector.extract_strided_slice %13 {offsets = [3, 3, 0], sizes = [1, 1, 32], strides = [1, 1, 1]} : vector<7x7x32xf32> to vector<1x1x32xf32>
    %137 = vector.broadcast %136 : vector<1x1x32xf32> to vector<8x8x32xf32>
    %138 = arith.mulf %135, %137 : vector<8x8x32xf32>
    %139 = arith.addf %134, %138 : vector<8x8x32xf32>
    %140 = vector.extract_strided_slice %12 {offsets = [3, 4, 0], sizes = [8, 8, 32], strides = [1, 1, 1]} : vector<14x14x32xf32> to vector<8x8x32xf32>
    %141 = vector.extract_strided_slice %13 {offsets = [3, 4, 0], sizes = [1, 1, 32], strides = [1, 1, 1]} : vector<7x7x32xf32> to vector<1x1x32xf32>
    %142 = vector.broadcast %141 : vector<1x1x32xf32> to vector<8x8x32xf32>
    %143 = arith.mulf %140, %142 : vector<8x8x32xf32>
    %144 = arith.addf %139, %143 : vector<8x8x32xf32>
    %145 = vector.extract_strided_slice %12 {offsets = [3, 5, 0], sizes = [8, 8, 32], strides = [1, 1, 1]} : vector<14x14x32xf32> to vector<8x8x32xf32>
    %146 = vector.extract_strided_slice %13 {offsets = [3, 5, 0], sizes = [1, 1, 32], strides = [1, 1, 1]} : vector<7x7x32xf32> to vector<1x1x32xf32>
    %147 = vector.broadcast %146 : vector<1x1x32xf32> to vector<8x8x32xf32>
    %148 = arith.mulf %145, %147 : vector<8x8x32xf32>
    %149 = arith.addf %144, %148 : vector<8x8x32xf32>
    %150 = vector.extract_strided_slice %12 {offsets = [3, 6, 0], sizes = [8, 8, 32], strides = [1, 1, 1]} : vector<14x14x32xf32> to vector<8x8x32xf32>
    %151 = vector.extract_strided_slice %13 {offsets = [3, 6, 0], sizes = [1, 1, 32], strides = [1, 1, 1]} : vector<7x7x32xf32> to vector<1x1x32xf32>
    %152 = vector.broadcast %151 : vector<1x1x32xf32> to vector<8x8x32xf32>
    %153 = arith.mulf %150, %152 : vector<8x8x32xf32>
    %154 = arith.addf %149, %153 : vector<8x8x32xf32>
    %155 = vector.extract_strided_slice %12 {offsets = [4, 0, 0], sizes = [8, 8, 32], strides = [1, 1, 1]} : vector<14x14x32xf32> to vector<8x8x32xf32>
    %156 = vector.extract_strided_slice %13 {offsets = [4, 0, 0], sizes = [1, 1, 32], strides = [1, 1, 1]} : vector<7x7x32xf32> to vector<1x1x32xf32>
    %157 = vector.broadcast %156 : vector<1x1x32xf32> to vector<8x8x32xf32>
    %158 = arith.mulf %155, %157 : vector<8x8x32xf32>
    %159 = arith.addf %154, %158 : vector<8x8x32xf32>
    %160 = vector.extract_strided_slice %12 {offsets = [4, 1, 0], sizes = [8, 8, 32], strides = [1, 1, 1]} : vector<14x14x32xf32> to vector<8x8x32xf32>
    %161 = vector.extract_strided_slice %13 {offsets = [4, 1, 0], sizes = [1, 1, 32], strides = [1, 1, 1]} : vector<7x7x32xf32> to vector<1x1x32xf32>
    %162 = vector.broadcast %161 : vector<1x1x32xf32> to vector<8x8x32xf32>
    %163 = arith.mulf %160, %162 : vector<8x8x32xf32>
    %164 = arith.addf %159, %163 : vector<8x8x32xf32>
    %165 = vector.extract_strided_slice %12 {offsets = [4, 2, 0], sizes = [8, 8, 32], strides = [1, 1, 1]} : vector<14x14x32xf32> to vector<8x8x32xf32>
    %166 = vector.extract_strided_slice %13 {offsets = [4, 2, 0], sizes = [1, 1, 32], strides = [1, 1, 1]} : vector<7x7x32xf32> to vector<1x1x32xf32>
    %167 = vector.broadcast %166 : vector<1x1x32xf32> to vector<8x8x32xf32>
    %168 = arith.mulf %165, %167 : vector<8x8x32xf32>
    %169 = arith.addf %164, %168 : vector<8x8x32xf32>
    %170 = vector.extract_strided_slice %12 {offsets = [4, 3, 0], sizes = [8, 8, 32], strides = [1, 1, 1]} : vector<14x14x32xf32> to vector<8x8x32xf32>
    %171 = vector.extract_strided_slice %13 {offsets = [4, 3, 0], sizes = [1, 1, 32], strides = [1, 1, 1]} : vector<7x7x32xf32> to vector<1x1x32xf32>
    %172 = vector.broadcast %171 : vector<1x1x32xf32> to vector<8x8x32xf32>
    %173 = arith.mulf %170, %172 : vector<8x8x32xf32>
    %174 = arith.addf %169, %173 : vector<8x8x32xf32>
    %175 = vector.extract_strided_slice %12 {offsets = [4, 4, 0], sizes = [8, 8, 32], strides = [1, 1, 1]} : vector<14x14x32xf32> to vector<8x8x32xf32>
    %176 = vector.extract_strided_slice %13 {offsets = [4, 4, 0], sizes = [1, 1, 32], strides = [1, 1, 1]} : vector<7x7x32xf32> to vector<1x1x32xf32>
    %177 = vector.broadcast %176 : vector<1x1x32xf32> to vector<8x8x32xf32>
    %178 = arith.mulf %175, %177 : vector<8x8x32xf32>
    %179 = arith.addf %174, %178 : vector<8x8x32xf32>
    %180 = vector.extract_strided_slice %12 {offsets = [4, 5, 0], sizes = [8, 8, 32], strides = [1, 1, 1]} : vector<14x14x32xf32> to vector<8x8x32xf32>
    %181 = vector.extract_strided_slice %13 {offsets = [4, 5, 0], sizes = [1, 1, 32], strides = [1, 1, 1]} : vector<7x7x32xf32> to vector<1x1x32xf32>
    %182 = vector.broadcast %181 : vector<1x1x32xf32> to vector<8x8x32xf32>
    %183 = arith.mulf %180, %182 : vector<8x8x32xf32>
    %184 = arith.addf %179, %183 : vector<8x8x32xf32>
    %185 = vector.extract_strided_slice %12 {offsets = [4, 6, 0], sizes = [8, 8, 32], strides = [1, 1, 1]} : vector<14x14x32xf32> to vector<8x8x32xf32>
    %186 = vector.extract_strided_slice %13 {offsets = [4, 6, 0], sizes = [1, 1, 32], strides = [1, 1, 1]} : vector<7x7x32xf32> to vector<1x1x32xf32>
    %187 = vector.broadcast %186 : vector<1x1x32xf32> to vector<8x8x32xf32>
    %188 = arith.mulf %185, %187 : vector<8x8x32xf32>
    %189 = arith.addf %184, %188 : vector<8x8x32xf32>
    %190 = vector.extract_strided_slice %12 {offsets = [5, 0, 0], sizes = [8, 8, 32], strides = [1, 1, 1]} : vector<14x14x32xf32> to vector<8x8x32xf32>
    %191 = vector.extract_strided_slice %13 {offsets = [5, 0, 0], sizes = [1, 1, 32], strides = [1, 1, 1]} : vector<7x7x32xf32> to vector<1x1x32xf32>
    %192 = vector.broadcast %191 : vector<1x1x32xf32> to vector<8x8x32xf32>
    %193 = arith.mulf %190, %192 : vector<8x8x32xf32>
    %194 = arith.addf %189, %193 : vector<8x8x32xf32>
    %195 = vector.extract_strided_slice %12 {offsets = [5, 1, 0], sizes = [8, 8, 32], strides = [1, 1, 1]} : vector<14x14x32xf32> to vector<8x8x32xf32>
    %196 = vector.extract_strided_slice %13 {offsets = [5, 1, 0], sizes = [1, 1, 32], strides = [1, 1, 1]} : vector<7x7x32xf32> to vector<1x1x32xf32>
    %197 = vector.broadcast %196 : vector<1x1x32xf32> to vector<8x8x32xf32>
    %198 = arith.mulf %195, %197 : vector<8x8x32xf32>
    %199 = arith.addf %194, %198 : vector<8x8x32xf32>
    %200 = vector.extract_strided_slice %12 {offsets = [5, 2, 0], sizes = [8, 8, 32], strides = [1, 1, 1]} : vector<14x14x32xf32> to vector<8x8x32xf32>
    %201 = vector.extract_strided_slice %13 {offsets = [5, 2, 0], sizes = [1, 1, 32], strides = [1, 1, 1]} : vector<7x7x32xf32> to vector<1x1x32xf32>
    %202 = vector.broadcast %201 : vector<1x1x32xf32> to vector<8x8x32xf32>
    %203 = arith.mulf %200, %202 : vector<8x8x32xf32>
    %204 = arith.addf %199, %203 : vector<8x8x32xf32>
    %205 = vector.extract_strided_slice %12 {offsets = [5, 3, 0], sizes = [8, 8, 32], strides = [1, 1, 1]} : vector<14x14x32xf32> to vector<8x8x32xf32>
    %206 = vector.extract_strided_slice %13 {offsets = [5, 3, 0], sizes = [1, 1, 32], strides = [1, 1, 1]} : vector<7x7x32xf32> to vector<1x1x32xf32>
    %207 = vector.broadcast %206 : vector<1x1x32xf32> to vector<8x8x32xf32>
    %208 = arith.mulf %205, %207 : vector<8x8x32xf32>
    %209 = arith.addf %204, %208 : vector<8x8x32xf32>
    %210 = vector.extract_strided_slice %12 {offsets = [5, 4, 0], sizes = [8, 8, 32], strides = [1, 1, 1]} : vector<14x14x32xf32> to vector<8x8x32xf32>
    %211 = vector.extract_strided_slice %13 {offsets = [5, 4, 0], sizes = [1, 1, 32], strides = [1, 1, 1]} : vector<7x7x32xf32> to vector<1x1x32xf32>
    %212 = vector.broadcast %211 : vector<1x1x32xf32> to vector<8x8x32xf32>
    %213 = arith.mulf %210, %212 : vector<8x8x32xf32>
    %214 = arith.addf %209, %213 : vector<8x8x32xf32>
    %215 = vector.extract_strided_slice %12 {offsets = [5, 5, 0], sizes = [8, 8, 32], strides = [1, 1, 1]} : vector<14x14x32xf32> to vector<8x8x32xf32>
    %216 = vector.extract_strided_slice %13 {offsets = [5, 5, 0], sizes = [1, 1, 32], strides = [1, 1, 1]} : vector<7x7x32xf32> to vector<1x1x32xf32>
    %217 = vector.broadcast %216 : vector<1x1x32xf32> to vector<8x8x32xf32>
    %218 = arith.mulf %215, %217 : vector<8x8x32xf32>
    %219 = arith.addf %214, %218 : vector<8x8x32xf32>
    %220 = vector.extract_strided_slice %12 {offsets = [5, 6, 0], sizes = [8, 8, 32], strides = [1, 1, 1]} : vector<14x14x32xf32> to vector<8x8x32xf32>
    %221 = vector.extract_strided_slice %13 {offsets = [5, 6, 0], sizes = [1, 1, 32], strides = [1, 1, 1]} : vector<7x7x32xf32> to vector<1x1x32xf32>
    %222 = vector.broadcast %221 : vector<1x1x32xf32> to vector<8x8x32xf32>
    %223 = arith.mulf %220, %222 : vector<8x8x32xf32>
    %224 = arith.addf %219, %223 : vector<8x8x32xf32>
    %225 = vector.extract_strided_slice %12 {offsets = [6, 0, 0], sizes = [8, 8, 32], strides = [1, 1, 1]} : vector<14x14x32xf32> to vector<8x8x32xf32>
    %226 = vector.extract_strided_slice %13 {offsets = [6, 0, 0], sizes = [1, 1, 32], strides = [1, 1, 1]} : vector<7x7x32xf32> to vector<1x1x32xf32>
    %227 = vector.broadcast %226 : vector<1x1x32xf32> to vector<8x8x32xf32>
    %228 = arith.mulf %225, %227 : vector<8x8x32xf32>
    %229 = arith.addf %224, %228 : vector<8x8x32xf32>
    %230 = vector.extract_strided_slice %12 {offsets = [6, 1, 0], sizes = [8, 8, 32], strides = [1, 1, 1]} : vector<14x14x32xf32> to vector<8x8x32xf32>
    %231 = vector.extract_strided_slice %13 {offsets = [6, 1, 0], sizes = [1, 1, 32], strides = [1, 1, 1]} : vector<7x7x32xf32> to vector<1x1x32xf32>
    %232 = vector.broadcast %231 : vector<1x1x32xf32> to vector<8x8x32xf32>
    %233 = arith.mulf %230, %232 : vector<8x8x32xf32>
    %234 = arith.addf %229, %233 : vector<8x8x32xf32>
    %235 = vector.extract_strided_slice %12 {offsets = [6, 2, 0], sizes = [8, 8, 32], strides = [1, 1, 1]} : vector<14x14x32xf32> to vector<8x8x32xf32>
    %236 = vector.extract_strided_slice %13 {offsets = [6, 2, 0], sizes = [1, 1, 32], strides = [1, 1, 1]} : vector<7x7x32xf32> to vector<1x1x32xf32>
    %237 = vector.broadcast %236 : vector<1x1x32xf32> to vector<8x8x32xf32>
    %238 = arith.mulf %235, %237 : vector<8x8x32xf32>
    %239 = arith.addf %234, %238 : vector<8x8x32xf32>
    %240 = vector.extract_strided_slice %12 {offsets = [6, 3, 0], sizes = [8, 8, 32], strides = [1, 1, 1]} : vector<14x14x32xf32> to vector<8x8x32xf32>
    %241 = vector.extract_strided_slice %13 {offsets = [6, 3, 0], sizes = [1, 1, 32], strides = [1, 1, 1]} : vector<7x7x32xf32> to vector<1x1x32xf32>
    %242 = vector.broadcast %241 : vector<1x1x32xf32> to vector<8x8x32xf32>
    %243 = arith.mulf %240, %242 : vector<8x8x32xf32>
    %244 = arith.addf %239, %243 : vector<8x8x32xf32>
    %245 = vector.extract_strided_slice %12 {offsets = [6, 4, 0], sizes = [8, 8, 32], strides = [1, 1, 1]} : vector<14x14x32xf32> to vector<8x8x32xf32>
    %246 = vector.extract_strided_slice %13 {offsets = [6, 4, 0], sizes = [1, 1, 32], strides = [1, 1, 1]} : vector<7x7x32xf32> to vector<1x1x32xf32>
    %247 = vector.broadcast %246 : vector<1x1x32xf32> to vector<8x8x32xf32>
    %248 = arith.mulf %245, %247 : vector<8x8x32xf32>
    %249 = arith.addf %244, %248 : vector<8x8x32xf32>
    %250 = vector.extract_strided_slice %12 {offsets = [6, 5, 0], sizes = [8, 8, 32], strides = [1, 1, 1]} : vector<14x14x32xf32> to vector<8x8x32xf32>
    %251 = vector.extract_strided_slice %13 {offsets = [6, 5, 0], sizes = [1, 1, 32], strides = [1, 1, 1]} : vector<7x7x32xf32> to vector<1x1x32xf32>
    %252 = vector.broadcast %251 : vector<1x1x32xf32> to vector<8x8x32xf32>
    %253 = arith.mulf %250, %252 : vector<8x8x32xf32>
    %254 = arith.addf %249, %253 : vector<8x8x32xf32>
    %255 = vector.extract_strided_slice %12 {offsets = [6, 6, 0], sizes = [8, 8, 32], strides = [1, 1, 1]} : vector<14x14x32xf32> to vector<8x8x32xf32>
    %256 = vector.extract_strided_slice %13 {offsets = [6, 6, 0], sizes = [1, 1, 32], strides = [1, 1, 1]} : vector<7x7x32xf32> to vector<1x1x32xf32>
    %257 = vector.broadcast %256 : vector<1x1x32xf32> to vector<8x8x32xf32>
    %258 = arith.mulf %255, %257 : vector<8x8x32xf32>
    %259 = arith.addf %254, %258 : vector<8x8x32xf32>
    %c0_26 = arith.constant 0 : index
    %c0_27 = arith.constant 0 : index
    %260 = vector.load %arg3[%c0_26, %c0_27] : memref<1x32xf32, #tpu.memory_space<vmem>>, vector<1x32xf32>
    %261 = vector.shape_cast %260 : vector<1x32xf32> to vector<1x1x32xf32>
    %262 = vector.broadcast %261 : vector<1x1x32xf32> to vector<8x8x32xf32>
    %263 = arith.addf %259, %262 : vector<8x8x32xf32>
    %c0_28 = arith.constant 0 : index
    %c0_29 = arith.constant 0 : index
    %c0_30 = arith.constant 0 : index
    %c0_31 = arith.constant 0 : index
    %264 = vector.load %arg4[%c0_28, %c0_29, %c0_30, %c0_31] : memref<1x8x8x32xf32, #tpu.memory_space<vmem>>, vector<1x8x8x32xf32>
    %265 = vector.shape_cast %264 : vector<1x8x8x32xf32> to vector<8x8x32xf32>
    %266 = vector.shape_cast %263 : vector<8x8x32xf32> to vector<1x8x8x32xf32>
    tpu.vector_store %arg4[%c0_28, %c0_29, %c0_30, %c0_31], %266 {strides = array<i32>} : memref<1x8x8x32xf32, #tpu.memory_space<vmem>>, vector<1x8x8x32xf32>,
    return
  }
  func.func @transform_0(%arg0: i32) -> (i32, i32, i32, i32) {
    %c0_i32 = arith.constant 0 : i32
    %c0_i32_0 = arith.constant 0 : i32
    %c0_i32_1 = arith.constant 0 : i32
    %c0_i32_2 = arith.constant 0 : i32
    return %arg0, %c0_i32, %c0_i32_0, %c0_i32_1 : i32, i32, i32, i32
  }
  func.func @transform_1(%arg0: i32) -> (i32, i32, i32) {
    %c0_i32 = arith.constant 0 : i32
    %c0_i32_0 = arith.constant 0 : i32
    %c0_i32_1 = arith.constant 0 : i32
    %c0_i32_2 = arith.constant 0 : i32
    return %c0_i32, %c0_i32_0, %c0_i32_1 : i32, i32, i32
  }
  func.func @transform_2(%arg0: i32) -> (i32, i32) {
    %c0_i32 = arith.constant 0 : i32
    %c0_i32_0 = arith.constant 0 : i32
    %c0_i32_1 = arith.constant 0 : i32
    return %c0_i32, %c0_i32_0 : i32, i32
  }
  func.func @transform_3(%arg0: i32) -> (i32, i32, i32, i32) {
    %c0_i32 = arith.constant 0 : i32
    %c0_i32_0 = arith.constant 0 : i32
    %c0_i32_1 = arith.constant 0 : i32
    %c0_i32_2 = arith.constant 0 : i32
    return %arg0, %c0_i32, %c0_i32_0, %c0_i32_1 : i32, i32, i32, i32
  }
}

module attributes {stable_mosaic.version = 11 : i64} {
  func.func @_factor_att_kernel(%arg0: i32, %arg1: memref<1x64x96xf32, #tpu.memory_space<vmem>>, %arg2: memref<1x64x32xf32, #tpu.memory_space<vmem>>, %arg3: memref<32x32xf32, #tpu.memory_space<vmem>>, %arg4: memref<1x64x32xf32, #tpu.memory_space<vmem>>) attributes {dimension_semantics = [#tpu.dimension_semantics<parallel>], iteration_bounds = array<i64: 2>, scalar_prefetch = 0 : i64, scratch_operands = 0 : i64, tpu.core_type = #tpu.core_type<tc>, window_params = [{transform_indices = @transform_0, window_bounds = array<i64: 1, 64, 96>}, {transform_indices = @transform_1, window_bounds = array<i64: 1, 64, 32>}, {pipeline_mode = #tpu.pipeline_mode<synchronous>, transform_indices = @transform_2, window_bounds = array<i64: 32, 32>}, {transform_indices = @transform_3, window_bounds = array<i64: 1, 64, 32>}]} {
    %c0 = arith.constant 0 : index
    %c0_0 = arith.constant 0 : index
    %c0_1 = arith.constant 0 : index
    %0 = vector.load %arg1[%c0, %c0_0, %c0_1] : memref<1x64x96xf32, #tpu.memory_space<vmem>>, vector<1x64x96xf32>
    %1 = vector.shape_cast %0 : vector<1x64x96xf32> to vector<64x96xf32>
    %2 = vector.extract_strided_slice %1 {offsets = [0, 0], sizes = [64, 32], strides = [1, 1]} : vector<64x96xf32> to vector<64x32xf32>
    %3 = vector.extract_strided_slice %1 {offsets = [0, 32], sizes = [64, 32], strides = [1, 1]} : vector<64x96xf32> to vector<64x32xf32>
    %4 = vector.extract_strided_slice %1 {offsets = [0, 64], sizes = [64, 32], strides = [1, 1]} : vector<64x96xf32> to vector<64x32xf32>
    %c0_2 = arith.constant 0 : index
    %c0_3 = arith.constant 0 : index
    %c0_4 = arith.constant 0 : index
    %5 = vector.load %arg2[%c0_2, %c0_3, %c0_4] : memref<1x64x32xf32, #tpu.memory_space<vmem>>, vector<1x64x32xf32>
    %6 = vector.shape_cast %5 : vector<1x64x32xf32> to vector<64x32xf32>
    %cst = arith.constant dense<0xFF800000> : vector<32xf32>
    %7 = vector.multi_reduction <maximumf>, %3, %cst [0] : vector<64x32xf32> to vector<32xf32>
    %8 = vector.shape_cast %7 : vector<32xf32> to vector<1x32xf32>
    %9 = vector.broadcast %8 : vector<1x32xf32> to vector<64x32xf32>
    %10 = arith.subf %3, %9 : vector<64x32xf32>
    %11 = math.exp %10 : vector<64x32xf32>
    %cst_5 = arith.constant dense<0.000000e+00> : vector<32xf32>
    %12 = vector.multi_reduction <add>, %11, %cst_5 [0] : vector<64x32xf32> to vector<32xf32>
    %13 = vector.shape_cast %12 : vector<32xf32> to vector<1x32xf32>
    %14 = tpu.reciprocal %13 {approx = true} : vector<1x32xf32> -> vector<1x32xf32>
    %15 = arith.truncf %4 : vector<64x32xf32> to vector<64x32xbf16>
    %16 = arith.truncf %11 : vector<64x32xf32> to vector<64x32xbf16>
    %cst_6 = arith.constant dense<0.000000e+00> : vector<32x32xf32>
    %17 = tpu.matmul %15, %16, %cst_6 {dimension_numbers = #tpu.dot_dimension_numbers<[0], [0], [1], [1], [0, 1, 1, 1], [], []>} : vector<64x32xbf16>, vector<64x32xbf16>, vector<32x32xf32> -> vector<32x32xf32>
    %c0_7 = arith.constant 0 : index
    %c0_8 = arith.constant 0 : index
    %18 = vector.load %arg3[%c0_7, %c0_8] : memref<32x32xf32, #tpu.memory_space<vmem>>, vector<32x32xf32>
    %19 = vector.broadcast %14 : vector<1x32xf32> to vector<32x32xf32>
    %20 = arith.mulf %18, %19 : vector<32x32xf32>
    %21 = arith.mulf %17, %20 : vector<32x32xf32>
    %22 = arith.truncf %2 : vector<64x32xf32> to vector<64x32xbf16>
    %23 = arith.truncf %21 : vector<32x32xf32> to vector<32x32xbf16>
    %cst_9 = arith.constant dense<0.000000e+00> : vector<64x32xf32>
    %24 = tpu.matmul %22, %23, %cst_9 {dimension_numbers = #tpu.dot_dimension_numbers<[1], [1], [0], [0], [0, 0, 1, 0], [], []>} : vector<64x32xbf16>, vector<32x32xbf16>, vector<64x32xf32> -> vector<64x32xf32>
    %25 = arith.mulf %2, %6 : vector<64x32xf32>
    %26 = arith.addf %24, %25 : vector<64x32xf32>
    %c0_10 = arith.constant 0 : index
    %c0_11 = arith.constant 0 : index
    %c0_12 = arith.constant 0 : index
    %27 = vector.load %arg4[%c0_10, %c0_11, %c0_12] : memref<1x64x32xf32, #tpu.memory_space<vmem>>, vector<1x64x32xf32>
    %28 = vector.shape_cast %27 : vector<1x64x32xf32> to vector<64x32xf32>
    %29 = vector.shape_cast %26 : vector<64x32xf32> to vector<1x64x32xf32>
    tpu.vector_store %arg4[%c0_10, %c0_11, %c0_12], %29 {strides = array<i32>} : memref<1x64x32xf32, #tpu.memory_space<vmem>>, vector<1x64x32xf32>,
    return
  }
  func.func @transform_0(%arg0: i32) -> (i32, i32, i32) {
    %c0_i32 = arith.constant 0 : i32
    %c0_i32_0 = arith.constant 0 : i32
    %c0_i32_1 = arith.constant 0 : i32
    return %arg0, %c0_i32, %c0_i32_0 : i32, i32, i32
  }
  func.func @transform_1(%arg0: i32) -> (i32, i32, i32) {
    %c0_i32 = arith.constant 0 : i32
    %c0_i32_0 = arith.constant 0 : i32
    %c0_i32_1 = arith.constant 0 : i32
    return %arg0, %c0_i32, %c0_i32_0 : i32, i32, i32
  }
  func.func @transform_2(%arg0: i32) -> (i32, i32) {
    %c0_i32 = arith.constant 0 : i32
    %c0_i32_0 = arith.constant 0 : i32
    %c0_i32_1 = arith.constant 0 : i32
    return %c0_i32, %c0_i32_0 : i32, i32
  }
  func.func @transform_3(%arg0: i32) -> (i32, i32, i32) {
    %c0_i32 = arith.constant 0 : i32
    %c0_i32_0 = arith.constant 0 : i32
    %c0_i32_1 = arith.constant 0 : i32
    return %arg0, %c0_i32, %c0_i32_0 : i32, i32, i32
  }
}

module attributes {stable_mosaic.version = 11 : i64} {
  func.func @_linear_kernel(%arg0: i32, %arg1: i32, %arg2: i32, %arg3: memref<128x32xf32, #tpu.memory_space<vmem>>, %arg4: memref<32x32xf32, #tpu.memory_space<vmem>>, %arg5: memref<1x32xf32, #tpu.memory_space<vmem>>, %arg6: memref<128x32xf32, #tpu.memory_space<vmem>>, %arg7: memref<128x32xf32, #tpu.memory_space<vmem>>, %arg8: memref<128x32xf32, #tpu.memory_space<vmem>>) attributes {dimension_semantics = [#tpu.dimension_semantics<parallel>, #tpu.dimension_semantics<parallel>, #tpu.dimension_semantics<arbitrary>], iteration_bounds = array<i64: 1, 1, 1>, scalar_prefetch = 0 : i64, scratch_operands = 1 : i64, tpu.core_type = #tpu.core_type<tc>, window_params = [{transform_indices = @transform_0, window_bounds = array<i64: 128, 32>}, {transform_indices = @transform_1, window_bounds = array<i64: 32, 32>}, {transform_indices = @transform_2, window_bounds = array<i64: 1, 32>}, {transform_indices = @transform_3, window_bounds = array<i64: 128, 32>}, {transform_indices = @transform_4, window_bounds = array<i64: 128, 32>}]} {
    %c0_i32 = arith.constant 0 : i32
    %0 = arith.cmpi eq, %arg2, %c0_i32 : i32
    %1 = arith.extui %0 : i1 to i32
    %c0_i32_0 = arith.constant 0 : i32
    %2 = arith.cmpi ne, %1, %c0_i32_0 : i32
    scf.if %2 {
      %cst_10 = arith.constant 0.000000e+00 : f32
      %14 = vector.broadcast %cst_10 : f32 to vector<128x32xf32>
      %c0_11 = arith.constant 0 : index
      %c0_12 = arith.constant 0 : index
      %15 = vector.load %arg8[%c0_11, %c0_12] : memref<128x32xf32, #tpu.memory_space<vmem>>, vector<128x32xf32>
      tpu.vector_store %arg8[%c0_11, %c0_12], %14 {strides = array<i32>} : memref<128x32xf32, #tpu.memory_space<vmem>>, vector<128x32xf32>,
    } else {
    }
    %c0 = arith.constant 0 : index
    %c0_1 = arith.constant 0 : index
    %3 = vector.load %arg3[%c0, %c0_1] : memref<128x32xf32, #tpu.memory_space<vmem>>, vector<128x32xf32>
    %4 = arith.truncf %3 : vector<128x32xf32> to vector<128x32xbf16>
    %c0_2 = arith.constant 0 : index
    %c0_3 = arith.constant 0 : index
    %5 = vector.load %arg8[%c0_2, %c0_3] : memref<128x32xf32, #tpu.memory_space<vmem>>, vector<128x32xf32>
    %c0_4 = arith.constant 0 : index
    %c0_5 = arith.constant 0 : index
    %6 = vector.load %arg4[%c0_4, %c0_5] : memref<32x32xf32, #tpu.memory_space<vmem>>, vector<32x32xf32>
    %7 = arith.truncf %6 : vector<32x32xf32> to vector<32x32xbf16>
    %cst = arith.constant dense<0.000000e+00> : vector<128x32xf32>
    %8 = tpu.matmul %4, %7, %cst {dimension_numbers = #tpu.dot_dimension_numbers<[1], [0], [0], [1], [0, 0, 1, 1], [], []>} : vector<128x32xbf16>, vector<32x32xbf16>, vector<128x32xf32> -> vector<128x32xf32>
    %9 = arith.addf %5, %8 : vector<128x32xf32>
    %c0_6 = arith.constant 0 : index
    %c0_7 = arith.constant 0 : index
    %10 = vector.load %arg8[%c0_6, %c0_7] : memref<128x32xf32, #tpu.memory_space<vmem>>, vector<128x32xf32>
    tpu.vector_store %arg8[%c0_6, %c0_7], %9 {strides = array<i32>} : memref<128x32xf32, #tpu.memory_space<vmem>>, vector<128x32xf32>,
    %c0_i32_8 = arith.constant 0 : i32
    %11 = arith.cmpi eq, %arg2, %c0_i32_8 : i32
    %12 = arith.extui %11 : i1 to i32
    %c0_i32_9 = arith.constant 0 : i32
    %13 = arith.cmpi ne, %12, %c0_i32_9 : i32
    scf.if %13 {
      %c0_10 = arith.constant 0 : index
      %c0_11 = arith.constant 0 : index
      %14 = vector.load %arg8[%c0_10, %c0_11] : memref<128x32xf32, #tpu.memory_space<vmem>>, vector<128x32xf32>
      %c0_12 = arith.constant 0 : index
      %c0_13 = arith.constant 0 : index
      %15 = vector.load %arg5[%c0_12, %c0_13] : memref<1x32xf32, #tpu.memory_space<vmem>>, vector<1x32xf32>
      %16 = vector.broadcast %15 : vector<1x32xf32> to vector<128x32xf32>
      %17 = arith.addf %14, %16 : vector<128x32xf32>
      %c0_14 = arith.constant 0 : index
      %c0_15 = arith.constant 0 : index
      %18 = vector.load %arg6[%c0_14, %c0_15] : memref<128x32xf32, #tpu.memory_space<vmem>>, vector<128x32xf32>
      %19 = arith.addf %17, %18 : vector<128x32xf32>
      %c0_16 = arith.constant 0 : index
      %c0_17 = arith.constant 0 : index
      %20 = vector.load %arg7[%c0_16, %c0_17] : memref<128x32xf32, #tpu.memory_space<vmem>>, vector<128x32xf32>
      tpu.vector_store %arg7[%c0_16, %c0_17], %19 {strides = array<i32>} : memref<128x32xf32, #tpu.memory_space<vmem>>, vector<128x32xf32>,
    } else {
    }
    return
  }
  func.func @transform_0(%arg0: i32, %arg1: i32, %arg2: i32) -> (i32, i32) {
    %c0_i32 = arith.constant 0 : i32
    return %arg0, %arg2 : i32, i32
  }
  func.func @transform_1(%arg0: i32, %arg1: i32, %arg2: i32) -> (i32, i32) {
    %c0_i32 = arith.constant 0 : i32
    return %arg2, %arg1 : i32, i32
  }
  func.func @transform_2(%arg0: i32, %arg1: i32, %arg2: i32) -> (i32, i32) {
    %c0_i32 = arith.constant 0 : i32
    %c0_i32_0 = arith.constant 0 : i32
    return %c0_i32, %arg1 : i32, i32
  }
  func.func @transform_3(%arg0: i32, %arg1: i32, %arg2: i32) -> (i32, i32) {
    %c0_i32 = arith.constant 0 : i32
    return %arg0, %arg1 : i32, i32
  }
  func.func @transform_4(%arg0: i32, %arg1: i32, %arg2: i32) -> (i32, i32) {
    %c0_i32 = arith.constant 0 : i32
    return %arg0, %arg1 : i32, i32
  }
}

module attributes {stable_mosaic.version = 11 : i64} {
  func.func @_linear_kernel(%arg0: i32, %arg1: i32, %arg2: i32, %arg3: memref<128x32xf32, #tpu.memory_space<vmem>>, %arg4: memref<32x96xf32, #tpu.memory_space<vmem>>, %arg5: memref<1x96xf32, #tpu.memory_space<vmem>>, %arg6: memref<1x32xf32, #tpu.memory_space<vmem>>, %arg7: memref<1x32xf32, #tpu.memory_space<vmem>>, %arg8: memref<128x96xf32, #tpu.memory_space<vmem>>, %arg9: memref<128x96xf32, #tpu.memory_space<vmem>>, %arg10: memref<128x32xbf16, #tpu.memory_space<vmem>>) attributes {dimension_semantics = [#tpu.dimension_semantics<parallel>, #tpu.dimension_semantics<arbitrary>, #tpu.dimension_semantics<arbitrary>], iteration_bounds = array<i64: 1, 1, 1>, scalar_prefetch = 0 : i64, scratch_operands = 2 : i64, tpu.core_type = #tpu.core_type<tc>, window_params = [{transform_indices = @transform_0, window_bounds = array<i64: 128, 32>}, {transform_indices = @transform_1, window_bounds = array<i64: 32, 96>}, {transform_indices = @transform_2, window_bounds = array<i64: 1, 96>}, {transform_indices = @transform_3, window_bounds = array<i64: 1, 32>}, {transform_indices = @transform_4, window_bounds = array<i64: 1, 32>}, {transform_indices = @transform_5, window_bounds = array<i64: 128, 96>}]} {
    %c0_i32 = arith.constant 0 : i32
    %0 = arith.cmpi eq, %arg2, %c0_i32 : i32
    %1 = arith.extui %0 : i1 to i32
    %c0_i32_0 = arith.constant 0 : i32
    %2 = arith.cmpi ne, %1, %c0_i32_0 : i32
    scf.if %2 {
      %cst_12 = arith.constant 0.000000e+00 : f32
      %16 = vector.broadcast %cst_12 : f32 to vector<128x96xf32>
      %c0_13 = arith.constant 0 : index
      %c0_14 = arith.constant 0 : index
      %17 = vector.load %arg9[%c0_13, %c0_14] : memref<128x96xf32, #tpu.memory_space<vmem>>, vector<128x96xf32>
      tpu.vector_store %arg9[%c0_13, %c0_14], %16 {strides = array<i32>} : memref<128x96xf32, #tpu.memory_space<vmem>>, vector<128x96xf32>,
    } else {
    }
    %c0_i32_1 = arith.constant 0 : i32
    %3 = arith.cmpi eq, %arg1, %c0_i32_1 : i32
    %4 = arith.extui %3 : i1 to i32
    %c0_i32_2 = arith.constant 0 : i32
    %5 = arith.cmpi ne, %4, %c0_i32_2 : i32
    scf.if %5 {
      %c0_12 = arith.constant 0 : index
      %c0_13 = arith.constant 0 : index
      %16 = vector.load %arg3[%c0_12, %c0_13] : memref<128x32xf32, #tpu.memory_space<vmem>>, vector<128x32xf32>
      %cst_14 = arith.constant dense<0.000000e+00> : vector<128xf32>
      %17 = vector.multi_reduction <add>, %16, %cst_14 [1] : vector<128x32xf32> to vector<128xf32>
      %18 = vector.shape_cast %17 : vector<128xf32> to vector<128x1xf32>
      %cst_15 = arith.constant 3.200000e+01 : f32
      %19 = vector.broadcast %cst_15 : f32 to vector<128x1xf32>
      %20 = arith.divf %18, %19 : vector<128x1xf32>
      %21 = vector.broadcast %20 : vector<128x1xf32> to vector<128x32xf32>
      %22 = arith.subf %16, %21 : vector<128x32xf32>
      %23 = arith.mulf %22, %22 : vector<128x32xf32>
      %cst_16 = arith.constant dense<0.000000e+00> : vector<128xf32>
      %24 = vector.multi_reduction <add>, %23, %cst_16 [1] : vector<128x32xf32> to vector<128xf32>
      %25 = vector.shape_cast %24 : vector<128xf32> to vector<128x1xf32>
      %cst_17 = arith.constant 3.200000e+01 : f32
      %26 = vector.broadcast %cst_17 : f32 to vector<128x1xf32>
      %27 = arith.divf %25, %26 : vector<128x1xf32>
      %cst_18 = arith.constant 9.99999997E-7 : f32
      %28 = vector.broadcast %cst_18 : f32 to vector<128x1xf32>
      %29 = arith.addf %27, %28 : vector<128x1xf32>
      %30 = math.rsqrt %29 : vector<128x1xf32>
      %31 = vector.broadcast %30 : vector<128x1xf32> to vector<128x32xf32>
      %32 = arith.mulf %22, %31 : vector<128x32xf32>
      %c0_19 = arith.constant 0 : index
      %c0_20 = arith.constant 0 : index
      %33 = vector.load %arg6[%c0_19, %c0_20] : memref<1x32xf32, #tpu.memory_space<vmem>>, vector<1x32xf32>
      %34 = vector.broadcast %33 : vector<1x32xf32> to vector<128x32xf32>
      %35 = arith.mulf %32, %34 : vector<128x32xf32>
      %c0_21 = arith.constant 0 : index
      %c0_22 = arith.constant 0 : index
      %36 = vector.load %arg7[%c0_21, %c0_22] : memref<1x32xf32, #tpu.memory_space<vmem>>, vector<1x32xf32>
      %37 = vector.broadcast %36 : vector<1x32xf32> to vector<128x32xf32>
      %38 = arith.addf %35, %37 : vector<128x32xf32>
      %39 = arith.truncf %38 : vector<128x32xf32> to vector<128x32xbf16>
      %c0_23 = arith.constant 0 : index
      %c0_24 = arith.constant 0 : index
      %40 = vector.load %arg10[%c0_23, %c0_24] : memref<128x32xbf16, #tpu.memory_space<vmem>>, vector<128x32xbf16>
      tpu.vector_store %arg10[%c0_23, %c0_24], %39 {strides = array<i32>} : memref<128x32xbf16, #tpu.memory_space<vmem>>, vector<128x32xbf16>,
    } else {
    }
    %c0 = arith.constant 0 : index
    %c0_3 = arith.constant 0 : index
    %6 = vector.load %arg10[%c0, %c0_3] : memref<128x32xbf16, #tpu.memory_space<vmem>>, vector<128x32xbf16>
    %c0_4 = arith.constant 0 : index
    %c0_5 = arith.constant 0 : index
    %7 = vector.load %arg9[%c0_4, %c0_5] : memref<128x96xf32, #tpu.memory_space<vmem>>, vector<128x96xf32>
    %c0_6 = arith.constant 0 : index
    %c0_7 = arith.constant 0 : index
    %8 = vector.load %arg4[%c0_6, %c0_7] : memref<32x96xf32, #tpu.memory_space<vmem>>, vector<32x96xf32>
    %9 = arith.truncf %8 : vector<32x96xf32> to vector<32x96xbf16>
    %cst = arith.constant dense<0.000000e+00> : vector<128x96xf32>
    %10 = tpu.matmul %6, %9, %cst {dimension_numbers = #tpu.dot_dimension_numbers<[1], [0], [0], [1], [0, 0, 1, 1], [], []>} : vector<128x32xbf16>, vector<32x96xbf16>, vector<128x96xf32> -> vector<128x96xf32>
    %11 = arith.addf %7, %10 : vector<128x96xf32>
    %c0_8 = arith.constant 0 : index
    %c0_9 = arith.constant 0 : index
    %12 = vector.load %arg9[%c0_8, %c0_9] : memref<128x96xf32, #tpu.memory_space<vmem>>, vector<128x96xf32>
    tpu.vector_store %arg9[%c0_8, %c0_9], %11 {strides = array<i32>} : memref<128x96xf32, #tpu.memory_space<vmem>>, vector<128x96xf32>,
    %c0_i32_10 = arith.constant 0 : i32
    %13 = arith.cmpi eq, %arg2, %c0_i32_10 : i32
    %14 = arith.extui %13 : i1 to i32
    %c0_i32_11 = arith.constant 0 : i32
    %15 = arith.cmpi ne, %14, %c0_i32_11 : i32
    scf.if %15 {
      %c0_12 = arith.constant 0 : index
      %c0_13 = arith.constant 0 : index
      %16 = vector.load %arg9[%c0_12, %c0_13] : memref<128x96xf32, #tpu.memory_space<vmem>>, vector<128x96xf32>
      %c0_14 = arith.constant 0 : index
      %c0_15 = arith.constant 0 : index
      %17 = vector.load %arg5[%c0_14, %c0_15] : memref<1x96xf32, #tpu.memory_space<vmem>>, vector<1x96xf32>
      %18 = vector.broadcast %17 : vector<1x96xf32> to vector<128x96xf32>
      %19 = arith.addf %16, %18 : vector<128x96xf32>
      %cst_16 = arith.constant 0.707106769 : f32
      %20 = vector.broadcast %cst_16 : f32 to vector<128x96xf32>
      %21 = arith.mulf %19, %20 : vector<128x96xf32>
      %22 = math.absf %21 : vector<128x96xf32>
      %cst_17 = arith.constant 0.327591091 : f32
      %23 = vector.broadcast %cst_17 : f32 to vector<128x96xf32>
      %24 = arith.mulf %23, %22 : vector<128x96xf32>
      %cst_18 = arith.constant 1.000000e+00 : f32
      %25 = vector.broadcast %cst_18 : f32 to vector<128x96xf32>
      %26 = arith.addf %25, %24 : vector<128x96xf32>
      %cst_19 = arith.constant 1.000000e+00 : f32
      %27 = vector.broadcast %cst_19 : f32 to vector<128x96xf32>
      %28 = arith.divf %27, %26 : vector<128x96xf32>
      %cst_20 = arith.constant 1.06140542 : f32
      %29 = vector.broadcast %cst_20 : f32 to vector<128x96xf32>
      %30 = arith.mulf %29, %28 : vector<128x96xf32>
      %cst_21 = arith.constant 1.45315206 : f32
      %31 = vector.broadcast %cst_21 : f32 to vector<128x96xf32>
      %32 = arith.subf %30, %31 : vector<128x96xf32>
      %33 = arith.mulf %32, %28 : vector<128x96xf32>
      %cst_22 = arith.constant 1.42141378 : f32
      %34 = vector.broadcast %cst_22 : f32 to vector<128x96xf32>
      %35 = arith.addf %33, %34 : vector<128x96xf32>
      %36 = arith.mulf %35, %28 : vector<128x96xf32>
      %cst_23 = arith.constant 0.284496725 : f32
      %37 = vector.broadcast %cst_23 : f32 to vector<128x96xf32>
      %38 = arith.subf %36, %37 : vector<128x96xf32>
      %39 = arith.mulf %38, %28 : vector<128x96xf32>
      %cst_24 = arith.constant 0.254829586 : f32
      %40 = vector.broadcast %cst_24 : f32 to vector<128x96xf32>
      %41 = arith.addf %39, %40 : vector<128x96xf32>
      %42 = arith.mulf %41, %28 : vector<128x96xf32>
      %cst_25 = arith.constant 0.000000e+00 : f32
      %43 = vector.broadcast %cst_25 : f32 to vector<128x96xf32>
      %44 = arith.subf %43, %22 : vector<128x96xf32>
      %45 = arith.mulf %44, %22 : vector<128x96xf32>
      %46 = math.exp %45 : vector<128x96xf32>
      %47 = arith.mulf %42, %46 : vector<128x96xf32>
      %cst_26 = arith.constant 1.000000e+00 : f32
      %48 = vector.broadcast %cst_26 : f32 to vector<128x96xf32>
      %49 = arith.subf %48, %47 : vector<128x96xf32>
      %cst_27 = arith.constant 0.000000e+00 : f32
      %50 = vector.broadcast %cst_27 : f32 to vector<128x96xf32>
      %51 = arith.cmpf oge, %21, %50 : vector<128x96xf32>
      %cst_28 = arith.constant 0.000000e+00 : f32
      %52 = vector.broadcast %cst_28 : f32 to vector<128x96xf32>
      %53 = arith.subf %52, %49 : vector<128x96xf32>
      %54 = arith.select %51, %49, %53 : vector<128x96xi1>, vector<128x96xf32>
      %cst_29 = arith.constant 5.000000e-01 : f32
      %55 = vector.broadcast %cst_29 : f32 to vector<128x96xf32>
      %56 = arith.mulf %55, %19 : vector<128x96xf32>
      %cst_30 = arith.constant 1.000000e+00 : f32
      %57 = vector.broadcast %cst_30 : f32 to vector<128x96xf32>
      %58 = arith.addf %57, %54 : vector<128x96xf32>
      %59 = arith.mulf %56, %58 : vector<128x96xf32>
      %c0_31 = arith.constant 0 : index
      %c0_32 = arith.constant 0 : index
      %60 = vector.load %arg8[%c0_31, %c0_32] : memref<128x96xf32, #tpu.memory_space<vmem>>, vector<128x96xf32>
      tpu.vector_store %arg8[%c0_31, %c0_32], %59 {strides = array<i32>} : memref<128x96xf32, #tpu.memory_space<vmem>>, vector<128x96xf32>,
    } else {
    }
    return
  }
  func.func @transform_0(%arg0: i32, %arg1: i32, %arg2: i32) -> (i32, i32) {
    %c0_i32 = arith.constant 0 : i32
    return %arg0, %arg2 : i32, i32
  }
  func.func @transform_1(%arg0: i32, %arg1: i32, %arg2: i32) -> (i32, i32) {
    %c0_i32 = arith.constant 0 : i32
    return %arg2, %arg1 : i32, i32
  }
  func.func @transform_2(%arg0: i32, %arg1: i32, %arg2: i32) -> (i32, i32) {
    %c0_i32 = arith.constant 0 : i32
    %c0_i32_0 = arith.constant 0 : i32
    return %c0_i32, %arg1 : i32, i32
  }
  func.func @transform_3(%arg0: i32, %arg1: i32, %arg2: i32) -> (i32, i32) {
    %c0_i32 = arith.constant 0 : i32
    %c0_i32_0 = arith.constant 0 : i32
    return %c0_i32, %arg2 : i32, i32
  }
  func.func @transform_4(%arg0: i32, %arg1: i32, %arg2: i32) -> (i32, i32) {
    %c0_i32 = arith.constant 0 : i32
    %c0_i32_0 = arith.constant 0 : i32
    return %c0_i32, %arg2 : i32, i32
  }
  func.func @transform_5(%arg0: i32, %arg1: i32, %arg2: i32) -> (i32, i32) {
    %c0_i32 = arith.constant 0 : i32
    return %arg0, %arg1 : i32, i32
  }
}

module attributes {stable_mosaic.version = 11 : i64} {
  func.func @_linear_kernel(%arg0: i32, %arg1: i32, %arg2: i32, %arg3: memref<128x96xf32, #tpu.memory_space<vmem>>, %arg4: memref<96x32xf32, #tpu.memory_space<vmem>>, %arg5: memref<1x32xf32, #tpu.memory_space<vmem>>, %arg6: memref<128x32xf32, #tpu.memory_space<vmem>>, %arg7: memref<128x32xf32, #tpu.memory_space<vmem>>, %arg8: memref<128x32xf32, #tpu.memory_space<vmem>>) attributes {dimension_semantics = [#tpu.dimension_semantics<parallel>, #tpu.dimension_semantics<parallel>, #tpu.dimension_semantics<arbitrary>], iteration_bounds = array<i64: 1, 1, 1>, scalar_prefetch = 0 : i64, scratch_operands = 1 : i64, tpu.core_type = #tpu.core_type<tc>, window_params = [{transform_indices = @transform_0, window_bounds = array<i64: 128, 96>}, {transform_indices = @transform_1, window_bounds = array<i64: 96, 32>}, {transform_indices = @transform_2, window_bounds = array<i64: 1, 32>}, {transform_indices = @transform_3, window_bounds = array<i64: 128, 32>}, {transform_indices = @transform_4, window_bounds = array<i64: 128, 32>}]} {
    %c0_i32 = arith.constant 0 : i32
    %0 = arith.cmpi eq, %arg2, %c0_i32 : i32
    %1 = arith.extui %0 : i1 to i32
    %c0_i32_0 = arith.constant 0 : i32
    %2 = arith.cmpi ne, %1, %c0_i32_0 : i32
    scf.if %2 {
      %cst_10 = arith.constant 0.000000e+00 : f32
      %14 = vector.broadcast %cst_10 : f32 to vector<128x32xf32>
      %c0_11 = arith.constant 0 : index
      %c0_12 = arith.constant 0 : index
      %15 = vector.load %arg8[%c0_11, %c0_12] : memref<128x32xf32, #tpu.memory_space<vmem>>, vector<128x32xf32>
      tpu.vector_store %arg8[%c0_11, %c0_12], %14 {strides = array<i32>} : memref<128x32xf32, #tpu.memory_space<vmem>>, vector<128x32xf32>,
    } else {
    }
    %c0 = arith.constant 0 : index
    %c0_1 = arith.constant 0 : index
    %3 = vector.load %arg3[%c0, %c0_1] : memref<128x96xf32, #tpu.memory_space<vmem>>, vector<128x96xf32>
    %4 = arith.truncf %3 : vector<128x96xf32> to vector<128x96xbf16>
    %c0_2 = arith.constant 0 : index
    %c0_3 = arith.constant 0 : index
    %5 = vector.load %arg8[%c0_2, %c0_3] : memref<128x32xf32, #tpu.memory_space<vmem>>, vector<128x32xf32>
    %c0_4 = arith.constant 0 : index
    %c0_5 = arith.constant 0 : index
    %6 = vector.load %arg4[%c0_4, %c0_5] : memref<96x32xf32, #tpu.memory_space<vmem>>, vector<96x32xf32>
    %7 = arith.truncf %6 : vector<96x32xf32> to vector<96x32xbf16>
    %cst = arith.constant dense<0.000000e+00> : vector<128x32xf32>
    %8 = tpu.matmul %4, %7, %cst {dimension_numbers = #tpu.dot_dimension_numbers<[1], [0], [0], [1], [0, 0, 1, 1], [], []>} : vector<128x96xbf16>, vector<96x32xbf16>, vector<128x32xf32> -> vector<128x32xf32>
    %9 = arith.addf %5, %8 : vector<128x32xf32>
    %c0_6 = arith.constant 0 : index
    %c0_7 = arith.constant 0 : index
    %10 = vector.load %arg8[%c0_6, %c0_7] : memref<128x32xf32, #tpu.memory_space<vmem>>, vector<128x32xf32>
    tpu.vector_store %arg8[%c0_6, %c0_7], %9 {strides = array<i32>} : memref<128x32xf32, #tpu.memory_space<vmem>>, vector<128x32xf32>,
    %c0_i32_8 = arith.constant 0 : i32
    %11 = arith.cmpi eq, %arg2, %c0_i32_8 : i32
    %12 = arith.extui %11 : i1 to i32
    %c0_i32_9 = arith.constant 0 : i32
    %13 = arith.cmpi ne, %12, %c0_i32_9 : i32
    scf.if %13 {
      %c0_10 = arith.constant 0 : index
      %c0_11 = arith.constant 0 : index
      %14 = vector.load %arg8[%c0_10, %c0_11] : memref<128x32xf32, #tpu.memory_space<vmem>>, vector<128x32xf32>
      %c0_12 = arith.constant 0 : index
      %c0_13 = arith.constant 0 : index
      %15 = vector.load %arg5[%c0_12, %c0_13] : memref<1x32xf32, #tpu.memory_space<vmem>>, vector<1x32xf32>
      %16 = vector.broadcast %15 : vector<1x32xf32> to vector<128x32xf32>
      %17 = arith.addf %14, %16 : vector<128x32xf32>
      %c0_14 = arith.constant 0 : index
      %c0_15 = arith.constant 0 : index
      %18 = vector.load %arg6[%c0_14, %c0_15] : memref<128x32xf32, #tpu.memory_space<vmem>>, vector<128x32xf32>
      %19 = arith.addf %17, %18 : vector<128x32xf32>
      %c0_16 = arith.constant 0 : index
      %c0_17 = arith.constant 0 : index
      %20 = vector.load %arg7[%c0_16, %c0_17] : memref<128x32xf32, #tpu.memory_space<vmem>>, vector<128x32xf32>
      tpu.vector_store %arg7[%c0_16, %c0_17], %19 {strides = array<i32>} : memref<128x32xf32, #tpu.memory_space<vmem>>, vector<128x32xf32>,
    } else {
    }
    return
  }
  func.func @transform_0(%arg0: i32, %arg1: i32, %arg2: i32) -> (i32, i32) {
    %c0_i32 = arith.constant 0 : i32
    return %arg0, %arg2 : i32, i32
  }
  func.func @transform_1(%arg0: i32, %arg1: i32, %arg2: i32) -> (i32, i32) {
    %c0_i32 = arith.constant 0 : i32
    return %arg2, %arg1 : i32, i32
  }
  func.func @transform_2(%arg0: i32, %arg1: i32, %arg2: i32) -> (i32, i32) {
    %c0_i32 = arith.constant 0 : i32
    %c0_i32_0 = arith.constant 0 : i32
    return %c0_i32, %arg1 : i32, i32
  }
  func.func @transform_3(%arg0: i32, %arg1: i32, %arg2: i32) -> (i32, i32) {
    %c0_i32 = arith.constant 0 : i32
    return %arg0, %arg1 : i32, i32
  }
  func.func @transform_4(%arg0: i32, %arg1: i32, %arg2: i32) -> (i32, i32) {
    %c0_i32 = arith.constant 0 : i32
    return %arg0, %arg1 : i32, i32
  }
}

</mosaic_0001>

<llo_original>
// kernel: mhca_encoder.15
$region0: #{mhca_encoder.15}
  #allocation0 [shape = 'u32[]', space=smem, size = 0x4, offset = 0x4, fixed_abs, tag = 'smem constant byte address 0x4 - core index']
  #allocation1 [shape = 'u32[144,128]{1,0:T(1,128)}', space=vmem, size = 0x12000, scoped, tag = 'internal scratch']
  #allocation2 [shape = 'f32[128,96]{1,0:T(8,128)}', space=vmem, size = 0x10000, scoped, tag = 'scratch operand']
  #allocation3 [shape = 'bf16[128,32]{1,0:T(16,128)(2,1)}', space=vmem, size = 0x8000, scoped, tag = 'scratch operand']
  %s0 = inlined_call_operand.hbm [shape: f32[128,32], index: 0, kind: input, shape index: {}]
  %s1 = inlined_call_operand.hbm [shape: f32[32,96], index: 1, kind: input, shape index: {}]
  %s2 = inlined_call_operand.hbm [shape: f32[1,96], index: 2, kind: input, shape index: {}]
  %s3 = inlined_call_operand.hbm [shape: f32[1,32], index: 3, kind: input, shape index: {}]
  %s4 = inlined_call_operand.hbm [shape: f32[1,32], index: 4, kind: input, shape index: {}]
  %s5 = inlined_call_operand.hbm [shape: f32[128,96], index: 5, kind: output, shape index: {}]
  %s6 = sld [smem:[#allocation0]]
  $region62: #{mhca_encoder.15} parent=0
    _
  %s8 = ssub.s32 1, %s6
  %s9 = scalar_select 0, %s8, %s6
  $region1: #{mhca_encoder.15} parent=0
    #allocation4 [shape = 'u8[65536]{0}', space=vmem, size = 0x10000, scoped, tag = 'input window, operand 0, single buffered']
    #allocation5 [shape = 's32[1]{0}', space=sflag, size = 0x4, scoped, tag = 'scoped memory for mhca_encoder.15']
    #allocation6 [shape = 's32[1]{0}', space=sflag, size = 0x4, scoped, tag = 'scoped memory for mhca_encoder.15']
    #allocation7 [shape = 'u8[16384]{0}', space=vmem, size = 0x4000, scoped, tag = 'input window, operand 1, single buffered']
    #allocation8 [shape = 's32[1]{0}', space=sflag, size = 0x4, scoped, tag = 'scoped memory for mhca_encoder.15']
    #allocation9 [shape = 'u8[512]{0}', space=vmem, size = 0x400, scoped, tag = 'input window, operand 2, single buffered']
    #allocation10 [shape = 'u8[512]{0}', space=vmem, size = 0x400, scoped, tag = 'input window, operand 3, single buffered']
    #allocation11 [shape = 's32[1]{0}', space=sflag, size = 0x4, scoped, tag = 'scoped memory for mhca_encoder.15']
    #allocation12 [shape = 'u8[512]{0}', space=vmem, size = 0x400, scoped, tag = 'input window, operand 4, single buffered']
    #allocation13 [shape = 'u8[65536]{0}', space=vmem, size = 0x10000, scoped, tag = 'output window, operand 0, single buffered']
    %10 = vsyncpa [#allocation5], 0
    %11 = vsyncpa [#allocation8], 0
    %12 = vsyncpa [#allocation11], 0
    %13 = vsyncpa [#allocation6], 0
    // Predicated region
    $region2: #{mhca_encoder.15} parent=1 // pred_check
      _
    $region3: #{mhca_encoder.15} parent=1 // pred_check_branch
      %15 = sbr.rel (0) target = $region5
    $region4: #{mhca_encoder.15} parent=1 // pred_region
      %s17 = ssub.s32 2048, 2048
      %18 = vsyncadd [#allocation5], %s17
      %s19 = sshll.u32 [#allocation4], 4
      %s20 = int_to_ptr.vmem [resolvable:$true] %s19
      %25 = dma.hbm_to_vmem [thread:$0]  %s0, 2048, %s20, [#allocation5], 128, 128, 8
    $region5: #{mhca_encoder.15} parent=1 // pred_fallthru
      _
    // Predicated region
    $region6: #{mhca_encoder.15} parent=1 // pred_check
      _
    $region7: #{mhca_encoder.15} parent=1 // pred_check_branch
      %27 = sbr.rel (0) target = $region9
    $region8: #{mhca_encoder.15} parent=1 // pred_region
      %s29 = ssub.s32 512, 512
      %30 = vsyncadd [#allocation8], %s29
      %s31 = sshll.u32 [#allocation7], 4
      %s32 = int_to_ptr.vmem [resolvable:$true] %s31
      %37 = dma.hbm_to_vmem [thread:$0]  %s1, 512, %s32, [#allocation8], 128, 128, 8
    $region9: #{mhca_encoder.15} parent=1 // pred_fallthru
      _
    // Predicated region
    $region10: #{mhca_encoder.15} parent=1 // pred_check
      _
    $region11: #{mhca_encoder.15} parent=1 // pred_check_branch
      %39 = sbr.rel (0) target = $region13
    $region12: #{mhca_encoder.15} parent=1 // pred_region
      %s41 = ssub.s32 16, 16
      %42 = vsyncadd [#allocation8], %s41
      %s44 = sshll.u32 [#allocation9], 4
      %s45 = int_to_ptr.vmem [resolvable:$true] %s44
      %47 = dma.hbm_to_vmem [thread:$0]  %s2, 16, %s45, [#allocation8]
    $region13: #{mhca_encoder.15} parent=1 // pred_fallthru
      _
    // Predicated region
    $region14: #{mhca_encoder.15} parent=1 // pred_check
      _
    $region15: #{mhca_encoder.15} parent=1 // pred_check_branch
      %49 = sbr.rel (0) target = $region17
    $region16: #{mhca_encoder.15} parent=1 // pred_region
      %s51 = ssub.s32 16, 16
      %52 = vsyncadd [#allocation11], %s51
      %s54 = sshll.u32 [#allocation10], 4
      %s55 = int_to_ptr.vmem [resolvable:$true] %s54
      %57 = dma.hbm_to_vmem [thread:$0]  %s3, 16, %s55, [#allocation11]
    $region17: #{mhca_encoder.15} parent=1 // pred_fallthru
      _
    // Predicated region
    $region18: #{mhca_encoder.15} parent=1 // pred_check
      _
    $region19: #{mhca_encoder.15} parent=1 // pred_check_branch
      %59 = sbr.rel (0) target = $region21
    $region20: #{mhca_encoder.15} parent=1 // pred_region
      %s61 = ssub.s32 16, 16
      %62 = vsyncadd [#allocation11], %s61
      %s64 = sshll.u32 [#allocation12], 4
      %s65 = int_to_ptr.vmem [resolvable:$true] %s64
      %67 = dma.hbm_to_vmem [thread:$0]  %s4, 16, %s65, [#allocation11]
    $region21: #{mhca_encoder.15} parent=1 // pred_fallthru
      _
    // Predicated region
    $region22: #{mhca_encoder.15} parent=1 // pred_check
      _
    $region23: #{mhca_encoder.15} parent=1 // pred_check_branch
      %69 = sbr.rel (0) target = $region25
    $region24: #{mhca_encoder.15} parent=1 // pred_region
      %70 = dma.done [#allocation5], 2048
    $region25: #{mhca_encoder.15} parent=1 // pred_fallthru
      _
    // Predicated region
    $region26: #{mhca_encoder.15} parent=1 // pred_check
      _
    $region27: #{mhca_encoder.15} parent=1 // pred_check_branch
      %72 = sbr.rel (0) target = $region29
    $region28: #{mhca_encoder.15} parent=1 // pred_region
      %73 = dma.done [#allocation8], 512
    $region29: #{mhca_encoder.15} parent=1 // pred_fallthru
      _
    // Predicated region
    $region30: #{mhca_encoder.15} parent=1 // pred_check
      _
    $region31: #{mhca_encoder.15} parent=1 // pred_check_branch
      %75 = sbr.rel (0) target = $region33
    $region32: #{mhca_encoder.15} parent=1 // pred_region
      %76 = dma.done [#allocation8], 16
    $region33: #{mhca_encoder.15} parent=1 // pred_fallthru
      _
    // Predicated region
    $region34: #{mhca_encoder.15} parent=1 // pred_check
      _
    $region35: #{mhca_encoder.15} parent=1 // pred_check_branch
      %78 = sbr.rel (0) target = $region37
    $region36: #{mhca_encoder.15} parent=1 // pred_region
      %79 = dma.done [#allocation11], 16
    $region37: #{mhca_encoder.15} parent=1 // pred_fallthru
      _
    // Predicated region
    $region38: #{mhca_encoder.15} parent=1 // pred_check
      _
    $region39: #{mhca_encoder.15} parent=1 // pred_check_branch
      %81 = sbr.rel (0) target = $region41
    $region40: #{mhca_encoder.15} parent=1 // pred_region
      %82 = dma.done [#allocation11], 16
    $region41: #{mhca_encoder.15} parent=1 // pred_fallthru
      _
    %p84 = scmp.eq.s32.totalorder 0, 0
    // Predicated region
    $region42: #{mhca_encoder.15} parent=1 // pred_check
      %p85 = pneg %p84
    $region43: #{mhca_encoder.15} parent=1 // pred_check_branch
      %87 = sbr.rel (%p85) target = $region45
    $region44: #{mhca_encoder.15} parent=1 // pred_region
      %vm88 = vcmask 785408
      %89 = vst.msk [vmem:[#allocation2] sm:$0xff] %vm88, 0.0
      %90 = vst.msk [vmem:[#allocation2 + $0x8] sm:$0xff] %vm88, 0.0
      %91 = vst.msk [vmem:[#allocation2 + $0x10] sm:$0xff] %vm88, 0.0
      %92 = vst.msk [vmem:[#allocation2 + $0x18] sm:$0xff] %vm88, 0.0
      %93 = vst.msk [vmem:[#allocation2 + $0x20] sm:$0xff] %vm88, 0.0
      %94 = vst.msk [vmem:[#allocation2 + $0x28] sm:$0xff] %vm88, 0.0
      %95 = vst.msk [vmem:[#allocation2 + $0x30] sm:$0xff] %vm88, 0.0
      %96 = vst.msk [vmem:[#allocation2 + $0x38] sm:$0xff] %vm88, 0.0
      %97 = vst.msk [vmem:[#allocation2 + $0x40] sm:$0xff] %vm88, 0.0
      %98 = vst.msk [vmem:[#allocation2 + $0x48] sm:$0xff] %vm88, 0.0
      %99 = vst.msk [vmem:[#allocation2 + $0x50] sm:$0xff] %vm88, 0.0
      %100 = vst.msk [vmem:[#allocation2 + $0x58] sm:$0xff] %vm88, 0.0
      %101 = vst.msk [vmem:[#allocation2 + $0x60] sm:$0xff] %vm88, 0.0
      %102 = vst.msk [vmem:[#allocation2 + $0x68] sm:$0xff] %vm88, 0.0
      %103 = vst.msk [vmem:[#allocation2 + $0x70] sm:$0xff] %vm88, 0.0
      %104 = vst.msk [vmem:[#allocation2 + $0x78] sm:$0xff] %vm88, 0.0
    $region45: #{mhca_encoder.15} parent=1 // pred_fallthru
      _
    %p105 = scmp.eq.s32.totalorder 0, 0
    // Predicated region
    $region46: #{mhca_encoder.15} parent=1 // pred_check
      %p106 = pneg %p105
    $region47: #{mhca_encoder.15} parent=1 // pred_check_branch
      %108 = sbr.rel (%p106) target = $region49
    $region48: #{mhca_encoder.15} parent=1 // pred_region
      %v109 = vld [vmem:[#allocation4] sm:$0xff]
      %v110 = vld [vmem:[#allocation4 + $0x8] sm:$0xff]
      %v111 = vld [vmem:[#allocation4 + $0x10] sm:$0xff]
      %v112 = vld [vmem:[#allocation4 + $0x18] sm:$0xff]
      %v113 = vld [vmem:[#allocation4 + $0x20] sm:$0xff]
      %v114 = vld [vmem:[#allocation4 + $0x28] sm:$0xff]
      %v115 = vld [vmem:[#allocation4 + $0x30] sm:$0xff]
      %v116 = vld [vmem:[#allocation4 + $0x38] sm:$0xff]
      %v117 = vld [vmem:[#allocation4 + $0x40] sm:$0xff]
      %v118 = vld [vmem:[#allocation4 + $0x48] sm:$0xff]
      %v119 = vld [vmem:[#allocation4 + $0x50] sm:$0xff]
      %v120 = vld [vmem:[#allocation4 + $0x58] sm:$0xff]
      %v121 = vld [vmem:[#allocation4 + $0x60] sm:$0xff]
      %v122 = vld [vmem:[#allocation4 + $0x68] sm:$0xff]
      %v123 = vld [vmem:[#allocation4 + $0x70] sm:$0xff]
      %v124 = vld [vmem:[#allocation4 + $0x78] sm:$0xff]
      %vm125 = vcmask 261120
      %v126 = vsel %vm125, %v109, 0.0
      %127 = vadd.xlane.f32.xlu0 %v126
      %v128 = vpop.xlane.xlu0 %127
      %v129 = vsel %vm125, %v110, 0.0
      %130 = vadd.xlane.f32.xlu0 %v129
      %v131 = vpop.xlane.xlu0 %130
      %v132 = vsel %vm125, %v111, 0.0
      %133 = vadd.xlane.f32.xlu0 %v132
      %v134 = vpop.xlane.xlu0 %133
      %v135 = vsel %vm125, %v112, 0.0
      %136 = vadd.xlane.f32.xlu0 %v135
      %v137 = vpop.xlane.xlu0 %136
      %v138 = vsel %vm125, %v113, 0.0
      %139 = vadd.xlane.f32.xlu0 %v138
      %v140 = vpop.xlane.xlu0 %139
      %v141 = vsel %vm125, %v114, 0.0
      %142 = vadd.xlane.f32.xlu0 %v141
      %v143 = vpop.xlane.xlu0 %142
      %v144 = vsel %vm125, %v115, 0.0
      %145 = vadd.xlane.f32.xlu0 %v144
      %v146 = vpop.xlane.xlu0 %145
      %v147 = vsel %vm125, %v116, 0.0
      %148 = vadd.xlane.f32.xlu0 %v147
      %v149 = vpop.xlane.xlu0 %148
      %v150 = vsel %vm125, %v117, 0.0
      %151 = vadd.xlane.f32.xlu0 %v150
      %v152 = vpop.xlane.xlu0 %151
      %v153 = vsel %vm125, %v118, 0.0
      %154 = vadd.xlane.f32.xlu0 %v153
      %v155 = vpop.xlane.xlu0 %154
      %v156 = vsel %vm125, %v119, 0.0
      %157 = vadd.xlane.f32.xlu0 %v156
      %v158 = vpop.xlane.xlu0 %157
      %v159 = vsel %vm125, %v120, 0.0
      %160 = vadd.xlane.f32.xlu0 %v159
      %v161 = vpop.xlane.xlu0 %160
      %v162 = vsel %vm125, %v121, 0.0
      %163 = vadd.xlane.f32.xlu0 %v162
      %v164 = vpop.xlane.xlu0 %163
      %v165 = vsel %vm125, %v122, 0.0
      %166 = vadd.xlane.f32.xlu0 %v165
      %v167 = vpop.xlane.xlu0 %166
      %v168 = vsel %vm125, %v123, 0.0
      %169 = vadd.xlane.f32.xlu0 %v168
      %v170 = vpop.xlane.xlu0 %169
      %v171 = vsel %vm125, %v124, 0.0
      %172 = vadd.xlane.f32.xlu0 %v171
      %v173 = vpop.xlane.xlu0 %172
      %v174 = vrcp.pop 32.0
      %v175 = vmul.f32 %v128, %v174
      %v176 = vmul.f32 %v131, %v174
      %v177 = vmul.f32 %v134, %v174
      %v178 = vmul.f32 %v137, %v174
      %v179 = vmul.f32 %v140, %v174
      %v180 = vmul.f32 %v143, %v174
      %v181 = vmul.f32 %v146, %v174
      %v182 = vmul.f32 %v149, %v174
      %v183 = vmul.f32 %v152, %v174
      %v184 = vmul.f32 %v155, %v174
      %v185 = vmul.f32 %v158, %v174
      %v186 = vmul.f32 %v161, %v174
      %v187 = vmul.f32 %v164, %v174
      %v188 = vmul.f32 %v167, %v174
      %v189 = vmul.f32 %v170, %v174
      %v190 = vmul.f32 %v173, %v174
      %v191 = vsub.f32 %v109, %v175
      %v192 = vsub.f32 %v110, %v176
      %v193 = vsub.f32 %v111, %v177
      %v194 = vsub.f32 %v112, %v178
      %v195 = vsub.f32 %v113, %v179
      %v196 = vsub.f32 %v114, %v180
      %v197 = vsub.f32 %v115, %v181
      %v198 = vsub.f32 %v116, %v182
      %v199 = vsub.f32 %v117, %v183
      %v200 = vsub.f32 %v118, %v184
      %v201 = vsub.f32 %v119, %v185
      %v202 = vsub.f32 %v120, %v186
      %v203 = vsub.f32 %v121, %v187
      %v204 = vsub.f32 %v122, %v188
      %v205 = vsub.f32 %v123, %v189
      %v206 = vsub.f32 %v124, %v190
      %v207 = vmul.f32 %v191, %v191
      %v208 = vmul.f32 %v192, %v192
      %v209 = vmul.f32 %v193, %v193
      %v210 = vmul.f32 %v194, %v194
      %v211 = vmul.f32 %v195, %v195
      %v212 = vmul.f32 %v196, %v196
      %v213 = vmul.f32 %v197, %v197
      %v214 = vmul.f32 %v198, %v198
      %v215 = vmul.f32 %v199, %v199
      %v216 = vmul.f32 %v200, %v200
      %v217 = vmul.f32 %v201, %v201
      %v218 = vmul.f32 %v202, %v202
      %v219 = vmul.f32 %v203, %v203
      %v220 = vmul.f32 %v204, %v204
      %v221 = vmul.f32 %v205, %v205
      %v222 = vmul.f32 %v206, %v206
      %v223 = vsel %vm125, %v207, 0.0
      %224 = vadd.xlane.f32.xlu0 %v223
      %v225 = vpop.xlane.xlu0 %224
      %v226 = vsel %vm125, %v208, 0.0
      %227 = vadd.xlane.f32.xlu0 %v226
      %v228 = vpop.xlane.xlu0 %227
      %v229 = vsel %vm125, %v209, 0.0
      %230 = vadd.xlane.f32.xlu0 %v229
      %v231 = vpop.xlane.xlu0 %230
      %v232 = vsel %vm125, %v210, 0.0
      %233 = vadd.xlane.f32.xlu0 %v232
      %v234 = vpop.xlane.xlu0 %233
      %v235 = vsel %vm125, %v211, 0.0
      %236 = vadd.xlane.f32.xlu0 %v235
      %v237 = vpop.xlane.xlu0 %236
      %v238 = vsel %vm125, %v212, 0.0
      %239 = vadd.xlane.f32.xlu0 %v238
      %v240 = vpop.xlane.xlu0 %239
      %v241 = vsel %vm125, %v213, 0.0
      %242 = vadd.xlane.f32.xlu0 %v241
      %v243 = vpop.xlane.xlu0 %242
      %v244 = vsel %vm125, %v214, 0.0
      %245 = vadd.xlane.f32.xlu0 %v244
      %v246 = vpop.xlane.xlu0 %245
      %v247 = vsel %vm125, %v215, 0.0
      %248 = vadd.xlane.f32.xlu0 %v247
      %v249 = vpop.xlane.xlu0 %248
      %v250 = vsel %vm125, %v216, 0.0
      %251 = vadd.xlane.f32.xlu0 %v250
      %v252 = vpop.xlane.xlu0 %251
      %v253 = vsel %vm125, %v217, 0.0
      %254 = vadd.xlane.f32.xlu0 %v253
      %v255 = vpop.xlane.xlu0 %254
      %v256 = vsel %vm125, %v218, 0.0
      %257 = vadd.xlane.f32.xlu0 %v256
      %v258 = vpop.xlane.xlu0 %257
      %v259 = vsel %vm125, %v219, 0.0
      %260 = vadd.xlane.f32.xlu0 %v259
      %v261 = vpop.xlane.xlu0 %260
      %v262 = vsel %vm125, %v220, 0.0
      %263 = vadd.xlane.f32.xlu0 %v262
      %v264 = vpop.xlane.xlu0 %263
      %v265 = vsel %vm125, %v221, 0.0
      %266 = vadd.xlane.f32.xlu0 %v265
      %v267 = vpop.xlane.xlu0 %266
      %v268 = vsel %vm125, %v222, 0.0
      %269 = vadd.xlane.f32.xlu0 %v268
      %v270 = vpop.xlane.xlu0 %269
      %v271 = vmul.f32 %v225, %v174
      %v272 = vmul.f32 %v228, %v174
      %v273 = vmul.f32 %v231, %v174
      %v274 = vmul.f32 %v234, %v174
      %v275 = vmul.f32 %v237, %v174
      %v276 = vmul.f32 %v240, %v174
      %v277 = vmul.f32 %v243, %v174
      %v278 = vmul.f32 %v246, %v174
      %v279 = vmul.f32 %v249, %v174
      %v280 = vmul.f32 %v252, %v174
      %v281 = vmul.f32 %v255, %v174
      %v282 = vmul.f32 %v258, %v174
      %v283 = vmul.f32 %v261, %v174
      %v284 = vmul.f32 %v264, %v174
      %v285 = vmul.f32 %v267, %v174
      %v286 = vmul.f32 %v270, %v174
      %v287 = vadd.f32 %v271, 1e-06
      %v288 = vadd.f32 %v272, 1e-06
      %v289 = vadd.f32 %v273, 1e-06
      %v290 = vadd.f32 %v274, 1e-06
      %v291 = vadd.f32 %v275, 1e-06
      %v292 = vadd.f32 %v276, 1e-06
      %v293 = vadd.f32 %v277, 1e-06
      %v294 = vadd.f32 %v278, 1e-06
      %v295 = vadd.f32 %v279, 1e-06
      %v296 = vadd.f32 %v280, 1e-06
      %v297 = vadd.f32 %v281, 1e-06
      %v298 = vadd.f32 %v282, 1e-06
      %v299 = vadd.f32 %v283, 1e-06
      %v300 = vadd.f32 %v284, 1e-06
      %v301 = vadd.f32 %v285, 1e-06
      %v302 = vadd.f32 %v286, 1e-06
      %v303 = vrsqrt.pop %v287
      %v304 = vrsqrt.pop %v288
      %v305 = vrsqrt.pop %v289
      %v306 = vrsqrt.pop %v290
      %v307 = vrsqrt.pop %v291
      %v308 = vrsqrt.pop %v292
      %v309 = vrsqrt.pop %v293
      %v310 = vrsqrt.pop %v294
      %v311 = vrsqrt.pop %v295
      %v312 = vrsqrt.pop %v296
      %v313 = vrsqrt.pop %v297
      %v314 = vrsqrt.pop %v298
      %v315 = vrsqrt.pop %v299
      %v316 = vrsqrt.pop %v300
      %v317 = vrsqrt.pop %v301
      %v318 = vrsqrt.pop %v302
      %v319 = vmul.f32 %v191, %v303
      %v320 = vmul.f32 %v192, %v304
      %v321 = vmul.f32 %v193, %v305
      %v322 = vmul.f32 %v194, %v306
      %v323 = vmul.f32 %v195, %v307
      %v324 = vmul.f32 %v196, %v308
      %v325 = vmul.f32 %v197, %v309
      %v326 = vmul.f32 %v198, %v310
      %v327 = vmul.f32 %v199, %v311
      %v328 = vmul.f32 %v200, %v312
      %v329 = vmul.f32 %v201, %v313
      %v330 = vmul.f32 %v202, %v314
      %v331 = vmul.f32 %v203, %v315
      %v332 = vmul.f32 %v204, %v316
      %v333 = vmul.f32 %v205, %v317
      %v334 = vmul.f32 %v206, %v318
      %v335 = vld [vmem:[#allocation10] sm:$0x1]
      %v337 = vlaneseq
      %v338 = vshrl.u32 %v337, 7
      %v339 = vsub.s32 0, %v338
      %v340 = vrot.slane %v335, %v339
      %v342 = vmul.f32 %v319, %v340
      %v343 = vmul.f32 %v320, %v340
      %v344 = vmul.f32 %v321, %v340
      %v345 = vmul.f32 %v322, %v340
      %v346 = vmul.f32 %v323, %v340
      %v347 = vmul.f32 %v324, %v340
      %v348 = vmul.f32 %v325, %v340
      %v349 = vmul.f32 %v326, %v340
      %v350 = vmul.f32 %v327, %v340
      %v351 = vmul.f32 %v328, %v340
      %v352 = vmul.f32 %v329, %v340
      %v353 = vmul.f32 %v330, %v340
      %v354 = vmul.f32 %v331, %v340
      %v355 = vmul.f32 %v332, %v340
      %v356 = vmul.f32 %v333, %v340
      %v357 = vmul.f32 %v334, %v340
      %v358 = vld [vmem:[#allocation12] sm:$0x1]
      %v360 = vlaneseq
      %v361 = vshrl.u32 %v360, 7
      %v362 = vsub.s32 0, %v361
      %v363 = vrot.slane %v358, %v362
      %v365 = vadd.f32 %v342, %v363
      %v366 = vadd.f32 %v343, %v363
      %v367 = vadd.f32 %v344, %v363
      %v368 = vadd.f32 %v345, %v363
      %v369 = vadd.f32 %v346, %v363
      %v370 = vadd.f32 %v347, %v363
      %v371 = vadd.f32 %v348, %v363
      %v372 = vadd.f32 %v349, %v363
      %v373 = vadd.f32 %v350, %v363
      %v374 = vadd.f32 %v351, %v363
      %v375 = vadd.f32 %v352, %v363
      %v376 = vadd.f32 %v353, %v363
      %v377 = vadd.f32 %v354, %v363
      %v378 = vadd.f32 %v355, %v363
      %v379 = vadd.f32 %v356, %v363
      %v380 = vadd.f32 %v357, %v363
      %v381 = vpack.c.bf16 %v366, %v365
      %v382 = vpack.c.bf16 %v368, %v367
      %v383 = vpack.c.bf16 %v370, %v369
      %v384 = vpack.c.bf16 %v372, %v371
      %v385 = vpack.c.bf16 %v374, %v373
      %v386 = vpack.c.bf16 %v376, %v375
      %v387 = vpack.c.bf16 %v378, %v377
      %v388 = vpack.c.bf16 %v380, %v379
      %389 = vst.msk [vmem:[#allocation3] sm:$0xff] %vm125, %v381
      %390 = vst.msk [vmem:[#allocation3 + $0x8] sm:$0xff] %vm125, %v382
      %391 = vst.msk [vmem:[#allocation3 + $0x10] sm:$0xff] %vm125, %v383
      %392 = vst.msk [vmem:[#allocation3 + $0x18] sm:$0xff] %vm125, %v384
      %393 = vst.msk [vmem:[#allocation3 + $0x20] sm:$0xff] %vm125, %v385
      %394 = vst.msk [vmem:[#allocation3 + $0x28] sm:$0xff] %vm125, %v386
      %395 = vst.msk [vmem:[#allocation3 + $0x30] sm:$0xff] %vm125, %v387
      %396 = vst.msk [vmem:[#allocation3 + $0x38] sm:$0xff] %vm125, %v388
    $region49: #{mhca_encoder.15} parent=1 // pred_fallthru
      _
    %v397 = vld [vmem:[#allocation3] sm:$0xff]
    %v398 = vld [vmem:[#allocation3 + $0x8] sm:$0xff]
    %v399 = vld [vmem:[#allocation3 + $0x10] sm:$0xff]
    %v400 = vld [vmem:[#allocation3 + $0x18] sm:$0xff]
    %v401 = vld [vmem:[#allocation3 + $0x20] sm:$0xff]
    %v402 = vld [vmem:[#allocation3 + $0x28] sm:$0xff]
    %v403 = vld [vmem:[#allocation3 + $0x30] sm:$0xff]
    %v404 = vld [vmem:[#allocation3 + $0x38] sm:$0xff]
    %v405 = vld [vmem:[#allocation2] sm:$0xff]
    %v406 = vld [vmem:[#allocation2 + $0x8] sm:$0xff]
    %v407 = vld [vmem:[#allocation2 + $0x10] sm:$0xff]
    %v408 = vld [vmem:[#allocation2 + $0x18] sm:$0xff]
    %v409 = vld [vmem:[#allocation2 + $0x20] sm:$0xff]
    %v410 = vld [vmem:[#allocation2 + $0x28] sm:$0xff]
    %v411 = vld [vmem:[#allocation2 + $0x30] sm:$0xff]
    %v412 = vld [vmem:[#allocation2 + $0x38] sm:$0xff]
    %v413 = vld [vmem:[#allocation2 + $0x40] sm:$0xff]
    %v414 = vld [vmem:[#allocation2 + $0x48] sm:$0xff]
    %v415 = vld [vmem:[#allocation2 + $0x50] sm:$0xff]
    %v416 = vld [vmem:[#allocation2 + $0x58] sm:$0xff]
    %v417 = vld [vmem:[#allocation2 + $0x60] sm:$0xff]
    %v418 = vld [vmem:[#allocation2 + $0x68] sm:$0xff]
    %v419 = vld [vmem:[#allocation2 + $0x70] sm:$0xff]
    %v420 = vld [vmem:[#allocation2 + $0x78] sm:$0xff]
    %v421 = vld [vmem:[#allocation7] sm:$0xff]
    %v422 = vld [vmem:[#allocation7 + $0x8] sm:$0xff]
    %v423 = vld [vmem:[#allocation7 + $0x10] sm:$0xff]
    %v424 = vld [vmem:[#allocation7 + $0x18] sm:$0xff]
    %v425 = vpack.c.bf16 %v422, %v421
    %v426 = vpack.c.bf16 %v424, %v423
    %vm427 = vcmask 261120
    %v429 = vsel %vm427, %v397, 0
    %v432 = vsel %vm427, %v398, 0
    %v435 = vsel %vm427, %v399, 0
    %v438 = vsel %vm427, %v400, 0
    %v441 = vsel %vm427, %v401, 0
    %v444 = vsel %vm427, %v402, 0
    %v447 = vsel %vm427, %v403, 0
    %v450 = vsel %vm427, %v404, 0
    %452 = vmatprep.subr.bf16.mxu0 0
    %453 = vmatpush1.bf16.msra.mxu0 %v425
    %454 = vmatprep.subr.bf16.mxu0 0
    %455 = vmatpush1.bf16.msra.mxu0 %v426
    %456 = vmatprep.subr.bf16.mxu0 0
    %457 = vmatpush1.bf16.msra.mxu0 0
    %458 = vmatprep.subr.bf16.mxu0 0
    %459 = vmatpush1.bf16.msra.mxu0 0
    %460 = vmatprep.subr.bf16.mxu0 0
    %461 = vmatpush1.bf16.msra.mxu0 0
    %462 = vmatprep.subr.bf16.mxu0 0
    %463 = vmatpush1.bf16.msra.mxu0 0
    %464 = vmatprep.subr.bf16.mxu0 0
    %465 = vmatpush1.bf16.msra.mxu0 0
    %466 = vmatprep.subr.bf16.mxu0 0
    %467 = vmatpush1.bf16.msra.mxu0 0
    %468 = vmatprep.subr.bf16.mxu0 0
    %469 = vmatpush1.bf16.msra.mxu0 0
    %470 = vmatprep.subr.bf16.mxu0 0
    %471 = vmatpush1.bf16.msra.mxu0 0
    %472 = vmatprep.subr.bf16.mxu0 0
    %473 = vmatpush1.bf16.msra.mxu0 0
    %474 = vmatprep.subr.bf16.mxu0 0
    %475 = vmatpush1.bf16.msra.mxu0 0
    %476 = vmatprep.subr.bf16.mxu0 0
    %477 = vmatpush1.bf16.msra.mxu0 0
    %478 = vmatprep.subr.bf16.mxu0 0
    %479 = vmatpush1.bf16.msra.mxu0 0
    %480 = vmatprep.subr.bf16.mxu0 0
    %481 = vmatpush1.bf16.msra.mxu0 0
    %482 = vmatprep.subr.bf16.mxu0 0
    %483 = vmatpush1.bf16.msra.mxu0 0
    %484 = vmatprep.mubr.bf16.mxu0 0
    %485 = vmatmul.mubr.bf16.gmra.mrb[0].mxu0 %v429
    %v486 = vpop.f32.mrb[0].mxu0
    %v487 = vadd.f32 0.0, %v486
    %v488 = vpop.f32.mrb[0].mxu0
    %v489 = vpop.f32.mrb[0].mxu0
    %v490 = vadd.f32 0.0, %v489
    %v491 = vpop.f32.mrb[0].mxu0
    %492 = vmatprep.mubr.bf16.mxu0 0
    %493 = vmatmul.mubr.bf16.gmra.mrb[0].mxu0 %v432
    %v494 = vpop.f32.mrb[0].mxu0
    %v495 = vadd.f32 0.0, %v494
    %v496 = vpop.f32.mrb[0].mxu0
    %v497 = vpop.f32.mrb[0].mxu0
    %v498 = vadd.f32 0.0, %v497
    %v499 = vpop.f32.mrb[0].mxu0
    %500 = vmatprep.mubr.bf16.mxu0 0
    %501 = vmatmul.mubr.bf16.gmra.mrb[0].mxu0 %v435
    %v502 = vpop.f32.mrb[0].mxu0
    %v503 = vadd.f32 0.0, %v502
    %v504 = vpop.f32.mrb[0].mxu0
    %v505 = vpop.f32.mrb[0].mxu0
    %v506 = vadd.f32 0.0, %v505
    %v507 = vpop.f32.mrb[0].mxu0
    %508 = vmatprep.mubr.bf16.mxu0 0
    %509 = vmatmul.mubr.bf16.gmra.mrb[0].mxu0 %v438
    %v510 = vpop.f32.mrb[0].mxu0
    %v511 = vadd.f32 0.0, %v510
    %v512 = vpop.f32.mrb[0].mxu0
    %v513 = vpop.f32.mrb[0].mxu0
    %v514 = vadd.f32 0.0, %v513
    %v515 = vpop.f32.mrb[0].mxu0
    %516 = vmatprep.mubr.bf16.mxu0 0
    %517 = vmatmul.mubr.bf16.gmra.mrb[0].mxu0 %v441
    %v518 = vpop.f32.mrb[0].mxu0
    %v519 = vadd.f32 0.0, %v518
    %v520 = vpop.f32.mrb[0].mxu0
    %v521 = vpop.f32.mrb[0].mxu0
    %v522 = vadd.f32 0.0, %v521
    %v523 = vpop.f32.mrb[0].mxu0
    %524 = vmatprep.mubr.bf16.mxu0 0
    %525 = vmatmul.mubr.bf16.gmra.mrb[0].mxu0 %v444
    %v526 = vpop.f32.mrb[0].mxu0
    %v527 = vadd.f32 0.0, %v526
    %v528 = vpop.f32.mrb[0].mxu0
    %v529 = vpop.f32.mrb[0].mxu0
    %v530 = vadd.f32 0.0, %v529
    %v531 = vpop.f32.mrb[0].mxu0
    %532 = vmatprep.mubr.bf16.mxu0 0
    %533 = vmatmul.mubr.bf16.gmra.mrb[0].mxu0 %v447
    %v534 = vpop.f32.mrb[0].mxu0
    %v535 = vadd.f32 0.0, %v534
    %v536 = vpop.f32.mrb[0].mxu0
    %v537 = vpop.f32.mrb[0].mxu0
    %v538 = vadd.f32 0.0, %v537
    %v539 = vpop.f32.mrb[0].mxu0
    %540 = vmatprep.mubr.bf16.mxu0 0
    %541 = vmatmul.mubr.bf16.gmra.mrb[0].mxu0 %v450
    %v542 = vpop.f32.mrb[0].mxu0
    %v543 = vadd.f32 0.0, %v542
    %v544 = vpop.f32.mrb[0].mxu0
    %v545 = vpop.f32.mrb[0].mxu0
    %v546 = vadd.f32 0.0, %v545
    %v547 = vpop.f32.mrb[0].mxu0
    %548 = vdwg.mxu0
    %v549 = vadd.f32 %v405, %v487
    %v550 = vadd.f32 %v406, %v490
    %v551 = vadd.f32 %v407, %v495
    %v552 = vadd.f32 %v408, %v498
    %v553 = vadd.f32 %v409, %v503
    %v554 = vadd.f32 %v410, %v506
    %v555 = vadd.f32 %v411, %v511
    %v556 = vadd.f32 %v412, %v514
    %v557 = vadd.f32 %v413, %v519
    %v558 = vadd.f32 %v414, %v522
    %v559 = vadd.f32 %v415, %v527
    %v560 = vadd.f32 %v416, %v530
    %v561 = vadd.f32 %v417, %v535
    %v562 = vadd.f32 %v418, %v538
    %v563 = vadd.f32 %v419, %v543
    %v564 = vadd.f32 %v420, %v546
    %vm565 = vcmask 785408
    %566 = vst.msk [vmem:[#allocation2] sm:$0xff] %vm565, %v549
    %567 = vst.msk [vmem:[#allocation2 + $0x8] sm:$0xff] %vm565, %v550
    %568 = vst.msk [vmem:[#allocation2 + $0x10] sm:$0xff] %vm565, %v551
    %569 = vst.msk [vmem:[#allocation2 + $0x18] sm:$0xff] %vm565, %v552
    %570 = vst.msk [vmem:[#allocation2 + $0x20] sm:$0xff] %vm565, %v553
    %571 = vst.msk [vmem:[#allocation2 + $0x28] sm:$0xff] %vm565, %v554
    %572 = vst.msk [vmem:[#allocation2 + $0x30] sm:$0xff] %vm565, %v555
    %573 = vst.msk [vmem:[#allocation2 + $0x38] sm:$0xff] %vm565, %v556
    %574 = vst.msk [vmem:[#allocation2 + $0x40] sm:$0xff] %vm565, %v557
    %575 = vst.msk [vmem:[#allocation2 + $0x48] sm:$0xff] %vm565, %v558
    %576 = vst.msk [vmem:[#allocation2 + $0x50] sm:$0xff] %vm565, %v559
    %577 = vst.msk [vmem:[#allocation2 + $0x58] sm:$0xff] %vm565, %v560
    %578 = vst.msk [vmem:[#allocation2 + $0x60] sm:$0xff] %vm565, %v561
    %579 = vst.msk [vmem:[#allocation2 + $0x68] sm:$0xff] %vm565, %v562
    %580 = vst.msk [vmem:[#allocation2 + $0x70] sm:$0xff] %vm565, %v563
    %581 = vst.msk [vmem:[#allocation2 + $0x78] sm:$0xff] %vm565, %v564
    // Predicated region
    $region50: #{mhca_encoder.15} parent=1 // pred_check
      %p582 = pneg %p84
    $region51: #{mhca_encoder.15} parent=1 // pred_check_branch
      %584 = sbr.rel (%p582) target = $region53
    $region52: #{mhca_encoder.15} parent=1 // pred_region
      %v585 = vld [vmem:[#allocation2] sm:$0xff]
      %v586 = vld [vmem:[#allocation2 + $0x8] sm:$0xff]
      %v587 = vld [vmem:[#allocation2 + $0x10] sm:$0xff]
      %v588 = vld [vmem:[#allocation2 + $0x18] sm:$0xff]
      %v589 = vld [vmem:[#allocation2 + $0x20] sm:$0xff]
      %v590 = vld [vmem:[#allocation2 + $0x28] sm:$0xff]
      %v591 = vld [vmem:[#allocation2 + $0x30] sm:$0xff]
      %v592 = vld [vmem:[#allocation2 + $0x38] sm:$0xff]
      %v593 = vld [vmem:[#allocation2 + $0x40] sm:$0xff]
      %v594 = vld [vmem:[#allocation2 + $0x48] sm:$0xff]
      %v595 = vld [vmem:[#allocation2 + $0x50] sm:$0xff]
      %v596 = vld [vmem:[#allocation2 + $0x58] sm:$0xff]
      %v597 = vld [vmem:[#allocation2 + $0x60] sm:$0xff]
      %v598 = vld [vmem:[#allocation2 + $0x68] sm:$0xff]
      %v599 = vld [vmem:[#allocation2 + $0x70] sm:$0xff]
      %v600 = vld [vmem:[#allocation2 + $0x78] sm:$0xff]
      %v601 = vld [vmem:[#allocation9] sm:$0x1]
      %v603 = vlaneseq
      %v604 = vshrl.u32 %v603, 7
      %v605 = vsub.s32 0, %v604
      %v606 = vrot.slane %v601, %v605
      %v608 = vadd.f32 %v585, %v606
      %v609 = vadd.f32 %v586, %v606
      %v610 = vadd.f32 %v587, %v606
      %v611 = vadd.f32 %v588, %v606
      %v612 = vadd.f32 %v589, %v606
      %v613 = vadd.f32 %v590, %v606
      %v614 = vadd.f32 %v591, %v606
      %v615 = vadd.f32 %v592, %v606
      %v616 = vadd.f32 %v593, %v606
      %v617 = vadd.f32 %v594, %v606
      %v618 = vadd.f32 %v595, %v606
      %v619 = vadd.f32 %v596, %v606
      %v620 = vadd.f32 %v597, %v606
      %v621 = vadd.f32 %v598, %v606
      %v622 = vadd.f32 %v599, %v606
      %v623 = vadd.f32 %v600, %v606
      %624 = vst.msk [vmem:[#allocation13] sm:$0xff] %vm565, %v608
      %625 = vst.msk [vmem:[#allocation13 + $0x8] sm:$0xff] %vm565, %v609
      %626 = vst.msk [vmem:[#allocation13 + $0x10] sm:$0xff] %vm565, %v610
      %627 = vst.msk [vmem:[#allocation13 + $0x18] sm:$0xff] %vm565, %v611
      %628 = vst.msk [vmem:[#allocation13 + $0x20] sm:$0xff] %vm565, %v612
      %629 = vst.msk [vmem:[#allocation13 + $0x28] sm:$0xff] %vm565, %v613
      %630 = vst.msk [vmem:[#allocation13 + $0x30] sm:$0xff] %vm565, %v614
      %631 = vst.msk [vmem:[#allocation13 + $0x38] sm:$0xff] %vm565, %v615
      %632 = vst.msk [vmem:[#allocation13 + $0x40] sm:$0xff] %vm565, %v616
      %633 = vst.msk [vmem:[#allocation13 + $0x48] sm:$0xff] %vm565, %v617
      %634 = vst.msk [vmem:[#allocation13 + $0x50] sm:$0xff] %vm565, %v618
      %635 = vst.msk [vmem:[#allocation13 + $0x58] sm:$0xff] %vm565, %v619
      %636 = vst.msk [vmem:[#allocation13 + $0x60] sm:$0xff] %vm565, %v620
      %637 = vst.msk [vmem:[#allocation13 + $0x68] sm:$0xff] %vm565, %v621
      %638 = vst.msk [vmem:[#allocation13 + $0x70] sm:$0xff] %vm565, %v622
      %639 = vst.msk [vmem:[#allocation13 + $0x78] sm:$0xff] %vm565, %v623
    $region53: #{mhca_encoder.15} parent=1 // pred_fallthru
      _
    // Predicated region
    $region54: #{mhca_encoder.15} parent=1 // pred_check
      _
    $region55: #{mhca_encoder.15} parent=1 // pred_check_branch
      %641 = sbr.rel (0) target = $region57
    $region56: #{mhca_encoder.15} parent=1 // pred_region
      %s643 = ssub.s32 2048, 2048
      %644 = vsyncadd [#allocation6], %s643
      %s645 = sshll.u32 [#allocation13], 4
      %s646 = int_to_ptr.vmem [resolvable:$true] %s645
      %651 = dma.vmem_to_hbm [thread:$0]  %s646, 2048, %s5, [#allocation6], 128, 128, 8
    $region57: #{mhca_encoder.15} parent=1 // pred_fallthru
      _
    // Predicated region
    $region58: #{mhca_encoder.15} parent=1 // pred_check
      _
    $region59: #{mhca_encoder.15} parent=1 // pred_check_branch
      %653 = sbr.rel (0) target = $region61
    $region60: #{mhca_encoder.15} parent=1 // pred_region
      %654 = dma.done [#allocation6], 2048
    $region61: #{mhca_encoder.15} parent=1 // pred_fallthru
      _
    %655 = vsyncpa [#allocation5], 1
    %656 = vsyncpa [#allocation8], 1
    %657 = vsyncpa [#allocation11], 1
    %658 = vsyncpa [#allocation6], 1

// kernel: mhca_encoder.14
$region0: #{mhca_encoder.14}
  #allocation0 [shape = 'u32[]', space=smem, size = 0x4, offset = 0x4, fixed_abs, tag = 'smem constant byte address 0x4 - core index']
  #allocation1 [shape = 'u32[144,128]{1,0:T(1,128)}', space=vmem, size = 0x12000, scoped, tag = 'internal scratch']
  #allocation2 [shape = 'f32[10,10,32]{2,1,0:T(8,128)}', space=vmem, size = 0x14000, scoped, tag = 'scratch operand']
  %s0 = inlined_call_operand.hbm [shape: f32[2,8,8,32], index: 0, kind: input, shape index: {}]
  %s1 = inlined_call_operand.hbm [shape: f32[3,3,32], index: 1, kind: input, shape index: {}]
  %s2 = inlined_call_operand.hbm [shape: f32[1,32], index: 2, kind: input, shape index: {}]
  %s3 = inlined_call_operand.hbm [shape: f32[2,8,8,32], index: 3, kind: output, shape index: {}]
  %s4 = sld [smem:[#allocation0]]
  $region57: #{mhca_encoder.14} parent=0
    _
  %s6 = ssub.s32 1, %s4
  %s7 = scalar_select 0, %s6, %s4
  $region1: #{mhca_encoder.14} parent=0
    #allocation3 [shape = 'u8[65536]{0}', space=vmem, size = 0x10000, scoped, tag = 'input window, operand 0']
    #allocation4 [shape = 's32[2]{0}', space=sflag, size = 0x8, scoped, tag = 'scoped memory for mhca_encoder.14']
    #allocation5 [shape = 's32[2]{0}', space=sflag, size = 0x8, scoped, tag = 'scoped memory for mhca_encoder.14']
    #allocation6 [shape = 'u8[6144]{0}', space=vmem, size = 0x1800, scoped, tag = 'input window, operand 1, single buffered']
    #allocation7 [shape = 's32[1]{0}', space=sflag, size = 0x4, scoped, tag = 'scoped memory for mhca_encoder.14']
    #allocation8 [shape = 'u8[512]{0}', space=vmem, size = 0x400, scoped, tag = 'input window, operand 2, single buffered']
    #allocation9 [shape = 'u8[65536]{0}', space=vmem, size = 0x10000, scoped, tag = 'output window, operand 0']
    %8 = vsyncpa [#allocation4], 0
    %s9 = scalar_lea.sflag [#allocation4], 1
    %10 = vsyncpa %s9, 0
    %11 = vsyncpa [#allocation7], 0
    %12 = vsyncpa [#allocation5], 0
    %s13 = scalar_lea.sflag [#allocation5], 1
    %14 = vsyncpa %s13, 0
    loop: start=0, step=1, limit=4
    $region2: #{mhca_encoder.14} parent=1 // loop_pre_header
      _
    $region3: #{mhca_encoder.14} parent=1 // loop_header
      %s16 = sphi 0, %s20
      %p17 = scmp.ge.s32.totalorder %s16, 4
      %s26 = sphi 0, %s28
      %s29 = sphi 0, %s26
      %s30 = sphi 0, %s29
      %s46 = sphi 0, %s30
      %s50 = sphi 0, %s50
      %s52 = sphi 0, %s50
      %s53 = sphi 0, %s52
      %s67 = sphi 0, %s53
      %s71 = sphi 0, %s71
      %s73 = sphi 0, %s71
      %s74 = sphi 0, %s73
      %s88 = sphi 0, %s74
      %s94 = sphi 0, %s96
      %s97 = sphi 0, %s94
      %s98 = sphi 0, %s97
      %s114 = sphi 0, %s98
    $region4: #{mhca_encoder.14} parent=1 // loop_header_branch
      %19 = sbr.rel (%p17) target = $region8
    $region5: #{mhca_encoder.14} parent=1 // loop_body
      %s21 = ssub.s32 %s16, 1
      %s22 = ssub.s32 %s16, 2
      %s23 = sadd.s32 %s16, 1
      %s24 = ssub.s32 %s16, %s23
      %p25 = scmp.eq.s32.totalorder %s24, 0
      %s27 = sadd.s32 %s26, 1
      %s28 = scalar_select %p25, %s26, %s27
      %p31 = pneg %p25
      %p32 = scmp.eq.s32.totalorder %s16, 1
      %p33 = por %p31, %p32
      %p34 = scmp.ne.s32.totalorder %s26, %s29
      %p35 = scmp.eq.s32.totalorder %s16, 0
      %p36 = por %p34, %p35
      %p37 = scmp.ne.s32.totalorder %s26, %s29
      %p38 = scmp.eq.s32.totalorder %s21, 1
      %p39 = por %p37, %p38
      %p40 = scmp.ne.s32.totalorder %s29, %s30
      %p41 = scmp.eq.s32.totalorder %s21, 0
      %p42 = por %p40, %p41
      %p43 = scmp.ne.s32.totalorder %s29, %s30
      %p44 = scmp.eq.s32.totalorder %s22, 1
      %p45 = por %p43, %p44
      %p47 = scmp.ne.s32.totalorder %s30, %s46
      %p48 = scmp.eq.s32.totalorder %s22, 0
      %p49 = por %p47, %p48
      %s51 = sadd.s32 %s50, 1
      %p54 = scmp.eq.s32.totalorder %s16, 1
      %p55 = scmp.ne.s32.totalorder %s50, %s52
      %p56 = scmp.eq.s32.totalorder %s16, 0
      %p57 = por %p55, %p56
      %p58 = scmp.ne.s32.totalorder %s50, %s52
      %p59 = scmp.eq.s32.totalorder %s21, 1
      %p60 = por %p58, %p59
      %p61 = scmp.ne.s32.totalorder %s52, %s53
      %p62 = scmp.eq.s32.totalorder %s21, 0
      %p63 = por %p61, %p62
      %p64 = scmp.ne.s32.totalorder %s52, %s53
      %p65 = scmp.eq.s32.totalorder %s22, 1
      %p66 = por %p64, %p65
      %p68 = scmp.ne.s32.totalorder %s53, %s67
      %p69 = scmp.eq.s32.totalorder %s22, 0
      %p70 = por %p68, %p69
      %s72 = sadd.s32 %s71, 1
      %p75 = scmp.eq.s32.totalorder %s16, 1
      %p76 = scmp.ne.s32.totalorder %s71, %s73
      %p77 = scmp.eq.s32.totalorder %s16, 0
      %p78 = por %p76, %p77
      %p79 = scmp.ne.s32.totalorder %s71, %s73
      %p80 = scmp.eq.s32.totalorder %s21, 1
      %p81 = por %p79, %p80
      %p82 = scmp.ne.s32.totalorder %s73, %s74
      %p83 = scmp.eq.s32.totalorder %s21, 0
      %p84 = por %p82, %p83
      %p85 = scmp.ne.s32.totalorder %s73, %s74
      %p86 = scmp.eq.s32.totalorder %s22, 1
      %p87 = por %p85, %p86
      %p89 = scmp.ne.s32.totalorder %s74, %s88
      %p90 = scmp.eq.s32.totalorder %s22, 0
      %p91 = por %p89, %p90
      %s92 = ssub.s32 %s16, %s23
      %p93 = scmp.eq.s32.totalorder %s92, 0
      %s95 = sadd.s32 %s94, 1
      %s96 = scalar_select %p93, %s94, %s95
      %p99 = pneg %p93
      %p100 = scmp.eq.s32.totalorder %s16, 1
      %p101 = por %p99, %p100
      %p102 = scmp.ne.s32.totalorder %s94, %s97
      %p103 = scmp.eq.s32.totalorder %s16, 0
      %p104 = por %p102, %p103
      %p105 = scmp.ne.s32.totalorder %s94, %s97
      %p106 = scmp.eq.s32.totalorder %s21, 1
      %p107 = por %p105, %p106
      %p108 = scmp.ne.s32.totalorder %s97, %s98
      %p109 = scmp.eq.s32.totalorder %s21, 0
      %p110 = por %p108, %p109
      %p111 = scmp.ne.s32.totalorder %s97, %s98
      %p112 = scmp.eq.s32.totalorder %s22, 1
      %p113 = por %p111, %p112
      %p115 = scmp.ne.s32.totalorder %s98, %s114
      %p116 = scmp.eq.s32.totalorder %s22, 0
      %p117 = por %p115, %p116
      %p118 = scmp.le.s32.totalorder 1, %s16
      %p119 = scmp.lt.s32.totalorder %s16, 3
      %p120 = pnand %p118, %p119
      %p121 = pneg %p120
      // Predicated region
      $region9: #{mhca_encoder.14} parent=5 // pred_check
        _
      $region10: #{mhca_encoder.14} parent=5 // pred_check_branch
        %123 = sbr.rel (%p120) target = $region12
      $region11: #{mhca_encoder.14} parent=5 // pred_region
        %s124 = ssub.s32 %s16, 1
        // Predicated region
        $region13: #{mhca_encoder.14} parent=11 // pred_check
          %p125 = pneg %p63
        $region14: #{mhca_encoder.14} parent=11 // pred_check_branch
          %127 = sbr.rel (%p125) target = $region16
        $region15: #{mhca_encoder.14} parent=11 // pred_region
          %s129 = ssub.s32 192, 192
          %130 = vsyncadd [#allocation7], %s129
          %s131 = sshll.u32 [#allocation6], 4
          %s132 = int_to_ptr.vmem [resolvable:$true] %s131
          %137 = dma.hbm_to_vmem [thread:$0]  %s1, 192, %s132, [#allocation7], 64, 64, 4
        $region16: #{mhca_encoder.14} parent=11 // pred_fallthru
          _
        // Predicated region
        $region17: #{mhca_encoder.14} parent=11 // pred_check
          %p138 = pneg %p84
        $region18: #{mhca_encoder.14} parent=11 // pred_check_branch
          %140 = sbr.rel (%p138) target = $region20
        $region19: #{mhca_encoder.14} parent=11 // pred_region
          %s142 = ssub.s32 16, 16
          %143 = vsyncadd [#allocation7], %s142
          %s145 = sshll.u32 [#allocation8], 4
          %s146 = int_to_ptr.vmem [resolvable:$true] %s145
          %148 = dma.hbm_to_vmem [thread:$0]  %s2, 16, %s146, [#allocation7]
        $region20: #{mhca_encoder.14} parent=11 // pred_fallthru
          _
      $region12: #{mhca_encoder.14} parent=5 // pred_fallthru
        _
      %p149 = scmp.lt.s32.totalorder %s16, 2
      // Predicated region
      $region21: #{mhca_encoder.14} parent=5 // pred_check
        %p150 = pneg %p149
      $region22: #{mhca_encoder.14} parent=5 // pred_check_branch
        %152 = sbr.rel (%p150) target = $region24
      $region23: #{mhca_encoder.14} parent=5 // pred_region
        // Predicated region
        $region25: #{mhca_encoder.14} parent=23 // pred_check
          %p153 = pneg %p36
        $region26: #{mhca_encoder.14} parent=23 // pred_check_branch
          %155 = sbr.rel (%p153) target = $region28
        $region27: #{mhca_encoder.14} parent=23 // pred_region
          %s156 = sand.u32 %s26, 1
          %s157 = scalar_lea.sflag [#allocation4], %s156
          %s158 = sand.u32 %s26, 1
          %s159 = smul.addr %s158, 64
          %s160 = scalar_lea.vmem [#allocation3], %s159
          %s162 = ssub.s32 1024, 1024
          %163 = vsyncadd %s157, %s162
          %s164 = smul.addr %s16, 8
          %s165 = smul.addr %s164, 128
          %s166 = scalar_lea.hbm %s0, %s165
          %s167 = sshll.u32 %s160, 4
          %s168 = int_to_ptr.vmem [resolvable:$true] %s167
          %173 = dma.hbm_to_vmem [thread:$0]  %s166, 1024, %s168, %s157, 128, 128, 8
        $region28: #{mhca_encoder.14} parent=23 // pred_fallthru
          _
      $region24: #{mhca_encoder.14} parent=5 // pred_fallthru
        _
      %p174 = scmp.le.s32.totalorder 1, %s16
      %p175 = scmp.lt.s32.totalorder %s16, 3
      %p176 = pnand %p174, %p175
      %p177 = pneg %p176
      // Predicated region
      $region29: #{mhca_encoder.14} parent=5 // pred_check
        _
      $region30: #{mhca_encoder.14} parent=5 // pred_check_branch
        %179 = sbr.rel (%p176) target = $region32
      $region31: #{mhca_encoder.14} parent=5 // pred_region
        %s180 = ssub.s32 %s16, 1
        %s181 = sand.u32 %s29, 1
        %s182 = scalar_lea.sflag [#allocation4], %s181
        %s183 = sand.u32 %s29, 1
        %s184 = smul.addr %s183, 64
        %s185 = scalar_lea.vmem [#allocation3], %s184
        // Predicated region
        $region33: #{mhca_encoder.14} parent=31 // pred_check
          %p186 = pneg %p42
        $region34: #{mhca_encoder.14} parent=31 // pred_check_branch
          %188 = sbr.rel (%p186) target = $region36
        $region35: #{mhca_encoder.14} parent=31 // pred_region
          %189 = dma.done %s182, 1024
        $region36: #{mhca_encoder.14} parent=31 // pred_fallthru
          _
        // Predicated region
        $region37: #{mhca_encoder.14} parent=31 // pred_check
          %p190 = pneg %p63
        $region38: #{mhca_encoder.14} parent=31 // pred_check_branch
          %192 = sbr.rel (%p190) target = $region40
        $region39: #{mhca_encoder.14} parent=31 // pred_region
          %193 = dma.done [#allocation7], 192
        $region40: #{mhca_encoder.14} parent=31 // pred_fallthru
          _
        // Predicated region
        $region41: #{mhca_encoder.14} parent=31 // pred_check
          %p194 = pneg %p84
        $region42: #{mhca_encoder.14} parent=31 // pred_check_branch
          %196 = sbr.rel (%p194) target = $region44
        $region43: #{mhca_encoder.14} parent=31 // pred_region
          %197 = dma.done [#allocation7], 16
        $region44: #{mhca_encoder.14} parent=31 // pred_fallthru
          _
        %s198 = sand.u32 %s29, 1
        %s199 = scalar_lea.sflag [#allocation4], %s198
        %s200 = sand.u32 %s29, 1
        %s201 = smul.addr %s200, 64
        %s202 = scalar_lea.vmem [#allocation3], %s201
        %p203 = pneg %p42
        %p204 = pneg %p39
        %p205 = pneg %p63
        %p206 = pneg %p60
        %p207 = pneg %p84
        %p208 = pneg %p81
        %p209 = pneg %p110
        %p210 = pneg %p107
        %s211 = sand.u32 %s97, 1
        %s212 = scalar_lea.sflag [#allocation5], %s211
        %s213 = sand.u32 %s97, 1
        %s214 = smul.addr %s213, 64
        %s215 = scalar_lea.vmem [#allocation9], %s214
        %v216 = vld [vmem:[%s185] sm:$0xff]
        %v217 = vld [vmem:[%s185 + $0x8] sm:$0xff]
        %v218 = vld [vmem:[%s185 + $0x10] sm:$0xff]
        %v219 = vld [vmem:[%s185 + $0x18] sm:$0xff]
        %v220 = vld [vmem:[%s185 + $0x20] sm:$0xff]
        %v221 = vld [vmem:[%s185 + $0x28] sm:$0xff]
        %v222 = vld [vmem:[%s185 + $0x30] sm:$0xff]
        %v223 = vld [vmem:[%s185 + $0x38] sm:$0xff]
        %vm224 = vcmask 261120
        %225 = vst.msk [vmem:[#allocation2] sm:$0xff] %vm224, 0.0
        %vm226 = vcmask 254976
        %227 = vst.msk [vmem:[#allocation2 + $0x8] sm:$0x3] %vm226, 0.0
        %s228 = scalar_lea.vmem [#allocation2], 144
        %229 = vst.msk [vmem:[%s228] sm:$0xff] %vm224, 0.0
        %230 = vst.msk [vmem:[%s228 + $0x8] sm:$0x3] %vm226, 0.0
        %s231 = scalar_lea.vmem [#allocation2], 16
        %vm232 = vcmask 253952
        %233 = vst.msk [vmem:[%s231] sm:$0x1] %vm232, 0.0
        %234 = vst.msk [vmem:[%s231 + $0x10] sm:$0x1] %vm232, 0.0
        %235 = vst.msk [vmem:[%s231 + $0x20] sm:$0x1] %vm232, 0.0
        %236 = vst.msk [vmem:[%s231 + $0x30] sm:$0x1] %vm232, 0.0
        %237 = vst.msk [vmem:[%s231 + $0x40] sm:$0x1] %vm232, 0.0
        %238 = vst.msk [vmem:[%s231 + $0x50] sm:$0x1] %vm232, 0.0
        %239 = vst.msk [vmem:[%s231 + $0x60] sm:$0x1] %vm232, 0.0
        %240 = vst.msk [vmem:[%s231 + $0x70] sm:$0x1] %vm232, 0.0
        %241 = vst.msk [vmem:[%s231 + $0x9] sm:$0x1] %vm232, 0.0
        %242 = vst.msk [vmem:[%s231 + $0x19] sm:$0x1] %vm232, 0.0
        %243 = vst.msk [vmem:[%s231 + $0x29] sm:$0x1] %vm232, 0.0
        %244 = vst.msk [vmem:[%s231 + $0x39] sm:$0x1] %vm232, 0.0
        %245 = vst.msk [vmem:[%s231 + $0x49] sm:$0x1] %vm232, 0.0
        %246 = vst.msk [vmem:[%s231 + $0x59] sm:$0x1] %vm232, 0.0
        %247 = vst.msk [vmem:[%s231 + $0x69] sm:$0x1] %vm232, 0.0
        %248 = vst.msk [vmem:[%s231 + $0x79] sm:$0x1] %vm232, 0.0
        %249 = vst.msk [vmem:[%s231 + $0x1] sm:$0xff] %vm224, %v216
        %250 = vst.msk [vmem:[%s231 + $0x11] sm:$0xff] %vm224, %v217
        %251 = vst.msk [vmem:[%s231 + $0x21] sm:$0xff] %vm224, %v218
        %252 = vst.msk [vmem:[%s231 + $0x31] sm:$0xff] %vm224, %v219
        %253 = vst.msk [vmem:[%s231 + $0x41] sm:$0xff] %vm224, %v220
        %254 = vst.msk [vmem:[%s231 + $0x51] sm:$0xff] %vm224, %v221
        %255 = vst.msk [vmem:[%s231 + $0x61] sm:$0xff] %vm224, %v222
        %256 = vst.msk [vmem:[%s231 + $0x71] sm:$0xff] %vm224, %v223
        %v257 = vld [vmem:[#allocation2] sm:$0xff]
        %v258 = vld [vmem:[#allocation2 + $0x8] sm:$0x3]
        %v259 = vld [vmem:[#allocation2 + $0x10] sm:$0xff]
        %v260 = vld [vmem:[#allocation2 + $0x18] sm:$0x3]
        %v261 = vld [vmem:[#allocation2 + $0x20] sm:$0xff]
        %v262 = vld [vmem:[#allocation2 + $0x28] sm:$0x3]
        %v263 = vld [vmem:[#allocation2 + $0x30] sm:$0xff]
        %v264 = vld [vmem:[#allocation2 + $0x38] sm:$0x3]
        %v265 = vld [vmem:[#allocation2 + $0x40] sm:$0xff]
        %v266 = vld [vmem:[#allocation2 + $0x48] sm:$0x3]
        %v267 = vld [vmem:[#allocation2 + $0x50] sm:$0xff]
        %v268 = vld [vmem:[#allocation2 + $0x58] sm:$0x3]
        %v269 = vld [vmem:[#allocation2 + $0x60] sm:$0xff]
        %v270 = vld [vmem:[#allocation2 + $0x68] sm:$0x3]
        %v271 = vld [vmem:[#allocation2 + $0x70] sm:$0xff]
        %v272 = vld [vmem:[#allocation2 + $0x78] sm:$0x3]
        %v273 = vld [vmem:[#allocation2 + $0x80] sm:$0xff]
        %v274 = vld [vmem:[#allocation2 + $0x88] sm:$0x3]
        %v275 = vld [vmem:[#allocation2 + $0x90] sm:$0xff]
        %v276 = vld [vmem:[#allocation2 + $0x98] sm:$0x3]
        %v277 = vld [vmem:[#allocation6] sm:$0x7]
        %v278 = vld [vmem:[#allocation6 + $0x4] sm:$0x7]
        %v279 = vld [vmem:[#allocation6 + $0x8] sm:$0x7]
        %v280 = vlaneseq
        %v281 = vshrl.u32 %v280, 7
        %v282 = vsub.s32 0, %v281
        %v283 = vrot.slane %v277, %v282
        %v284 = vmul.f32 %v257, %v283
        %v285 = vmul.f32 %v259, %v283
        %v286 = vmul.f32 %v261, %v283
        %v287 = vmul.f32 %v263, %v283
        %v288 = vmul.f32 %v265, %v283
        %v289 = vmul.f32 %v267, %v283
        %v290 = vmul.f32 %v269, %v283
        %v291 = vmul.f32 %v271, %v283
        %v292 = vadd.f32 %v284, 0.0
        %v293 = vadd.f32 %v285, 0.0
        %v294 = vadd.f32 %v286, 0.0
        %v295 = vadd.f32 %v287, 0.0
        %v296 = vadd.f32 %v288, 0.0
        %v297 = vadd.f32 %v289, 0.0
        %v298 = vadd.f32 %v290, 0.0
        %v299 = vadd.f32 %v291, 0.0
        %v300 = vlaneseq
        %v301 = vshrl.u32 %v300, 7
        %v302 = vsub.s32 1, %v301
        %v303 = vrot.slane %v277, %v302
        %v304 = vmul.f32 %v257, %v303
        %v305 = vmul.f32 %v258, %v303
        %v306 = vmul.f32 %v259, %v303
        %v307 = vmul.f32 %v260, %v303
        %v308 = vmul.f32 %v261, %v303
        %v309 = vmul.f32 %v262, %v303
        %v310 = vmul.f32 %v263, %v303
        %v311 = vmul.f32 %v264, %v303
        %v312 = vmul.f32 %v265, %v303
        %v313 = vmul.f32 %v266, %v303
        %v314 = vmul.f32 %v267, %v303
        %v315 = vmul.f32 %v268, %v303
        %v316 = vmul.f32 %v269, %v303
        %v317 = vmul.f32 %v270, %v303
        %v318 = vmul.f32 %v271, %v303
        %v319 = vmul.f32 %v272, %v303
        %vm336 = vcmask 1046528
        %v337 = vrot.slane %v304, 1
        %v338 = vrot.slane %v305, 1
        %v339 = vsel %vm336, %v337, %v338
        %v340 = vrot.slane %v306, 1
        %v341 = vrot.slane %v307, 1
        %v342 = vsel %vm336, %v340, %v341
        %v343 = vrot.slane %v308, 1
        %v344 = vrot.slane %v309, 1
        %v345 = vsel %vm336, %v343, %v344
        %v346 = vrot.slane %v310, 1
        %v347 = vrot.slane %v311, 1
        %v348 = vsel %vm336, %v346, %v347
        %v349 = vrot.slane %v312, 1
        %v350 = vrot.slane %v313, 1
        %v351 = vsel %vm336, %v349, %v350
        %v352 = vrot.slane %v314, 1
        %v353 = vrot.slane %v315, 1
        %v354 = vsel %vm336, %v352, %v353
        %v355 = vrot.slane %v316, 1
        %v356 = vrot.slane %v317, 1
        %v357 = vsel %vm336, %v355, %v356
        %v358 = vrot.slane %v318, 1
        %v359 = vrot.slane %v319, 1
        %v360 = vsel %vm336, %v358, %v359
        %v369 = vadd.f32 %v292, %v339
        %v370 = vadd.f32 %v293, %v342
        %v371 = vadd.f32 %v294, %v345
        %v372 = vadd.f32 %v295, %v348
        %v373 = vadd.f32 %v296, %v351
        %v374 = vadd.f32 %v297, %v354
        %v375 = vadd.f32 %v298, %v357
        %v376 = vadd.f32 %v299, %v360
        %v377 = vlaneseq
        %v378 = vshrl.u32 %v377, 7
        %v379 = vsub.s32 2, %v378
        %v380 = vrot.slane %v277, %v379
        %v381 = vmul.f32 %v257, %v380
        %v382 = vmul.f32 %v258, %v380
        %v383 = vmul.f32 %v259, %v380
        %v384 = vmul.f32 %v260, %v380
        %v385 = vmul.f32 %v261, %v380
        %v386 = vmul.f32 %v262, %v380
        %v387 = vmul.f32 %v263, %v380
        %v388 = vmul.f32 %v264, %v380
        %v389 = vmul.f32 %v265, %v380
        %v390 = vmul.f32 %v266, %v380
        %v391 = vmul.f32 %v267, %v380
        %v392 = vmul.f32 %v268, %v380
        %v393 = vmul.f32 %v269, %v380
        %v394 = vmul.f32 %v270, %v380
        %v395 = vmul.f32 %v271, %v380
        %v396 = vmul.f32 %v272, %v380
        %vm413 = vcmask 1045504
        %v414 = vrot.slane %v381, 2
        %v415 = vrot.slane %v382, 2
        %v416 = vsel %vm413, %v414, %v415
        %v417 = vrot.slane %v383, 2
        %v418 = vrot.slane %v384, 2
        %v419 = vsel %vm413, %v417, %v418
        %v420 = vrot.slane %v385, 2
        %v421 = vrot.slane %v386, 2
        %v422 = vsel %vm413, %v420, %v421
        %v423 = vrot.slane %v387, 2
        %v424 = vrot.slane %v388, 2
        %v425 = vsel %vm413, %v423, %v424
        %v426 = vrot.slane %v389, 2
        %v427 = vrot.slane %v390, 2
        %v428 = vsel %vm413, %v426, %v427
        %v429 = vrot.slane %v391, 2
        %v430 = vrot.slane %v392, 2
        %v431 = vsel %vm413, %v429, %v430
        %v432 = vrot.slane %v393, 2
        %v433 = vrot.slane %v394, 2
        %v434 = vsel %vm413, %v432, %v433
        %v435 = vrot.slane %v395, 2
        %v436 = vrot.slane %v396, 2
        %v437 = vsel %vm413, %v435, %v436
        %v446 = vadd.f32 %v369, %v416
        %v447 = vadd.f32 %v370, %v419
        %v448 = vadd.f32 %v371, %v422
        %v449 = vadd.f32 %v372, %v425
        %v450 = vadd.f32 %v373, %v428
        %v451 = vadd.f32 %v374, %v431
        %v452 = vadd.f32 %v375, %v434
        %v453 = vadd.f32 %v376, %v437
        %v454 = vlaneseq
        %v455 = vshrl.u32 %v454, 7
        %v456 = vsub.s32 0, %v455
        %v457 = vrot.slane %v278, %v456
        %v458 = vmul.f32 %v259, %v457
        %v459 = vmul.f32 %v261, %v457
        %v460 = vmul.f32 %v263, %v457
        %v461 = vmul.f32 %v265, %v457
        %v462 = vmul.f32 %v267, %v457
        %v463 = vmul.f32 %v269, %v457
        %v464 = vmul.f32 %v271, %v457
        %v465 = vmul.f32 %v273, %v457
        %v466 = vadd.f32 %v446, %v458
        %v467 = vadd.f32 %v447, %v459
        %v468 = vadd.f32 %v448, %v460
        %v469 = vadd.f32 %v449, %v461
        %v470 = vadd.f32 %v450, %v462
        %v471 = vadd.f32 %v451, %v463
        %v472 = vadd.f32 %v452, %v464
        %v473 = vadd.f32 %v453, %v465
        %v474 = vlaneseq
        %v475 = vshrl.u32 %v474, 7
        %v476 = vsub.s32 1, %v475
        %v477 = vrot.slane %v278, %v476
        %v478 = vmul.f32 %v259, %v477
        %v479 = vmul.f32 %v260, %v477
        %v480 = vmul.f32 %v261, %v477
        %v481 = vmul.f32 %v262, %v477
        %v482 = vmul.f32 %v263, %v477
        %v483 = vmul.f32 %v264, %v477
        %v484 = vmul.f32 %v265, %v477
        %v485 = vmul.f32 %v266, %v477
        %v486 = vmul.f32 %v267, %v477
        %v487 = vmul.f32 %v268, %v477
        %v488 = vmul.f32 %v269, %v477
        %v489 = vmul.f32 %v270, %v477
        %v490 = vmul.f32 %v271, %v477
        %v491 = vmul.f32 %v272, %v477
        %v492 = vmul.f32 %v273, %v477
        %v493 = vmul.f32 %v274, %v477
        %v510 = vrot.slane %v478, 1
        %v511 = vrot.slane %v479, 1
        %v512 = vsel %vm336, %v510, %v511
        %v513 = vrot.slane %v480, 1
        %v514 = vrot.slane %v481, 1
        %v515 = vsel %vm336, %v513, %v514
        %v516 = vrot.slane %v482, 1
        %v517 = vrot.slane %v483, 1
        %v518 = vsel %vm336, %v516, %v517
        %v519 = vrot.slane %v484, 1
        %v520 = vrot.slane %v485, 1
        %v521 = vsel %vm336, %v519, %v520
        %v522 = vrot.slane %v486, 1
        %v523 = vrot.slane %v487, 1
        %v524 = vsel %vm336, %v522, %v523
        %v525 = vrot.slane %v488, 1
        %v526 = vrot.slane %v489, 1
        %v527 = vsel %vm336, %v525, %v526
        %v528 = vrot.slane %v490, 1
        %v529 = vrot.slane %v491, 1
        %v530 = vsel %vm336, %v528, %v529
        %v531 = vrot.slane %v492, 1
        %v532 = vrot.slane %v493, 1
        %v533 = vsel %vm336, %v531, %v532
        %v542 = vadd.f32 %v466, %v512
        %v543 = vadd.f32 %v467, %v515
        %v544 = vadd.f32 %v468, %v518
        %v545 = vadd.f32 %v469, %v521
        %v546 = vadd.f32 %v470, %v524
        %v547 = vadd.f32 %v471, %v527
        %v548 = vadd.f32 %v472, %v530
        %v549 = vadd.f32 %v473, %v533
        %v550 = vlaneseq
        %v551 = vshrl.u32 %v550, 7
        %v552 = vsub.s32 2, %v551
        %v553 = vrot.slane %v278, %v552
        %v554 = vmul.f32 %v259, %v553
        %v555 = vmul.f32 %v260, %v553
        %v556 = vmul.f32 %v261, %v553
        %v557 = vmul.f32 %v262, %v553
        %v558 = vmul.f32 %v263, %v553
        %v559 = vmul.f32 %v264, %v553
        %v560 = vmul.f32 %v265, %v553
        %v561 = vmul.f32 %v266, %v553
        %v562 = vmul.f32 %v267, %v553
        %v563 = vmul.f32 %v268, %v553
        %v564 = vmul.f32 %v269, %v553
        %v565 = vmul.f32 %v270, %v553
        %v566 = vmul.f32 %v271, %v553
        %v567 = vmul.f32 %v272, %v553
        %v568 = vmul.f32 %v273, %v553
        %v569 = vmul.f32 %v274, %v553
        %v586 = vrot.slane %v554, 2
        %v587 = vrot.slane %v555, 2
        %v588 = vsel %vm413, %v586, %v587
        %v589 = vrot.slane %v556, 2
        %v590 = vrot.slane %v557, 2
        %v591 = vsel %vm413, %v589, %v590
        %v592 = vrot.slane %v558, 2
        %v593 = vrot.slane %v559, 2
        %v594 = vsel %vm413, %v592, %v593
        %v595 = vrot.slane %v560, 2
        %v596 = vrot.slane %v561, 2
        %v597 = vsel %vm413, %v595, %v596
        %v598 = vrot.slane %v562, 2
        %v599 = vrot.slane %v563, 2
        %v600 = vsel %vm413, %v598, %v599
        %v601 = vrot.slane %v564, 2
        %v602 = vrot.slane %v565, 2
        %v603 = vsel %vm413, %v601, %v602
        %v604 = vrot.slane %v566, 2
        %v605 = vrot.slane %v567, 2
        %v606 = vsel %vm413, %v604, %v605
        %v607 = vrot.slane %v568, 2
        %v608 = vrot.slane %v569, 2
        %v609 = vsel %vm413, %v607, %v608
        %v618 = vadd.f32 %v542, %v588
        %v619 = vadd.f32 %v543, %v591
        %v620 = vadd.f32 %v544, %v594
        %v621 = vadd.f32 %v545, %v597
        %v622 = vadd.f32 %v546, %v600
        %v623 = vadd.f32 %v547, %v603
        %v624 = vadd.f32 %v548, %v606
        %v625 = vadd.f32 %v549, %v609
        %v626 = vlaneseq
        %v627 = vshrl.u32 %v626, 7
        %v628 = vsub.s32 0, %v627
        %v629 = vrot.slane %v279, %v628
        %v630 = vmul.f32 %v261, %v629
        %v631 = vmul.f32 %v263, %v629
        %v632 = vmul.f32 %v265, %v629
        %v633 = vmul.f32 %v267, %v629
        %v634 = vmul.f32 %v269, %v629
        %v635 = vmul.f32 %v271, %v629
        %v636 = vmul.f32 %v273, %v629
        %v637 = vmul.f32 %v275, %v629
        %v638 = vadd.f32 %v618, %v630
        %v639 = vadd.f32 %v619, %v631
        %v640 = vadd.f32 %v620, %v632
        %v641 = vadd.f32 %v621, %v633
        %v642 = vadd.f32 %v622, %v634
        %v643 = vadd.f32 %v623, %v635
        %v644 = vadd.f32 %v624, %v636
        %v645 = vadd.f32 %v625, %v637
        %v646 = vlaneseq
        %v647 = vshrl.u32 %v646, 7
        %v648 = vsub.s32 1, %v647
        %v649 = vrot.slane %v279, %v648
        %v650 = vmul.f32 %v261, %v649
        %v651 = vmul.f32 %v262, %v649
        %v652 = vmul.f32 %v263, %v649
        %v653 = vmul.f32 %v264, %v649
        %v654 = vmul.f32 %v265, %v649
        %v655 = vmul.f32 %v266, %v649
        %v656 = vmul.f32 %v267, %v649
        %v657 = vmul.f32 %v268, %v649
        %v658 = vmul.f32 %v269, %v649
        %v659 = vmul.f32 %v270, %v649
        %v660 = vmul.f32 %v271, %v649
        %v661 = vmul.f32 %v272, %v649
        %v662 = vmul.f32 %v273, %v649
        %v663 = vmul.f32 %v274, %v649
        %v664 = vmul.f32 %v275, %v649
        %v665 = vmul.f32 %v276, %v649
        %v682 = vrot.slane %v650, 1
        %v683 = vrot.slane %v651, 1
        %v684 = vsel %vm336, %v682, %v683
        %v685 = vrot.slane %v652, 1
        %v686 = vrot.slane %v653, 1
        %v687 = vsel %vm336, %v685, %v686
        %v688 = vrot.slane %v654, 1
        %v689 = vrot.slane %v655, 1
        %v690 = vsel %vm336, %v688, %v689
        %v691 = vrot.slane %v656, 1
        %v692 = vrot.slane %v657, 1
        %v693 = vsel %vm336, %v691, %v692
        %v694 = vrot.slane %v658, 1
        %v695 = vrot.slane %v659, 1
        %v696 = vsel %vm336, %v694, %v695
        %v697 = vrot.slane %v660, 1
        %v698 = vrot.slane %v661, 1
        %v699 = vsel %vm336, %v697, %v698
        %v700 = vrot.slane %v662, 1
        %v701 = vrot.slane %v663, 1
        %v702 = vsel %vm336, %v700, %v701
        %v703 = vrot.slane %v664, 1
        %v704 = vrot.slane %v665, 1
        %v705 = vsel %vm336, %v703, %v704
        %v714 = vadd.f32 %v638, %v684
        %v715 = vadd.f32 %v639, %v687
        %v716 = vadd.f32 %v640, %v690
        %v717 = vadd.f32 %v641, %v693
        %v718 = vadd.f32 %v642, %v696
        %v719 = vadd.f32 %v643, %v699
        %v720 = vadd.f32 %v644, %v702
        %v721 = vadd.f32 %v645, %v705
        %v722 = vlaneseq
        %v723 = vshrl.u32 %v722, 7
        %v724 = vsub.s32 2, %v723
        %v725 = vrot.slane %v279, %v724
        %v726 = vmul.f32 %v261, %v725
        %v727 = vmul.f32 %v262, %v725
        %v728 = vmul.f32 %v263, %v725
        %v729 = vmul.f32 %v264, %v725
        %v730 = vmul.f32 %v265, %v725
        %v731 = vmul.f32 %v266, %v725
        %v732 = vmul.f32 %v267, %v725
        %v733 = vmul.f32 %v268, %v725
        %v734 = vmul.f32 %v269, %v725
        %v735 = vmul.f32 %v270, %v725
        %v736 = vmul.f32 %v271, %v725
        %v737 = vmul.f32 %v272, %v725
        %v738 = vmul.f32 %v273, %v725
        %v739 = vmul.f32 %v274, %v725
        %v740 = vmul.f32 %v275, %v725
        %v741 = vmul.f32 %v276, %v725
        %v758 = vrot.slane %v726, 2
        %v759 = vrot.slane %v727, 2
        %v760 = vsel %vm413, %v758, %v759
        %v761 = vrot.slane %v728, 2
        %v762 = vrot.slane %v729, 2
        %v763 = vsel %vm413, %v761, %v762
        %v764 = vrot.slane %v730, 2
        %v765 = vrot.slane %v731, 2
        %v766 = vsel %vm413, %v764, %v765
        %v767 = vrot.slane %v732, 2
        %v768 = vrot.slane %v733, 2
        %v769 = vsel %vm413, %v767, %v768
        %v770 = vrot.slane %v734, 2
        %v771 = vrot.slane %v735, 2
        %v772 = vsel %vm413, %v770, %v771
        %v773 = vrot.slane %v736, 2
        %v774 = vrot.slane %v737, 2
        %v775 = vsel %vm413, %v773, %v774
        %v776 = vrot.slane %v738, 2
        %v777 = vrot.slane %v739, 2
        %v778 = vsel %vm413, %v776, %v777
        %v779 = vrot.slane %v740, 2
        %v780 = vrot.slane %v741, 2
        %v781 = vsel %vm413, %v779, %v780
        %v790 = vadd.f32 %v714, %v760
        %v791 = vadd.f32 %v715, %v763
        %v792 = vadd.f32 %v716, %v766
        %v793 = vadd.f32 %v717, %v769
        %v794 = vadd.f32 %v718, %v772
        %v795 = vadd.f32 %v719, %v775
        %v796 = vadd.f32 %v720, %v778
        %v797 = vadd.f32 %v721, %v781
        %v798 = vld [vmem:[#allocation8] sm:$0x1]
        %v800 = vlaneseq
        %v801 = vshrl.u32 %v800, 7
        %v802 = vsub.s32 0, %v801
        %v803 = vrot.slane %v798, %v802
        %v805 = vadd.f32 %v790, %v803
        %v806 = vadd.f32 %v791, %v803
        %v807 = vadd.f32 %v792, %v803
        %v808 = vadd.f32 %v793, %v803
        %v809 = vadd.f32 %v794, %v803
        %v810 = vadd.f32 %v795, %v803
        %v811 = vadd.f32 %v796, %v803
        %v812 = vadd.f32 %v797, %v803
        %v813 = vadd.f32 %v805, %v216
        %v814 = vadd.f32 %v806, %v217
        %v815 = vadd.f32 %v807, %v218
        %v816 = vadd.f32 %v808, %v219
        %v817 = vadd.f32 %v809, %v220
        %v818 = vadd.f32 %v810, %v221
        %v819 = vadd.f32 %v811, %v222
        %v820 = vadd.f32 %v812, %v223
        %821 = vst.msk [vmem:[%s215] sm:$0xff] %vm224, %v813
        %822 = vst.msk [vmem:[%s215 + $0x8] sm:$0xff] %vm224, %v814
        %823 = vst.msk [vmem:[%s215 + $0x10] sm:$0xff] %vm224, %v815
        %824 = vst.msk [vmem:[%s215 + $0x18] sm:$0xff] %vm224, %v816
        %825 = vst.msk [vmem:[%s215 + $0x20] sm:$0xff] %vm224, %v817
        %826 = vst.msk [vmem:[%s215 + $0x28] sm:$0xff] %vm224, %v818
        %827 = vst.msk [vmem:[%s215 + $0x30] sm:$0xff] %vm224, %v819
        %828 = vst.msk [vmem:[%s215 + $0x38] sm:$0xff] %vm224, %v820
        %s829 = sand.u32 %s97, 1
        %s830 = scalar_lea.sflag [#allocation5], %s829
        %s831 = sand.u32 %s97, 1
        %s832 = smul.addr %s831, 64
        %s833 = scalar_lea.vmem [#allocation9], %s832
        // Predicated region
        $region45: #{mhca_encoder.14} parent=31 // pred_check
          %p834 = pneg %p107
        $region46: #{mhca_encoder.14} parent=31 // pred_check_branch
          %836 = sbr.rel (%p834) target = $region48
        $region47: #{mhca_encoder.14} parent=31 // pred_region
          %s838 = ssub.s32 1024, 1024
          %839 = vsyncadd %s830, %s838
          %s840 = smul.addr %s21, 8
          %s841 = smul.addr %s840, 128
          %s842 = scalar_lea.hbm %s3, %s841
          %s843 = sshll.u32 %s833, 4
          %s844 = int_to_ptr.vmem [resolvable:$true] %s843
          %849 = dma.vmem_to_hbm [thread:$0]  %s844, 1024, %s842, %s830, 128, 128, 8
        $region48: #{mhca_encoder.14} parent=31 // pred_fallthru
          _
      $region32: #{mhca_encoder.14} parent=5 // pred_fallthru
        _
      %p850 = scmp.le.s32.totalorder 2, %s16
      // Predicated region
      $region49: #{mhca_encoder.14} parent=5 // pred_check
        %p851 = pneg %p850
      $region50: #{mhca_encoder.14} parent=5 // pred_check_branch
        %853 = sbr.rel (%p851) target = $region52
      $region51: #{mhca_encoder.14} parent=5 // pred_region
        %s854 = ssub.s32 %s16, 2
        // Predicated region
        $region53: #{mhca_encoder.14} parent=51 // pred_check
          %p855 = pneg %p113
        $region54: #{mhca_encoder.14} parent=51 // pred_check_branch
          %857 = sbr.rel (%p855) target = $region56
        $region55: #{mhca_encoder.14} parent=51 // pred_region
          %s858 = sand.u32 %s98, 1
          %s859 = scalar_lea.sflag [#allocation5], %s858
          %s860 = sand.u32 %s98, 1
          %s861 = smul.addr %s860, 64
          %s862 = scalar_lea.vmem [#allocation9], %s861
          %863 = dma.done %s859, 1024
        $region56: #{mhca_encoder.14} parent=51 // pred_fallthru
          _
      $region52: #{mhca_encoder.14} parent=5 // pred_fallthru
        _
    $region6: #{mhca_encoder.14} parent=1 // loop_footer
      %s20 = sadd.s32 1, %s16
    $region7: #{mhca_encoder.14} parent=1 // loop_footer_branch
      %15 = sbr.rel target = $region3
    $region8: #{mhca_encoder.14} parent=1 // loop_exit
      _
    %864 = vsyncpa [#allocation4], 1
    %s865 = scalar_lea.sflag [#allocation4], 1
    %866 = vsyncpa %s865, 1
    %867 = vsyncpa [#allocation7], 1
    %868 = vsyncpa [#allocation5], 1
    %s869 = scalar_lea.sflag [#allocation5], 1
    %870 = vsyncpa %s869, 1

// kernel: mhca_encoder.17
$region0: #{mhca_encoder.17}
  #allocation0 [shape = 'u32[]', space=smem, size = 0x4, offset = 0x4, fixed_abs, tag = 'smem constant byte address 0x4 - core index']
  #allocation1 [shape = 'u32[144,128]{1,0:T(1,128)}', space=vmem, size = 0x12000, scoped, tag = 'internal scratch']
  %s0 = inlined_call_operand.hbm [shape: f32[2,64,96], index: 0, kind: input, shape index: {}]
  %s1 = inlined_call_operand.hbm [shape: f32[2,64,32], index: 1, kind: input, shape index: {}]
  %s2 = inlined_call_operand.hbm [shape: f32[32,32], index: 2, kind: input, shape index: {}]
  %s3 = inlined_call_operand.hbm [shape: f32[2,64,32], index: 3, kind: output, shape index: {}]
  %s4 = sld [smem:[#allocation0]]
  $region57: #{mhca_encoder.17} parent=0
    _
  %s6 = ssub.s32 1, %s4
  %s7 = scalar_select 0, %s6, %s4
  $region1: #{mhca_encoder.17} parent=0
    #allocation2 [shape = 'u8[65536]{0}', space=vmem, size = 0x10000, scoped, tag = 'input window, operand 0']
    #allocation3 [shape = 's32[2]{0}', space=sflag, size = 0x8, scoped, tag = 'scoped memory for mhca_encoder.17']
    #allocation4 [shape = 's32[2]{0}', space=sflag, size = 0x8, scoped, tag = 'scoped memory for mhca_encoder.17']
    #allocation5 [shape = 'u8[65536]{0}', space=vmem, size = 0x10000, scoped, tag = 'input window, operand 1']
    #allocation6 [shape = 's32[2]{0}', space=sflag, size = 0x8, scoped, tag = 'scoped memory for mhca_encoder.17']
    #allocation7 [shape = 'u8[16384]{0}', space=vmem, size = 0x4000, scoped, tag = 'input window, operand 2, single buffered']
    #allocation8 [shape = 'u8[65536]{0}', space=vmem, size = 0x10000, scoped, tag = 'output window, operand 0']
    %8 = vsyncpa [#allocation3], 0
    %s9 = scalar_lea.sflag [#allocation3], 1
    %10 = vsyncpa %s9, 0
    %11 = vsyncpa [#allocation6], 0
    %s12 = scalar_lea.sflag [#allocation6], 1
    %13 = vsyncpa %s12, 0
    %14 = vsyncpa [#allocation4], 0
    %s15 = scalar_lea.sflag [#allocation4], 1
    %16 = vsyncpa %s15, 0
    loop: start=0, step=1, limit=4
    $region2: #{mhca_encoder.17} parent=1 // loop_pre_header
      _
    $region3: #{mhca_encoder.17} parent=1 // loop_header
      %s18 = sphi 0, %s22
      %p19 = scmp.ge.s32.totalorder %s18, 4
      %s28 = sphi 0, %s30
      %s31 = sphi 0, %s28
      %s32 = sphi 0, %s31
      %s48 = sphi 0, %s32
      %s54 = sphi 0, %s56
      %s57 = sphi 0, %s54
      %s58 = sphi 0, %s57
      %s74 = sphi 0, %s58
      %s78 = sphi 0, %s78
      %s80 = sphi 0, %s78
      %s81 = sphi 0, %s80
      %s95 = sphi 0, %s81
      %s101 = sphi 0, %s103
      %s104 = sphi 0, %s101
      %s105 = sphi 0, %s104
      %s121 = sphi 0, %s105
    $region4: #{mhca_encoder.17} parent=1 // loop_header_branch
      %21 = sbr.rel (%p19) target = $region8
    $region5: #{mhca_encoder.17} parent=1 // loop_body
      %s23 = ssub.s32 %s18, 1
      %s24 = ssub.s32 %s18, 2
      %s25 = sadd.s32 %s18, 1
      %s26 = ssub.s32 %s18, %s25
      %p27 = scmp.eq.s32.totalorder %s26, 0
      %s29 = sadd.s32 %s28, 1
      %s30 = scalar_select %p27, %s28, %s29
      %p33 = pneg %p27
      %p34 = scmp.eq.s32.totalorder %s18, 1
      %p35 = por %p33, %p34
      %p36 = scmp.ne.s32.totalorder %s28, %s31
      %p37 = scmp.eq.s32.totalorder %s18, 0
      %p38 = por %p36, %p37
      %p39 = scmp.ne.s32.totalorder %s28, %s31
      %p40 = scmp.eq.s32.totalorder %s23, 1
      %p41 = por %p39, %p40
      %p42 = scmp.ne.s32.totalorder %s31, %s32
      %p43 = scmp.eq.s32.totalorder %s23, 0
      %p44 = por %p42, %p43
      %p45 = scmp.ne.s32.totalorder %s31, %s32
      %p46 = scmp.eq.s32.totalorder %s24, 1
      %p47 = por %p45, %p46
      %p49 = scmp.ne.s32.totalorder %s32, %s48
      %p50 = scmp.eq.s32.totalorder %s24, 0
      %p51 = por %p49, %p50
      %s52 = ssub.s32 %s18, %s25
      %p53 = scmp.eq.s32.totalorder %s52, 0
      %s55 = sadd.s32 %s54, 1
      %s56 = scalar_select %p53, %s54, %s55
      %p59 = pneg %p53
      %p60 = scmp.eq.s32.totalorder %s18, 1
      %p61 = por %p59, %p60
      %p62 = scmp.ne.s32.totalorder %s54, %s57
      %p63 = scmp.eq.s32.totalorder %s18, 0
      %p64 = por %p62, %p63
      %p65 = scmp.ne.s32.totalorder %s54, %s57
      %p66 = scmp.eq.s32.totalorder %s23, 1
      %p67 = por %p65, %p66
      %p68 = scmp.ne.s32.totalorder %s57, %s58
      %p69 = scmp.eq.s32.totalorder %s23, 0
      %p70 = por %p68, %p69
      %p71 = scmp.ne.s32.totalorder %s57, %s58
      %p72 = scmp.eq.s32.totalorder %s24, 1
      %p73 = por %p71, %p72
      %p75 = scmp.ne.s32.totalorder %s58, %s74
      %p76 = scmp.eq.s32.totalorder %s24, 0
      %p77 = por %p75, %p76
      %s79 = sadd.s32 %s78, 1
      %p82 = scmp.eq.s32.totalorder %s18, 1
      %p83 = scmp.ne.s32.totalorder %s78, %s80
      %p84 = scmp.eq.s32.totalorder %s18, 0
      %p85 = por %p83, %p84
      %p86 = scmp.ne.s32.totalorder %s78, %s80
      %p87 = scmp.eq.s32.totalorder %s23, 1
      %p88 = por %p86, %p87
      %p89 = scmp.ne.s32.totalorder %s80, %s81
      %p90 = scmp.eq.s32.totalorder %s23, 0
      %p91 = por %p89, %p90
      %p92 = scmp.ne.s32.totalorder %s80, %s81
      %p93 = scmp.eq.s32.totalorder %s24, 1
      %p94 = por %p92, %p93
      %p96 = scmp.ne.s32.totalorder %s81, %s95
      %p97 = scmp.eq.s32.totalorder %s24, 0
      %p98 = por %p96, %p97
      %s99 = ssub.s32 %s18, %s25
      %p100 = scmp.eq.s32.totalorder %s99, 0
      %s102 = sadd.s32 %s101, 1
      %s103 = scalar_select %p100, %s101, %s102
      %p106 = pneg %p100
      %p107 = scmp.eq.s32.totalorder %s18, 1
      %p108 = por %p106, %p107
      %p109 = scmp.ne.s32.totalorder %s101, %s104
      %p110 = scmp.eq.s32.totalorder %s18, 0
      %p111 = por %p109, %p110
      %p112 = scmp.ne.s32.totalorder %s101, %s104
      %p113 = scmp.eq.s32.totalorder %s23, 1
      %p114 = por %p112, %p113
      %p115 = scmp.ne.s32.totalorder %s104, %s105
      %p116 = scmp.eq.s32.totalorder %s23, 0
      %p117 = por %p115, %p116
      %p118 = scmp.ne.s32.totalorder %s104, %s105
      %p119 = scmp.eq.s32.totalorder %s24, 1
      %p120 = por %p118, %p119
      %p122 = scmp.ne.s32.totalorder %s105, %s121
      %p123 = scmp.eq.s32.totalorder %s24, 0
      %p124 = por %p122, %p123
      %p125 = scmp.le.s32.totalorder 1, %s18
      %p126 = scmp.lt.s32.totalorder %s18, 3
      %p127 = pnand %p125, %p126
      %p128 = pneg %p127
      // Predicated region
      $region9: #{mhca_encoder.17} parent=5 // pred_check
        _
      $region10: #{mhca_encoder.17} parent=5 // pred_check_branch
        %130 = sbr.rel (%p127) target = $region12
      $region11: #{mhca_encoder.17} parent=5 // pred_region
        %s131 = ssub.s32 %s18, 1
        // Predicated region
        $region13: #{mhca_encoder.17} parent=11 // pred_check
          %p132 = pneg %p91
        $region14: #{mhca_encoder.17} parent=11 // pred_check_branch
          %134 = sbr.rel (%p132) target = $region16
        $region15: #{mhca_encoder.17} parent=11 // pred_region
          %s136 = ssub.s32 512, 512
          %137 = vsyncadd [#allocation6], %s136
          %s138 = sshll.u32 [#allocation7], 4
          %s139 = int_to_ptr.vmem [resolvable:$true] %s138
          %144 = dma.hbm_to_vmem [thread:$0]  %s2, 512, %s139, [#allocation6], 128, 128, 8
        $region16: #{mhca_encoder.17} parent=11 // pred_fallthru
          _
      $region12: #{mhca_encoder.17} parent=5 // pred_fallthru
        _
      %p145 = scmp.lt.s32.totalorder %s18, 2
      // Predicated region
      $region17: #{mhca_encoder.17} parent=5 // pred_check
        %p146 = pneg %p145
      $region18: #{mhca_encoder.17} parent=5 // pred_check_branch
        %148 = sbr.rel (%p146) target = $region20
      $region19: #{mhca_encoder.17} parent=5 // pred_region
        // Predicated region
        $region21: #{mhca_encoder.17} parent=19 // pred_check
          %p149 = pneg %p38
        $region22: #{mhca_encoder.17} parent=19 // pred_check_branch
          %151 = sbr.rel (%p149) target = $region24
        $region23: #{mhca_encoder.17} parent=19 // pred_region
          %s152 = sand.u32 %s28, 1
          %s153 = scalar_lea.sflag [#allocation3], %s152
          %s154 = sand.u32 %s28, 1
          %s155 = smul.addr %s154, 64
          %s156 = scalar_lea.vmem [#allocation2], %s155
          %s158 = ssub.s32 1024, 1024
          %159 = vsyncadd %s153, %s158
          %s160 = smul.addr %s18, 8
          %s161 = smul.addr %s160, 128
          %s162 = scalar_lea.hbm %s0, %s161
          %s163 = sshll.u32 %s156, 4
          %s164 = int_to_ptr.vmem [resolvable:$true] %s163
          %169 = dma.hbm_to_vmem [thread:$0]  %s162, 1024, %s164, %s153, 128, 128, 8
        $region24: #{mhca_encoder.17} parent=19 // pred_fallthru
          _
        // Predicated region
        $region25: #{mhca_encoder.17} parent=19 // pred_check
          %p170 = pneg %p64
        $region26: #{mhca_encoder.17} parent=19 // pred_check_branch
          %172 = sbr.rel (%p170) target = $region28
        $region27: #{mhca_encoder.17} parent=19 // pred_region
          %s173 = sand.u32 %s18, 1
          %s174 = scalar_lea.sflag [#allocation6], %s173
          %s175 = sand.u32 %s54, 1
          %s176 = smul.addr %s175, 64
          %s177 = scalar_lea.vmem [#allocation5], %s176
          %s179 = ssub.s32 1024, 1024
          %180 = vsyncadd %s174, %s179
          %s181 = smul.addr %s18, 8
          %s182 = smul.addr %s181, 128
          %s183 = scalar_lea.hbm %s1, %s182
          %s184 = sshll.u32 %s177, 4
          %s185 = int_to_ptr.vmem [resolvable:$true] %s184
          %190 = dma.hbm_to_vmem [thread:$0]  %s183, 1024, %s185, %s174, 128, 128, 8
        $region28: #{mhca_encoder.17} parent=19 // pred_fallthru
          _
      $region20: #{mhca_encoder.17} parent=5 // pred_fallthru
        _
      %p191 = scmp.le.s32.totalorder 1, %s18
      %p192 = scmp.lt.s32.totalorder %s18, 3
      %p193 = pnand %p191, %p192
      %p194 = pneg %p193
      // Predicated region
      $region29: #{mhca_encoder.17} parent=5 // pred_check
        _
      $region30: #{mhca_encoder.17} parent=5 // pred_check_branch
        %196 = sbr.rel (%p193) target = $region32
      $region31: #{mhca_encoder.17} parent=5 // pred_region
        %s197 = ssub.s32 %s18, 1
        %s198 = sand.u32 %s31, 1
        %s199 = scalar_lea.sflag [#allocation3], %s198
        %s200 = sand.u32 %s31, 1
        %s201 = smul.addr %s200, 64
        %s202 = scalar_lea.vmem [#allocation2], %s201
        // Predicated region
        $region33: #{mhca_encoder.17} parent=31 // pred_check
          %p203 = pneg %p44
        $region34: #{mhca_encoder.17} parent=31 // pred_check_branch
          %205 = sbr.rel (%p203) target = $region36
        $region35: #{mhca_encoder.17} parent=31 // pred_region
          %206 = dma.done %s199, 1024
        $region36: #{mhca_encoder.17} parent=31 // pred_fallthru
          _
        %s207 = sand.u32 %s23, 1
        %s208 = scalar_lea.sflag [#allocation6], %s207
        %s209 = sand.u32 %s57, 1
        %s210 = smul.addr %s209, 64
        %s211 = scalar_lea.vmem [#allocation5], %s210
        // Predicated region
        $region37: #{mhca_encoder.17} parent=31 // pred_check
          %p212 = pneg %p70
        $region38: #{mhca_encoder.17} parent=31 // pred_check_branch
          %214 = sbr.rel (%p212) target = $region40
        $region39: #{mhca_encoder.17} parent=31 // pred_region
          %215 = dma.done %s208, 1024
        $region40: #{mhca_encoder.17} parent=31 // pred_fallthru
          _
        // Predicated region
        $region41: #{mhca_encoder.17} parent=31 // pred_check
          %p216 = pneg %p91
        $region42: #{mhca_encoder.17} parent=31 // pred_check_branch
          %218 = sbr.rel (%p216) target = $region44
        $region43: #{mhca_encoder.17} parent=31 // pred_region
          %219 = dma.done [#allocation6], 512
        $region44: #{mhca_encoder.17} parent=31 // pred_fallthru
          _
        %s220 = sand.u32 %s31, 1
        %s221 = scalar_lea.sflag [#allocation3], %s220
        %s222 = sand.u32 %s31, 1
        %s223 = smul.addr %s222, 64
        %s224 = scalar_lea.vmem [#allocation2], %s223
        %p225 = pneg %p44
        %p226 = pneg %p41
        %s227 = sand.u32 %s23, 1
        %s228 = scalar_lea.sflag [#allocation6], %s227
        %s229 = sand.u32 %s57, 1
        %s230 = smul.addr %s229, 64
        %s231 = scalar_lea.vmem [#allocation5], %s230
        %p232 = pneg %p70
        %p233 = pneg %p67
        %p234 = pneg %p91
        %p235 = pneg %p88
        %p236 = pneg %p117
        %p237 = pneg %p114
        %s238 = sand.u32 %s104, 1
        %s239 = scalar_lea.sflag [#allocation4], %s238
        %s240 = sand.u32 %s104, 1
        %s241 = smul.addr %s240, 64
        %s242 = scalar_lea.vmem [#allocation8], %s241
        %v244 = vld [vmem:[%s202] sm:$0xff]
        %v245 = vld [vmem:[%s202 + $0x8] sm:$0xff]
        %v246 = vld [vmem:[%s202 + $0x10] sm:$0xff]
        %v247 = vld [vmem:[%s202 + $0x18] sm:$0xff]
        %v248 = vld [vmem:[%s202 + $0x20] sm:$0xff]
        %v249 = vld [vmem:[%s202 + $0x28] sm:$0xff]
        %v250 = vld [vmem:[%s202 + $0x30] sm:$0xff]
        %v251 = vld [vmem:[%s202 + $0x38] sm:$0xff]
        %v252 = vld [vmem:[%s211] sm:$0xff]
        %v253 = vld [vmem:[%s211 + $0x8] sm:$0xff]
        %v254 = vld [vmem:[%s211 + $0x10] sm:$0xff]
        %v255 = vld [vmem:[%s211 + $0x18] sm:$0xff]
        %v256 = vld [vmem:[%s211 + $0x20] sm:$0xff]
        %v257 = vld [vmem:[%s211 + $0x28] sm:$0xff]
        %v258 = vld [vmem:[%s211 + $0x30] sm:$0xff]
        %v259 = vld [vmem:[%s211 + $0x38] sm:$0xff]
        %vm260 = vcmask 523520
        %v261 = vsel %vm260, %v244, -inf
        %v262 = vsel %vm260, %v245, -inf
        %v263 = vsel %vm260, %v246, -inf
        %v264 = vsel %vm260, %v247, -inf
        %v265 = vsel %vm260, %v248, -inf
        %v266 = vmax.f32 %v261, %v265
        %v267 = vsel %vm260, %v249, -inf
        %v268 = vmax.f32 %v262, %v267
        %v269 = vsel %vm260, %v250, -inf
        %v270 = vmax.f32 %v263, %v269
        %v271 = vsel %vm260, %v251, -inf
        %v272 = vmax.f32 %v264, %v271
        %v273 = vmax.f32 %v266, %v268
        %v274 = vmax.f32 %v270, %v272
        %v275 = vmax.f32 %v273, %v274
        %v276 = vrot.slane %v275, 4
        %v277 = vmax.f32 %v275, %v276
        %v278 = vrot.slane %v277, 2
        %v279 = vmax.f32 %v277, %v278
        %v280 = vrot.slane %v279, 1
        %v281 = vmax.f32 %v279, %v280
        %v282 = vsub.f32 %v244, %v281
        %v283 = vsub.f32 %v245, %v281
        %v284 = vsub.f32 %v246, %v281
        %v285 = vsub.f32 %v247, %v281
        %v286 = vsub.f32 %v248, %v281
        %v287 = vsub.f32 %v249, %v281
        %v288 = vsub.f32 %v250, %v281
        %v289 = vsub.f32 %v251, %v281
        %v290 = vmul.f32 %v282, 1.442695
        %v291 = vpow.pop %v290
        %v292 = vmul.f32 %v283, 1.442695
        %v293 = vpow.pop %v292
        %v294 = vmul.f32 %v284, 1.442695
        %v295 = vpow.pop %v294
        %v296 = vmul.f32 %v285, 1.442695
        %v297 = vpow.pop %v296
        %v298 = vmul.f32 %v286, 1.442695
        %v299 = vpow.pop %v298
        %v300 = vmul.f32 %v287, 1.442695
        %v301 = vpow.pop %v300
        %v302 = vmul.f32 %v288, 1.442695
        %v303 = vpow.pop %v302
        %v304 = vmul.f32 %v289, 1.442695
        %v305 = vpow.pop %v304
        %v306 = vsel %vm260, %v291, 0.0
        %v307 = vsel %vm260, %v293, 0.0
        %v308 = vadd.f32 %v306, %v307
        %v309 = vsel %vm260, %v295, 0.0
        %v310 = vadd.f32 %v308, %v309
        %v311 = vsel %vm260, %v297, 0.0
        %v312 = vadd.f32 %v310, %v311
        %v313 = vsel %vm260, %v299, 0.0
        %v314 = vadd.f32 %v312, %v313
        %v315 = vsel %vm260, %v301, 0.0
        %v316 = vadd.f32 %v314, %v315
        %v317 = vsel %vm260, %v303, 0.0
        %v318 = vadd.f32 %v316, %v317
        %v319 = vsel %vm260, %v305, 0.0
        %v320 = vadd.f32 %v318, %v319
        %v321 = vrot.slane %v320, 4
        %v322 = vadd.f32 %v320, %v321
        %v323 = vrot.slane %v322, 2
        %v324 = vadd.f32 %v322, %v323
        %v325 = vrot.slane %v324, 1
        %v326 = vadd.f32 %v324, %v325
        %v327 = vrcp.pop %v326
        %v328 = vpack.c.bf16 %v245, %v244
        %v329 = vpack.c.bf16 %v247, %v246
        %v330 = vpack.c.bf16 %v249, %v248
        %v331 = vpack.c.bf16 %v251, %v250
        %v332 = vpack.c.bf16 %v293, %v291
        %v333 = vpack.c.bf16 %v297, %v295
        %v334 = vpack.c.bf16 %v301, %v299
        %v335 = vpack.c.bf16 %v305, %v303
        %340 = vrot.lane.b32.xlu0 %v328, 64
        %v341 = vpop.permute.xlu0 %340
        %342 = vrot.lane.b32.xlu0 %v329, 64
        %v343 = vpop.permute.xlu0 %342
        %344 = vrot.lane.b32.xlu0 %v330, 64
        %v345 = vpop.permute.xlu0 %344
        %346 = vrot.lane.b32.xlu0 %v331, 64
        %v347 = vpop.permute.xlu0 %346
        %352 = vxpose.xlu0.c.b16.start [1/8] %v341, 128
        %353 = vxpose.xlu0.c.b16.cont [2/8] %v343, 128
        %354 = vxpose.xlu0.c.b16.cont [3/8] %v345, 128
        %355 = vxpose.xlu0.c.b16.cont [4/8] %v347, 128
        %356 = vxpose.xlu0.c.b16.cont [5/8] 0, 128
        %357 = vxpose.xlu0.c.b16.cont [6/8] 0, 128
        %358 = vxpose.xlu0.c.b16.cont [7/8] 0, 128
        %359 = vxpose.xlu0.c.b16.end [8/8] 0, 128
        %v360 = vpop.trf.xlu0
        %v361 = vpop.trf.xlu0
        %v362 = vpop.trf.xlu0
        %v363 = vpop.trf.xlu0
        %v364 = vpop.trf.xlu0
        %v365 = vpop.trf.xlu0
        %v366 = vpop.trf.xlu0
        %v367 = vpop.trf.xlu0
        %372 = vrot.lane.b32.xlu0 %v332, 96
        %v373 = vpop.permute.xlu0 %372
        %374 = vrot.lane.b32.xlu0 %v333, 96
        %v375 = vpop.permute.xlu0 %374
        %376 = vrot.lane.b32.xlu0 %v334, 96
        %v377 = vpop.permute.xlu0 %376
        %378 = vrot.lane.b32.xlu0 %v335, 96
        %v379 = vpop.permute.xlu0 %378
        %vm384 = vcmask 523264
        %v386 = vsel %vm384, %v360, 0
        %v389 = vsel %vm384, %v361, 0
        %391 = vmatprep.subr.bf16.mxu0 0
        %392 = vmatpush1.bf16.msra.mxu0 %v373
        %393 = vmatprep.subr.bf16.mxu0 0
        %394 = vmatpush1.bf16.msra.mxu0 %v375
        %395 = vmatprep.subr.bf16.mxu0 0
        %396 = vmatpush1.bf16.msra.mxu0 %v377
        %397 = vmatprep.subr.bf16.mxu0 0
        %398 = vmatpush1.bf16.msra.mxu0 %v379
        %399 = vmatprep.subr.bf16.mxu0 0
        %400 = vmatpush1.bf16.msra.mxu0 0
        %401 = vmatprep.subr.bf16.mxu0 0
        %402 = vmatpush1.bf16.msra.mxu0 0
        %403 = vmatprep.subr.bf16.mxu0 0
        %404 = vmatpush1.bf16.msra.mxu0 0
        %405 = vmatprep.subr.bf16.mxu0 0
        %406 = vmatpush1.bf16.msra.mxu0 0
        %407 = vmatprep.subr.bf16.mxu0 0
        %408 = vmatpush1.bf16.msra.mxu0 0
        %409 = vmatprep.subr.bf16.mxu0 0
        %410 = vmatpush1.bf16.msra.mxu0 0
        %411 = vmatprep.subr.bf16.mxu0 0
        %412 = vmatpush1.bf16.msra.mxu0 0
        %413 = vmatprep.subr.bf16.mxu0 0
        %414 = vmatpush1.bf16.msra.mxu0 0
        %415 = vmatprep.subr.bf16.mxu0 0
        %416 = vmatpush1.bf16.msra.mxu0 0
        %417 = vmatprep.subr.bf16.mxu0 0
        %418 = vmatpush1.bf16.msra.mxu0 0
        %419 = vmatprep.subr.bf16.mxu0 0
        %420 = vmatpush1.bf16.msra.mxu0 0
        %421 = vmatprep.subr.bf16.mxu0 0
        %422 = vmatpush1.bf16.msra.mxu0 0
        %423 = vmatprep.mubr.bf16.mxu0 0
        %424 = vmatmul.mubr.bf16.gmra.mrb[0].mxu0 %v386
        %v425 = vpop.f32.mrb[0].mxu0
        %v426 = vadd.f32 0.0, %v425
        %v427 = vpop.f32.mrb[0].mxu0
        %v428 = vpop.f32.mrb[0].mxu0
        %v429 = vadd.f32 0.0, %v428
        %v430 = vpop.f32.mrb[0].mxu0
        %431 = vmatprep.mubr.bf16.mxu0 0
        %432 = vmatmul.mubr.bf16.gmra.mrb[0].mxu0 %v389
        %v433 = vpop.f32.mrb[0].mxu0
        %v434 = vadd.f32 0.0, %v433
        %v435 = vpop.f32.mrb[0].mxu0
        %v436 = vpop.f32.mrb[0].mxu0
        %v437 = vadd.f32 0.0, %v436
        %v438 = vpop.f32.mrb[0].mxu0
        %439 = vdwg.mxu0
        %v440 = vld [vmem:[#allocation7] sm:$0xff]
        %v441 = vld [vmem:[#allocation7 + $0x8] sm:$0xff]
        %v442 = vld [vmem:[#allocation7 + $0x10] sm:$0xff]
        %v443 = vld [vmem:[#allocation7 + $0x18] sm:$0xff]
        %445 = vrot.lane.b32.xlu0 %v327, 96
        %v446 = vpop.permute.xlu0 %445
        %v448 = vmul.f32 %v440, %v446
        %v449 = vmul.f32 %v441, %v446
        %v450 = vmul.f32 %v442, %v446
        %v451 = vmul.f32 %v443, %v446
        %v452 = vmul.f32 %v426, %v448
        %v453 = vmul.f32 %v429, %v449
        %v454 = vmul.f32 %v434, %v450
        %v455 = vmul.f32 %v437, %v451
        %v456 = vpack.c.bf16 %v453, %v452
        %v457 = vpack.c.bf16 %v455, %v454
        %v458 = vmul.f32 %v244, %v252
        %v459 = vmul.f32 %v245, %v253
        %v460 = vmul.f32 %v246, %v254
        %v461 = vmul.f32 %v247, %v255
        %v462 = vmul.f32 %v248, %v256
        %v463 = vmul.f32 %v249, %v257
        %v464 = vmul.f32 %v250, %v258
        %v465 = vmul.f32 %v251, %v259
        %vm466 = vcmask 261120
        %v468 = vsel %vm466, %v328, 0
        %v471 = vsel %vm466, %v329, 0
        %v474 = vsel %vm466, %v330, 0
        %v477 = vsel %vm466, %v331, 0
        %v480 = vsel %vm466, %v456, 0
        %v483 = vsel %vm466, %v457, 0
        %485 = vmatprep.subr.bf16.mxu0 0
        %486 = vmatpush1.bf16.xpose.msra.mxu0 %v480
        %487 = vmatprep.subr.bf16.mxu0 0
        %488 = vmatpush1.bf16.xpose.msra.mxu0 %v483
        %489 = vmatprep.subr.bf16.mxu0 0
        %490 = vmatpush1.bf16.xpose.msra.mxu0 0
        %491 = vmatprep.subr.bf16.mxu0 0
        %492 = vmatpush1.bf16.xpose.msra.mxu0 0
        %493 = vmatprep.subr.bf16.mxu0 0
        %494 = vmatpush1.bf16.xpose.msra.mxu0 0
        %495 = vmatprep.subr.bf16.mxu0 0
        %496 = vmatpush1.bf16.xpose.msra.mxu0 0
        %497 = vmatprep.subr.bf16.mxu0 0
        %498 = vmatpush1.bf16.xpose.msra.mxu0 0
        %499 = vmatprep.subr.bf16.mxu0 0
        %500 = vmatpush1.bf16.xpose.msra.mxu0 0
        %501 = vmatprep.subr.bf16.mxu0 0
        %502 = vmatpush1.bf16.xpose.msra.mxu0 0
        %503 = vmatprep.subr.bf16.mxu0 0
        %504 = vmatpush1.bf16.xpose.msra.mxu0 0
        %505 = vmatprep.subr.bf16.mxu0 0
        %506 = vmatpush1.bf16.xpose.msra.mxu0 0
        %507 = vmatprep.subr.bf16.mxu0 0
        %508 = vmatpush1.bf16.xpose.msra.mxu0 0
        %509 = vmatprep.subr.bf16.mxu0 0
        %510 = vmatpush1.bf16.xpose.msra.mxu0 0
        %511 = vmatprep.subr.bf16.mxu0 0
        %512 = vmatpush1.bf16.xpose.msra.mxu0 0
        %513 = vmatprep.subr.bf16.mxu0 0
        %514 = vmatpush1.bf16.xpose.msra.mxu0 0
        %515 = vmatprep.subr.bf16.mxu0 0
        %516 = vmatpush1.bf16.xpose.msra.mxu0 0
        %517 = vmatprep.mubr.bf16.mxu0 0
        %518 = vmatmul.mubr.bf16.gmra.mrb[0].mxu0 %v468
        %v519 = vpop.f32.mrb[0].mxu0
        %v520 = vadd.f32 %v458, %v519
        %v521 = vpop.f32.mrb[0].mxu0
        %v522 = vpop.f32.mrb[0].mxu0
        %v523 = vadd.f32 %v459, %v522
        %v524 = vpop.f32.mrb[0].mxu0
        %525 = vmatprep.mubr.bf16.mxu0 0
        %526 = vmatmul.mubr.bf16.gmra.mrb[0].mxu0 %v471
        %v527 = vpop.f32.mrb[0].mxu0
        %v528 = vadd.f32 %v460, %v527
        %v529 = vpop.f32.mrb[0].mxu0
        %v530 = vpop.f32.mrb[0].mxu0
        %v531 = vadd.f32 %v461, %v530
        %v532 = vpop.f32.mrb[0].mxu0
        %533 = vmatprep.mubr.bf16.mxu0 0
        %534 = vmatmul.mubr.bf16.gmra.mrb[0].mxu0 %v474
        %v535 = vpop.f32.mrb[0].mxu0
        %v536 = vadd.f32 %v462, %v535
        %v537 = vpop.f32.mrb[0].mxu0
        %v538 = vpop.f32.mrb[0].mxu0
        %v539 = vadd.f32 %v463, %v538
        %v540 = vpop.f32.mrb[0].mxu0
        %541 = vmatprep.mubr.bf16.mxu0 0
        %542 = vmatmul.mubr.bf16.gmra.mrb[0].mxu0 %v477
        %v543 = vpop.f32.mrb[0].mxu0
        %v544 = vadd.f32 %v464, %v543
        %v545 = vpop.f32.mrb[0].mxu0
        %v546 = vpop.f32.mrb[0].mxu0
        %v547 = vadd.f32 %v465, %v546
        %v548 = vpop.f32.mrb[0].mxu0
        %549 = vdwg.mxu0
        %550 = vst.msk [vmem:[%s242] sm:$0xff] %vm466, %v520
        %551 = vst.msk [vmem:[%s242 + $0x8] sm:$0xff] %vm466, %v523
        %552 = vst.msk [vmem:[%s242 + $0x10] sm:$0xff] %vm466, %v528
        %553 = vst.msk [vmem:[%s242 + $0x18] sm:$0xff] %vm466, %v531
        %554 = vst.msk [vmem:[%s242 + $0x20] sm:$0xff] %vm466, %v536
        %555 = vst.msk [vmem:[%s242 + $0x28] sm:$0xff] %vm466, %v539
        %556 = vst.msk [vmem:[%s242 + $0x30] sm:$0xff] %vm466, %v544
        %557 = vst.msk [vmem:[%s242 + $0x38] sm:$0xff] %vm466, %v547
        %s558 = sand.u32 %s104, 1
        %s559 = scalar_lea.sflag [#allocation4], %s558
        %s560 = sand.u32 %s104, 1
        %s561 = smul.addr %s560, 64
        %s562 = scalar_lea.vmem [#allocation8], %s561
        // Predicated region
        $region45: #{mhca_encoder.17} parent=31 // pred_check
          %p563 = pneg %p114
        $region46: #{mhca_encoder.17} parent=31 // pred_check_branch
          %565 = sbr.rel (%p563) target = $region48
        $region47: #{mhca_encoder.17} parent=31 // pred_region
          %s567 = ssub.s32 1024, 1024
          %568 = vsyncadd %s559, %s567
          %s569 = smul.addr %s23, 8
          %s570 = smul.addr %s569, 128
          %s571 = scalar_lea.hbm %s3, %s570
          %s572 = sshll.u32 %s562, 4
          %s573 = int_to_ptr.vmem [resolvable:$true] %s572
          %578 = dma.vmem_to_hbm [thread:$0]  %s573, 1024, %s571, %s559, 128, 128, 8
        $region48: #{mhca_encoder.17} parent=31 // pred_fallthru
          _
      $region32: #{mhca_encoder.17} parent=5 // pred_fallthru
        _
      %p579 = scmp.le.s32.totalorder 2, %s18
      // Predicated region
      $region49: #{mhca_encoder.17} parent=5 // pred_check
        %p580 = pneg %p579
      $region50: #{mhca_encoder.17} parent=5 // pred_check_branch
        %582 = sbr.rel (%p580) target = $region52
      $region51: #{mhca_encoder.17} parent=5 // pred_region
        %s583 = ssub.s32 %s18, 2
        // Predicated region
        $region53: #{mhca_encoder.17} parent=51 // pred_check
          %p584 = pneg %p120
        $region54: #{mhca_encoder.17} parent=51 // pred_check_branch
          %586 = sbr.rel (%p584) target = $region56
        $region55: #{mhca_encoder.17} parent=51 // pred_region
          %s587 = sand.u32 %s105, 1
          %s588 = scalar_lea.sflag [#allocation4], %s587
          %s589 = sand.u32 %s105, 1
          %s590 = smul.addr %s589, 64
          %s591 = scalar_lea.vmem [#allocation8], %s590
          %592 = dma.done %s588, 1024
        $region56: #{mhca_encoder.17} parent=51 // pred_fallthru
          _
      $region52: #{mhca_encoder.17} parent=5 // pred_fallthru
        _
    $region6: #{mhca_encoder.17} parent=1 // loop_footer
      %s22 = sadd.s32 1, %s18
    $region7: #{mhca_encoder.17} parent=1 // loop_footer_branch
      %17 = sbr.rel target = $region3
    $region8: #{mhca_encoder.17} parent=1 // loop_exit
      _
    %593 = vsyncpa [#allocation3], 1
    %s594 = scalar_lea.sflag [#allocation3], 1
    %595 = vsyncpa %s594, 1
    %596 = vsyncpa [#allocation6], 1
    %s597 = scalar_lea.sflag [#allocation6], 1
    %598 = vsyncpa %s597, 1
    %599 = vsyncpa [#allocation4], 1
    %s600 = scalar_lea.sflag [#allocation4], 1
    %601 = vsyncpa %s600, 1

// kernel: mhca_encoder.18
$region0: #{mhca_encoder.18}
  #allocation0 [shape = 'u32[]', space=smem, size = 0x4, offset = 0x4, fixed_abs, tag = 'smem constant byte address 0x4 - core index']
  #allocation1 [shape = 'u32[144,128]{1,0:T(1,128)}', space=vmem, size = 0x12000, scoped, tag = 'internal scratch']
  #allocation2 [shape = 'f32[128,32]{1,0:T(8,128)}', space=vmem, size = 0x10000, scoped, tag = 'scratch operand']
  %s0 = inlined_call_operand.hbm [shape: f32[128,32], index: 0, kind: input, shape index: {}]
  %s1 = inlined_call_operand.hbm [shape: f32[32,32], index: 1, kind: input, shape index: {}]
  %s2 = inlined_call_operand.hbm [shape: f32[1,32], index: 2, kind: input, shape index: {}]
  %s3 = inlined_call_operand.hbm [shape: f32[128,32], index: 3, kind: input, shape index: {}]
  %s4 = inlined_call_operand.hbm [shape: f32[128,32], index: 4, kind: output, shape index: {}]
  %s5 = sld [smem:[#allocation0]]
  $region50: #{mhca_encoder.18} parent=0
    _
  %s7 = ssub.s32 1, %s5
  %s8 = scalar_select 0, %s7, %s5
  $region1: #{mhca_encoder.18} parent=0
    #allocation3 [shape = 'u8[65536]{0}', space=vmem, size = 0x10000, scoped, tag = 'input window, operand 0, single buffered']
    #allocation4 [shape = 's32[1]{0}', space=sflag, size = 0x4, scoped, tag = 'scoped memory for mhca_encoder.18']
    #allocation5 [shape = 's32[1]{0}', space=sflag, size = 0x4, scoped, tag = 'scoped memory for mhca_encoder.18']
    #allocation6 [shape = 'u8[16384]{0}', space=vmem, size = 0x4000, scoped, tag = 'input window, operand 1, single buffered']
    #allocation7 [shape = 's32[1]{0}', space=sflag, size = 0x4, scoped, tag = 'scoped memory for mhca_encoder.18']
    #allocation8 [shape = 'u8[512]{0}', space=vmem, size = 0x400, scoped, tag = 'input window, operand 2, single buffered']
    #allocation9 [shape = 'u8[65536]{0}', space=vmem, size = 0x10000, scoped, tag = 'input window, operand 3, single buffered']
    #allocation10 [shape = 's32[1]{0}', space=sflag, size = 0x4, scoped, tag = 'scoped memory for mhca_encoder.18']
    #allocation11 [shape = 'u8[65536]{0}', space=vmem, size = 0x10000, scoped, tag = 'output window, operand 0, single buffered']
    %9 = vsyncpa [#allocation4], 0
    %10 = vsyncpa [#allocation7], 0
    %11 = vsyncpa [#allocation10], 0
    %12 = vsyncpa [#allocation5], 0
    // Predicated region
    $region2: #{mhca_encoder.18} parent=1 // pred_check
      _
    $region3: #{mhca_encoder.18} parent=1 // pred_check_branch
      %14 = sbr.rel (0) target = $region5
    $region4: #{mhca_encoder.18} parent=1 // pred_region
      %s16 = ssub.s32 2048, 2048
      %17 = vsyncadd [#allocation4], %s16
      %s18 = sshll.u32 [#allocation3], 4
      %s19 = int_to_ptr.vmem [resolvable:$true] %s18
      %24 = dma.hbm_to_vmem [thread:$0]  %s0, 2048, %s19, [#allocation4], 128, 128, 8
    $region5: #{mhca_encoder.18} parent=1 // pred_fallthru
      _
    // Predicated region
    $region6: #{mhca_encoder.18} parent=1 // pred_check
      _
    $region7: #{mhca_encoder.18} parent=1 // pred_check_branch
      %26 = sbr.rel (0) target = $region9
    $region8: #{mhca_encoder.18} parent=1 // pred_region
      %s28 = ssub.s32 512, 512
      %29 = vsyncadd [#allocation7], %s28
      %s30 = sshll.u32 [#allocation6], 4
      %s31 = int_to_ptr.vmem [resolvable:$true] %s30
      %36 = dma.hbm_to_vmem [thread:$0]  %s1, 512, %s31, [#allocation7], 128, 128, 8
    $region9: #{mhca_encoder.18} parent=1 // pred_fallthru
      _
    // Predicated region
    $region10: #{mhca_encoder.18} parent=1 // pred_check
      _
    $region11: #{mhca_encoder.18} parent=1 // pred_check_branch
      %38 = sbr.rel (0) target = $region13
    $region12: #{mhca_encoder.18} parent=1 // pred_region
      %s40 = ssub.s32 16, 16
      %41 = vsyncadd [#allocation7], %s40
      %s43 = sshll.u32 [#allocation8], 4
      %s44 = int_to_ptr.vmem [resolvable:$true] %s43
      %46 = dma.hbm_to_vmem [thread:$0]  %s2, 16, %s44, [#allocation7]
    $region13: #{mhca_encoder.18} parent=1 // pred_fallthru
      _
    // Predicated region
    $region14: #{mhca_encoder.18} parent=1 // pred_check
      _
    $region15: #{mhca_encoder.18} parent=1 // pred_check_branch
      %48 = sbr.rel (0) target = $region17
    $region16: #{mhca_encoder.18} parent=1 // pred_region
      %s50 = ssub.s32 2048, 2048
      %51 = vsyncadd [#allocation10], %s50
      %s52 = sshll.u32 [#allocation9], 4
      %s53 = int_to_ptr.vmem [resolvable:$true] %s52
      %58 = dma.hbm_to_vmem [thread:$0]  %s3, 2048, %s53, [#allocation10], 128, 128, 8
    $region17: #{mhca_encoder.18} parent=1 // pred_fallthru
      _
    // Predicated region
    $region18: #{mhca_encoder.18} parent=1 // pred_check
      _
    $region19: #{mhca_encoder.18} parent=1 // pred_check_branch
      %60 = sbr.rel (0) target = $region21
    $region20: #{mhca_encoder.18} parent=1 // pred_region
      %61 = dma.done [#allocation4], 2048
    $region21: #{mhca_encoder.18} parent=1 // pred_fallthru
      _
    // Predicated region
    $region22: #{mhca_encoder.18} parent=1 // pred_check
      _
    $region23: #{mhca_encoder.18} parent=1 // pred_check_branch
      %63 = sbr.rel (0) target = $region25
    $region24: #{mhca_encoder.18} parent=1 // pred_region
      %64 = dma.done [#allocation7], 512
    $region25: #{mhca_encoder.18} parent=1 // pred_fallthru
      _
    // Predicated region
    $region26: #{mhca_encoder.18} parent=1 // pred_check
      _
    $region27: #{mhca_encoder.18} parent=1 // pred_check_branch
      %66 = sbr.rel (0) target = $region29
    $region28: #{mhca_encoder.18} parent=1 // pred_region
      %67 = dma.done [#allocation7], 16
    $region29: #{mhca_encoder.18} parent=1 // pred_fallthru
      _
    // Predicated region
    $region30: #{mhca_encoder.18} parent=1 // pred_check
      _
    $region31: #{mhca_encoder.18} parent=1 // pred_check_branch
      %69 = sbr.rel (0) target = $region33
    $region32: #{mhca_encoder.18} parent=1 // pred_region
      %70 = dma.done [#allocation10], 2048
    $region33: #{mhca_encoder.18} parent=1 // pred_fallthru
      _
    %p72 = scmp.eq.s32.totalorder 0, 0
    // Predicated region
    $region34: #{mhca_encoder.18} parent=1 // pred_check
      %p73 = pneg %p72
    $region35: #{mhca_encoder.18} parent=1 // pred_check_branch
      %75 = sbr.rel (%p73) target = $region37
    $region36: #{mhca_encoder.18} parent=1 // pred_region
      %vm76 = vcmask 261120
      %77 = vst.msk [vmem:[#allocation2] sm:$0xff] %vm76, 0.0
      %78 = vst.msk [vmem:[#allocation2 + $0x8] sm:$0xff] %vm76, 0.0
      %79 = vst.msk [vmem:[#allocation2 + $0x10] sm:$0xff] %vm76, 0.0
      %80 = vst.msk [vmem:[#allocation2 + $0x18] sm:$0xff] %vm76, 0.0
      %81 = vst.msk [vmem:[#allocation2 + $0x20] sm:$0xff] %vm76, 0.0
      %82 = vst.msk [vmem:[#allocation2 + $0x28] sm:$0xff] %vm76, 0.0
      %83 = vst.msk [vmem:[#allocation2 + $0x30] sm:$0xff] %vm76, 0.0
      %84 = vst.msk [vmem:[#allocation2 + $0x38] sm:$0xff] %vm76, 0.0
      %85 = vst.msk [vmem:[#allocation2 + $0x40] sm:$0xff] %vm76, 0.0
      %86 = vst.msk [vmem:[#allocation2 + $0x48] sm:$0xff] %vm76, 0.0
      %87 = vst.msk [vmem:[#allocation2 + $0x50] sm:$0xff] %vm76, 0.0
      %88 = vst.msk [vmem:[#allocation2 + $0x58] sm:$0xff] %vm76, 0.0
      %89 = vst.msk [vmem:[#allocation2 + $0x60] sm:$0xff] %vm76, 0.0
      %90 = vst.msk [vmem:[#allocation2 + $0x68] sm:$0xff] %vm76, 0.0
      %91 = vst.msk [vmem:[#allocation2 + $0x70] sm:$0xff] %vm76, 0.0
      %92 = vst.msk [vmem:[#allocation2 + $0x78] sm:$0xff] %vm76, 0.0
    $region37: #{mhca_encoder.18} parent=1 // pred_fallthru
      _
    %v93 = vld [vmem:[#allocation3] sm:$0xff]
    %v94 = vld [vmem:[#allocation3 + $0x8] sm:$0xff]
    %v95 = vld [vmem:[#allocation3 + $0x10] sm:$0xff]
    %v96 = vld [vmem:[#allocation3 + $0x18] sm:$0xff]
    %v97 = vld [vmem:[#allocation3 + $0x20] sm:$0xff]
    %v98 = vld [vmem:[#allocation3 + $0x28] sm:$0xff]
    %v99 = vld [vmem:[#allocation3 + $0x30] sm:$0xff]
    %v100 = vld [vmem:[#allocation3 + $0x38] sm:$0xff]
    %v101 = vld [vmem:[#allocation3 + $0x40] sm:$0xff]
    %v102 = vld [vmem:[#allocation3 + $0x48] sm:$0xff]
    %v103 = vld [vmem:[#allocation3 + $0x50] sm:$0xff]
    %v104 = vld [vmem:[#allocation3 + $0x58] sm:$0xff]
    %v105 = vld [vmem:[#allocation3 + $0x60] sm:$0xff]
    %v106 = vld [vmem:[#allocation3 + $0x68] sm:$0xff]
    %v107 = vld [vmem:[#allocation3 + $0x70] sm:$0xff]
    %v108 = vld [vmem:[#allocation3 + $0x78] sm:$0xff]
    %v109 = vpack.c.bf16 %v94, %v93
    %v110 = vpack.c.bf16 %v96, %v95
    %v111 = vpack.c.bf16 %v98, %v97
    %v112 = vpack.c.bf16 %v100, %v99
    %v113 = vpack.c.bf16 %v102, %v101
    %v114 = vpack.c.bf16 %v104, %v103
    %v115 = vpack.c.bf16 %v106, %v105
    %v116 = vpack.c.bf16 %v108, %v107
    %v117 = vld [vmem:[#allocation2] sm:$0xff]
    %v118 = vld [vmem:[#allocation2 + $0x8] sm:$0xff]
    %v119 = vld [vmem:[#allocation2 + $0x10] sm:$0xff]
    %v120 = vld [vmem:[#allocation2 + $0x18] sm:$0xff]
    %v121 = vld [vmem:[#allocation2 + $0x20] sm:$0xff]
    %v122 = vld [vmem:[#allocation2 + $0x28] sm:$0xff]
    %v123 = vld [vmem:[#allocation2 + $0x30] sm:$0xff]
    %v124 = vld [vmem:[#allocation2 + $0x38] sm:$0xff]
    %v125 = vld [vmem:[#allocation2 + $0x40] sm:$0xff]
    %v126 = vld [vmem:[#allocation2 + $0x48] sm:$0xff]
    %v127 = vld [vmem:[#allocation2 + $0x50] sm:$0xff]
    %v128 = vld [vmem:[#allocation2 + $0x58] sm:$0xff]
    %v129 = vld [vmem:[#allocation2 + $0x60] sm:$0xff]
    %v130 = vld [vmem:[#allocation2 + $0x68] sm:$0xff]
    %v131 = vld [vmem:[#allocation2 + $0x70] sm:$0xff]
    %v132 = vld [vmem:[#allocation2 + $0x78] sm:$0xff]
    %v133 = vld [vmem:[#allocation6] sm:$0xff]
    %v134 = vld [vmem:[#allocation6 + $0x8] sm:$0xff]
    %v135 = vld [vmem:[#allocation6 + $0x10] sm:$0xff]
    %v136 = vld [vmem:[#allocation6 + $0x18] sm:$0xff]
    %v137 = vpack.c.bf16 %v134, %v133
    %v138 = vpack.c.bf16 %v136, %v135
    %vm139 = vcmask 261120
    %v141 = vsel %vm139, %v109, 0
    %v144 = vsel %vm139, %v110, 0
    %v147 = vsel %vm139, %v111, 0
    %v150 = vsel %vm139, %v112, 0
    %v153 = vsel %vm139, %v113, 0
    %v156 = vsel %vm139, %v114, 0
    %v159 = vsel %vm139, %v115, 0
    %v162 = vsel %vm139, %v116, 0
    %164 = vmatprep.subr.bf16.mxu0 0
    %165 = vmatpush1.bf16.msra.mxu0 %v137
    %166 = vmatprep.subr.bf16.mxu0 0
    %167 = vmatpush1.bf16.msra.mxu0 %v138
    %168 = vmatprep.subr.bf16.mxu0 0
    %169 = vmatpush1.bf16.msra.mxu0 0
    %170 = vmatprep.subr.bf16.mxu0 0
    %171 = vmatpush1.bf16.msra.mxu0 0
    %172 = vmatprep.subr.bf16.mxu0 0
    %173 = vmatpush1.bf16.msra.mxu0 0
    %174 = vmatprep.subr.bf16.mxu0 0
    %175 = vmatpush1.bf16.msra.mxu0 0
    %176 = vmatprep.subr.bf16.mxu0 0
    %177 = vmatpush1.bf16.msra.mxu0 0
    %178 = vmatprep.subr.bf16.mxu0 0
    %179 = vmatpush1.bf16.msra.mxu0 0
    %180 = vmatprep.subr.bf16.mxu0 0
    %181 = vmatpush1.bf16.msra.mxu0 0
    %182 = vmatprep.subr.bf16.mxu0 0
    %183 = vmatpush1.bf16.msra.mxu0 0
    %184 = vmatprep.subr.bf16.mxu0 0
    %185 = vmatpush1.bf16.msra.mxu0 0
    %186 = vmatprep.subr.bf16.mxu0 0
    %187 = vmatpush1.bf16.msra.mxu0 0
    %188 = vmatprep.subr.bf16.mxu0 0
    %189 = vmatpush1.bf16.msra.mxu0 0
    %190 = vmatprep.subr.bf16.mxu0 0
    %191 = vmatpush1.bf16.msra.mxu0 0
    %192 = vmatprep.subr.bf16.mxu0 0
    %193 = vmatpush1.bf16.msra.mxu0 0
    %194 = vmatprep.subr.bf16.mxu0 0
    %195 = vmatpush1.bf16.msra.mxu0 0
    %196 = vmatprep.mubr.bf16.mxu0 0
    %197 = vmatmul.mubr.bf16.gmra.mrb[0].mxu0 %v141
    %v198 = vpop.f32.mrb[0].mxu0
    %v199 = vadd.f32 0.0, %v198
    %v200 = vpop.f32.mrb[0].mxu0
    %v201 = vpop.f32.mrb[0].mxu0
    %v202 = vadd.f32 0.0, %v201
    %v203 = vpop.f32.mrb[0].mxu0
    %204 = vmatprep.mubr.bf16.mxu0 0
    %205 = vmatmul.mubr.bf16.gmra.mrb[0].mxu0 %v144
    %v206 = vpop.f32.mrb[0].mxu0
    %v207 = vadd.f32 0.0, %v206
    %v208 = vpop.f32.mrb[0].mxu0
    %v209 = vpop.f32.mrb[0].mxu0
    %v210 = vadd.f32 0.0, %v209
    %v211 = vpop.f32.mrb[0].mxu0
    %212 = vmatprep.mubr.bf16.mxu0 0
    %213 = vmatmul.mubr.bf16.gmra.mrb[0].mxu0 %v147
    %v214 = vpop.f32.mrb[0].mxu0
    %v215 = vadd.f32 0.0, %v214
    %v216 = vpop.f32.mrb[0].mxu0
    %v217 = vpop.f32.mrb[0].mxu0
    %v218 = vadd.f32 0.0, %v217
    %v219 = vpop.f32.mrb[0].mxu0
    %220 = vmatprep.mubr.bf16.mxu0 0
    %221 = vmatmul.mubr.bf16.gmra.mrb[0].mxu0 %v150
    %v222 = vpop.f32.mrb[0].mxu0
    %v223 = vadd.f32 0.0, %v222
    %v224 = vpop.f32.mrb[0].mxu0
    %v225 = vpop.f32.mrb[0].mxu0
    %v226 = vadd.f32 0.0, %v225
    %v227 = vpop.f32.mrb[0].mxu0
    %228 = vmatprep.mubr.bf16.mxu0 0
    %229 = vmatmul.mubr.bf16.gmra.mrb[0].mxu0 %v153
    %v230 = vpop.f32.mrb[0].mxu0
    %v231 = vadd.f32 0.0, %v230
    %v232 = vpop.f32.mrb[0].mxu0
    %v233 = vpop.f32.mrb[0].mxu0
    %v234 = vadd.f32 0.0, %v233
    %v235 = vpop.f32.mrb[0].mxu0
    %236 = vmatprep.mubr.bf16.mxu0 0
    %237 = vmatmul.mubr.bf16.gmra.mrb[0].mxu0 %v156
    %v238 = vpop.f32.mrb[0].mxu0
    %v239 = vadd.f32 0.0, %v238
    %v240 = vpop.f32.mrb[0].mxu0
    %v241 = vpop.f32.mrb[0].mxu0
    %v242 = vadd.f32 0.0, %v241
    %v243 = vpop.f32.mrb[0].mxu0
    %244 = vmatprep.mubr.bf16.mxu0 0
    %245 = vmatmul.mubr.bf16.gmra.mrb[0].mxu0 %v159
    %v246 = vpop.f32.mrb[0].mxu0
    %v247 = vadd.f32 0.0, %v246
    %v248 = vpop.f32.mrb[0].mxu0
    %v249 = vpop.f32.mrb[0].mxu0
    %v250 = vadd.f32 0.0, %v249
    %v251 = vpop.f32.mrb[0].mxu0
    %252 = vmatprep.mubr.bf16.mxu0 0
    %253 = vmatmul.mubr.bf16.gmra.mrb[0].mxu0 %v162
    %v254 = vpop.f32.mrb[0].mxu0
    %v255 = vadd.f32 0.0, %v254
    %v256 = vpop.f32.mrb[0].mxu0
    %v257 = vpop.f32.mrb[0].mxu0
    %v258 = vadd.f32 0.0, %v257
    %v259 = vpop.f32.mrb[0].mxu0
    %260 = vdwg.mxu0
    %v261 = vadd.f32 %v117, %v199
    %v262 = vadd.f32 %v118, %v202
    %v263 = vadd.f32 %v119, %v207
    %v264 = vadd.f32 %v120, %v210
    %v265 = vadd.f32 %v121, %v215
    %v266 = vadd.f32 %v122, %v218
    %v267 = vadd.f32 %v123, %v223
    %v268 = vadd.f32 %v124, %v226
    %v269 = vadd.f32 %v125, %v231
    %v270 = vadd.f32 %v126, %v234
    %v271 = vadd.f32 %v127, %v239
    %v272 = vadd.f32 %v128, %v242
    %v273 = vadd.f32 %v129, %v247
    %v274 = vadd.f32 %v130, %v250
    %v275 = vadd.f32 %v131, %v255
    %v276 = vadd.f32 %v132, %v258
    %277 = vst.msk [vmem:[#allocation2] sm:$0xff] %vm139, %v261
    %278 = vst.msk [vmem:[#allocation2 + $0x8] sm:$0xff] %vm139, %v262
    %279 = vst.msk [vmem:[#allocation2 + $0x10] sm:$0xff] %vm139, %v263
    %280 = vst.msk [vmem:[#allocation2 + $0x18] sm:$0xff] %vm139, %v264
    %281 = vst.msk [vmem:[#allocation2 + $0x20] sm:$0xff] %vm139, %v265
    %282 = vst.msk [vmem:[#allocation2 + $0x28] sm:$0xff] %vm139, %v266
    %283 = vst.msk [vmem:[#allocation2 + $0x30] sm:$0xff] %vm139, %v267
    %284 = vst.msk [vmem:[#allocation2 + $0x38] sm:$0xff] %vm139, %v268
    %285 = vst.msk [vmem:[#allocation2 + $0x40] sm:$0xff] %vm139, %v269
    %286 = vst.msk [vmem:[#allocation2 + $0x48] sm:$0xff] %vm139, %v270
    %287 = vst.msk [vmem:[#allocation2 + $0x50] sm:$0xff] %vm139, %v271
    %288 = vst.msk [vmem:[#allocation2 + $0x58] sm:$0xff] %vm139, %v272
    %289 = vst.msk [vmem:[#allocation2 + $0x60] sm:$0xff] %vm139, %v273
    %290 = vst.msk [vmem:[#allocation2 + $0x68] sm:$0xff] %vm139, %v274
    %291 = vst.msk [vmem:[#allocation2 + $0x70] sm:$0xff] %vm139, %v275
    %292 = vst.msk [vmem:[#allocation2 + $0x78] sm:$0xff] %vm139, %v276
    // Predicated region
    $region38: #{mhca_encoder.18} parent=1 // pred_check
      %p293 = pneg %p72
    $region39: #{mhca_encoder.18} parent=1 // pred_check_branch
      %295 = sbr.rel (%p293) target = $region41
    $region40: #{mhca_encoder.18} parent=1 // pred_region
      %v296 = vld [vmem:[#allocation2] sm:$0xff]
      %v297 = vld [vmem:[#allocation2 + $0x8] sm:$0xff]
      %v298 = vld [vmem:[#allocation2 + $0x10] sm:$0xff]
      %v299 = vld [vmem:[#allocation2 + $0x18] sm:$0xff]
      %v300 = vld [vmem:[#allocation2 + $0x20] sm:$0xff]
      %v301 = vld [vmem:[#allocation2 + $0x28] sm:$0xff]
      %v302 = vld [vmem:[#allocation2 + $0x30] sm:$0xff]
      %v303 = vld [vmem:[#allocation2 + $0x38] sm:$0xff]
      %v304 = vld [vmem:[#allocation2 + $0x40] sm:$0xff]
      %v305 = vld [vmem:[#allocation2 + $0x48] sm:$0xff]
      %v306 = vld [vmem:[#allocation2 + $0x50] sm:$0xff]
      %v307 = vld [vmem:[#allocation2 + $0x58] sm:$0xff]
      %v308 = vld [vmem:[#allocation2 + $0x60] sm:$0xff]
      %v309 = vld [vmem:[#allocation2 + $0x68] sm:$0xff]
      %v310 = vld [vmem:[#allocation2 + $0x70] sm:$0xff]
      %v311 = vld [vmem:[#allocation2 + $0x78] sm:$0xff]
      %v312 = vld [vmem:[#allocation8] sm:$0x1]
      %v314 = vlaneseq
      %v315 = vshrl.u32 %v314, 7
      %v316 = vsub.s32 0, %v315
      %v317 = vrot.slane %v312, %v316
      %v319 = vadd.f32 %v296, %v317
      %v320 = vadd.f32 %v297, %v317
      %v321 = vadd.f32 %v298, %v317
      %v322 = vadd.f32 %v299, %v317
      %v323 = vadd.f32 %v300, %v317
      %v324 = vadd.f32 %v301, %v317
      %v325 = vadd.f32 %v302, %v317
      %v326 = vadd.f32 %v303, %v317
      %v327 = vadd.f32 %v304, %v317
      %v328 = vadd.f32 %v305, %v317
      %v329 = vadd.f32 %v306, %v317
      %v330 = vadd.f32 %v307, %v317
      %v331 = vadd.f32 %v308, %v317
      %v332 = vadd.f32 %v309, %v317
      %v333 = vadd.f32 %v310, %v317
      %v334 = vadd.f32 %v311, %v317
      %v335 = vld [vmem:[#allocation9] sm:$0xff]
      %v336 = vld [vmem:[#allocation9 + $0x8] sm:$0xff]
      %v337 = vld [vmem:[#allocation9 + $0x10] sm:$0xff]
      %v338 = vld [vmem:[#allocation9 + $0x18] sm:$0xff]
      %v339 = vld [vmem:[#allocation9 + $0x20] sm:$0xff]
      %v340 = vld [vmem:[#allocation9 + $0x28] sm:$0xff]
      %v341 = vld [vmem:[#allocation9 + $0x30] sm:$0xff]
      %v342 = vld [vmem:[#allocation9 + $0x38] sm:$0xff]
      %v343 = vld [vmem:[#allocation9 + $0x40] sm:$0xff]
      %v344 = vld [vmem:[#allocation9 + $0x48] sm:$0xff]
      %v345 = vld [vmem:[#allocation9 + $0x50] sm:$0xff]
      %v346 = vld [vmem:[#allocation9 + $0x58] sm:$0xff]
      %v347 = vld [vmem:[#allocation9 + $0x60] sm:$0xff]
      %v348 = vld [vmem:[#allocation9 + $0x68] sm:$0xff]
      %v349 = vld [vmem:[#allocation9 + $0x70] sm:$0xff]
      %v350 = vld [vmem:[#allocation9 + $0x78] sm:$0xff]
      %v351 = vadd.f32 %v319, %v335
      %v352 = vadd.f32 %v320, %v336
      %v353 = vadd.f32 %v321, %v337
      %v354 = vadd.f32 %v322, %v338
      %v355 = vadd.f32 %v323, %v339
      %v356 = vadd.f32 %v324, %v340
      %v357 = vadd.f32 %v325, %v341
      %v358 = vadd.f32 %v326, %v342
      %v359 = vadd.f32 %v327, %v343
      %v360 = vadd.f32 %v328, %v344
      %v361 = vadd.f32 %v329, %v345
      %v362 = vadd.f32 %v330, %v346
      %v363 = vadd.f32 %v331, %v347
      %v364 = vadd.f32 %v332, %v348
      %v365 = vadd.f32 %v333, %v349
      %v366 = vadd.f32 %v334, %v350
      %367 = vst.msk [vmem:[#allocation11] sm:$0xff] %vm139, %v351
      %368 = vst.msk [vmem:[#allocation11 + $0x8] sm:$0xff] %vm139, %v352
      %369 = vst.msk [vmem:[#allocation11 + $0x10] sm:$0xff] %vm139, %v353
      %370 = vst.msk [vmem:[#allocation11 + $0x18] sm:$0xff] %vm139, %v354
      %371 = vst.msk [vmem:[#allocation11 + $0x20] sm:$0xff] %vm139, %v355
      %372 = vst.msk [vmem:[#allocation11 + $0x28] sm:$0xff] %vm139, %v356
      %373 = vst.msk [vmem:[#allocation11 + $0x30] sm:$0xff] %vm139, %v357
      %374 = vst.msk [vmem:[#allocation11 + $0x38] sm:$0xff] %vm139, %v358
      %375 = vst.msk [vmem:[#allocation11 + $0x40] sm:$0xff] %vm139, %v359
      %376 = vst.msk [vmem:[#allocation11 + $0x48] sm:$0xff] %vm139, %v360
      %377 = vst.msk [vmem:[#allocation11 + $0x50] sm:$0xff] %vm139, %v361
      %378 = vst.msk [vmem:[#allocation11 + $0x58] sm:$0xff] %vm139, %v362
      %379 = vst.msk [vmem:[#allocation11 + $0x60] sm:$0xff] %vm139, %v363
      %380 = vst.msk [vmem:[#allocation11 + $0x68] sm:$0xff] %vm139, %v364
      %381 = vst.msk [vmem:[#allocation11 + $0x70] sm:$0xff] %vm139, %v365
      %382 = vst.msk [vmem:[#allocation11 + $0x78] sm:$0xff] %vm139, %v366
    $region41: #{mhca_encoder.18} parent=1 // pred_fallthru
      _
    // Predicated region
    $region42: #{mhca_encoder.18} parent=1 // pred_check
      _
    $region43: #{mhca_encoder.18} parent=1 // pred_check_branch
      %384 = sbr.rel (0) target = $region45
    $region44: #{mhca_encoder.18} parent=1 // pred_region
      %s386 = ssub.s32 2048, 2048
      %387 = vsyncadd [#allocation5], %s386
      %s388 = sshll.u32 [#allocation11], 4
      %s389 = int_to_ptr.vmem [resolvable:$true] %s388
      %394 = dma.vmem_to_hbm [thread:$0]  %s389, 2048, %s4, [#allocation5], 128, 128, 8
    $region45: #{mhca_encoder.18} parent=1 // pred_fallthru
      _
    // Predicated region
    $region46: #{mhca_encoder.18} parent=1 // pred_check
      _
    $region47: #{mhca_encoder.18} parent=1 // pred_check_branch
      %396 = sbr.rel (0) target = $region49
    $region48: #{mhca_encoder.18} parent=1 // pred_region
      %397 = dma.done [#allocation5], 2048
    $region49: #{mhca_encoder.18} parent=1 // pred_fallthru
      _
    %398 = vsyncpa [#allocation4], 1
    %399 = vsyncpa [#allocation7], 1
    %400 = vsyncpa [#allocation10], 1
    %401 = vsyncpa [#allocation5], 1

// kernel: mhca_encoder.16
$region0: #{mhca_encoder.16}
  #allocation0 [shape = 'u32[]', space=smem, size = 0x4, offset = 0x4, fixed_abs, tag = 'smem constant byte address 0x4 - core index']
  #allocation1 [shape = 'u32[144,128]{1,0:T(1,128)}', space=vmem, size = 0x12000, scoped, tag = 'internal scratch']
  #allocation2 [shape = 'f32[14,14,32]{2,1,0:T(8,128)}', space=vmem, size = 0x1c000, scoped, tag = 'scratch operand']
  %s0 = inlined_call_operand.hbm [shape: f32[2,8,8,96], index: 0, kind: input, shape index: {}]
  %s1 = inlined_call_operand.hbm [shape: f32[7,7,32], index: 1, kind: input, shape index: {}]
  %s2 = inlined_call_operand.hbm [shape: f32[1,32], index: 2, kind: input, shape index: {}]
  %s3 = inlined_call_operand.hbm [shape: f32[2,8,8,32], index: 3, kind: output, shape index: {}]
  %s4 = sld [smem:[#allocation0]]
  $region57: #{mhca_encoder.16} parent=0
    _
  %s6 = ssub.s32 1, %s4
  %s7 = scalar_select 0, %s6, %s4
  $region1: #{mhca_encoder.16} parent=0
    #allocation3 [shape = 'u8[65536]{0}', space=vmem, size = 0x10000, scoped, tag = 'input window, operand 0']
    #allocation4 [shape = 's32[2]{0}', space=sflag, size = 0x8, scoped, tag = 'scoped memory for mhca_encoder.16']
    #allocation5 [shape = 's32[2]{0}', space=sflag, size = 0x8, scoped, tag = 'scoped memory for mhca_encoder.16']
    #allocation6 [shape = 'u8[28672]{0}', space=vmem, size = 0x7000, scoped, tag = 'input window, operand 1, single buffered']
    #allocation7 [shape = 's32[1]{0}', space=sflag, size = 0x4, scoped, tag = 'scoped memory for mhca_encoder.16']
    #allocation8 [shape = 'u8[512]{0}', space=vmem, size = 0x400, scoped, tag = 'input window, operand 2, single buffered']
    #allocation9 [shape = 'u8[65536]{0}', space=vmem, size = 0x10000, scoped, tag = 'output window, operand 0']
    %8 = vsyncpa [#allocation4], 0
    %s9 = scalar_lea.sflag [#allocation4], 1
    %10 = vsyncpa %s9, 0
    %11 = vsyncpa [#allocation7], 0
    %12 = vsyncpa [#allocation5], 0
    %s13 = scalar_lea.sflag [#allocation5], 1
    %14 = vsyncpa %s13, 0
    loop: start=0, step=1, limit=4
    $region2: #{mhca_encoder.16} parent=1 // loop_pre_header
      _
    $region3: #{mhca_encoder.16} parent=1 // loop_header
      %s16 = sphi 0, %s20
      %p17 = scmp.ge.s32.totalorder %s16, 4
      %s26 = sphi 0, %s28
      %s29 = sphi 0, %s26
      %s30 = sphi 0, %s29
      %s46 = sphi 0, %s30
      %s50 = sphi 0, %s50
      %s52 = sphi 0, %s50
      %s53 = sphi 0, %s52
      %s67 = sphi 0, %s53
      %s71 = sphi 0, %s71
      %s73 = sphi 0, %s71
      %s74 = sphi 0, %s73
      %s88 = sphi 0, %s74
      %s94 = sphi 0, %s96
      %s97 = sphi 0, %s94
      %s98 = sphi 0, %s97
      %s114 = sphi 0, %s98
    $region4: #{mhca_encoder.16} parent=1 // loop_header_branch
      %19 = sbr.rel (%p17) target = $region8
    $region5: #{mhca_encoder.16} parent=1 // loop_body
      %s21 = ssub.s32 %s16, 1
      %s22 = ssub.s32 %s16, 2
      %s23 = sadd.s32 %s16, 1
      %s24 = ssub.s32 %s16, %s23
      %p25 = scmp.eq.s32.totalorder %s24, 0
      %s27 = sadd.s32 %s26, 1
      %s28 = scalar_select %p25, %s26, %s27
      %p31 = pneg %p25
      %p32 = scmp.eq.s32.totalorder %s16, 1
      %p33 = por %p31, %p32
      %p34 = scmp.ne.s32.totalorder %s26, %s29
      %p35 = scmp.eq.s32.totalorder %s16, 0
      %p36 = por %p34, %p35
      %p37 = scmp.ne.s32.totalorder %s26, %s29
      %p38 = scmp.eq.s32.totalorder %s21, 1
      %p39 = por %p37, %p38
      %p40 = scmp.ne.s32.totalorder %s29, %s30
      %p41 = scmp.eq.s32.totalorder %s21, 0
      %p42 = por %p40, %p41
      %p43 = scmp.ne.s32.totalorder %s29, %s30
      %p44 = scmp.eq.s32.totalorder %s22, 1
      %p45 = por %p43, %p44
      %p47 = scmp.ne.s32.totalorder %s30, %s46
      %p48 = scmp.eq.s32.totalorder %s22, 0
      %p49 = por %p47, %p48
      %s51 = sadd.s32 %s50, 1
      %p54 = scmp.eq.s32.totalorder %s16, 1
      %p55 = scmp.ne.s32.totalorder %s50, %s52
      %p56 = scmp.eq.s32.totalorder %s16, 0
      %p57 = por %p55, %p56
      %p58 = scmp.ne.s32.totalorder %s50, %s52
      %p59 = scmp.eq.s32.totalorder %s21, 1
      %p60 = por %p58, %p59
      %p61 = scmp.ne.s32.totalorder %s52, %s53
      %p62 = scmp.eq.s32.totalorder %s21, 0
      %p63 = por %p61, %p62
      %p64 = scmp.ne.s32.totalorder %s52, %s53
      %p65 = scmp.eq.s32.totalorder %s22, 1
      %p66 = por %p64, %p65
      %p68 = scmp.ne.s32.totalorder %s53, %s67
      %p69 = scmp.eq.s32.totalorder %s22, 0
      %p70 = por %p68, %p69
      %s72 = sadd.s32 %s71, 1
      %p75 = scmp.eq.s32.totalorder %s16, 1
      %p76 = scmp.ne.s32.totalorder %s71, %s73
      %p77 = scmp.eq.s32.totalorder %s16, 0
      %p78 = por %p76, %p77
      %p79 = scmp.ne.s32.totalorder %s71, %s73
      %p80 = scmp.eq.s32.totalorder %s21, 1
      %p81 = por %p79, %p80
      %p82 = scmp.ne.s32.totalorder %s73, %s74
      %p83 = scmp.eq.s32.totalorder %s21, 0
      %p84 = por %p82, %p83
      %p85 = scmp.ne.s32.totalorder %s73, %s74
      %p86 = scmp.eq.s32.totalorder %s22, 1
      %p87 = por %p85, %p86
      %p89 = scmp.ne.s32.totalorder %s74, %s88
      %p90 = scmp.eq.s32.totalorder %s22, 0
      %p91 = por %p89, %p90
      %s92 = ssub.s32 %s16, %s23
      %p93 = scmp.eq.s32.totalorder %s92, 0
      %s95 = sadd.s32 %s94, 1
      %s96 = scalar_select %p93, %s94, %s95
      %p99 = pneg %p93
      %p100 = scmp.eq.s32.totalorder %s16, 1
      %p101 = por %p99, %p100
      %p102 = scmp.ne.s32.totalorder %s94, %s97
      %p103 = scmp.eq.s32.totalorder %s16, 0
      %p104 = por %p102, %p103
      %p105 = scmp.ne.s32.totalorder %s94, %s97
      %p106 = scmp.eq.s32.totalorder %s21, 1
      %p107 = por %p105, %p106
      %p108 = scmp.ne.s32.totalorder %s97, %s98
      %p109 = scmp.eq.s32.totalorder %s21, 0
      %p110 = por %p108, %p109
      %p111 = scmp.ne.s32.totalorder %s97, %s98
      %p112 = scmp.eq.s32.totalorder %s22, 1
      %p113 = por %p111, %p112
      %p115 = scmp.ne.s32.totalorder %s98, %s114
      %p116 = scmp.eq.s32.totalorder %s22, 0
      %p117 = por %p115, %p116
      %p118 = scmp.le.s32.totalorder 1, %s16
      %p119 = scmp.lt.s32.totalorder %s16, 3
      %p120 = pnand %p118, %p119
      %p121 = pneg %p120
      // Predicated region
      $region9: #{mhca_encoder.16} parent=5 // pred_check
        _
      $region10: #{mhca_encoder.16} parent=5 // pred_check_branch
        %123 = sbr.rel (%p120) target = $region12
      $region11: #{mhca_encoder.16} parent=5 // pred_region
        %s124 = ssub.s32 %s16, 1
        // Predicated region
        $region13: #{mhca_encoder.16} parent=11 // pred_check
          %p125 = pneg %p63
        $region14: #{mhca_encoder.16} parent=11 // pred_check_branch
          %127 = sbr.rel (%p125) target = $region16
        $region15: #{mhca_encoder.16} parent=11 // pred_region
          %s129 = ssub.s32 896, 896
          %130 = vsyncadd [#allocation7], %s129
          %s131 = sshll.u32 [#allocation6], 4
          %s132 = int_to_ptr.vmem [resolvable:$true] %s131
          %137 = dma.hbm_to_vmem [thread:$0]  %s1, 896, %s132, [#allocation7], 128, 128, 8
        $region16: #{mhca_encoder.16} parent=11 // pred_fallthru
          _
        // Predicated region
        $region17: #{mhca_encoder.16} parent=11 // pred_check
          %p138 = pneg %p84
        $region18: #{mhca_encoder.16} parent=11 // pred_check_branch
          %140 = sbr.rel (%p138) target = $region20
        $region19: #{mhca_encoder.16} parent=11 // pred_region
          %s142 = ssub.s32 16, 16
          %143 = vsyncadd [#allocation7], %s142
          %s145 = sshll.u32 [#allocation8], 4
          %s146 = int_to_ptr.vmem [resolvable:$true] %s145
          %148 = dma.hbm_to_vmem [thread:$0]  %s2, 16, %s146, [#allocation7]
        $region20: #{mhca_encoder.16} parent=11 // pred_fallthru
          _
      $region12: #{mhca_encoder.16} parent=5 // pred_fallthru
        _
      %p149 = scmp.lt.s32.totalorder %s16, 2
      // Predicated region
      $region21: #{mhca_encoder.16} parent=5 // pred_check
        %p150 = pneg %p149
      $region22: #{mhca_encoder.16} parent=5 // pred_check_branch
        %152 = sbr.rel (%p150) target = $region24
      $region23: #{mhca_encoder.16} parent=5 // pred_region
        // Predicated region
        $region25: #{mhca_encoder.16} parent=23 // pred_check
          %p153 = pneg %p36
        $region26: #{mhca_encoder.16} parent=23 // pred_check_branch
          %155 = sbr.rel (%p153) target = $region28
        $region27: #{mhca_encoder.16} parent=23 // pred_region
          %s156 = sand.u32 %s26, 1
          %s157 = scalar_lea.sflag [#allocation4], %s156
          %s158 = sand.u32 %s26, 1
          %s159 = smul.addr %s158, 64
          %s160 = scalar_lea.vmem [#allocation3], %s159
          %s162 = ssub.s32 1024, 1024
          %163 = vsyncadd %s157, %s162
          %s164 = smul.addr %s16, 8
          %s165 = smul.addr %s164, 128
          %s166 = scalar_lea.hbm %s0, %s165
          %s167 = sshll.u32 %s160, 4
          %s168 = int_to_ptr.vmem [resolvable:$true] %s167
          %173 = dma.hbm_to_vmem [thread:$0]  %s166, 1024, %s168, %s157, 128, 128, 8
        $region28: #{mhca_encoder.16} parent=23 // pred_fallthru
          _
      $region24: #{mhca_encoder.16} parent=5 // pred_fallthru
        _
      %p174 = scmp.le.s32.totalorder 1, %s16
      %p175 = scmp.lt.s32.totalorder %s16, 3
      %p176 = pnand %p174, %p175
      %p177 = pneg %p176
      // Predicated region
      $region29: #{mhca_encoder.16} parent=5 // pred_check
        _
      $region30: #{mhca_encoder.16} parent=5 // pred_check_branch
        %179 = sbr.rel (%p176) target = $region32
      $region31: #{mhca_encoder.16} parent=5 // pred_region
        %s180 = ssub.s32 %s16, 1
        %s181 = sand.u32 %s29, 1
        %s182 = scalar_lea.sflag [#allocation4], %s181
        %s183 = sand.u32 %s29, 1
        %s184 = smul.addr %s183, 64
        %s185 = scalar_lea.vmem [#allocation3], %s184
        // Predicated region
        $region33: #{mhca_encoder.16} parent=31 // pred_check
          %p186 = pneg %p42
        $region34: #{mhca_encoder.16} parent=31 // pred_check_branch
          %188 = sbr.rel (%p186) target = $region36
        $region35: #{mhca_encoder.16} parent=31 // pred_region
          %189 = dma.done %s182, 1024
        $region36: #{mhca_encoder.16} parent=31 // pred_fallthru
          _
        // Predicated region
        $region37: #{mhca_encoder.16} parent=31 // pred_check
          %p190 = pneg %p63
        $region38: #{mhca_encoder.16} parent=31 // pred_check_branch
          %192 = sbr.rel (%p190) target = $region40
        $region39: #{mhca_encoder.16} parent=31 // pred_region
          %193 = dma.done [#allocation7], 896
        $region40: #{mhca_encoder.16} parent=31 // pred_fallthru
          _
        // Predicated region
        $region41: #{mhca_encoder.16} parent=31 // pred_check
          %p194 = pneg %p84
        $region42: #{mhca_encoder.16} parent=31 // pred_check_branch
          %196 = sbr.rel (%p194) target = $region44
        $region43: #{mhca_encoder.16} parent=31 // pred_region
          %197 = dma.done [#allocation7], 16
        $region44: #{mhca_encoder.16} parent=31 // pred_fallthru
          _
        %s198 = sand.u32 %s29, 1
        %s199 = scalar_lea.sflag [#allocation4], %s198
        %s200 = sand.u32 %s29, 1
        %s201 = smul.addr %s200, 64
        %s202 = scalar_lea.vmem [#allocation3], %s201
        %p203 = pneg %p42
        %p204 = pneg %p39
        %p205 = pneg %p63
        %p206 = pneg %p60
        %p207 = pneg %p84
        %p208 = pneg %p81
        %p209 = pneg %p110
        %p210 = pneg %p107
        %s211 = sand.u32 %s97, 1
        %s212 = scalar_lea.sflag [#allocation5], %s211
        %s213 = sand.u32 %s97, 1
        %s214 = smul.addr %s213, 64
        %s215 = scalar_lea.vmem [#allocation9], %s214
        %v216 = vld [vmem:[%s185] sm:$0xff]
        %v217 = vld [vmem:[%s185 + $0x8] sm:$0xff]
        %v218 = vld [vmem:[%s185 + $0x10] sm:$0xff]
        %v219 = vld [vmem:[%s185 + $0x18] sm:$0xff]
        %v220 = vld [vmem:[%s185 + $0x20] sm:$0xff]
        %v221 = vld [vmem:[%s185 + $0x28] sm:$0xff]
        %v222 = vld [vmem:[%s185 + $0x30] sm:$0xff]
        %v223 = vld [vmem:[%s185 + $0x38] sm:$0xff]
        %vm224 = vcmask 261120
        %225 = vst.msk [vmem:[#allocation2] sm:$0xff] %vm224, 0.0
        %vm226 = vcmask 259072
        %227 = vst.msk [vmem:[#allocation2 + $0x8] sm:$0x3f] %vm226, 0.0
        %228 = vst.msk [vmem:[#allocation2 + $0x10] sm:$0xff] %vm224, 0.0
        %229 = vst.msk [vmem:[#allocation2 + $0x18] sm:$0x3f] %vm226, 0.0
        %230 = vst.msk [vmem:[#allocation2 + $0x20] sm:$0xff] %vm224, 0.0
        %231 = vst.msk [vmem:[#allocation2 + $0x28] sm:$0x3f] %vm226, 0.0
        %s232 = scalar_lea.vmem [#allocation2], 176
        %233 = vst.msk [vmem:[%s232] sm:$0xff] %vm224, 0.0
        %234 = vst.msk [vmem:[%s232 + $0x8] sm:$0x3f] %vm226, 0.0
        %235 = vst.msk [vmem:[%s232 + $0x10] sm:$0xff] %vm224, 0.0
        %236 = vst.msk [vmem:[%s232 + $0x18] sm:$0x3f] %vm226, 0.0
        %237 = vst.msk [vmem:[%s232 + $0x20] sm:$0xff] %vm224, 0.0
        %238 = vst.msk [vmem:[%s232 + $0x28] sm:$0x3f] %vm226, 0.0
        %s239 = scalar_lea.vmem [#allocation2], 48
        %vm240 = vcmask 256000
        %241 = vst.msk [vmem:[%s239] sm:$0x7] %vm240, 0.0
        %242 = vst.msk [vmem:[%s239 + $0x10] sm:$0x7] %vm240, 0.0
        %243 = vst.msk [vmem:[%s239 + $0x20] sm:$0x7] %vm240, 0.0
        %244 = vst.msk [vmem:[%s239 + $0x30] sm:$0x7] %vm240, 0.0
        %245 = vst.msk [vmem:[%s239 + $0x40] sm:$0x7] %vm240, 0.0
        %246 = vst.msk [vmem:[%s239 + $0x50] sm:$0x7] %vm240, 0.0
        %247 = vst.msk [vmem:[%s239 + $0x60] sm:$0x7] %vm240, 0.0
        %248 = vst.msk [vmem:[%s239 + $0x70] sm:$0x7] %vm240, 0.0
        %249 = vst.msk [vmem:[%s239 + $0xb] sm:$0x7] %vm240, 0.0
        %250 = vst.msk [vmem:[%s239 + $0x1b] sm:$0x7] %vm240, 0.0
        %251 = vst.msk [vmem:[%s239 + $0x2b] sm:$0x7] %vm240, 0.0
        %252 = vst.msk [vmem:[%s239 + $0x3b] sm:$0x7] %vm240, 0.0
        %253 = vst.msk [vmem:[%s239 + $0x4b] sm:$0x7] %vm240, 0.0
        %254 = vst.msk [vmem:[%s239 + $0x5b] sm:$0x7] %vm240, 0.0
        %255 = vst.msk [vmem:[%s239 + $0x6b] sm:$0x7] %vm240, 0.0
        %256 = vst.msk [vmem:[%s239 + $0x7b] sm:$0x7] %vm240, 0.0
        %265 = vrot.lane.b32.xlu0 %v216, 64
        %v266 = vpop.permute.xlu0 %265
        %267 = vrot.lane.b32.xlu0 %v217, 64
        %v268 = vpop.permute.xlu0 %267
        %269 = vrot.lane.b32.xlu0 %v218, 64
        %v270 = vpop.permute.xlu0 %269
        %271 = vrot.lane.b32.xlu0 %v219, 64
        %v272 = vpop.permute.xlu0 %271
        %273 = vrot.lane.b32.xlu0 %v220, 64
        %v274 = vpop.permute.xlu0 %273
        %275 = vrot.lane.b32.xlu0 %v221, 64
        %v276 = vpop.permute.xlu0 %275
        %277 = vrot.lane.b32.xlu0 %v222, 64
        %v278 = vpop.permute.xlu0 %277
        %279 = vrot.lane.b32.xlu0 %v223, 64
        %v280 = vpop.permute.xlu0 %279
        %289 = vst.msk [vmem:[%s239 + $0x3] sm:$0xff] %vm224, %v266
        %290 = vst.msk [vmem:[%s239 + $0x13] sm:$0xff] %vm224, %v268
        %291 = vst.msk [vmem:[%s239 + $0x23] sm:$0xff] %vm224, %v270
        %292 = vst.msk [vmem:[%s239 + $0x33] sm:$0xff] %vm224, %v272
        %293 = vst.msk [vmem:[%s239 + $0x43] sm:$0xff] %vm224, %v274
        %294 = vst.msk [vmem:[%s239 + $0x53] sm:$0xff] %vm224, %v276
        %295 = vst.msk [vmem:[%s239 + $0x63] sm:$0xff] %vm224, %v278
        %296 = vst.msk [vmem:[%s239 + $0x73] sm:$0xff] %vm224, %v280
        %v297 = vld [vmem:[#allocation2] sm:$0xff]
        %v298 = vld [vmem:[#allocation2 + $0x8] sm:$0x3f]
        %v299 = vld [vmem:[#allocation2 + $0x10] sm:$0xff]
        %v300 = vld [vmem:[#allocation2 + $0x18] sm:$0x3f]
        %v301 = vld [vmem:[#allocation2 + $0x20] sm:$0xff]
        %v302 = vld [vmem:[#allocation2 + $0x28] sm:$0x3f]
        %v303 = vld [vmem:[#allocation2 + $0x30] sm:$0xff]
        %v304 = vld [vmem:[#allocation2 + $0x38] sm:$0x3f]
        %v305 = vld [vmem:[#allocation2 + $0x40] sm:$0xff]
        %v306 = vld [vmem:[#allocation2 + $0x48] sm:$0x3f]
        %v307 = vld [vmem:[#allocation2 + $0x50] sm:$0xff]
        %v308 = vld [vmem:[#allocation2 + $0x58] sm:$0x3f]
        %v309 = vld [vmem:[#allocation2 + $0x60] sm:$0xff]
        %v310 = vld [vmem:[#allocation2 + $0x68] sm:$0x3f]
        %v311 = vld [vmem:[#allocation2 + $0x70] sm:$0xff]
        %v312 = vld [vmem:[#allocation2 + $0x78] sm:$0x3f]
        %v313 = vld [vmem:[#allocation2 + $0x80] sm:$0xff]
        %v314 = vld [vmem:[#allocation2 + $0x88] sm:$0x3f]
        %v315 = vld [vmem:[#allocation2 + $0x90] sm:$0xff]
        %v316 = vld [vmem:[#allocation2 + $0x98] sm:$0x3f]
        %v317 = vld [vmem:[#allocation2 + $0xa0] sm:$0xff]
        %v318 = vld [vmem:[#allocation2 + $0xa8] sm:$0x3f]
        %v319 = vld [vmem:[#allocation2 + $0xb0] sm:$0xff]
        %v320 = vld [vmem:[#allocation2 + $0xb8] sm:$0x3f]
        %v321 = vld [vmem:[#allocation2 + $0xc0] sm:$0xff]
        %v322 = vld [vmem:[#allocation2 + $0xc8] sm:$0x3f]
        %v323 = vld [vmem:[#allocation2 + $0xd0] sm:$0xff]
        %v324 = vld [vmem:[#allocation2 + $0xd8] sm:$0x3f]
        %v325 = vld [vmem:[#allocation6] sm:$0x7f]
        %v326 = vld [vmem:[#allocation6 + $0x8] sm:$0x7f]
        %v327 = vld [vmem:[#allocation6 + $0x10] sm:$0x7f]
        %v328 = vld [vmem:[#allocation6 + $0x18] sm:$0x7f]
        %v329 = vld [vmem:[#allocation6 + $0x20] sm:$0x7f]
        %v330 = vld [vmem:[#allocation6 + $0x28] sm:$0x7f]
        %v331 = vld [vmem:[#allocation6 + $0x30] sm:$0x7f]
        %v332 = vlaneseq
        %v333 = vshrl.u32 %v332, 7
        %v334 = vsub.s32 0, %v333
        %v335 = vrot.slane %v325, %v334
        %v336 = vmul.f32 %v297, %v335
        %v337 = vmul.f32 %v299, %v335
        %v338 = vmul.f32 %v301, %v335
        %v339 = vmul.f32 %v303, %v335
        %v340 = vmul.f32 %v305, %v335
        %v341 = vmul.f32 %v307, %v335
        %v342 = vmul.f32 %v309, %v335
        %v343 = vmul.f32 %v311, %v335
        %v344 = vadd.f32 %v336, 0.0
        %v345 = vadd.f32 %v337, 0.0
        %v346 = vadd.f32 %v338, 0.0
        %v347 = vadd.f32 %v339, 0.0
        %v348 = vadd.f32 %v340, 0.0
        %v349 = vadd.f32 %v341, 0.0
        %v350 = vadd.f32 %v342, 0.0
        %v351 = vadd.f32 %v343, 0.0
        %v352 = vlaneseq
        %v353 = vshrl.u32 %v352, 7
        %v354 = vsub.s32 1, %v353
        %v355 = vrot.slane %v325, %v354
        %v356 = vmul.f32 %v297, %v355
        %v357 = vmul.f32 %v298, %v355
        %v358 = vmul.f32 %v299, %v355
        %v359 = vmul.f32 %v300, %v355
        %v360 = vmul.f32 %v301, %v355
        %v361 = vmul.f32 %v302, %v355
        %v362 = vmul.f32 %v303, %v355
        %v363 = vmul.f32 %v304, %v355
        %v364 = vmul.f32 %v305, %v355
        %v365 = vmul.f32 %v306, %v355
        %v366 = vmul.f32 %v307, %v355
        %v367 = vmul.f32 %v308, %v355
        %v368 = vmul.f32 %v309, %v355
        %v369 = vmul.f32 %v310, %v355
        %v370 = vmul.f32 %v311, %v355
        %v371 = vmul.f32 %v312, %v355
        %vm388 = vcmask 1046528
        %v389 = vrot.slane %v356, 1
        %v390 = vrot.slane %v357, 1
        %v391 = vsel %vm388, %v389, %v390
        %v392 = vrot.slane %v358, 1
        %v393 = vrot.slane %v359, 1
        %v394 = vsel %vm388, %v392, %v393
        %v395 = vrot.slane %v360, 1
        %v396 = vrot.slane %v361, 1
        %v397 = vsel %vm388, %v395, %v396
        %v398 = vrot.slane %v362, 1
        %v399 = vrot.slane %v363, 1
        %v400 = vsel %vm388, %v398, %v399
        %v401 = vrot.slane %v364, 1
        %v402 = vrot.slane %v365, 1
        %v403 = vsel %vm388, %v401, %v402
        %v404 = vrot.slane %v366, 1
        %v405 = vrot.slane %v367, 1
        %v406 = vsel %vm388, %v404, %v405
        %v407 = vrot.slane %v368, 1
        %v408 = vrot.slane %v369, 1
        %v409 = vsel %vm388, %v407, %v408
        %v410 = vrot.slane %v370, 1
        %v411 = vrot.slane %v371, 1
        %v412 = vsel %vm388, %v410, %v411
        %v421 = vadd.f32 %v344, %v391
        %v422 = vadd.f32 %v345, %v394
        %v423 = vadd.f32 %v346, %v397
        %v424 = vadd.f32 %v347, %v400
        %v425 = vadd.f32 %v348, %v403
        %v426 = vadd.f32 %v349, %v406
        %v427 = vadd.f32 %v350, %v409
        %v428 = vadd.f32 %v351, %v412
        %v429 = vlaneseq
        %v430 = vshrl.u32 %v429, 7
        %v431 = vsub.s32 2, %v430
        %v432 = vrot.slane %v325, %v431
        %v433 = vmul.f32 %v297, %v432
        %v434 = vmul.f32 %v298, %v432
        %v435 = vmul.f32 %v299, %v432
        %v436 = vmul.f32 %v300, %v432
        %v437 = vmul.f32 %v301, %v432
        %v438 = vmul.f32 %v302, %v432
        %v439 = vmul.f32 %v303, %v432
        %v440 = vmul.f32 %v304, %v432
        %v441 = vmul.f32 %v305, %v432
        %v442 = vmul.f32 %v306, %v432
        %v443 = vmul.f32 %v307, %v432
        %v444 = vmul.f32 %v308, %v432
        %v445 = vmul.f32 %v309, %v432
        %v446 = vmul.f32 %v310, %v432
        %v447 = vmul.f32 %v311, %v432
        %v448 = vmul.f32 %v312, %v432
        %vm465 = vcmask 1045504
        %v466 = vrot.slane %v433, 2
        %v467 = vrot.slane %v434, 2
        %v468 = vsel %vm465, %v466, %v467
        %v469 = vrot.slane %v435, 2
        %v470 = vrot.slane %v436, 2
        %v471 = vsel %vm465, %v469, %v470
        %v472 = vrot.slane %v437, 2
        %v473 = vrot.slane %v438, 2
        %v474 = vsel %vm465, %v472, %v473
        %v475 = vrot.slane %v439, 2
        %v476 = vrot.slane %v440, 2
        %v477 = vsel %vm465, %v475, %v476
        %v478 = vrot.slane %v441, 2
        %v479 = vrot.slane %v442, 2
        %v480 = vsel %vm465, %v478, %v479
        %v481 = vrot.slane %v443, 2
        %v482 = vrot.slane %v444, 2
        %v483 = vsel %vm465, %v481, %v482
        %v484 = vrot.slane %v445, 2
        %v485 = vrot.slane %v446, 2
        %v486 = vsel %vm465, %v484, %v485
        %v487 = vrot.slane %v447, 2
        %v488 = vrot.slane %v448, 2
        %v489 = vsel %vm465, %v487, %v488
        %v498 = vadd.f32 %v421, %v468
        %v499 = vadd.f32 %v422, %v471
        %v500 = vadd.f32 %v423, %v474
        %v501 = vadd.f32 %v424, %v477
        %v502 = vadd.f32 %v425, %v480
        %v503 = vadd.f32 %v426, %v483
        %v504 = vadd.f32 %v427, %v486
        %v505 = vadd.f32 %v428, %v489
        %v506 = vlaneseq
        %v507 = vshrl.u32 %v506, 7
        %v508 = vsub.s32 3, %v507
        %v509 = vrot.slane %v325, %v508
        %v510 = vmul.f32 %v297, %v509
        %v511 = vmul.f32 %v298, %v509
        %v512 = vmul.f32 %v299, %v509
        %v513 = vmul.f32 %v300, %v509
        %v514 = vmul.f32 %v301, %v509
        %v515 = vmul.f32 %v302, %v509
        %v516 = vmul.f32 %v303, %v509
        %v517 = vmul.f32 %v304, %v509
        %v518 = vmul.f32 %v305, %v509
        %v519 = vmul.f32 %v306, %v509
        %v520 = vmul.f32 %v307, %v509
        %v521 = vmul.f32 %v308, %v509
        %v522 = vmul.f32 %v309, %v509
        %v523 = vmul.f32 %v310, %v509
        %v524 = vmul.f32 %v311, %v509
        %v525 = vmul.f32 %v312, %v509
        %vm542 = vcmask 1044480
        %v543 = vrot.slane %v510, 3
        %v544 = vrot.slane %v511, 3
        %v545 = vsel %vm542, %v543, %v544
        %v546 = vrot.slane %v512, 3
        %v547 = vrot.slane %v513, 3
        %v548 = vsel %vm542, %v546, %v547
        %v549 = vrot.slane %v514, 3
        %v550 = vrot.slane %v515, 3
        %v551 = vsel %vm542, %v549, %v550
        %v552 = vrot.slane %v516, 3
        %v553 = vrot.slane %v517, 3
        %v554 = vsel %vm542, %v552, %v553
        %v555 = vrot.slane %v518, 3
        %v556 = vrot.slane %v519, 3
        %v557 = vsel %vm542, %v555, %v556
        %v558 = vrot.slane %v520, 3
        %v559 = vrot.slane %v521, 3
        %v560 = vsel %vm542, %v558, %v559
        %v561 = vrot.slane %v522, 3
        %v562 = vrot.slane %v523, 3
        %v563 = vsel %vm542, %v561, %v562
        %v564 = vrot.slane %v524, 3
        %v565 = vrot.slane %v525, 3
        %v566 = vsel %vm542, %v564, %v565
        %v575 = vadd.f32 %v498, %v545
        %v576 = vadd.f32 %v499, %v548
        %v577 = vadd.f32 %v500, %v551
        %v578 = vadd.f32 %v501, %v554
        %v579 = vadd.f32 %v502, %v557
        %v580 = vadd.f32 %v503, %v560
        %v581 = vadd.f32 %v504, %v563
        %v582 = vadd.f32 %v505, %v566
        %v583 = vlaneseq
        %v584 = vshrl.u32 %v583, 7
        %v585 = vsub.s32 4, %v584
        %v586 = vrot.slane %v325, %v585
        %v587 = vmul.f32 %v297, %v586
        %v588 = vmul.f32 %v298, %v586
        %v589 = vmul.f32 %v299, %v586
        %v590 = vmul.f32 %v300, %v586
        %v591 = vmul.f32 %v301, %v586
        %v592 = vmul.f32 %v302, %v586
        %v593 = vmul.f32 %v303, %v586
        %v594 = vmul.f32 %v304, %v586
        %v595 = vmul.f32 %v305, %v586
        %v596 = vmul.f32 %v306, %v586
        %v597 = vmul.f32 %v307, %v586
        %v598 = vmul.f32 %v308, %v586
        %v599 = vmul.f32 %v309, %v586
        %v600 = vmul.f32 %v310, %v586
        %v601 = vmul.f32 %v311, %v586
        %v602 = vmul.f32 %v312, %v586
        %vm619 = vcmask 1043456
        %v620 = vrot.slane %v587, 4
        %v621 = vrot.slane %v588, 4
        %v622 = vsel %vm619, %v620, %v621
        %v623 = vrot.slane %v589, 4
        %v624 = vrot.slane %v590, 4
        %v625 = vsel %vm619, %v623, %v624
        %v626 = vrot.slane %v591, 4
        %v627 = vrot.slane %v592, 4
        %v628 = vsel %vm619, %v626, %v627
        %v629 = vrot.slane %v593, 4
        %v630 = vrot.slane %v594, 4
        %v631 = vsel %vm619, %v629, %v630
        %v632 = vrot.slane %v595, 4
        %v633 = vrot.slane %v596, 4
        %v634 = vsel %vm619, %v632, %v633
        %v635 = vrot.slane %v597, 4
        %v636 = vrot.slane %v598, 4
        %v637 = vsel %vm619, %v635, %v636
        %v638 = vrot.slane %v599, 4
        %v639 = vrot.slane %v600, 4
        %v640 = vsel %vm619, %v638, %v639
        %v641 = vrot.slane %v601, 4
        %v642 = vrot.slane %v602, 4
        %v643 = vsel %vm619, %v641, %v642
        %v652 = vadd.f32 %v575, %v622
        %v653 = vadd.f32 %v576, %v625
        %v654 = vadd.f32 %v577, %v628
        %v655 = vadd.f32 %v578, %v631
        %v656 = vadd.f32 %v579, %v634
        %v657 = vadd.f32 %v580, %v637
        %v658 = vadd.f32 %v581, %v640
        %v659 = vadd.f32 %v582, %v643
        %v660 = vlaneseq
        %v661 = vshrl.u32 %v660, 7
        %v662 = vsub.s32 5, %v661
        %v663 = vrot.slane %v325, %v662
        %v664 = vmul.f32 %v297, %v663
        %v665 = vmul.f32 %v298, %v663
        %v666 = vmul.f32 %v299, %v663
        %v667 = vmul.f32 %v300, %v663
        %v668 = vmul.f32 %v301, %v663
        %v669 = vmul.f32 %v302, %v663
        %v670 = vmul.f32 %v303, %v663
        %v671 = vmul.f32 %v304, %v663
        %v672 = vmul.f32 %v305, %v663
        %v673 = vmul.f32 %v306, %v663
        %v674 = vmul.f32 %v307, %v663
        %v675 = vmul.f32 %v308, %v663
        %v676 = vmul.f32 %v309, %v663
        %v677 = vmul.f32 %v310, %v663
        %v678 = vmul.f32 %v311, %v663
        %v679 = vmul.f32 %v312, %v663
        %vm696 = vcmask 1042432
        %v697 = vrot.slane %v664, 5
        %v698 = vrot.slane %v665, 5
        %v699 = vsel %vm696, %v697, %v698
        %v700 = vrot.slane %v666, 5
        %v701 = vrot.slane %v667, 5
        %v702 = vsel %vm696, %v700, %v701
        %v703 = vrot.slane %v668, 5
        %v704 = vrot.slane %v669, 5
        %v705 = vsel %vm696, %v703, %v704
        %v706 = vrot.slane %v670, 5
        %v707 = vrot.slane %v671, 5
        %v708 = vsel %vm696, %v706, %v707
        %v709 = vrot.slane %v672, 5
        %v710 = vrot.slane %v673, 5
        %v711 = vsel %vm696, %v709, %v710
        %v712 = vrot.slane %v674, 5
        %v713 = vrot.slane %v675, 5
        %v714 = vsel %vm696, %v712, %v713
        %v715 = vrot.slane %v676, 5
        %v716 = vrot.slane %v677, 5
        %v717 = vsel %vm696, %v715, %v716
        %v718 = vrot.slane %v678, 5
        %v719 = vrot.slane %v679, 5
        %v720 = vsel %vm696, %v718, %v719
        %v729 = vadd.f32 %v652, %v699
        %v730 = vadd.f32 %v653, %v702
        %v731 = vadd.f32 %v654, %v705
        %v732 = vadd.f32 %v655, %v708
        %v733 = vadd.f32 %v656, %v711
        %v734 = vadd.f32 %v657, %v714
        %v735 = vadd.f32 %v658, %v717
        %v736 = vadd.f32 %v659, %v720
        %v737 = vlaneseq
        %v738 = vshrl.u32 %v737, 7
        %v739 = vsub.s32 6, %v738
        %v740 = vrot.slane %v325, %v739
        %v741 = vmul.f32 %v297, %v740
        %v742 = vmul.f32 %v298, %v740
        %v743 = vmul.f32 %v299, %v740
        %v744 = vmul.f32 %v300, %v740
        %v745 = vmul.f32 %v301, %v740
        %v746 = vmul.f32 %v302, %v740
        %v747 = vmul.f32 %v303, %v740
        %v748 = vmul.f32 %v304, %v740
        %v749 = vmul.f32 %v305, %v740
        %v750 = vmul.f32 %v306, %v740
        %v751 = vmul.f32 %v307, %v740
        %v752 = vmul.f32 %v308, %v740
        %v753 = vmul.f32 %v309, %v740
        %v754 = vmul.f32 %v310, %v740
        %v755 = vmul.f32 %v311, %v740
        %v756 = vmul.f32 %v312, %v740
        %vm773 = vcmask 1041408
        %v774 = vrot.slane %v741, 6
        %v775 = vrot.slane %v742, 6
        %v776 = vsel %vm773, %v774, %v775
        %v777 = vrot.slane %v743, 6
        %v778 = vrot.slane %v744, 6
        %v779 = vsel %vm773, %v777, %v778
        %v780 = vrot.slane %v745, 6
        %v781 = vrot.slane %v746, 6
        %v782 = vsel %vm773, %v780, %v781
        %v783 = vrot.slane %v747, 6
        %v784 = vrot.slane %v748, 6
        %v785 = vsel %vm773, %v783, %v784
        %v786 = vrot.slane %v749, 6
        %v787 = vrot.slane %v750, 6
        %v788 = vsel %vm773, %v786, %v787
        %v789 = vrot.slane %v751, 6
        %v790 = vrot.slane %v752, 6
        %v791 = vsel %vm773, %v789, %v790
        %v792 = vrot.slane %v753, 6
        %v793 = vrot.slane %v754, 6
        %v794 = vsel %vm773, %v792, %v793
        %v795 = vrot.slane %v755, 6
        %v796 = vrot.slane %v756, 6
        %v797 = vsel %vm773, %v795, %v796
        %v806 = vadd.f32 %v729, %v776
        %v807 = vadd.f32 %v730, %v779
        %v808 = vadd.f32 %v731, %v782
        %v809 = vadd.f32 %v732, %v785
        %v810 = vadd.f32 %v733, %v788
        %v811 = vadd.f32 %v734, %v791
        %v812 = vadd.f32 %v735, %v794
        %v813 = vadd.f32 %v736, %v797
        %v814 = vlaneseq
        %v815 = vshrl.u32 %v814, 7
        %v816 = vsub.s32 0, %v815
        %v817 = vrot.slane %v326, %v816
        %v818 = vmul.f32 %v299, %v817
        %v819 = vmul.f32 %v301, %v817
        %v820 = vmul.f32 %v303, %v817
        %v821 = vmul.f32 %v305, %v817
        %v822 = vmul.f32 %v307, %v817
        %v823 = vmul.f32 %v309, %v817
        %v824 = vmul.f32 %v311, %v817
        %v825 = vmul.f32 %v313, %v817
        %v826 = vadd.f32 %v806, %v818
        %v827 = vadd.f32 %v807, %v819
        %v828 = vadd.f32 %v808, %v820
        %v829 = vadd.f32 %v809, %v821
        %v830 = vadd.f32 %v810, %v822
        %v831 = vadd.f32 %v811, %v823
        %v832 = vadd.f32 %v812, %v824
        %v833 = vadd.f32 %v813, %v825
        %v834 = vlaneseq
        %v835 = vshrl.u32 %v834, 7
        %v836 = vsub.s32 1, %v835
        %v837 = vrot.slane %v326, %v836
        %v838 = vmul.f32 %v299, %v837
        %v839 = vmul.f32 %v300, %v837
        %v840 = vmul.f32 %v301, %v837
        %v841 = vmul.f32 %v302, %v837
        %v842 = vmul.f32 %v303, %v837
        %v843 = vmul.f32 %v304, %v837
        %v844 = vmul.f32 %v305, %v837
        %v845 = vmul.f32 %v306, %v837
        %v846 = vmul.f32 %v307, %v837
        %v847 = vmul.f32 %v308, %v837
        %v848 = vmul.f32 %v309, %v837
        %v849 = vmul.f32 %v310, %v837
        %v850 = vmul.f32 %v311, %v837
        %v851 = vmul.f32 %v312, %v837
        %v852 = vmul.f32 %v313, %v837
        %v853 = vmul.f32 %v314, %v837
        %v870 = vrot.slane %v838, 1
        %v871 = vrot.slane %v839, 1
        %v872 = vsel %vm388, %v870, %v871
        %v873 = vrot.slane %v840, 1
        %v874 = vrot.slane %v841, 1
        %v875 = vsel %vm388, %v873, %v874
        %v876 = vrot.slane %v842, 1
        %v877 = vrot.slane %v843, 1
        %v878 = vsel %vm388, %v876, %v877
        %v879 = vrot.slane %v844, 1
        %v880 = vrot.slane %v845, 1
        %v881 = vsel %vm388, %v879, %v880
        %v882 = vrot.slane %v846, 1
        %v883 = vrot.slane %v847, 1
        %v884 = vsel %vm388, %v882, %v883
        %v885 = vrot.slane %v848, 1
        %v886 = vrot.slane %v849, 1
        %v887 = vsel %vm388, %v885, %v886
        %v888 = vrot.slane %v850, 1
        %v889 = vrot.slane %v851, 1
        %v890 = vsel %vm388, %v888, %v889
        %v891 = vrot.slane %v852, 1
        %v892 = vrot.slane %v853, 1
        %v893 = vsel %vm388, %v891, %v892
        %v902 = vadd.f32 %v826, %v872
        %v903 = vadd.f32 %v827, %v875
        %v904 = vadd.f32 %v828, %v878
        %v905 = vadd.f32 %v829, %v881
        %v906 = vadd.f32 %v830, %v884
        %v907 = vadd.f32 %v831, %v887
        %v908 = vadd.f32 %v832, %v890
        %v909 = vadd.f32 %v833, %v893
        %v910 = vlaneseq
        %v911 = vshrl.u32 %v910, 7
        %v912 = vsub.s32 2, %v911
        %v913 = vrot.slane %v326, %v912
        %v914 = vmul.f32 %v299, %v913
        %v915 = vmul.f32 %v300, %v913
        %v916 = vmul.f32 %v301, %v913
        %v917 = vmul.f32 %v302, %v913
        %v918 = vmul.f32 %v303, %v913
        %v919 = vmul.f32 %v304, %v913
        %v920 = vmul.f32 %v305, %v913
        %v921 = vmul.f32 %v306, %v913
        %v922 = vmul.f32 %v307, %v913
        %v923 = vmul.f32 %v308, %v913
        %v924 = vmul.f32 %v309, %v913
        %v925 = vmul.f32 %v310, %v913
        %v926 = vmul.f32 %v311, %v913
        %v927 = vmul.f32 %v312, %v913
        %v928 = vmul.f32 %v313, %v913
        %v929 = vmul.f32 %v314, %v913
        %v946 = vrot.slane %v914, 2
        %v947 = vrot.slane %v915, 2
        %v948 = vsel %vm465, %v946, %v947
        %v949 = vrot.slane %v916, 2
        %v950 = vrot.slane %v917, 2
        %v951 = vsel %vm465, %v949, %v950
        %v952 = vrot.slane %v918, 2
        %v953 = vrot.slane %v919, 2
        %v954 = vsel %vm465, %v952, %v953
        %v955 = vrot.slane %v920, 2
        %v956 = vrot.slane %v921, 2
        %v957 = vsel %vm465, %v955, %v956
        %v958 = vrot.slane %v922, 2
        %v959 = vrot.slane %v923, 2
        %v960 = vsel %vm465, %v958, %v959
        %v961 = vrot.slane %v924, 2
        %v962 = vrot.slane %v925, 2
        %v963 = vsel %vm465, %v961, %v962
        %v964 = vrot.slane %v926, 2
        %v965 = vrot.slane %v927, 2
        %v966 = vsel %vm465, %v964, %v965
        %v967 = vrot.slane %v928, 2
        %v968 = vrot.slane %v929, 2
        %v969 = vsel %vm465, %v967, %v968
        %v978 = vadd.f32 %v902, %v948
        %v979 = vadd.f32 %v903, %v951
        %v980 = vadd.f32 %v904, %v954
        %v981 = vadd.f32 %v905, %v957
        %v982 = vadd.f32 %v906, %v960
        %v983 = vadd.f32 %v907, %v963
        %v984 = vadd.f32 %v908, %v966
        %v985 = vadd.f32 %v909, %v969
        %v986 = vlaneseq
        %v987 = vshrl.u32 %v986, 7
        %v988 = vsub.s32 3, %v987
        %v989 = vrot.slane %v326, %v988
        %v990 = vmul.f32 %v299, %v989
        %v991 = vmul.f32 %v300, %v989
        %v992 = vmul.f32 %v301, %v989
        %v993 = vmul.f32 %v302, %v989
        %v994 = vmul.f32 %v303, %v989
        %v995 = vmul.f32 %v304, %v989
        %v996 = vmul.f32 %v305, %v989
        %v997 = vmul.f32 %v306, %v989
        %v998 = vmul.f32 %v307, %v989
        %v999 = vmul.f32 %v308, %v989
        %v1000 = vmul.f32 %v309, %v989
        %v1001 = vmul.f32 %v310, %v989
        %v1002 = vmul.f32 %v311, %v989
        %v1003 = vmul.f32 %v312, %v989
        %v1004 = vmul.f32 %v313, %v989
        %v1005 = vmul.f32 %v314, %v989
        %v1022 = vrot.slane %v990, 3
        %v1023 = vrot.slane %v991, 3
        %v1024 = vsel %vm542, %v1022, %v1023
        %v1025 = vrot.slane %v992, 3
        %v1026 = vrot.slane %v993, 3
        %v1027 = vsel %vm542, %v1025, %v1026
        %v1028 = vrot.slane %v994, 3
        %v1029 = vrot.slane %v995, 3
        %v1030 = vsel %vm542, %v1028, %v1029
        %v1031 = vrot.slane %v996, 3
        %v1032 = vrot.slane %v997, 3
        %v1033 = vsel %vm542, %v1031, %v1032
        %v1034 = vrot.slane %v998, 3
        %v1035 = vrot.slane %v999, 3
        %v1036 = vsel %vm542, %v1034, %v1035
        %v1037 = vrot.slane %v1000, 3
        %v1038 = vrot.slane %v1001, 3
        %v1039 = vsel %vm542, %v1037, %v1038
        %v1040 = vrot.slane %v1002, 3
        %v1041 = vrot.slane %v1003, 3
        %v1042 = vsel %vm542, %v1040, %v1041
        %v1043 = vrot.slane %v1004, 3
        %v1044 = vrot.slane %v1005, 3
        %v1045 = vsel %vm542, %v1043, %v1044
        %v1054 = vadd.f32 %v978, %v1024
        %v1055 = vadd.f32 %v979, %v1027
        %v1056 = vadd.f32 %v980, %v1030
        %v1057 = vadd.f32 %v981, %v1033
        %v1058 = vadd.f32 %v982, %v1036
        %v1059 = vadd.f32 %v983, %v1039
        %v1060 = vadd.f32 %v984, %v1042
        %v1061 = vadd.f32 %v985, %v1045
        %v1062 = vlaneseq
        %v1063 = vshrl.u32 %v1062, 7
        %v1064 = vsub.s32 4, %v1063
        %v1065 = vrot.slane %v326, %v1064
        %v1066 = vmul.f32 %v299, %v1065
        %v1067 = vmul.f32 %v300, %v1065
        %v1068 = vmul.f32 %v301, %v1065
        %v1069 = vmul.f32 %v302, %v1065
        %v1070 = vmul.f32 %v303, %v1065
        %v1071 = vmul.f32 %v304, %v1065
        %v1072 = vmul.f32 %v305, %v1065
        %v1073 = vmul.f32 %v306, %v1065
        %v1074 = vmul.f32 %v307, %v1065
        %v1075 = vmul.f32 %v308, %v1065
        %v1076 = vmul.f32 %v309, %v1065
        %v1077 = vmul.f32 %v310, %v1065
        %v1078 = vmul.f32 %v311, %v1065
        %v1079 = vmul.f32 %v312, %v1065
        %v1080 = vmul.f32 %v313, %v1065
        %v1081 = vmul.f32 %v314, %v1065
        %v1098 = vrot.slane %v1066, 4
        %v1099 = vrot.slane %v1067, 4
        %v1100 = vsel %vm619, %v1098, %v1099
        %v1101 = vrot.slane %v1068, 4
        %v1102 = vrot.slane %v1069, 4
        %v1103 = vsel %vm619, %v1101, %v1102
        %v1104 = vrot.slane %v1070, 4
        %v1105 = vrot.slane %v1071, 4
        %v1106 = vsel %vm619, %v1104, %v1105
        %v1107 = vrot.slane %v1072, 4
        %v1108 = vrot.slane %v1073, 4
        %v1109 = vsel %vm619, %v1107, %v1108
        %v1110 = vrot.slane %v1074, 4
        %v1111 = vrot.slane %v1075, 4
        %v1112 = vsel %vm619, %v1110, %v1111
        %v1113 = vrot.slane %v1076, 4
        %v1114 = vrot.slane %v1077, 4
        %v1115 = vsel %vm619, %v1113, %v1114
        %v1116 = vrot.slane %v1078, 4
        %v1117 = vrot.slane %v1079, 4
        %v1118 = vsel %vm619, %v1116, %v1117
        %v1119 = vrot.slane %v1080, 4
        %v1120 = vrot.slane %v1081, 4
        %v1121 = vsel %vm619, %v1119, %v1120
        %v1130 = vadd.f32 %v1054, %v1100
        %v1131 = vadd.f32 %v1055, %v1103
        %v1132 = vadd.f32 %v1056, %v1106
        %v1133 = vadd.f32 %v1057, %v1109
        %v1134 = vadd.f32 %v1058, %v1112
        %v1135 = vadd.f32 %v1059, %v1115
        %v1136 = vadd.f32 %v1060, %v1118
        %v1137 = vadd.f32 %v1061, %v1121
        %v1138 = vlaneseq
        %v1139 = vshrl.u32 %v1138, 7
        %v1140 = vsub.s32 5, %v1139
        %v1141 = vrot.slane %v326, %v1140
        %v1142 = vmul.f32 %v299, %v1141
        %v1143 = vmul.f32 %v300, %v1141
        %v1144 = vmul.f32 %v301, %v1141
        %v1145 = vmul.f32 %v302, %v1141
        %v1146 = vmul.f32 %v303, %v1141
        %v1147 = vmul.f32 %v304, %v1141
        %v1148 = vmul.f32 %v305, %v1141
        %v1149 = vmul.f32 %v306, %v1141
        %v1150 = vmul.f32 %v307, %v1141
        %v1151 = vmul.f32 %v308, %v1141
        %v1152 = vmul.f32 %v309, %v1141
        %v1153 = vmul.f32 %v310, %v1141
        %v1154 = vmul.f32 %v311, %v1141
        %v1155 = vmul.f32 %v312, %v1141
        %v1156 = vmul.f32 %v313, %v1141
        %v1157 = vmul.f32 %v314, %v1141
        %v1174 = vrot.slane %v1142, 5
        %v1175 = vrot.slane %v1143, 5
        %v1176 = vsel %vm696, %v1174, %v1175
        %v1177 = vrot.slane %v1144, 5
        %v1178 = vrot.slane %v1145, 5
        %v1179 = vsel %vm696, %v1177, %v1178
        %v1180 = vrot.slane %v1146, 5
        %v1181 = vrot.slane %v1147, 5
        %v1182 = vsel %vm696, %v1180, %v1181
        %v1183 = vrot.slane %v1148, 5
        %v1184 = vrot.slane %v1149, 5
        %v1185 = vsel %vm696, %v1183, %v1184
        %v1186 = vrot.slane %v1150, 5
        %v1187 = vrot.slane %v1151, 5
        %v1188 = vsel %vm696, %v1186, %v1187
        %v1189 = vrot.slane %v1152, 5
        %v1190 = vrot.slane %v1153, 5
        %v1191 = vsel %vm696, %v1189, %v1190
        %v1192 = vrot.slane %v1154, 5
        %v1193 = vrot.slane %v1155, 5
        %v1194 = vsel %vm696, %v1192, %v1193
        %v1195 = vrot.slane %v1156, 5
        %v1196 = vrot.slane %v1157, 5
        %v1197 = vsel %vm696, %v1195, %v1196
        %v1206 = vadd.f32 %v1130, %v1176
        %v1207 = vadd.f32 %v1131, %v1179
        %v1208 = vadd.f32 %v1132, %v1182
        %v1209 = vadd.f32 %v1133, %v1185
        %v1210 = vadd.f32 %v1134, %v1188
        %v1211 = vadd.f32 %v1135, %v1191
        %v1212 = vadd.f32 %v1136, %v1194
        %v1213 = vadd.f32 %v1137, %v1197
        %v1214 = vlaneseq
        %v1215 = vshrl.u32 %v1214, 7
        %v1216 = vsub.s32 6, %v1215
        %v1217 = vrot.slane %v326, %v1216
        %v1218 = vmul.f32 %v299, %v1217
        %v1219 = vmul.f32 %v300, %v1217
        %v1220 = vmul.f32 %v301, %v1217
        %v1221 = vmul.f32 %v302, %v1217
        %v1222 = vmul.f32 %v303, %v1217
        %v1223 = vmul.f32 %v304, %v1217
        %v1224 = vmul.f32 %v305, %v1217
        %v1225 = vmul.f32 %v306, %v1217
        %v1226 = vmul.f32 %v307, %v1217
        %v1227 = vmul.f32 %v308, %v1217
        %v1228 = vmul.f32 %v309, %v1217
        %v1229 = vmul.f32 %v310, %v1217
        %v1230 = vmul.f32 %v311, %v1217
        %v1231 = vmul.f32 %v312, %v1217
        %v1232 = vmul.f32 %v313, %v1217
        %v1233 = vmul.f32 %v314, %v1217
        %v1250 = vrot.slane %v1218, 6
        %v1251 = vrot.slane %v1219, 6
        %v1252 = vsel %vm773, %v1250, %v1251
        %v1253 = vrot.slane %v1220, 6
        %v1254 = vrot.slane %v1221, 6
        %v1255 = vsel %vm773, %v1253, %v1254
        %v1256 = vrot.slane %v1222, 6
        %v1257 = vrot.slane %v1223, 6
        %v1258 = vsel %vm773, %v1256, %v1257
        %v1259 = vrot.slane %v1224, 6
        %v1260 = vrot.slane %v1225, 6
        %v1261 = vsel %vm773, %v1259, %v1260
        %v1262 = vrot.slane %v1226, 6
        %v1263 = vrot.slane %v1227, 6
        %v1264 = vsel %vm773, %v1262, %v1263
        %v1265 = vrot.slane %v1228, 6
        %v1266 = vrot.slane %v1229, 6
        %v1267 = vsel %vm773, %v1265, %v1266
        %v1268 = vrot.slane %v1230, 6
        %v1269 = vrot.slane %v1231, 6
        %v1270 = vsel %vm773, %v1268, %v1269
        %v1271 = vrot.slane %v1232, 6
        %v1272 = vrot.slane %v1233, 6
        %v1273 = vsel %vm773, %v1271, %v1272
        %v1282 = vadd.f32 %v1206, %v1252
        %v1283 = vadd.f32 %v1207, %v1255
        %v1284 = vadd.f32 %v1208, %v1258
        %v1285 = vadd.f32 %v1209, %v1261
        %v1286 = vadd.f32 %v1210, %v1264
        %v1287 = vadd.f32 %v1211, %v1267
        %v1288 = vadd.f32 %v1212, %v1270
        %v1289 = vadd.f32 %v1213, %v1273
        %v1290 = vlaneseq
        %v1291 = vshrl.u32 %v1290, 7
        %v1292 = vsub.s32 0, %v1291
        %v1293 = vrot.slane %v327, %v1292
        %v1294 = vmul.f32 %v301, %v1293
        %v1295 = vmul.f32 %v303, %v1293
        %v1296 = vmul.f32 %v305, %v1293
        %v1297 = vmul.f32 %v307, %v1293
        %v1298 = vmul.f32 %v309, %v1293
        %v1299 = vmul.f32 %v311, %v1293
        %v1300 = vmul.f32 %v313, %v1293
        %v1301 = vmul.f32 %v315, %v1293
        %v1302 = vadd.f32 %v1282, %v1294
        %v1303 = vadd.f32 %v1283, %v1295
        %v1304 = vadd.f32 %v1284, %v1296
        %v1305 = vadd.f32 %v1285, %v1297
        %v1306 = vadd.f32 %v1286, %v1298
        %v1307 = vadd.f32 %v1287, %v1299
        %v1308 = vadd.f32 %v1288, %v1300
        %v1309 = vadd.f32 %v1289, %v1301
        %v1310 = vlaneseq
        %v1311 = vshrl.u32 %v1310, 7
        %v1312 = vsub.s32 1, %v1311
        %v1313 = vrot.slane %v327, %v1312
        %v1314 = vmul.f32 %v301, %v1313
        %v1315 = vmul.f32 %v302, %v1313
        %v1316 = vmul.f32 %v303, %v1313
        %v1317 = vmul.f32 %v304, %v1313
        %v1318 = vmul.f32 %v305, %v1313
        %v1319 = vmul.f32 %v306, %v1313
        %v1320 = vmul.f32 %v307, %v1313
        %v1321 = vmul.f32 %v308, %v1313
        %v1322 = vmul.f32 %v309, %v1313
        %v1323 = vmul.f32 %v310, %v1313
        %v1324 = vmul.f32 %v311, %v1313
        %v1325 = vmul.f32 %v312, %v1313
        %v1326 = vmul.f32 %v313, %v1313
        %v1327 = vmul.f32 %v314, %v1313
        %v1328 = vmul.f32 %v315, %v1313
        %v1329 = vmul.f32 %v316, %v1313
        %v1346 = vrot.slane %v1314, 1
        %v1347 = vrot.slane %v1315, 1
        %v1348 = vsel %vm388, %v1346, %v1347
        %v1349 = vrot.slane %v1316, 1
        %v1350 = vrot.slane %v1317, 1
        %v1351 = vsel %vm388, %v1349, %v1350
        %v1352 = vrot.slane %v1318, 1
        %v1353 = vrot.slane %v1319, 1
        %v1354 = vsel %vm388, %v1352, %v1353
        %v1355 = vrot.slane %v1320, 1
        %v1356 = vrot.slane %v1321, 1
        %v1357 = vsel %vm388, %v1355, %v1356
        %v1358 = vrot.slane %v1322, 1
        %v1359 = vrot.slane %v1323, 1
        %v1360 = vsel %vm388, %v1358, %v1359
        %v1361 = vrot.slane %v1324, 1
        %v1362 = vrot.slane %v1325, 1
        %v1363 = vsel %vm388, %v1361, %v1362
        %v1364 = vrot.slane %v1326, 1
        %v1365 = vrot.slane %v1327, 1
        %v1366 = vsel %vm388, %v1364, %v1365
        %v1367 = vrot.slane %v1328, 1
        %v1368 = vrot.slane %v1329, 1
        %v1369 = vsel %vm388, %v1367, %v1368
        %v1378 = vadd.f32 %v1302, %v1348
        %v1379 = vadd.f32 %v1303, %v1351
        %v1380 = vadd.f32 %v1304, %v1354
        %v1381 = vadd.f32 %v1305, %v1357
        %v1382 = vadd.f32 %v1306, %v1360
        %v1383 = vadd.f32 %v1307, %v1363
        %v1384 = vadd.f32 %v1308, %v1366
        %v1385 = vadd.f32 %v1309, %v1369
        %v1386 = vlaneseq
        %v1387 = vshrl.u32 %v1386, 7
        %v1388 = vsub.s32 2, %v1387
        %v1389 = vrot.slane %v327, %v1388
        %v1390 = vmul.f32 %v301, %v1389
        %v1391 = vmul.f32 %v302, %v1389
        %v1392 = vmul.f32 %v303, %v1389
        %v1393 = vmul.f32 %v304, %v1389
        %v1394 = vmul.f32 %v305, %v1389
        %v1395 = vmul.f32 %v306, %v1389
        %v1396 = vmul.f32 %v307, %v1389
        %v1397 = vmul.f32 %v308, %v1389
        %v1398 = vmul.f32 %v309, %v1389
        %v1399 = vmul.f32 %v310, %v1389
        %v1400 = vmul.f32 %v311, %v1389
        %v1401 = vmul.f32 %v312, %v1389
        %v1402 = vmul.f32 %v313, %v1389
        %v1403 = vmul.f32 %v314, %v1389
        %v1404 = vmul.f32 %v315, %v1389
        %v1405 = vmul.f32 %v316, %v1389
        %v1422 = vrot.slane %v1390, 2
        %v1423 = vrot.slane %v1391, 2
        %v1424 = vsel %vm465, %v1422, %v1423
        %v1425 = vrot.slane %v1392, 2
        %v1426 = vrot.slane %v1393, 2
        %v1427 = vsel %vm465, %v1425, %v1426
        %v1428 = vrot.slane %v1394, 2
        %v1429 = vrot.slane %v1395, 2
        %v1430 = vsel %vm465, %v1428, %v1429
        %v1431 = vrot.slane %v1396, 2
        %v1432 = vrot.slane %v1397, 2
        %v1433 = vsel %vm465, %v1431, %v1432
        %v1434 = vrot.slane %v1398, 2
        %v1435 = vrot.slane %v1399, 2
        %v1436 = vsel %vm465, %v1434, %v1435
        %v1437 = vrot.slane %v1400, 2
        %v1438 = vrot.slane %v1401, 2
        %v1439 = vsel %vm465, %v1437, %v1438
        %v1440 = vrot.slane %v1402, 2
        %v1441 = vrot.slane %v1403, 2
        %v1442 = vsel %vm465, %v1440, %v1441
        %v1443 = vrot.slane %v1404, 2
        %v1444 = vrot.slane %v1405, 2
        %v1445 = vsel %vm465, %v1443, %v1444
        %v1454 = vadd.f32 %v1378, %v1424
        %v1455 = vadd.f32 %v1379, %v1427
        %v1456 = vadd.f32 %v1380, %v1430
        %v1457 = vadd.f32 %v1381, %v1433
        %v1458 = vadd.f32 %v1382, %v1436
        %v1459 = vadd.f32 %v1383, %v1439
        %v1460 = vadd.f32 %v1384, %v1442
        %v1461 = vadd.f32 %v1385, %v1445
        %v1462 = vlaneseq
        %v1463 = vshrl.u32 %v1462, 7
        %v1464 = vsub.s32 3, %v1463
        %v1465 = vrot.slane %v327, %v1464
        %v1466 = vmul.f32 %v301, %v1465
        %v1467 = vmul.f32 %v302, %v1465
        %v1468 = vmul.f32 %v303, %v1465
        %v1469 = vmul.f32 %v304, %v1465
        %v1470 = vmul.f32 %v305, %v1465
        %v1471 = vmul.f32 %v306, %v1465
        %v1472 = vmul.f32 %v307, %v1465
        %v1473 = vmul.f32 %v308, %v1465
        %v1474 = vmul.f32 %v309, %v1465
        %v1475 = vmul.f32 %v310, %v1465
        %v1476 = vmul.f32 %v311, %v1465
        %v1477 = vmul.f32 %v312, %v1465
        %v1478 = vmul.f32 %v313, %v1465
        %v1479 = vmul.f32 %v314, %v1465
        %v1480 = vmul.f32 %v315, %v1465
        %v1481 = vmul.f32 %v316, %v1465
        %v1498 = vrot.slane %v1466, 3
        %v1499 = vrot.slane %v1467, 3
        %v1500 = vsel %vm542, %v1498, %v1499
        %v1501 = vrot.slane %v1468, 3
        %v1502 = vrot.slane %v1469, 3
        %v1503 = vsel %vm542, %v1501, %v1502
        %v1504 = vrot.slane %v1470, 3
        %v1505 = vrot.slane %v1471, 3
        %v1506 = vsel %vm542, %v1504, %v1505
        %v1507 = vrot.slane %v1472, 3
        %v1508 = vrot.slane %v1473, 3
        %v1509 = vsel %vm542, %v1507, %v1508
        %v1510 = vrot.slane %v1474, 3
        %v1511 = vrot.slane %v1475, 3
        %v1512 = vsel %vm542, %v1510, %v1511
        %v1513 = vrot.slane %v1476, 3
        %v1514 = vrot.slane %v1477, 3
        %v1515 = vsel %vm542, %v1513, %v1514
        %v1516 = vrot.slane %v1478, 3
        %v1517 = vrot.slane %v1479, 3
        %v1518 = vsel %vm542, %v1516, %v1517
        %v1519 = vrot.slane %v1480, 3
        %v1520 = vrot.slane %v1481, 3
        %v1521 = vsel %vm542, %v1519, %v1520
        %v1530 = vadd.f32 %v1454, %v1500
        %v1531 = vadd.f32 %v1455, %v1503
        %v1532 = vadd.f32 %v1456, %v1506
        %v1533 = vadd.f32 %v1457, %v1509
        %v1534 = vadd.f32 %v1458, %v1512
        %v1535 = vadd.f32 %v1459, %v1515
        %v1536 = vadd.f32 %v1460, %v1518
        %v1537 = vadd.f32 %v1461, %v1521
        %v1538 = vlaneseq
        %v1539 = vshrl.u32 %v1538, 7
        %v1540 = vsub.s32 4, %v1539
        %v1541 = vrot.slane %v327, %v1540
        %v1542 = vmul.f32 %v301, %v1541
        %v1543 = vmul.f32 %v302, %v1541
        %v1544 = vmul.f32 %v303, %v1541
        %v1545 = vmul.f32 %v304, %v1541
        %v1546 = vmul.f32 %v305, %v1541
        %v1547 = vmul.f32 %v306, %v1541
        %v1548 = vmul.f32 %v307, %v1541
        %v1549 = vmul.f32 %v308, %v1541
        %v1550 = vmul.f32 %v309, %v1541
        %v1551 = vmul.f32 %v310, %v1541
        %v1552 = vmul.f32 %v311, %v1541
        %v1553 = vmul.f32 %v312, %v1541
        %v1554 = vmul.f32 %v313, %v1541
        %v1555 = vmul.f32 %v314, %v1541
        %v1556 = vmul.f32 %v315, %v1541
        %v1557 = vmul.f32 %v316, %v1541
        %v1574 = vrot.slane %v1542, 4
        %v1575 = vrot.slane %v1543, 4
        %v1576 = vsel %vm619, %v1574, %v1575
        %v1577 = vrot.slane %v1544, 4
        %v1578 = vrot.slane %v1545, 4
        %v1579 = vsel %vm619, %v1577, %v1578
        %v1580 = vrot.slane %v1546, 4
        %v1581 = vrot.slane %v1547, 4
        %v1582 = vsel %vm619, %v1580, %v1581
        %v1583 = vrot.slane %v1548, 4
        %v1584 = vrot.slane %v1549, 4
        %v1585 = vsel %vm619, %v1583, %v1584
        %v1586 = vrot.slane %v1550, 4
        %v1587 = vrot.slane %v1551, 4
        %v1588 = vsel %vm619, %v1586, %v1587
        %v1589 = vrot.slane %v1552, 4
        %v1590 = vrot.slane %v1553, 4
        %v1591 = vsel %vm619, %v1589, %v1590
        %v1592 = vrot.slane %v1554, 4
        %v1593 = vrot.slane %v1555, 4
        %v1594 = vsel %vm619, %v1592, %v1593
        %v1595 = vrot.slane %v1556, 4
        %v1596 = vrot.slane %v1557, 4
        %v1597 = vsel %vm619, %v1595, %v1596
        %v1606 = vadd.f32 %v1530, %v1576
        %v1607 = vadd.f32 %v1531, %v1579
        %v1608 = vadd.f32 %v1532, %v1582
        %v1609 = vadd.f32 %v1533, %v1585
        %v1610 = vadd.f32 %v1534, %v1588
        %v1611 = vadd.f32 %v1535, %v1591
        %v1612 = vadd.f32 %v1536, %v1594
        %v1613 = vadd.f32 %v1537, %v1597
        %v1614 = vlaneseq
        %v1615 = vshrl.u32 %v1614, 7
        %v1616 = vsub.s32 5, %v1615
        %v1617 = vrot.slane %v327, %v1616
        %v1618 = vmul.f32 %v301, %v1617
        %v1619 = vmul.f32 %v302, %v1617
        %v1620 = vmul.f32 %v303, %v1617
        %v1621 = vmul.f32 %v304, %v1617
        %v1622 = vmul.f32 %v305, %v1617
        %v1623 = vmul.f32 %v306, %v1617
        %v1624 = vmul.f32 %v307, %v1617
        %v1625 = vmul.f32 %v308, %v1617
        %v1626 = vmul.f32 %v309, %v1617
        %v1627 = vmul.f32 %v310, %v1617
        %v1628 = vmul.f32 %v311, %v1617
        %v1629 = vmul.f32 %v312, %v1617
        %v1630 = vmul.f32 %v313, %v1617
        %v1631 = vmul.f32 %v314, %v1617
        %v1632 = vmul.f32 %v315, %v1617
        %v1633 = vmul.f32 %v316, %v1617
        %v1650 = vrot.slane %v1618, 5
        %v1651 = vrot.slane %v1619, 5
        %v1652 = vsel %vm696, %v1650, %v1651
        %v1653 = vrot.slane %v1620, 5
        %v1654 = vrot.slane %v1621, 5
        %v1655 = vsel %vm696, %v1653, %v1654
        %v1656 = vrot.slane %v1622, 5
        %v1657 = vrot.slane %v1623, 5
        %v1658 = vsel %vm696, %v1656, %v1657
        %v1659 = vrot.slane %v1624, 5
        %v1660 = vrot.slane %v1625, 5
        %v1661 = vsel %vm696, %v1659, %v1660
        %v1662 = vrot.slane %v1626, 5
        %v1663 = vrot.slane %v1627, 5
        %v1664 = vsel %vm696, %v1662, %v1663
        %v1665 = vrot.slane %v1628, 5
        %v1666 = vrot.slane %v1629, 5
        %v1667 = vsel %vm696, %v1665, %v1666
        %v1668 = vrot.slane %v1630, 5
        %v1669 = vrot.slane %v1631, 5
        %v1670 = vsel %vm696, %v1668, %v1669
        %v1671 = vrot.slane %v1632, 5
        %v1672 = vrot.slane %v1633, 5
        %v1673 = vsel %vm696, %v1671, %v1672
        %v1682 = vadd.f32 %v1606, %v1652
        %v1683 = vadd.f32 %v1607, %v1655
        %v1684 = vadd.f32 %v1608, %v1658
        %v1685 = vadd.f32 %v1609, %v1661
        %v1686 = vadd.f32 %v1610, %v1664
        %v1687 = vadd.f32 %v1611, %v1667
        %v1688 = vadd.f32 %v1612, %v1670
        %v1689 = vadd.f32 %v1613, %v1673
        %v1690 = vlaneseq
        %v1691 = vshrl.u32 %v1690, 7
        %v1692 = vsub.s32 6, %v1691
        %v1693 = vrot.slane %v327, %v1692
        %v1694 = vmul.f32 %v301, %v1693
        %v1695 = vmul.f32 %v302, %v1693
        %v1696 = vmul.f32 %v303, %v1693
        %v1697 = vmul.f32 %v304, %v1693
        %v1698 = vmul.f32 %v305, %v1693
        %v1699 = vmul.f32 %v306, %v1693
        %v1700 = vmul.f32 %v307, %v1693
        %v1701 = vmul.f32 %v308, %v1693
        %v1702 = vmul.f32 %v309, %v1693
        %v1703 = vmul.f32 %v310, %v1693
        %v1704 = vmul.f32 %v311, %v1693
        %v1705 = vmul.f32 %v312, %v1693
        %v1706 = vmul.f32 %v313, %v1693
        %v1707 = vmul.f32 %v314, %v1693
        %v1708 = vmul.f32 %v315, %v1693
        %v1709 = vmul.f32 %v316, %v1693
        %v1726 = vrot.slane %v1694, 6
        %v1727 = vrot.slane %v1695, 6
        %v1728 = vsel %vm773, %v1726, %v1727
        %v1729 = vrot.slane %v1696, 6
        %v1730 = vrot.slane %v1697, 6
        %v1731 = vsel %vm773, %v1729, %v1730
        %v1732 = vrot.slane %v1698, 6
        %v1733 = vrot.slane %v1699, 6
        %v1734 = vsel %vm773, %v1732, %v1733
        %v1735 = vrot.slane %v1700, 6
        %v1736 = vrot.slane %v1701, 6
        %v1737 = vsel %vm773, %v1735, %v1736
        %v1738 = vrot.slane %v1702, 6
        %v1739 = vrot.slane %v1703, 6
        %v1740 = vsel %vm773, %v1738, %v1739
        %v1741 = vrot.slane %v1704, 6
        %v1742 = vrot.slane %v1705, 6
        %v1743 = vsel %vm773, %v1741, %v1742
        %v1744 = vrot.slane %v1706, 6
        %v1745 = vrot.slane %v1707, 6
        %v1746 = vsel %vm773, %v1744, %v1745
        %v1747 = vrot.slane %v1708, 6
        %v1748 = vrot.slane %v1709, 6
        %v1749 = vsel %vm773, %v1747, %v1748
        %v1758 = vadd.f32 %v1682, %v1728
        %v1759 = vadd.f32 %v1683, %v1731
        %v1760 = vadd.f32 %v1684, %v1734
        %v1761 = vadd.f32 %v1685, %v1737
        %v1762 = vadd.f32 %v1686, %v1740
        %v1763 = vadd.f32 %v1687, %v1743
        %v1764 = vadd.f32 %v1688, %v1746
        %v1765 = vadd.f32 %v1689, %v1749
        %v1766 = vlaneseq
        %v1767 = vshrl.u32 %v1766, 7
        %v1768 = vsub.s32 0, %v1767
        %v1769 = vrot.slane %v328, %v1768
        %v1770 = vmul.f32 %v303, %v1769
        %v1771 = vmul.f32 %v305, %v1769
        %v1772 = vmul.f32 %v307, %v1769
        %v1773 = vmul.f32 %v309, %v1769
        %v1774 = vmul.f32 %v311, %v1769
        %v1775 = vmul.f32 %v313, %v1769
        %v1776 = vmul.f32 %v315, %v1769
        %v1777 = vmul.f32 %v317, %v1769
        %v1778 = vadd.f32 %v1758, %v1770
        %v1779 = vadd.f32 %v1759, %v1771
        %v1780 = vadd.f32 %v1760, %v1772
        %v1781 = vadd.f32 %v1761, %v1773
        %v1782 = vadd.f32 %v1762, %v1774
        %v1783 = vadd.f32 %v1763, %v1775
        %v1784 = vadd.f32 %v1764, %v1776
        %v1785 = vadd.f32 %v1765, %v1777
        %v1786 = vlaneseq
        %v1787 = vshrl.u32 %v1786, 7
        %v1788 = vsub.s32 1, %v1787
        %v1789 = vrot.slane %v328, %v1788
        %v1790 = vmul.f32 %v303, %v1789
        %v1791 = vmul.f32 %v304, %v1789
        %v1792 = vmul.f32 %v305, %v1789
        %v1793 = vmul.f32 %v306, %v1789
        %v1794 = vmul.f32 %v307, %v1789
        %v1795 = vmul.f32 %v308, %v1789
        %v1796 = vmul.f32 %v309, %v1789
        %v1797 = vmul.f32 %v310, %v1789
        %v1798 = vmul.f32 %v311, %v1789
        %v1799 = vmul.f32 %v312, %v1789
        %v1800 = vmul.f32 %v313, %v1789
        %v1801 = vmul.f32 %v314, %v1789
        %v1802 = vmul.f32 %v315, %v1789
        %v1803 = vmul.f32 %v316, %v1789
        %v1804 = vmul.f32 %v317, %v1789
        %v1805 = vmul.f32 %v318, %v1789
        %v1822 = vrot.slane %v1790, 1
        %v1823 = vrot.slane %v1791, 1
        %v1824 = vsel %vm388, %v1822, %v1823
        %v1825 = vrot.slane %v1792, 1
        %v1826 = vrot.slane %v1793, 1
        %v1827 = vsel %vm388, %v1825, %v1826
        %v1828 = vrot.slane %v1794, 1
        %v1829 = vrot.slane %v1795, 1
        %v1830 = vsel %vm388, %v1828, %v1829
        %v1831 = vrot.slane %v1796, 1
        %v1832 = vrot.slane %v1797, 1
        %v1833 = vsel %vm388, %v1831, %v1832
        %v1834 = vrot.slane %v1798, 1
        %v1835 = vrot.slane %v1799, 1
        %v1836 = vsel %vm388, %v1834, %v1835
        %v1837 = vrot.slane %v1800, 1
        %v1838 = vrot.slane %v1801, 1
        %v1839 = vsel %vm388, %v1837, %v1838
        %v1840 = vrot.slane %v1802, 1
        %v1841 = vrot.slane %v1803, 1
        %v1842 = vsel %vm388, %v1840, %v1841
        %v1843 = vrot.slane %v1804, 1
        %v1844 = vrot.slane %v1805, 1
        %v1845 = vsel %vm388, %v1843, %v1844
        %v1854 = vadd.f32 %v1778, %v1824
        %v1855 = vadd.f32 %v1779, %v1827
        %v1856 = vadd.f32 %v1780, %v1830
        %v1857 = vadd.f32 %v1781, %v1833
        %v1858 = vadd.f32 %v1782, %v1836
        %v1859 = vadd.f32 %v1783, %v1839
        %v1860 = vadd.f32 %v1784, %v1842
        %v1861 = vadd.f32 %v1785, %v1845
        %v1862 = vlaneseq
        %v1863 = vshrl.u32 %v1862, 7
        %v1864 = vsub.s32 2, %v1863
        %v1865 = vrot.slane %v328, %v1864
        %v1866 = vmul.f32 %v303, %v1865
        %v1867 = vmul.f32 %v304, %v1865
        %v1868 = vmul.f32 %v305, %v1865
        %v1869 = vmul.f32 %v306, %v1865
        %v1870 = vmul.f32 %v307, %v1865
        %v1871 = vmul.f32 %v308, %v1865
        %v1872 = vmul.f32 %v309, %v1865
        %v1873 = vmul.f32 %v310, %v1865
        %v1874 = vmul.f32 %v311, %v1865
        %v1875 = vmul.f32 %v312, %v1865
        %v1876 = vmul.f32 %v313, %v1865
        %v1877 = vmul.f32 %v314, %v1865
        %v1878 = vmul.f32 %v315, %v1865
        %v1879 = vmul.f32 %v316, %v1865
        %v1880 = vmul.f32 %v317, %v1865
        %v1881 = vmul.f32 %v318, %v1865
        %v1898 = vrot.slane %v1866, 2
        %v1899 = vrot.slane %v1867, 2
        %v1900 = vsel %vm465, %v1898, %v1899
        %v1901 = vrot.slane %v1868, 2
        %v1902 = vrot.slane %v1869, 2
        %v1903 = vsel %vm465, %v1901, %v1902
        %v1904 = vrot.slane %v1870, 2
        %v1905 = vrot.slane %v1871, 2
        %v1906 = vsel %vm465, %v1904, %v1905
        %v1907 = vrot.slane %v1872, 2
        %v1908 = vrot.slane %v1873, 2
        %v1909 = vsel %vm465, %v1907, %v1908
        %v1910 = vrot.slane %v1874, 2
        %v1911 = vrot.slane %v1875, 2
        %v1912 = vsel %vm465, %v1910, %v1911
        %v1913 = vrot.slane %v1876, 2
        %v1914 = vrot.slane %v1877, 2
        %v1915 = vsel %vm465, %v1913, %v1914
        %v1916 = vrot.slane %v1878, 2
        %v1917 = vrot.slane %v1879, 2
        %v1918 = vsel %vm465, %v1916, %v1917
        %v1919 = vrot.slane %v1880, 2
        %v1920 = vrot.slane %v1881, 2
        %v1921 = vsel %vm465, %v1919, %v1920
        %v1930 = vadd.f32 %v1854, %v1900
        %v1931 = vadd.f32 %v1855, %v1903
        %v1932 = vadd.f32 %v1856, %v1906
        %v1933 = vadd.f32 %v1857, %v1909
        %v1934 = vadd.f32 %v1858, %v1912
        %v1935 = vadd.f32 %v1859, %v1915
        %v1936 = vadd.f32 %v1860, %v1918
        %v1937 = vadd.f32 %v1861, %v1921
        %v1938 = vlaneseq
        %v1939 = vshrl.u32 %v1938, 7
        %v1940 = vsub.s32 3, %v1939
        %v1941 = vrot.slane %v328, %v1940
        %v1942 = vmul.f32 %v303, %v1941
        %v1943 = vmul.f32 %v304, %v1941
        %v1944 = vmul.f32 %v305, %v1941
        %v1945 = vmul.f32 %v306, %v1941
        %v1946 = vmul.f32 %v307, %v1941
        %v1947 = vmul.f32 %v308, %v1941
        %v1948 = vmul.f32 %v309, %v1941
        %v1949 = vmul.f32 %v310, %v1941
        %v1950 = vmul.f32 %v311, %v1941
        %v1951 = vmul.f32 %v312, %v1941
        %v1952 = vmul.f32 %v313, %v1941
        %v1953 = vmul.f32 %v314, %v1941
        %v1954 = vmul.f32 %v315, %v1941
        %v1955 = vmul.f32 %v316, %v1941
        %v1956 = vmul.f32 %v317, %v1941
        %v1957 = vmul.f32 %v318, %v1941
        %v1974 = vrot.slane %v1942, 3
        %v1975 = vrot.slane %v1943, 3
        %v1976 = vsel %vm542, %v1974, %v1975
        %v1977 = vrot.slane %v1944, 3
        %v1978 = vrot.slane %v1945, 3
        %v1979 = vsel %vm542, %v1977, %v1978
        %v1980 = vrot.slane %v1946, 3
        %v1981 = vrot.slane %v1947, 3
        %v1982 = vsel %vm542, %v1980, %v1981
        %v1983 = vrot.slane %v1948, 3
        %v1984 = vrot.slane %v1949, 3
        %v1985 = vsel %vm542, %v1983, %v1984
        %v1986 = vrot.slane %v1950, 3
        %v1987 = vrot.slane %v1951, 3
        %v1988 = vsel %vm542, %v1986, %v1987
        %v1989 = vrot.slane %v1952, 3
        %v1990 = vrot.slane %v1953, 3
        %v1991 = vsel %vm542, %v1989, %v1990
        %v1992 = vrot.slane %v1954, 3
        %v1993 = vrot.slane %v1955, 3
        %v1994 = vsel %vm542, %v1992, %v1993
        %v1995 = vrot.slane %v1956, 3
        %v1996 = vrot.slane %v1957, 3
        %v1997 = vsel %vm542, %v1995, %v1996
        %v2006 = vadd.f32 %v1930, %v1976
        %v2007 = vadd.f32 %v1931, %v1979
        %v2008 = vadd.f32 %v1932, %v1982
        %v2009 = vadd.f32 %v1933, %v1985
        %v2010 = vadd.f32 %v1934, %v1988
        %v2011 = vadd.f32 %v1935, %v1991
        %v2012 = vadd.f32 %v1936, %v1994
        %v2013 = vadd.f32 %v1937, %v1997
        %v2014 = vlaneseq
        %v2015 = vshrl.u32 %v2014, 7
        %v2016 = vsub.s32 4, %v2015
        %v2017 = vrot.slane %v328, %v2016
        %v2018 = vmul.f32 %v303, %v2017
        %v2019 = vmul.f32 %v304, %v2017
        %v2020 = vmul.f32 %v305, %v2017
        %v2021 = vmul.f32 %v306, %v2017
        %v2022 = vmul.f32 %v307, %v2017
        %v2023 = vmul.f32 %v308, %v2017
        %v2024 = vmul.f32 %v309, %v2017
        %v2025 = vmul.f32 %v310, %v2017
        %v2026 = vmul.f32 %v311, %v2017
        %v2027 = vmul.f32 %v312, %v2017
        %v2028 = vmul.f32 %v313, %v2017
        %v2029 = vmul.f32 %v314, %v2017
        %v2030 = vmul.f32 %v315, %v2017
        %v2031 = vmul.f32 %v316, %v2017
        %v2032 = vmul.f32 %v317, %v2017
        %v2033 = vmul.f32 %v318, %v2017
        %v2050 = vrot.slane %v2018, 4
        %v2051 = vrot.slane %v2019, 4
        %v2052 = vsel %vm619, %v2050, %v2051
        %v2053 = vrot.slane %v2020, 4
        %v2054 = vrot.slane %v2021, 4
        %v2055 = vsel %vm619, %v2053, %v2054
        %v2056 = vrot.slane %v2022, 4
        %v2057 = vrot.slane %v2023, 4
        %v2058 = vsel %vm619, %v2056, %v2057
        %v2059 = vrot.slane %v2024, 4
        %v2060 = vrot.slane %v2025, 4
        %v2061 = vsel %vm619, %v2059, %v2060
        %v2062 = vrot.slane %v2026, 4
        %v2063 = vrot.slane %v2027, 4
        %v2064 = vsel %vm619, %v2062, %v2063
        %v2065 = vrot.slane %v2028, 4
        %v2066 = vrot.slane %v2029, 4
        %v2067 = vsel %vm619, %v2065, %v2066
        %v2068 = vrot.slane %v2030, 4
        %v2069 = vrot.slane %v2031, 4
        %v2070 = vsel %vm619, %v2068, %v2069
        %v2071 = vrot.slane %v2032, 4
        %v2072 = vrot.slane %v2033, 4
        %v2073 = vsel %vm619, %v2071, %v2072
        %v2082 = vadd.f32 %v2006, %v2052
        %v2083 = vadd.f32 %v2007, %v2055
        %v2084 = vadd.f32 %v2008, %v2058
        %v2085 = vadd.f32 %v2009, %v2061
        %v2086 = vadd.f32 %v2010, %v2064
        %v2087 = vadd.f32 %v2011, %v2067
        %v2088 = vadd.f32 %v2012, %v2070
        %v2089 = vadd.f32 %v2013, %v2073
        %v2090 = vlaneseq
        %v2091 = vshrl.u32 %v2090, 7
        %v2092 = vsub.s32 5, %v2091
        %v2093 = vrot.slane %v328, %v2092
        %v2094 = vmul.f32 %v303, %v2093
        %v2095 = vmul.f32 %v304, %v2093
        %v2096 = vmul.f32 %v305, %v2093
        %v2097 = vmul.f32 %v306, %v2093
        %v2098 = vmul.f32 %v307, %v2093
        %v2099 = vmul.f32 %v308, %v2093
        %v2100 = vmul.f32 %v309, %v2093
        %v2101 = vmul.f32 %v310, %v2093
        %v2102 = vmul.f32 %v311, %v2093
        %v2103 = vmul.f32 %v312, %v2093
        %v2104 = vmul.f32 %v313, %v2093
        %v2105 = vmul.f32 %v314, %v2093
        %v2106 = vmul.f32 %v315, %v2093
        %v2107 = vmul.f32 %v316, %v2093
        %v2108 = vmul.f32 %v317, %v2093
        %v2109 = vmul.f32 %v318, %v2093
        %v2126 = vrot.slane %v2094, 5
        %v2127 = vrot.slane %v2095, 5
        %v2128 = vsel %vm696, %v2126, %v2127
        %v2129 = vrot.slane %v2096, 5
        %v2130 = vrot.slane %v2097, 5
        %v2131 = vsel %vm696, %v2129, %v2130
        %v2132 = vrot.slane %v2098, 5
        %v2133 = vrot.slane %v2099, 5
        %v2134 = vsel %vm696, %v2132, %v2133
        %v2135 = vrot.slane %v2100, 5
        %v2136 = vrot.slane %v2101, 5
        %v2137 = vsel %vm696, %v2135, %v2136
        %v2138 = vrot.slane %v2102, 5
        %v2139 = vrot.slane %v2103, 5
        %v2140 = vsel %vm696, %v2138, %v2139
        %v2141 = vrot.slane %v2104, 5
        %v2142 = vrot.slane %v2105, 5
        %v2143 = vsel %vm696, %v2141, %v2142
        %v2144 = vrot.slane %v2106, 5
        %v2145 = vrot.slane %v2107, 5
        %v2146 = vsel %vm696, %v2144, %v2145
        %v2147 = vrot.slane %v2108, 5
        %v2148 = vrot.slane %v2109, 5
        %v2149 = vsel %vm696, %v2147, %v2148
        %v2158 = vadd.f32 %v2082, %v2128
        %v2159 = vadd.f32 %v2083, %v2131
        %v2160 = vadd.f32 %v2084, %v2134
        %v2161 = vadd.f32 %v2085, %v2137
        %v2162 = vadd.f32 %v2086, %v2140
        %v2163 = vadd.f32 %v2087, %v2143
        %v2164 = vadd.f32 %v2088, %v2146
        %v2165 = vadd.f32 %v2089, %v2149
        %v2166 = vlaneseq
        %v2167 = vshrl.u32 %v2166, 7
        %v2168 = vsub.s32 6, %v2167
        %v2169 = vrot.slane %v328, %v2168
        %v2170 = vmul.f32 %v303, %v2169
        %v2171 = vmul.f32 %v304, %v2169
        %v2172 = vmul.f32 %v305, %v2169
        %v2173 = vmul.f32 %v306, %v2169
        %v2174 = vmul.f32 %v307, %v2169
        %v2175 = vmul.f32 %v308, %v2169
        %v2176 = vmul.f32 %v309, %v2169
        %v2177 = vmul.f32 %v310, %v2169
        %v2178 = vmul.f32 %v311, %v2169
        %v2179 = vmul.f32 %v312, %v2169
        %v2180 = vmul.f32 %v313, %v2169
        %v2181 = vmul.f32 %v314, %v2169
        %v2182 = vmul.f32 %v315, %v2169
        %v2183 = vmul.f32 %v316, %v2169
        %v2184 = vmul.f32 %v317, %v2169
        %v2185 = vmul.f32 %v318, %v2169
        %v2202 = vrot.slane %v2170, 6
        %v2203 = vrot.slane %v2171, 6
        %v2204 = vsel %vm773, %v2202, %v2203
        %v2205 = vrot.slane %v2172, 6
        %v2206 = vrot.slane %v2173, 6
        %v2207 = vsel %vm773, %v2205, %v2206
        %v2208 = vrot.slane %v2174, 6
        %v2209 = vrot.slane %v2175, 6
        %v2210 = vsel %vm773, %v2208, %v2209
        %v2211 = vrot.slane %v2176, 6
        %v2212 = vrot.slane %v2177, 6
        %v2213 = vsel %vm773, %v2211, %v2212
        %v2214 = vrot.slane %v2178, 6
        %v2215 = vrot.slane %v2179, 6
        %v2216 = vsel %vm773, %v2214, %v2215
        %v2217 = vrot.slane %v2180, 6
        %v2218 = vrot.slane %v2181, 6
        %v2219 = vsel %vm773, %v2217, %v2218
        %v2220 = vrot.slane %v2182, 6
        %v2221 = vrot.slane %v2183, 6
        %v2222 = vsel %vm773, %v2220, %v2221
        %v2223 = vrot.slane %v2184, 6
        %v2224 = vrot.slane %v2185, 6
        %v2225 = vsel %vm773, %v2223, %v2224
        %v2234 = vadd.f32 %v2158, %v2204
        %v2235 = vadd.f32 %v2159, %v2207
        %v2236 = vadd.f32 %v2160, %v2210
        %v2237 = vadd.f32 %v2161, %v2213
        %v2238 = vadd.f32 %v2162, %v2216
        %v2239 = vadd.f32 %v2163, %v2219
        %v2240 = vadd.f32 %v2164, %v2222
        %v2241 = vadd.f32 %v2165, %v2225
        %v2242 = vlaneseq
        %v2243 = vshrl.u32 %v2242, 7
        %v2244 = vsub.s32 0, %v2243
        %v2245 = vrot.slane %v329, %v2244
        %v2246 = vmul.f32 %v305, %v2245
        %v2247 = vmul.f32 %v307, %v2245
        %v2248 = vmul.f32 %v309, %v2245
        %v2249 = vmul.f32 %v311, %v2245
        %v2250 = vmul.f32 %v313, %v2245
        %v2251 = vmul.f32 %v315, %v2245
        %v2252 = vmul.f32 %v317, %v2245
        %v2253 = vmul.f32 %v319, %v2245
        %v2254 = vadd.f32 %v2234, %v2246
        %v2255 = vadd.f32 %v2235, %v2247
        %v2256 = vadd.f32 %v2236, %v2248
        %v2257 = vadd.f32 %v2237, %v2249
        %v2258 = vadd.f32 %v2238, %v2250
        %v2259 = vadd.f32 %v2239, %v2251
        %v2260 = vadd.f32 %v2240, %v2252
        %v2261 = vadd.f32 %v2241, %v2253
        %v2262 = vlaneseq
        %v2263 = vshrl.u32 %v2262, 7
        %v2264 = vsub.s32 1, %v2263
        %v2265 = vrot.slane %v329, %v2264
        %v2266 = vmul.f32 %v305, %v2265
        %v2267 = vmul.f32 %v306, %v2265
        %v2268 = vmul.f32 %v307, %v2265
        %v2269 = vmul.f32 %v308, %v2265
        %v2270 = vmul.f32 %v309, %v2265
        %v2271 = vmul.f32 %v310, %v2265
        %v2272 = vmul.f32 %v311, %v2265
        %v2273 = vmul.f32 %v312, %v2265
        %v2274 = vmul.f32 %v313, %v2265
        %v2275 = vmul.f32 %v314, %v2265
        %v2276 = vmul.f32 %v315, %v2265
        %v2277 = vmul.f32 %v316, %v2265
        %v2278 = vmul.f32 %v317, %v2265
        %v2279 = vmul.f32 %v318, %v2265
        %v2280 = vmul.f32 %v319, %v2265
        %v2281 = vmul.f32 %v320, %v2265
        %v2298 = vrot.slane %v2266, 1
        %v2299 = vrot.slane %v2267, 1
        %v2300 = vsel %vm388, %v2298, %v2299
        %v2301 = vrot.slane %v2268, 1
        %v2302 = vrot.slane %v2269, 1
        %v2303 = vsel %vm388, %v2301, %v2302
        %v2304 = vrot.slane %v2270, 1
        %v2305 = vrot.slane %v2271, 1
        %v2306 = vsel %vm388, %v2304, %v2305
        %v2307 = vrot.slane %v2272, 1
        %v2308 = vrot.slane %v2273, 1
        %v2309 = vsel %vm388, %v2307, %v2308
        %v2310 = vrot.slane %v2274, 1
        %v2311 = vrot.slane %v2275, 1
        %v2312 = vsel %vm388, %v2310, %v2311
        %v2313 = vrot.slane %v2276, 1
        %v2314 = vrot.slane %v2277, 1
        %v2315 = vsel %vm388, %v2313, %v2314
        %v2316 = vrot.slane %v2278, 1
        %v2317 = vrot.slane %v2279, 1
        %v2318 = vsel %vm388, %v2316, %v2317
        %v2319 = vrot.slane %v2280, 1
        %v2320 = vrot.slane %v2281, 1
        %v2321 = vsel %vm388, %v2319, %v2320
        %v2330 = vadd.f32 %v2254, %v2300
        %v2331 = vadd.f32 %v2255, %v2303
        %v2332 = vadd.f32 %v2256, %v2306
        %v2333 = vadd.f32 %v2257, %v2309
        %v2334 = vadd.f32 %v2258, %v2312
        %v2335 = vadd.f32 %v2259, %v2315
        %v2336 = vadd.f32 %v2260, %v2318
        %v2337 = vadd.f32 %v2261, %v2321
        %v2338 = vlaneseq
        %v2339 = vshrl.u32 %v2338, 7
        %v2340 = vsub.s32 2, %v2339
        %v2341 = vrot.slane %v329, %v2340
        %v2342 = vmul.f32 %v305, %v2341
        %v2343 = vmul.f32 %v306, %v2341
        %v2344 = vmul.f32 %v307, %v2341
        %v2345 = vmul.f32 %v308, %v2341
        %v2346 = vmul.f32 %v309, %v2341
        %v2347 = vmul.f32 %v310, %v2341
        %v2348 = vmul.f32 %v311, %v2341
        %v2349 = vmul.f32 %v312, %v2341
        %v2350 = vmul.f32 %v313, %v2341
        %v2351 = vmul.f32 %v314, %v2341
        %v2352 = vmul.f32 %v315, %v2341
        %v2353 = vmul.f32 %v316, %v2341
        %v2354 = vmul.f32 %v317, %v2341
        %v2355 = vmul.f32 %v318, %v2341
        %v2356 = vmul.f32 %v319, %v2341
        %v2357 = vmul.f32 %v320, %v2341
        %v2374 = vrot.slane %v2342, 2
        %v2375 = vrot.slane %v2343, 2
        %v2376 = vsel %vm465, %v2374, %v2375
        %v2377 = vrot.slane %v2344, 2
        %v2378 = vrot.slane %v2345, 2
        %v2379 = vsel %vm465, %v2377, %v2378
        %v2380 = vrot.slane %v2346, 2
        %v2381 = vrot.slane %v2347, 2
        %v2382 = vsel %vm465, %v2380, %v2381
        %v2383 = vrot.slane %v2348, 2
        %v2384 = vrot.slane %v2349, 2
        %v2385 = vsel %vm465, %v2383, %v2384
        %v2386 = vrot.slane %v2350, 2
        %v2387 = vrot.slane %v2351, 2
        %v2388 = vsel %vm465, %v2386, %v2387
        %v2389 = vrot.slane %v2352, 2
        %v2390 = vrot.slane %v2353, 2
        %v2391 = vsel %vm465, %v2389, %v2390
        %v2392 = vrot.slane %v2354, 2
        %v2393 = vrot.slane %v2355, 2
        %v2394 = vsel %vm465, %v2392, %v2393
        %v2395 = vrot.slane %v2356, 2
        %v2396 = vrot.slane %v2357, 2
        %v2397 = vsel %vm465, %v2395, %v2396
        %v2406 = vadd.f32 %v2330, %v2376
        %v2407 = vadd.f32 %v2331, %v2379
        %v2408 = vadd.f32 %v2332, %v2382
        %v2409 = vadd.f32 %v2333, %v2385
        %v2410 = vadd.f32 %v2334, %v2388
        %v2411 = vadd.f32 %v2335, %v2391
        %v2412 = vadd.f32 %v2336, %v2394
        %v2413 = vadd.f32 %v2337, %v2397
        %v2414 = vlaneseq
        %v2415 = vshrl.u32 %v2414, 7
        %v2416 = vsub.s32 3, %v2415
        %v2417 = vrot.slane %v329, %v2416
        %v2418 = vmul.f32 %v305, %v2417
        %v2419 = vmul.f32 %v306, %v2417
        %v2420 = vmul.f32 %v307, %v2417
        %v2421 = vmul.f32 %v308, %v2417
        %v2422 = vmul.f32 %v309, %v2417
        %v2423 = vmul.f32 %v310, %v2417
        %v2424 = vmul.f32 %v311, %v2417
        %v2425 = vmul.f32 %v312, %v2417
        %v2426 = vmul.f32 %v313, %v2417
        %v2427 = vmul.f32 %v314, %v2417
        %v2428 = vmul.f32 %v315, %v2417
        %v2429 = vmul.f32 %v316, %v2417
        %v2430 = vmul.f32 %v317, %v2417
        %v2431 = vmul.f32 %v318, %v2417
        %v2432 = vmul.f32 %v319, %v2417
        %v2433 = vmul.f32 %v320, %v2417
        %v2450 = vrot.slane %v2418, 3
        %v2451 = vrot.slane %v2419, 3
        %v2452 = vsel %vm542, %v2450, %v2451
        %v2453 = vrot.slane %v2420, 3
        %v2454 = vrot.slane %v2421, 3
        %v2455 = vsel %vm542, %v2453, %v2454
        %v2456 = vrot.slane %v2422, 3
        %v2457 = vrot.slane %v2423, 3
        %v2458 = vsel %vm542, %v2456, %v2457
        %v2459 = vrot.slane %v2424, 3
        %v2460 = vrot.slane %v2425, 3
        %v2461 = vsel %vm542, %v2459, %v2460
        %v2462 = vrot.slane %v2426, 3
        %v2463 = vrot.slane %v2427, 3
        %v2464 = vsel %vm542, %v2462, %v2463
        %v2465 = vrot.slane %v2428, 3
        %v2466 = vrot.slane %v2429, 3
        %v2467 = vsel %vm542, %v2465, %v2466
        %v2468 = vrot.slane %v2430, 3
        %v2469 = vrot.slane %v2431, 3
        %v2470 = vsel %vm542, %v2468, %v2469
        %v2471 = vrot.slane %v2432, 3
        %v2472 = vrot.slane %v2433, 3
        %v2473 = vsel %vm542, %v2471, %v2472
        %v2482 = vadd.f32 %v2406, %v2452
        %v2483 = vadd.f32 %v2407, %v2455
        %v2484 = vadd.f32 %v2408, %v2458
        %v2485 = vadd.f32 %v2409, %v2461
        %v2486 = vadd.f32 %v2410, %v2464
        %v2487 = vadd.f32 %v2411, %v2467
        %v2488 = vadd.f32 %v2412, %v2470
        %v2489 = vadd.f32 %v2413, %v2473
        %v2490 = vlaneseq
        %v2491 = vshrl.u32 %v2490, 7
        %v2492 = vsub.s32 4, %v2491
        %v2493 = vrot.slane %v329, %v2492
        %v2494 = vmul.f32 %v305, %v2493
        %v2495 = vmul.f32 %v306, %v2493
        %v2496 = vmul.f32 %v307, %v2493
        %v2497 = vmul.f32 %v308, %v2493
        %v2498 = vmul.f32 %v309, %v2493
        %v2499 = vmul.f32 %v310, %v2493
        %v2500 = vmul.f32 %v311, %v2493
        %v2501 = vmul.f32 %v312, %v2493
        %v2502 = vmul.f32 %v313, %v2493
        %v2503 = vmul.f32 %v314, %v2493
        %v2504 = vmul.f32 %v315, %v2493
        %v2505 = vmul.f32 %v316, %v2493
        %v2506 = vmul.f32 %v317, %v2493
        %v2507 = vmul.f32 %v318, %v2493
        %v2508 = vmul.f32 %v319, %v2493
        %v2509 = vmul.f32 %v320, %v2493
        %v2526 = vrot.slane %v2494, 4
        %v2527 = vrot.slane %v2495, 4
        %v2528 = vsel %vm619, %v2526, %v2527
        %v2529 = vrot.slane %v2496, 4
        %v2530 = vrot.slane %v2497, 4
        %v2531 = vsel %vm619, %v2529, %v2530
        %v2532 = vrot.slane %v2498, 4
        %v2533 = vrot.slane %v2499, 4
        %v2534 = vsel %vm619, %v2532, %v2533
        %v2535 = vrot.slane %v2500, 4
        %v2536 = vrot.slane %v2501, 4
        %v2537 = vsel %vm619, %v2535, %v2536
        %v2538 = vrot.slane %v2502, 4
        %v2539 = vrot.slane %v2503, 4
        %v2540 = vsel %vm619, %v2538, %v2539
        %v2541 = vrot.slane %v2504, 4
        %v2542 = vrot.slane %v2505, 4
        %v2543 = vsel %vm619, %v2541, %v2542
        %v2544 = vrot.slane %v2506, 4
        %v2545 = vrot.slane %v2507, 4
        %v2546 = vsel %vm619, %v2544, %v2545
        %v2547 = vrot.slane %v2508, 4
        %v2548 = vrot.slane %v2509, 4
        %v2549 = vsel %vm619, %v2547, %v2548
        %v2558 = vadd.f32 %v2482, %v2528
        %v2559 = vadd.f32 %v2483, %v2531
        %v2560 = vadd.f32 %v2484, %v2534
        %v2561 = vadd.f32 %v2485, %v2537
        %v2562 = vadd.f32 %v2486, %v2540
        %v2563 = vadd.f32 %v2487, %v2543
        %v2564 = vadd.f32 %v2488, %v2546
        %v2565 = vadd.f32 %v2489, %v2549
        %v2566 = vlaneseq
        %v2567 = vshrl.u32 %v2566, 7
        %v2568 = vsub.s32 5, %v2567
        %v2569 = vrot.slane %v329, %v2568
        %v2570 = vmul.f32 %v305, %v2569
        %v2571 = vmul.f32 %v306, %v2569
        %v2572 = vmul.f32 %v307, %v2569
        %v2573 = vmul.f32 %v308, %v2569
        %v2574 = vmul.f32 %v309, %v2569
        %v2575 = vmul.f32 %v310, %v2569
        %v2576 = vmul.f32 %v311, %v2569
        %v2577 = vmul.f32 %v312, %v2569
        %v2578 = vmul.f32 %v313, %v2569
        %v2579 = vmul.f32 %v314, %v2569
        %v2580 = vmul.f32 %v315, %v2569
        %v2581 = vmul.f32 %v316, %v2569
        %v2582 = vmul.f32 %v317, %v2569
        %v2583 = vmul.f32 %v318, %v2569
        %v2584 = vmul.f32 %v319, %v2569
        %v2585 = vmul.f32 %v320, %v2569
        %v2602 = vrot.slane %v2570, 5
        %v2603 = vrot.slane %v2571, 5
        %v2604 = vsel %vm696, %v2602, %v2603
        %v2605 = vrot.slane %v2572, 5
        %v2606 = vrot.slane %v2573, 5
        %v2607 = vsel %vm696, %v2605, %v2606
        %v2608 = vrot.slane %v2574, 5
        %v2609 = vrot.slane %v2575, 5
        %v2610 = vsel %vm696, %v2608, %v2609
        %v2611 = vrot.slane %v2576, 5
        %v2612 = vrot.slane %v2577, 5
        %v2613 = vsel %vm696, %v2611, %v2612
        %v2614 = vrot.slane %v2578, 5
        %v2615 = vrot.slane %v2579, 5
        %v2616 = vsel %vm696, %v2614, %v2615
        %v2617 = vrot.slane %v2580, 5
        %v2618 = vrot.slane %v2581, 5
        %v2619 = vsel %vm696, %v2617, %v2618
        %v2620 = vrot.slane %v2582, 5
        %v2621 = vrot.slane %v2583, 5
        %v2622 = vsel %vm696, %v2620, %v2621
        %v2623 = vrot.slane %v2584, 5
        %v2624 = vrot.slane %v2585, 5
        %v2625 = vsel %vm696, %v2623, %v2624
        %v2634 = vadd.f32 %v2558, %v2604
        %v2635 = vadd.f32 %v2559, %v2607
        %v2636 = vadd.f32 %v2560, %v2610
        %v2637 = vadd.f32 %v2561, %v2613
        %v2638 = vadd.f32 %v2562, %v2616
        %v2639 = vadd.f32 %v2563, %v2619
        %v2640 = vadd.f32 %v2564, %v2622
        %v2641 = vadd.f32 %v2565, %v2625
        %v2642 = vlaneseq
        %v2643 = vshrl.u32 %v2642, 7
        %v2644 = vsub.s32 6, %v2643
        %v2645 = vrot.slane %v329, %v2644
        %v2646 = vmul.f32 %v305, %v2645
        %v2647 = vmul.f32 %v306, %v2645
        %v2648 = vmul.f32 %v307, %v2645
        %v2649 = vmul.f32 %v308, %v2645
        %v2650 = vmul.f32 %v309, %v2645
        %v2651 = vmul.f32 %v310, %v2645
        %v2652 = vmul.f32 %v311, %v2645
        %v2653 = vmul.f32 %v312, %v2645
        %v2654 = vmul.f32 %v313, %v2645
        %v2655 = vmul.f32 %v314, %v2645
        %v2656 = vmul.f32 %v315, %v2645
        %v2657 = vmul.f32 %v316, %v2645
        %v2658 = vmul.f32 %v317, %v2645
        %v2659 = vmul.f32 %v318, %v2645
        %v2660 = vmul.f32 %v319, %v2645
        %v2661 = vmul.f32 %v320, %v2645
        %v2678 = vrot.slane %v2646, 6
        %v2679 = vrot.slane %v2647, 6
        %v2680 = vsel %vm773, %v2678, %v2679
        %v2681 = vrot.slane %v2648, 6
        %v2682 = vrot.slane %v2649, 6
        %v2683 = vsel %vm773, %v2681, %v2682
        %v2684 = vrot.slane %v2650, 6
        %v2685 = vrot.slane %v2651, 6
        %v2686 = vsel %vm773, %v2684, %v2685
        %v2687 = vrot.slane %v2652, 6
        %v2688 = vrot.slane %v2653, 6
        %v2689 = vsel %vm773, %v2687, %v2688
        %v2690 = vrot.slane %v2654, 6
        %v2691 = vrot.slane %v2655, 6
        %v2692 = vsel %vm773, %v2690, %v2691
        %v2693 = vrot.slane %v2656, 6
        %v2694 = vrot.slane %v2657, 6
        %v2695 = vsel %vm773, %v2693, %v2694
        %v2696 = vrot.slane %v2658, 6
        %v2697 = vrot.slane %v2659, 6
        %v2698 = vsel %vm773, %v2696, %v2697
        %v2699 = vrot.slane %v2660, 6
        %v2700 = vrot.slane %v2661, 6
        %v2701 = vsel %vm773, %v2699, %v2700
        %v2710 = vadd.f32 %v2634, %v2680
        %v2711 = vadd.f32 %v2635, %v2683
        %v2712 = vadd.f32 %v2636, %v2686
        %v2713 = vadd.f32 %v2637, %v2689
        %v2714 = vadd.f32 %v2638, %v2692
        %v2715 = vadd.f32 %v2639, %v2695
        %v2716 = vadd.f32 %v2640, %v2698
        %v2717 = vadd.f32 %v2641, %v2701
        %v2718 = vlaneseq
        %v2719 = vshrl.u32 %v2718, 7
        %v2720 = vsub.s32 0, %v2719
        %v2721 = vrot.slane %v330, %v2720
        %v2722 = vmul.f32 %v307, %v2721
        %v2723 = vmul.f32 %v309, %v2721
        %v2724 = vmul.f32 %v311, %v2721
        %v2725 = vmul.f32 %v313, %v2721
        %v2726 = vmul.f32 %v315, %v2721
        %v2727 = vmul.f32 %v317, %v2721
        %v2728 = vmul.f32 %v319, %v2721
        %v2729 = vmul.f32 %v321, %v2721
        %v2730 = vadd.f32 %v2710, %v2722
        %v2731 = vadd.f32 %v2711, %v2723
        %v2732 = vadd.f32 %v2712, %v2724
        %v2733 = vadd.f32 %v2713, %v2725
        %v2734 = vadd.f32 %v2714, %v2726
        %v2735 = vadd.f32 %v2715, %v2727
        %v2736 = vadd.f32 %v2716, %v2728
        %v2737 = vadd.f32 %v2717, %v2729
        %v2738 = vlaneseq
        %v2739 = vshrl.u32 %v2738, 7
        %v2740 = vsub.s32 1, %v2739
        %v2741 = vrot.slane %v330, %v2740
        %v2742 = vmul.f32 %v307, %v2741
        %v2743 = vmul.f32 %v308, %v2741
        %v2744 = vmul.f32 %v309, %v2741
        %v2745 = vmul.f32 %v310, %v2741
        %v2746 = vmul.f32 %v311, %v2741
        %v2747 = vmul.f32 %v312, %v2741
        %v2748 = vmul.f32 %v313, %v2741
        %v2749 = vmul.f32 %v314, %v2741
        %v2750 = vmul.f32 %v315, %v2741
        %v2751 = vmul.f32 %v316, %v2741
        %v2752 = vmul.f32 %v317, %v2741
        %v2753 = vmul.f32 %v318, %v2741
        %v2754 = vmul.f32 %v319, %v2741
        %v2755 = vmul.f32 %v320, %v2741
        %v2756 = vmul.f32 %v321, %v2741
        %v2757 = vmul.f32 %v322, %v2741
        %v2774 = vrot.slane %v2742, 1
        %v2775 = vrot.slane %v2743, 1
        %v2776 = vsel %vm388, %v2774, %v2775
        %v2777 = vrot.slane %v2744, 1
        %v2778 = vrot.slane %v2745, 1
        %v2779 = vsel %vm388, %v2777, %v2778
        %v2780 = vrot.slane %v2746, 1
        %v2781 = vrot.slane %v2747, 1
        %v2782 = vsel %vm388, %v2780, %v2781
        %v2783 = vrot.slane %v2748, 1
        %v2784 = vrot.slane %v2749, 1
        %v2785 = vsel %vm388, %v2783, %v2784
        %v2786 = vrot.slane %v2750, 1
        %v2787 = vrot.slane %v2751, 1
        %v2788 = vsel %vm388, %v2786, %v2787
        %v2789 = vrot.slane %v2752, 1
        %v2790 = vrot.slane %v2753, 1
        %v2791 = vsel %vm388, %v2789, %v2790
        %v2792 = vrot.slane %v2754, 1
        %v2793 = vrot.slane %v2755, 1
        %v2794 = vsel %vm388, %v2792, %v2793
        %v2795 = vrot.slane %v2756, 1
        %v2796 = vrot.slane %v2757, 1
        %v2797 = vsel %vm388, %v2795, %v2796
        %v2806 = vadd.f32 %v2730, %v2776
        %v2807 = vadd.f32 %v2731, %v2779
        %v2808 = vadd.f32 %v2732, %v2782
        %v2809 = vadd.f32 %v2733, %v2785
        %v2810 = vadd.f32 %v2734, %v2788
        %v2811 = vadd.f32 %v2735, %v2791
        %v2812 = vadd.f32 %v2736, %v2794
        %v2813 = vadd.f32 %v2737, %v2797
        %v2814 = vlaneseq
        %v2815 = vshrl.u32 %v2814, 7
        %v2816 = vsub.s32 2, %v2815
        %v2817 = vrot.slane %v330, %v2816
        %v2818 = vmul.f32 %v307, %v2817
        %v2819 = vmul.f32 %v308, %v2817
        %v2820 = vmul.f32 %v309, %v2817
        %v2821 = vmul.f32 %v310, %v2817
        %v2822 = vmul.f32 %v311, %v2817
        %v2823 = vmul.f32 %v312, %v2817
        %v2824 = vmul.f32 %v313, %v2817
        %v2825 = vmul.f32 %v314, %v2817
        %v2826 = vmul.f32 %v315, %v2817
        %v2827 = vmul.f32 %v316, %v2817
        %v2828 = vmul.f32 %v317, %v2817
        %v2829 = vmul.f32 %v318, %v2817
        %v2830 = vmul.f32 %v319, %v2817
        %v2831 = vmul.f32 %v320, %v2817
        %v2832 = vmul.f32 %v321, %v2817
        %v2833 = vmul.f32 %v322, %v2817
        %v2850 = vrot.slane %v2818, 2
        %v2851 = vrot.slane %v2819, 2
        %v2852 = vsel %vm465, %v2850, %v2851
        %v2853 = vrot.slane %v2820, 2
        %v2854 = vrot.slane %v2821, 2
        %v2855 = vsel %vm465, %v2853, %v2854
        %v2856 = vrot.slane %v2822, 2
        %v2857 = vrot.slane %v2823, 2
        %v2858 = vsel %vm465, %v2856, %v2857
        %v2859 = vrot.slane %v2824, 2
        %v2860 = vrot.slane %v2825, 2
        %v2861 = vsel %vm465, %v2859, %v2860
        %v2862 = vrot.slane %v2826, 2
        %v2863 = vrot.slane %v2827, 2
        %v2864 = vsel %vm465, %v2862, %v2863
        %v2865 = vrot.slane %v2828, 2
        %v2866 = vrot.slane %v2829, 2
        %v2867 = vsel %vm465, %v2865, %v2866
        %v2868 = vrot.slane %v2830, 2
        %v2869 = vrot.slane %v2831, 2
        %v2870 = vsel %vm465, %v2868, %v2869
        %v2871 = vrot.slane %v2832, 2
        %v2872 = vrot.slane %v2833, 2
        %v2873 = vsel %vm465, %v2871, %v2872
        %v2882 = vadd.f32 %v2806, %v2852
        %v2883 = vadd.f32 %v2807, %v2855
        %v2884 = vadd.f32 %v2808, %v2858
        %v2885 = vadd.f32 %v2809, %v2861
        %v2886 = vadd.f32 %v2810, %v2864
        %v2887 = vadd.f32 %v2811, %v2867
        %v2888 = vadd.f32 %v2812, %v2870
        %v2889 = vadd.f32 %v2813, %v2873
        %v2890 = vlaneseq
        %v2891 = vshrl.u32 %v2890, 7
        %v2892 = vsub.s32 3, %v2891
        %v2893 = vrot.slane %v330, %v2892
        %v2894 = vmul.f32 %v307, %v2893
        %v2895 = vmul.f32 %v308, %v2893
        %v2896 = vmul.f32 %v309, %v2893
        %v2897 = vmul.f32 %v310, %v2893
        %v2898 = vmul.f32 %v311, %v2893
        %v2899 = vmul.f32 %v312, %v2893
        %v2900 = vmul.f32 %v313, %v2893
        %v2901 = vmul.f32 %v314, %v2893
        %v2902 = vmul.f32 %v315, %v2893
        %v2903 = vmul.f32 %v316, %v2893
        %v2904 = vmul.f32 %v317, %v2893
        %v2905 = vmul.f32 %v318, %v2893
        %v2906 = vmul.f32 %v319, %v2893
        %v2907 = vmul.f32 %v320, %v2893
        %v2908 = vmul.f32 %v321, %v2893
        %v2909 = vmul.f32 %v322, %v2893
        %v2926 = vrot.slane %v2894, 3
        %v2927 = vrot.slane %v2895, 3
        %v2928 = vsel %vm542, %v2926, %v2927
        %v2929 = vrot.slane %v2896, 3
        %v2930 = vrot.slane %v2897, 3
        %v2931 = vsel %vm542, %v2929, %v2930
        %v2932 = vrot.slane %v2898, 3
        %v2933 = vrot.slane %v2899, 3
        %v2934 = vsel %vm542, %v2932, %v2933
        %v2935 = vrot.slane %v2900, 3
        %v2936 = vrot.slane %v2901, 3
        %v2937 = vsel %vm542, %v2935, %v2936
        %v2938 = vrot.slane %v2902, 3
        %v2939 = vrot.slane %v2903, 3
        %v2940 = vsel %vm542, %v2938, %v2939
        %v2941 = vrot.slane %v2904, 3
        %v2942 = vrot.slane %v2905, 3
        %v2943 = vsel %vm542, %v2941, %v2942
        %v2944 = vrot.slane %v2906, 3
        %v2945 = vrot.slane %v2907, 3
        %v2946 = vsel %vm542, %v2944, %v2945
        %v2947 = vrot.slane %v2908, 3
        %v2948 = vrot.slane %v2909, 3
        %v2949 = vsel %vm542, %v2947, %v2948
        %v2958 = vadd.f32 %v2882, %v2928
        %v2959 = vadd.f32 %v2883, %v2931
        %v2960 = vadd.f32 %v2884, %v2934
        %v2961 = vadd.f32 %v2885, %v2937
        %v2962 = vadd.f32 %v2886, %v2940
        %v2963 = vadd.f32 %v2887, %v2943
        %v2964 = vadd.f32 %v2888, %v2946
        %v2965 = vadd.f32 %v2889, %v2949
        %v2966 = vlaneseq
        %v2967 = vshrl.u32 %v2966, 7
        %v2968 = vsub.s32 4, %v2967
        %v2969 = vrot.slane %v330, %v2968
        %v2970 = vmul.f32 %v307, %v2969
        %v2971 = vmul.f32 %v308, %v2969
        %v2972 = vmul.f32 %v309, %v2969
        %v2973 = vmul.f32 %v310, %v2969
        %v2974 = vmul.f32 %v311, %v2969
        %v2975 = vmul.f32 %v312, %v2969
        %v2976 = vmul.f32 %v313, %v2969
        %v2977 = vmul.f32 %v314, %v2969
        %v2978 = vmul.f32 %v315, %v2969
        %v2979 = vmul.f32 %v316, %v2969
        %v2980 = vmul.f32 %v317, %v2969
        %v2981 = vmul.f32 %v318, %v2969
        %v2982 = vmul.f32 %v319, %v2969
        %v2983 = vmul.f32 %v320, %v2969
        %v2984 = vmul.f32 %v321, %v2969
        %v2985 = vmul.f32 %v322, %v2969
        %v3002 = vrot.slane %v2970, 4
        %v3003 = vrot.slane %v2971, 4
        %v3004 = vsel %vm619, %v3002, %v3003
        %v3005 = vrot.slane %v2972, 4
        %v3006 = vrot.slane %v2973, 4
        %v3007 = vsel %vm619, %v3005, %v3006
        %v3008 = vrot.slane %v2974, 4
        %v3009 = vrot.slane %v2975, 4
        %v3010 = vsel %vm619, %v3008, %v3009
        %v3011 = vrot.slane %v2976, 4
        %v3012 = vrot.slane %v2977, 4
        %v3013 = vsel %vm619, %v3011, %v3012
        %v3014 = vrot.slane %v2978, 4
        %v3015 = vrot.slane %v2979, 4
        %v3016 = vsel %vm619, %v3014, %v3015
        %v3017 = vrot.slane %v2980, 4
        %v3018 = vrot.slane %v2981, 4
        %v3019 = vsel %vm619, %v3017, %v3018
        %v3020 = vrot.slane %v2982, 4
        %v3021 = vrot.slane %v2983, 4
        %v3022 = vsel %vm619, %v3020, %v3021
        %v3023 = vrot.slane %v2984, 4
        %v3024 = vrot.slane %v2985, 4
        %v3025 = vsel %vm619, %v3023, %v3024
        %v3034 = vadd.f32 %v2958, %v3004
        %v3035 = vadd.f32 %v2959, %v3007
        %v3036 = vadd.f32 %v2960, %v3010
        %v3037 = vadd.f32 %v2961, %v3013
        %v3038 = vadd.f32 %v2962, %v3016
        %v3039 = vadd.f32 %v2963, %v3019
        %v3040 = vadd.f32 %v2964, %v3022
        %v3041 = vadd.f32 %v2965, %v3025
        %v3042 = vlaneseq
        %v3043 = vshrl.u32 %v3042, 7
        %v3044 = vsub.s32 5, %v3043
        %v3045 = vrot.slane %v330, %v3044
        %v3046 = vmul.f32 %v307, %v3045
        %v3047 = vmul.f32 %v308, %v3045
        %v3048 = vmul.f32 %v309, %v3045
        %v3049 = vmul.f32 %v310, %v3045
        %v3050 = vmul.f32 %v311, %v3045
        %v3051 = vmul.f32 %v312, %v3045
        %v3052 = vmul.f32 %v313, %v3045
        %v3053 = vmul.f32 %v314, %v3045
        %v3054 = vmul.f32 %v315, %v3045
        %v3055 = vmul.f32 %v316, %v3045
        %v3056 = vmul.f32 %v317, %v3045
        %v3057 = vmul.f32 %v318, %v3045
        %v3058 = vmul.f32 %v319, %v3045
        %v3059 = vmul.f32 %v320, %v3045
        %v3060 = vmul.f32 %v321, %v3045
        %v3061 = vmul.f32 %v322, %v3045
        %v3078 = vrot.slane %v3046, 5
        %v3079 = vrot.slane %v3047, 5
        %v3080 = vsel %vm696, %v3078, %v3079
        %v3081 = vrot.slane %v3048, 5
        %v3082 = vrot.slane %v3049, 5
        %v3083 = vsel %vm696, %v3081, %v3082
        %v3084 = vrot.slane %v3050, 5
        %v3085 = vrot.slane %v3051, 5
        %v3086 = vsel %vm696, %v3084, %v3085
        %v3087 = vrot.slane %v3052, 5
        %v3088 = vrot.slane %v3053, 5
        %v3089 = vsel %vm696, %v3087, %v3088
        %v3090 = vrot.slane %v3054, 5
        %v3091 = vrot.slane %v3055, 5
        %v3092 = vsel %vm696, %v3090, %v3091
        %v3093 = vrot.slane %v3056, 5
        %v3094 = vrot.slane %v3057, 5
        %v3095 = vsel %vm696, %v3093, %v3094
        %v3096 = vrot.slane %v3058, 5
        %v3097 = vrot.slane %v3059, 5
        %v3098 = vsel %vm696, %v3096, %v3097
        %v3099 = vrot.slane %v3060, 5
        %v3100 = vrot.slane %v3061, 5
        %v3101 = vsel %vm696, %v3099, %v3100
        %v3110 = vadd.f32 %v3034, %v3080
        %v3111 = vadd.f32 %v3035, %v3083
        %v3112 = vadd.f32 %v3036, %v3086
        %v3113 = vadd.f32 %v3037, %v3089
        %v3114 = vadd.f32 %v3038, %v3092
        %v3115 = vadd.f32 %v3039, %v3095
        %v3116 = vadd.f32 %v3040, %v3098
        %v3117 = vadd.f32 %v3041, %v3101
        %v3118 = vlaneseq
        %v3119 = vshrl.u32 %v3118, 7
        %v3120 = vsub.s32 6, %v3119
        %v3121 = vrot.slane %v330, %v3120
        %v3122 = vmul.f32 %v307, %v3121
        %v3123 = vmul.f32 %v308, %v3121
        %v3124 = vmul.f32 %v309, %v3121
        %v3125 = vmul.f32 %v310, %v3121
        %v3126 = vmul.f32 %v311, %v3121
        %v3127 = vmul.f32 %v312, %v3121
        %v3128 = vmul.f32 %v313, %v3121
        %v3129 = vmul.f32 %v314, %v3121
        %v3130 = vmul.f32 %v315, %v3121
        %v3131 = vmul.f32 %v316, %v3121
        %v3132 = vmul.f32 %v317, %v3121
        %v3133 = vmul.f32 %v318, %v3121
        %v3134 = vmul.f32 %v319, %v3121
        %v3135 = vmul.f32 %v320, %v3121
        %v3136 = vmul.f32 %v321, %v3121
        %v3137 = vmul.f32 %v322, %v3121
        %v3154 = vrot.slane %v3122, 6
        %v3155 = vrot.slane %v3123, 6
        %v3156 = vsel %vm773, %v3154, %v3155
        %v3157 = vrot.slane %v3124, 6
        %v3158 = vrot.slane %v3125, 6
        %v3159 = vsel %vm773, %v3157, %v3158
        %v3160 = vrot.slane %v3126, 6
        %v3161 = vrot.slane %v3127, 6
        %v3162 = vsel %vm773, %v3160, %v3161
        %v3163 = vrot.slane %v3128, 6
        %v3164 = vrot.slane %v3129, 6
        %v3165 = vsel %vm773, %v3163, %v3164
        %v3166 = vrot.slane %v3130, 6
        %v3167 = vrot.slane %v3131, 6
        %v3168 = vsel %vm773, %v3166, %v3167
        %v3169 = vrot.slane %v3132, 6
        %v3170 = vrot.slane %v3133, 6
        %v3171 = vsel %vm773, %v3169, %v3170
        %v3172 = vrot.slane %v3134, 6
        %v3173 = vrot.slane %v3135, 6
        %v3174 = vsel %vm773, %v3172, %v3173
        %v3175 = vrot.slane %v3136, 6
        %v3176 = vrot.slane %v3137, 6
        %v3177 = vsel %vm773, %v3175, %v3176
        %v3186 = vadd.f32 %v3110, %v3156
        %v3187 = vadd.f32 %v3111, %v3159
        %v3188 = vadd.f32 %v3112, %v3162
        %v3189 = vadd.f32 %v3113, %v3165
        %v3190 = vadd.f32 %v3114, %v3168
        %v3191 = vadd.f32 %v3115, %v3171
        %v3192 = vadd.f32 %v3116, %v3174
        %v3193 = vadd.f32 %v3117, %v3177
        %v3194 = vlaneseq
        %v3195 = vshrl.u32 %v3194, 7
        %v3196 = vsub.s32 0, %v3195
        %v3197 = vrot.slane %v331, %v3196
        %v3198 = vmul.f32 %v309, %v3197
        %v3199 = vmul.f32 %v311, %v3197
        %v3200 = vmul.f32 %v313, %v3197
        %v3201 = vmul.f32 %v315, %v3197
        %v3202 = vmul.f32 %v317, %v3197
        %v3203 = vmul.f32 %v319, %v3197
        %v3204 = vmul.f32 %v321, %v3197
        %v3205 = vmul.f32 %v323, %v3197
        %v3206 = vadd.f32 %v3186, %v3198
        %v3207 = vadd.f32 %v3187, %v3199
        %v3208 = vadd.f32 %v3188, %v3200
        %v3209 = vadd.f32 %v3189, %v3201
        %v3210 = vadd.f32 %v3190, %v3202
        %v3211 = vadd.f32 %v3191, %v3203
        %v3212 = vadd.f32 %v3192, %v3204
        %v3213 = vadd.f32 %v3193, %v3205
        %v3214 = vlaneseq
        %v3215 = vshrl.u32 %v3214, 7
        %v3216 = vsub.s32 1, %v3215
        %v3217 = vrot.slane %v331, %v3216
        %v3218 = vmul.f32 %v309, %v3217
        %v3219 = vmul.f32 %v310, %v3217
        %v3220 = vmul.f32 %v311, %v3217
        %v3221 = vmul.f32 %v312, %v3217
        %v3222 = vmul.f32 %v313, %v3217
        %v3223 = vmul.f32 %v314, %v3217
        %v3224 = vmul.f32 %v315, %v3217
        %v3225 = vmul.f32 %v316, %v3217
        %v3226 = vmul.f32 %v317, %v3217
        %v3227 = vmul.f32 %v318, %v3217
        %v3228 = vmul.f32 %v319, %v3217
        %v3229 = vmul.f32 %v320, %v3217
        %v3230 = vmul.f32 %v321, %v3217
        %v3231 = vmul.f32 %v322, %v3217
        %v3232 = vmul.f32 %v323, %v3217
        %v3233 = vmul.f32 %v324, %v3217
        %v3250 = vrot.slane %v3218, 1
        %v3251 = vrot.slane %v3219, 1
        %v3252 = vsel %vm388, %v3250, %v3251
        %v3253 = vrot.slane %v3220, 1
        %v3254 = vrot.slane %v3221, 1
        %v3255 = vsel %vm388, %v3253, %v3254
        %v3256 = vrot.slane %v3222, 1
        %v3257 = vrot.slane %v3223, 1
        %v3258 = vsel %vm388, %v3256, %v3257
        %v3259 = vrot.slane %v3224, 1
        %v3260 = vrot.slane %v3225, 1
        %v3261 = vsel %vm388, %v3259, %v3260
        %v3262 = vrot.slane %v3226, 1
        %v3263 = vrot.slane %v3227, 1
        %v3264 = vsel %vm388, %v3262, %v3263
        %v3265 = vrot.slane %v3228, 1
        %v3266 = vrot.slane %v3229, 1
        %v3267 = vsel %vm388, %v3265, %v3266
        %v3268 = vrot.slane %v3230, 1
        %v3269 = vrot.slane %v3231, 1
        %v3270 = vsel %vm388, %v3268, %v3269
        %v3271 = vrot.slane %v3232, 1
        %v3272 = vrot.slane %v3233, 1
        %v3273 = vsel %vm388, %v3271, %v3272
        %v3282 = vadd.f32 %v3206, %v3252
        %v3283 = vadd.f32 %v3207, %v3255
        %v3284 = vadd.f32 %v3208, %v3258
        %v3285 = vadd.f32 %v3209, %v3261
        %v3286 = vadd.f32 %v3210, %v3264
        %v3287 = vadd.f32 %v3211, %v3267
        %v3288 = vadd.f32 %v3212, %v3270
        %v3289 = vadd.f32 %v3213, %v3273
        %v3290 = vlaneseq
        %v3291 = vshrl.u32 %v3290, 7
        %v3292 = vsub.s32 2, %v3291
        %v3293 = vrot.slane %v331, %v3292
        %v3294 = vmul.f32 %v309, %v3293
        %v3295 = vmul.f32 %v310, %v3293
        %v3296 = vmul.f32 %v311, %v3293
        %v3297 = vmul.f32 %v312, %v3293
        %v3298 = vmul.f32 %v313, %v3293
        %v3299 = vmul.f32 %v314, %v3293
        %v3300 = vmul.f32 %v315, %v3293
        %v3301 = vmul.f32 %v316, %v3293
        %v3302 = vmul.f32 %v317, %v3293
        %v3303 = vmul.f32 %v318, %v3293
        %v3304 = vmul.f32 %v319, %v3293
        %v3305 = vmul.f32 %v320, %v3293
        %v3306 = vmul.f32 %v321, %v3293
        %v3307 = vmul.f32 %v322, %v3293
        %v3308 = vmul.f32 %v323, %v3293
        %v3309 = vmul.f32 %v324, %v3293
        %v3326 = vrot.slane %v3294, 2
        %v3327 = vrot.slane %v3295, 2
        %v3328 = vsel %vm465, %v3326, %v3327
        %v3329 = vrot.slane %v3296, 2
        %v3330 = vrot.slane %v3297, 2
        %v3331 = vsel %vm465, %v3329, %v3330
        %v3332 = vrot.slane %v3298, 2
        %v3333 = vrot.slane %v3299, 2
        %v3334 = vsel %vm465, %v3332, %v3333
        %v3335 = vrot.slane %v3300, 2
        %v3336 = vrot.slane %v3301, 2
        %v3337 = vsel %vm465, %v3335, %v3336
        %v3338 = vrot.slane %v3302, 2
        %v3339 = vrot.slane %v3303, 2
        %v3340 = vsel %vm465, %v3338, %v3339
        %v3341 = vrot.slane %v3304, 2
        %v3342 = vrot.slane %v3305, 2
        %v3343 = vsel %vm465, %v3341, %v3342
        %v3344 = vrot.slane %v3306, 2
        %v3345 = vrot.slane %v3307, 2
        %v3346 = vsel %vm465, %v3344, %v3345
        %v3347 = vrot.slane %v3308, 2
        %v3348 = vrot.slane %v3309, 2
        %v3349 = vsel %vm465, %v3347, %v3348
        %v3358 = vadd.f32 %v3282, %v3328
        %v3359 = vadd.f32 %v3283, %v3331
        %v3360 = vadd.f32 %v3284, %v3334
        %v3361 = vadd.f32 %v3285, %v3337
        %v3362 = vadd.f32 %v3286, %v3340
        %v3363 = vadd.f32 %v3287, %v3343
        %v3364 = vadd.f32 %v3288, %v3346
        %v3365 = vadd.f32 %v3289, %v3349
        %v3366 = vlaneseq
        %v3367 = vshrl.u32 %v3366, 7
        %v3368 = vsub.s32 3, %v3367
        %v3369 = vrot.slane %v331, %v3368
        %v3370 = vmul.f32 %v309, %v3369
        %v3371 = vmul.f32 %v310, %v3369
        %v3372 = vmul.f32 %v311, %v3369
        %v3373 = vmul.f32 %v312, %v3369
        %v3374 = vmul.f32 %v313, %v3369
        %v3375 = vmul.f32 %v314, %v3369
        %v3376 = vmul.f32 %v315, %v3369
        %v3377 = vmul.f32 %v316, %v3369
        %v3378 = vmul.f32 %v317, %v3369
        %v3379 = vmul.f32 %v318, %v3369
        %v3380 = vmul.f32 %v319, %v3369
        %v3381 = vmul.f32 %v320, %v3369
        %v3382 = vmul.f32 %v321, %v3369
        %v3383 = vmul.f32 %v322, %v3369
        %v3384 = vmul.f32 %v323, %v3369
        %v3385 = vmul.f32 %v324, %v3369
        %v3402 = vrot.slane %v3370, 3
        %v3403 = vrot.slane %v3371, 3
        %v3404 = vsel %vm542, %v3402, %v3403
        %v3405 = vrot.slane %v3372, 3
        %v3406 = vrot.slane %v3373, 3
        %v3407 = vsel %vm542, %v3405, %v3406
        %v3408 = vrot.slane %v3374, 3
        %v3409 = vrot.slane %v3375, 3
        %v3410 = vsel %vm542, %v3408, %v3409
        %v3411 = vrot.slane %v3376, 3
        %v3412 = vrot.slane %v3377, 3
        %v3413 = vsel %vm542, %v3411, %v3412
        %v3414 = vrot.slane %v3378, 3
        %v3415 = vrot.slane %v3379, 3
        %v3416 = vsel %vm542, %v3414, %v3415
        %v3417 = vrot.slane %v3380, 3
        %v3418 = vrot.slane %v3381, 3
        %v3419 = vsel %vm542, %v3417, %v3418
        %v3420 = vrot.slane %v3382, 3
        %v3421 = vrot.slane %v3383, 3
        %v3422 = vsel %vm542, %v3420, %v3421
        %v3423 = vrot.slane %v3384, 3
        %v3424 = vrot.slane %v3385, 3
        %v3425 = vsel %vm542, %v3423, %v3424
        %v3434 = vadd.f32 %v3358, %v3404
        %v3435 = vadd.f32 %v3359, %v3407
        %v3436 = vadd.f32 %v3360, %v3410
        %v3437 = vadd.f32 %v3361, %v3413
        %v3438 = vadd.f32 %v3362, %v3416
        %v3439 = vadd.f32 %v3363, %v3419
        %v3440 = vadd.f32 %v3364, %v3422
        %v3441 = vadd.f32 %v3365, %v3425
        %v3442 = vlaneseq
        %v3443 = vshrl.u32 %v3442, 7
        %v3444 = vsub.s32 4, %v3443
        %v3445 = vrot.slane %v331, %v3444
        %v3446 = vmul.f32 %v309, %v3445
        %v3447 = vmul.f32 %v310, %v3445
        %v3448 = vmul.f32 %v311, %v3445
        %v3449 = vmul.f32 %v312, %v3445
        %v3450 = vmul.f32 %v313, %v3445
        %v3451 = vmul.f32 %v314, %v3445
        %v3452 = vmul.f32 %v315, %v3445
        %v3453 = vmul.f32 %v316, %v3445
        %v3454 = vmul.f32 %v317, %v3445
        %v3455 = vmul.f32 %v318, %v3445
        %v3456 = vmul.f32 %v319, %v3445
        %v3457 = vmul.f32 %v320, %v3445
        %v3458 = vmul.f32 %v321, %v3445
        %v3459 = vmul.f32 %v322, %v3445
        %v3460 = vmul.f32 %v323, %v3445
        %v3461 = vmul.f32 %v324, %v3445
        %v3478 = vrot.slane %v3446, 4
        %v3479 = vrot.slane %v3447, 4
        %v3480 = vsel %vm619, %v3478, %v3479
        %v3481 = vrot.slane %v3448, 4
        %v3482 = vrot.slane %v3449, 4
        %v3483 = vsel %vm619, %v3481, %v3482
        %v3484 = vrot.slane %v3450, 4
        %v3485 = vrot.slane %v3451, 4
        %v3486 = vsel %vm619, %v3484, %v3485
        %v3487 = vrot.slane %v3452, 4
        %v3488 = vrot.slane %v3453, 4
        %v3489 = vsel %vm619, %v3487, %v3488
        %v3490 = vrot.slane %v3454, 4
        %v3491 = vrot.slane %v3455, 4
        %v3492 = vsel %vm619, %v3490, %v3491
        %v3493 = vrot.slane %v3456, 4
        %v3494 = vrot.slane %v3457, 4
        %v3495 = vsel %vm619, %v3493, %v3494
        %v3496 = vrot.slane %v3458, 4
        %v3497 = vrot.slane %v3459, 4
        %v3498 = vsel %vm619, %v3496, %v3497
        %v3499 = vrot.slane %v3460, 4
        %v3500 = vrot.slane %v3461, 4
        %v3501 = vsel %vm619, %v3499, %v3500
        %v3510 = vadd.f32 %v3434, %v3480
        %v3511 = vadd.f32 %v3435, %v3483
        %v3512 = vadd.f32 %v3436, %v3486
        %v3513 = vadd.f32 %v3437, %v3489
        %v3514 = vadd.f32 %v3438, %v3492
        %v3515 = vadd.f32 %v3439, %v3495
        %v3516 = vadd.f32 %v3440, %v3498
        %v3517 = vadd.f32 %v3441, %v3501
        %v3518 = vlaneseq
        %v3519 = vshrl.u32 %v3518, 7
        %v3520 = vsub.s32 5, %v3519
        %v3521 = vrot.slane %v331, %v3520
        %v3522 = vmul.f32 %v309, %v3521
        %v3523 = vmul.f32 %v310, %v3521
        %v3524 = vmul.f32 %v311, %v3521
        %v3525 = vmul.f32 %v312, %v3521
        %v3526 = vmul.f32 %v313, %v3521
        %v3527 = vmul.f32 %v314, %v3521
        %v3528 = vmul.f32 %v315, %v3521
        %v3529 = vmul.f32 %v316, %v3521
        %v3530 = vmul.f32 %v317, %v3521
        %v3531 = vmul.f32 %v318, %v3521
        %v3532 = vmul.f32 %v319, %v3521
        %v3533 = vmul.f32 %v320, %v3521
        %v3534 = vmul.f32 %v321, %v3521
        %v3535 = vmul.f32 %v322, %v3521
        %v3536 = vmul.f32 %v323, %v3521
        %v3537 = vmul.f32 %v324, %v3521
        %v3554 = vrot.slane %v3522, 5
        %v3555 = vrot.slane %v3523, 5
        %v3556 = vsel %vm696, %v3554, %v3555
        %v3557 = vrot.slane %v3524, 5
        %v3558 = vrot.slane %v3525, 5
        %v3559 = vsel %vm696, %v3557, %v3558
        %v3560 = vrot.slane %v3526, 5
        %v3561 = vrot.slane %v3527, 5
        %v3562 = vsel %vm696, %v3560, %v3561
        %v3563 = vrot.slane %v3528, 5
        %v3564 = vrot.slane %v3529, 5
        %v3565 = vsel %vm696, %v3563, %v3564
        %v3566 = vrot.slane %v3530, 5
        %v3567 = vrot.slane %v3531, 5
        %v3568 = vsel %vm696, %v3566, %v3567
        %v3569 = vrot.slane %v3532, 5
        %v3570 = vrot.slane %v3533, 5
        %v3571 = vsel %vm696, %v3569, %v3570
        %v3572 = vrot.slane %v3534, 5
        %v3573 = vrot.slane %v3535, 5
        %v3574 = vsel %vm696, %v3572, %v3573
        %v3575 = vrot.slane %v3536, 5
        %v3576 = vrot.slane %v3537, 5
        %v3577 = vsel %vm696, %v3575, %v3576
        %v3586 = vadd.f32 %v3510, %v3556
        %v3587 = vadd.f32 %v3511, %v3559
        %v3588 = vadd.f32 %v3512, %v3562
        %v3589 = vadd.f32 %v3513, %v3565
        %v3590 = vadd.f32 %v3514, %v3568
        %v3591 = vadd.f32 %v3515, %v3571
        %v3592 = vadd.f32 %v3516, %v3574
        %v3593 = vadd.f32 %v3517, %v3577
        %v3594 = vlaneseq
        %v3595 = vshrl.u32 %v3594, 7
        %v3596 = vsub.s32 6, %v3595
        %v3597 = vrot.slane %v331, %v3596
        %v3598 = vmul.f32 %v309, %v3597
        %v3599 = vmul.f32 %v310, %v3597
        %v3600 = vmul.f32 %v311, %v3597
        %v3601 = vmul.f32 %v312, %v3597
        %v3602 = vmul.f32 %v313, %v3597
        %v3603 = vmul.f32 %v314, %v3597
        %v3604 = vmul.f32 %v315, %v3597
        %v3605 = vmul.f32 %v316, %v3597
        %v3606 = vmul.f32 %v317, %v3597
        %v3607 = vmul.f32 %v318, %v3597
        %v3608 = vmul.f32 %v319, %v3597
        %v3609 = vmul.f32 %v320, %v3597
        %v3610 = vmul.f32 %v321, %v3597
        %v3611 = vmul.f32 %v322, %v3597
        %v3612 = vmul.f32 %v323, %v3597
        %v3613 = vmul.f32 %v324, %v3597
        %v3630 = vrot.slane %v3598, 6
        %v3631 = vrot.slane %v3599, 6
        %v3632 = vsel %vm773, %v3630, %v3631
        %v3633 = vrot.slane %v3600, 6
        %v3634 = vrot.slane %v3601, 6
        %v3635 = vsel %vm773, %v3633, %v3634
        %v3636 = vrot.slane %v3602, 6
        %v3637 = vrot.slane %v3603, 6
        %v3638 = vsel %vm773, %v3636, %v3637
        %v3639 = vrot.slane %v3604, 6
        %v3640 = vrot.slane %v3605, 6
        %v3641 = vsel %vm773, %v3639, %v3640
        %v3642 = vrot.slane %v3606, 6
        %v3643 = vrot.slane %v3607, 6
        %v3644 = vsel %vm773, %v3642, %v3643
        %v3645 = vrot.slane %v3608, 6
        %v3646 = vrot.slane %v3609, 6
        %v3647 = vsel %vm773, %v3645, %v3646
        %v3648 = vrot.slane %v3610, 6
        %v3649 = vrot.slane %v3611, 6
        %v3650 = vsel %vm773, %v3648, %v3649
        %v3651 = vrot.slane %v3612, 6
        %v3652 = vrot.slane %v3613, 6
        %v3653 = vsel %vm773, %v3651, %v3652
        %v3662 = vadd.f32 %v3586, %v3632
        %v3663 = vadd.f32 %v3587, %v3635
        %v3664 = vadd.f32 %v3588, %v3638
        %v3665 = vadd.f32 %v3589, %v3641
        %v3666 = vadd.f32 %v3590, %v3644
        %v3667 = vadd.f32 %v3591, %v3647
        %v3668 = vadd.f32 %v3592, %v3650
        %v3669 = vadd.f32 %v3593, %v3653
        %v3670 = vld [vmem:[#allocation8] sm:$0x1]
        %v3672 = vlaneseq
        %v3673 = vshrl.u32 %v3672, 7
        %v3674 = vsub.s32 0, %v3673
        %v3675 = vrot.slane %v3670, %v3674
        %v3677 = vadd.f32 %v3662, %v3675
        %v3678 = vadd.f32 %v3663, %v3675
        %v3679 = vadd.f32 %v3664, %v3675
        %v3680 = vadd.f32 %v3665, %v3675
        %v3681 = vadd.f32 %v3666, %v3675
        %v3682 = vadd.f32 %v3667, %v3675
        %v3683 = vadd.f32 %v3668, %v3675
        %v3684 = vadd.f32 %v3669, %v3675
        %3685 = vst.msk [vmem:[%s215] sm:$0xff] %vm224, %v3677
        %3686 = vst.msk [vmem:[%s215 + $0x8] sm:$0xff] %vm224, %v3678
        %3687 = vst.msk [vmem:[%s215 + $0x10] sm:$0xff] %vm224, %v3679
        %3688 = vst.msk [vmem:[%s215 + $0x18] sm:$0xff] %vm224, %v3680
        %3689 = vst.msk [vmem:[%s215 + $0x20] sm:$0xff] %vm224, %v3681
        %3690 = vst.msk [vmem:[%s215 + $0x28] sm:$0xff] %vm224, %v3682
        %3691 = vst.msk [vmem:[%s215 + $0x30] sm:$0xff] %vm224, %v3683
        %3692 = vst.msk [vmem:[%s215 + $0x38] sm:$0xff] %vm224, %v3684
        %s3693 = sand.u32 %s97, 1
        %s3694 = scalar_lea.sflag [#allocation5], %s3693
        %s3695 = sand.u32 %s97, 1
        %s3696 = smul.addr %s3695, 64
        %s3697 = scalar_lea.vmem [#allocation9], %s3696
        // Predicated region
        $region45: #{mhca_encoder.16} parent=31 // pred_check
          %p3698 = pneg %p107
        $region46: #{mhca_encoder.16} parent=31 // pred_check_branch
          %3700 = sbr.rel (%p3698) target = $region48
        $region47: #{mhca_encoder.16} parent=31 // pred_region
          %s3702 = ssub.s32 1024, 1024
          %3703 = vsyncadd %s3694, %s3702
          %s3704 = smul.addr %s21, 8
          %s3705 = smul.addr %s3704, 128
          %s3706 = scalar_lea.hbm %s3, %s3705
          %s3707 = sshll.u32 %s3697, 4
          %s3708 = int_to_ptr.vmem [resolvable:$true] %s3707
          %3713 = dma.vmem_to_hbm [thread:$0]  %s3708, 1024, %s3706, %s3694, 128, 128, 8
        $region48: #{mhca_encoder.16} parent=31 // pred_fallthru
          _
      $region32: #{mhca_encoder.16} parent=5 // pred_fallthru
        _
      %p3714 = scmp.le.s32.totalorder 2, %s16
      // Predicated region
      $region49: #{mhca_encoder.16} parent=5 // pred_check
        %p3715 = pneg %p3714
      $region50: #{mhca_encoder.16} parent=5 // pred_check_branch
        %3717 = sbr.rel (%p3715) target = $region52
      $region51: #{mhca_encoder.16} parent=5 // pred_region
        %s3718 = ssub.s32 %s16, 2
        // Predicated region
        $region53: #{mhca_encoder.16} parent=51 // pred_check
          %p3719 = pneg %p113
        $region54: #{mhca_encoder.16} parent=51 // pred_check_branch
          %3721 = sbr.rel (%p3719) target = $region56
        $region55: #{mhca_encoder.16} parent=51 // pred_region
          %s3722 = sand.u32 %s98, 1
          %s3723 = scalar_lea.sflag [#allocation5], %s3722
          %s3724 = sand.u32 %s98, 1
          %s3725 = smul.addr %s3724, 64
          %s3726 = scalar_lea.vmem [#allocation9], %s3725
          %3727 = dma.done %s3723, 1024
        $region56: #{mhca_encoder.16} parent=51 // pred_fallthru
          _
      $region52: #{mhca_encoder.16} parent=5 // pred_fallthru
        _
    $region6: #{mhca_encoder.16} parent=1 // loop_footer
      %s20 = sadd.s32 1, %s16
    $region7: #{mhca_encoder.16} parent=1 // loop_footer_branch
      %15 = sbr.rel target = $region3
    $region8: #{mhca_encoder.16} parent=1 // loop_exit
      _
    %3728 = vsyncpa [#allocation4], 1
    %s3729 = scalar_lea.sflag [#allocation4], 1
    %3730 = vsyncpa %s3729, 1
    %3731 = vsyncpa [#allocation7], 1
    %3732 = vsyncpa [#allocation5], 1
    %s3733 = scalar_lea.sflag [#allocation5], 1
    %3734 = vsyncpa %s3733, 1

// kernel: mhca_encoder.20
$region0: #{mhca_encoder.20}
  #allocation0 [shape = 'u32[]', space=smem, size = 0x4, offset = 0x4, fixed_abs, tag = 'smem constant byte address 0x4 - core index']
  #allocation1 [shape = 'u32[144,128]{1,0:T(1,128)}', space=vmem, size = 0x12000, scoped, tag = 'internal scratch']
  #allocation2 [shape = 'f32[128,32]{1,0:T(8,128)}', space=vmem, size = 0x10000, scoped, tag = 'scratch operand']
  %s0 = inlined_call_operand.hbm [shape: f32[128,96], index: 0, kind: input, shape index: {}]
  %s1 = inlined_call_operand.hbm [shape: f32[96,32], index: 1, kind: input, shape index: {}]
  %s2 = inlined_call_operand.hbm [shape: f32[1,32], index: 2, kind: input, shape index: {}]
  %s3 = inlined_call_operand.hbm [shape: f32[128,32], index: 3, kind: input, shape index: {}]
  %s4 = inlined_call_operand.hbm [shape: f32[128,32], index: 4, kind: output, shape index: {}]
  %s5 = sld [smem:[#allocation0]]
  $region50: #{mhca_encoder.20} parent=0
    _
  %s7 = ssub.s32 1, %s5
  %s8 = scalar_select 0, %s7, %s5
  $region1: #{mhca_encoder.20} parent=0
    #allocation3 [shape = 'u8[65536]{0}', space=vmem, size = 0x10000, scoped, tag = 'input window, operand 0, single buffered']
    #allocation4 [shape = 's32[1]{0}', space=sflag, size = 0x4, scoped, tag = 'scoped memory for mhca_encoder.20']
    #allocation5 [shape = 's32[1]{0}', space=sflag, size = 0x4, scoped, tag = 'scoped memory for mhca_encoder.20']
    #allocation6 [shape = 'u8[49152]{0}', space=vmem, size = 0xc000, scoped, tag = 'input window, operand 1, single buffered']
    #allocation7 [shape = 's32[1]{0}', space=sflag, size = 0x4, scoped, tag = 'scoped memory for mhca_encoder.20']
    #allocation8 [shape = 'u8[512]{0}', space=vmem, size = 0x400, scoped, tag = 'input window, operand 2, single buffered']
    #allocation9 [shape = 'u8[65536]{0}', space=vmem, size = 0x10000, scoped, tag = 'input window, operand 3, single buffered']
    #allocation10 [shape = 's32[1]{0}', space=sflag, size = 0x4, scoped, tag = 'scoped memory for mhca_encoder.20']
    #allocation11 [shape = 'u8[65536]{0}', space=vmem, size = 0x10000, scoped, tag = 'output window, operand 0, single buffered']
    %9 = vsyncpa [#allocation4], 0
    %10 = vsyncpa [#allocation7], 0
    %11 = vsyncpa [#allocation10], 0
    %12 = vsyncpa [#allocation5], 0
    // Predicated region
    $region2: #{mhca_encoder.20} parent=1 // pred_check
      _
    $region3: #{mhca_encoder.20} parent=1 // pred_check_branch
      %14 = sbr.rel (0) target = $region5
    $region4: #{mhca_encoder.20} parent=1 // pred_region
      %s16 = ssub.s32 2048, 2048
      %17 = vsyncadd [#allocation4], %s16
      %s18 = sshll.u32 [#allocation3], 4
      %s19 = int_to_ptr.vmem [resolvable:$true] %s18
      %24 = dma.hbm_to_vmem [thread:$0]  %s0, 2048, %s19, [#allocation4], 128, 128, 8
    $region5: #{mhca_encoder.20} parent=1 // pred_fallthru
      _
    // Predicated region
    $region6: #{mhca_encoder.20} parent=1 // pred_check
      _
    $region7: #{mhca_encoder.20} parent=1 // pred_check_branch
      %26 = sbr.rel (0) target = $region9
    $region8: #{mhca_encoder.20} parent=1 // pred_region
      %s28 = ssub.s32 1536, 1536
      %29 = vsyncadd [#allocation7], %s28
      %s30 = sshll.u32 [#allocation6], 4
      %s31 = int_to_ptr.vmem [resolvable:$true] %s30
      %36 = dma.hbm_to_vmem [thread:$0]  %s1, 1536, %s31, [#allocation7], 128, 128, 8
    $region9: #{mhca_encoder.20} parent=1 // pred_fallthru
      _
    // Predicated region
    $region10: #{mhca_encoder.20} parent=1 // pred_check
      _
    $region11: #{mhca_encoder.20} parent=1 // pred_check_branch
      %38 = sbr.rel (0) target = $region13
    $region12: #{mhca_encoder.20} parent=1 // pred_region
      %s40 = ssub.s32 16, 16
      %41 = vsyncadd [#allocation7], %s40
      %s43 = sshll.u32 [#allocation8], 4
      %s44 = int_to_ptr.vmem [resolvable:$true] %s43
      %46 = dma.hbm_to_vmem [thread:$0]  %s2, 16, %s44, [#allocation7]
    $region13: #{mhca_encoder.20} parent=1 // pred_fallthru
      _
    // Predicated region
    $region14: #{mhca_encoder.20} parent=1 // pred_check
      _
    $region15: #{mhca_encoder.20} parent=1 // pred_check_branch
      %48 = sbr.rel (0) target = $region17
    $region16: #{mhca_encoder.20} parent=1 // pred_region
      %s50 = ssub.s32 2048, 2048
      %51 = vsyncadd [#allocation10], %s50
      %s52 = sshll.u32 [#allocation9], 4
      %s53 = int_to_ptr.vmem [resolvable:$true] %s52
      %58 = dma.hbm_to_vmem [thread:$0]  %s3, 2048, %s53, [#allocation10], 128, 128, 8
    $region17: #{mhca_encoder.20} parent=1 // pred_fallthru
      _
    // Predicated region
    $region18: #{mhca_encoder.20} parent=1 // pred_check
      _
    $region19: #{mhca_encoder.20} parent=1 // pred_check_branch
      %60 = sbr.rel (0) target = $region21
    $region20: #{mhca_encoder.20} parent=1 // pred_region
      %61 = dma.done [#allocation4], 2048
    $region21: #{mhca_encoder.20} parent=1 // pred_fallthru
      _
    // Predicated region
    $region22: #{mhca_encoder.20} parent=1 // pred_check
      _
    $region23: #{mhca_encoder.20} parent=1 // pred_check_branch
      %63 = sbr.rel (0) target = $region25
    $region24: #{mhca_encoder.20} parent=1 // pred_region
      %64 = dma.done [#allocation7], 1536
    $region25: #{mhca_encoder.20} parent=1 // pred_fallthru
      _
    // Predicated region
    $region26: #{mhca_encoder.20} parent=1 // pred_check
      _
    $region27: #{mhca_encoder.20} parent=1 // pred_check_branch
      %66 = sbr.rel (0) target = $region29
    $region28: #{mhca_encoder.20} parent=1 // pred_region
      %67 = dma.done [#allocation7], 16
    $region29: #{mhca_encoder.20} parent=1 // pred_fallthru
      _
    // Predicated region
    $region30: #{mhca_encoder.20} parent=1 // pred_check
      _
    $region31: #{mhca_encoder.20} parent=1 // pred_check_branch
      %69 = sbr.rel (0) target = $region33
    $region32: #{mhca_encoder.20} parent=1 // pred_region
      %70 = dma.done [#allocation10], 2048
    $region33: #{mhca_encoder.20} parent=1 // pred_fallthru
      _
    %p72 = scmp.eq.s32.totalorder 0, 0
    // Predicated region
    $region34: #{mhca_encoder.20} parent=1 // pred_check
      %p73 = pneg %p72
    $region35: #{mhca_encoder.20} parent=1 // pred_check_branch
      %75 = sbr.rel (%p73) target = $region37
    $region36: #{mhca_encoder.20} parent=1 // pred_region
      %vm76 = vcmask 261120
      %77 = vst.msk [vmem:[#allocation2] sm:$0xff] %vm76, 0.0
      %78 = vst.msk [vmem:[#allocation2 + $0x8] sm:$0xff] %vm76, 0.0
      %79 = vst.msk [vmem:[#allocation2 + $0x10] sm:$0xff] %vm76, 0.0
      %80 = vst.msk [vmem:[#allocation2 + $0x18] sm:$0xff] %vm76, 0.0
      %81 = vst.msk [vmem:[#allocation2 + $0x20] sm:$0xff] %vm76, 0.0
      %82 = vst.msk [vmem:[#allocation2 + $0x28] sm:$0xff] %vm76, 0.0
      %83 = vst.msk [vmem:[#allocation2 + $0x30] sm:$0xff] %vm76, 0.0
      %84 = vst.msk [vmem:[#allocation2 + $0x38] sm:$0xff] %vm76, 0.0
      %85 = vst.msk [vmem:[#allocation2 + $0x40] sm:$0xff] %vm76, 0.0
      %86 = vst.msk [vmem:[#allocation2 + $0x48] sm:$0xff] %vm76, 0.0
      %87 = vst.msk [vmem:[#allocation2 + $0x50] sm:$0xff] %vm76, 0.0
      %88 = vst.msk [vmem:[#allocation2 + $0x58] sm:$0xff] %vm76, 0.0
      %89 = vst.msk [vmem:[#allocation2 + $0x60] sm:$0xff] %vm76, 0.0
      %90 = vst.msk [vmem:[#allocation2 + $0x68] sm:$0xff] %vm76, 0.0
      %91 = vst.msk [vmem:[#allocation2 + $0x70] sm:$0xff] %vm76, 0.0
      %92 = vst.msk [vmem:[#allocation2 + $0x78] sm:$0xff] %vm76, 0.0
    $region37: #{mhca_encoder.20} parent=1 // pred_fallthru
      _
    %v93 = vld [vmem:[#allocation3] sm:$0xff]
    %v94 = vld [vmem:[#allocation3 + $0x8] sm:$0xff]
    %v95 = vld [vmem:[#allocation3 + $0x10] sm:$0xff]
    %v96 = vld [vmem:[#allocation3 + $0x18] sm:$0xff]
    %v97 = vld [vmem:[#allocation3 + $0x20] sm:$0xff]
    %v98 = vld [vmem:[#allocation3 + $0x28] sm:$0xff]
    %v99 = vld [vmem:[#allocation3 + $0x30] sm:$0xff]
    %v100 = vld [vmem:[#allocation3 + $0x38] sm:$0xff]
    %v101 = vld [vmem:[#allocation3 + $0x40] sm:$0xff]
    %v102 = vld [vmem:[#allocation3 + $0x48] sm:$0xff]
    %v103 = vld [vmem:[#allocation3 + $0x50] sm:$0xff]
    %v104 = vld [vmem:[#allocation3 + $0x58] sm:$0xff]
    %v105 = vld [vmem:[#allocation3 + $0x60] sm:$0xff]
    %v106 = vld [vmem:[#allocation3 + $0x68] sm:$0xff]
    %v107 = vld [vmem:[#allocation3 + $0x70] sm:$0xff]
    %v108 = vld [vmem:[#allocation3 + $0x78] sm:$0xff]
    %v109 = vpack.c.bf16 %v94, %v93
    %v110 = vpack.c.bf16 %v96, %v95
    %v111 = vpack.c.bf16 %v98, %v97
    %v112 = vpack.c.bf16 %v100, %v99
    %v113 = vpack.c.bf16 %v102, %v101
    %v114 = vpack.c.bf16 %v104, %v103
    %v115 = vpack.c.bf16 %v106, %v105
    %v116 = vpack.c.bf16 %v108, %v107
    %v117 = vld [vmem:[#allocation2] sm:$0xff]
    %v118 = vld [vmem:[#allocation2 + $0x8] sm:$0xff]
    %v119 = vld [vmem:[#allocation2 + $0x10] sm:$0xff]
    %v120 = vld [vmem:[#allocation2 + $0x18] sm:$0xff]
    %v121 = vld [vmem:[#allocation2 + $0x20] sm:$0xff]
    %v122 = vld [vmem:[#allocation2 + $0x28] sm:$0xff]
    %v123 = vld [vmem:[#allocation2 + $0x30] sm:$0xff]
    %v124 = vld [vmem:[#allocation2 + $0x38] sm:$0xff]
    %v125 = vld [vmem:[#allocation2 + $0x40] sm:$0xff]
    %v126 = vld [vmem:[#allocation2 + $0x48] sm:$0xff]
    %v127 = vld [vmem:[#allocation2 + $0x50] sm:$0xff]
    %v128 = vld [vmem:[#allocation2 + $0x58] sm:$0xff]
    %v129 = vld [vmem:[#allocation2 + $0x60] sm:$0xff]
    %v130 = vld [vmem:[#allocation2 + $0x68] sm:$0xff]
    %v131 = vld [vmem:[#allocation2 + $0x70] sm:$0xff]
    %v132 = vld [vmem:[#allocation2 + $0x78] sm:$0xff]
    %v133 = vld [vmem:[#allocation6] sm:$0xff]
    %v134 = vld [vmem:[#allocation6 + $0x8] sm:$0xff]
    %v135 = vld [vmem:[#allocation6 + $0x10] sm:$0xff]
    %v136 = vld [vmem:[#allocation6 + $0x18] sm:$0xff]
    %v137 = vld [vmem:[#allocation6 + $0x20] sm:$0xff]
    %v138 = vld [vmem:[#allocation6 + $0x28] sm:$0xff]
    %v139 = vld [vmem:[#allocation6 + $0x30] sm:$0xff]
    %v140 = vld [vmem:[#allocation6 + $0x38] sm:$0xff]
    %v141 = vld [vmem:[#allocation6 + $0x40] sm:$0xff]
    %v142 = vld [vmem:[#allocation6 + $0x48] sm:$0xff]
    %v143 = vld [vmem:[#allocation6 + $0x50] sm:$0xff]
    %v144 = vld [vmem:[#allocation6 + $0x58] sm:$0xff]
    %v145 = vpack.c.bf16 %v134, %v133
    %v146 = vpack.c.bf16 %v136, %v135
    %v147 = vpack.c.bf16 %v138, %v137
    %v148 = vpack.c.bf16 %v140, %v139
    %v149 = vpack.c.bf16 %v142, %v141
    %v150 = vpack.c.bf16 %v144, %v143
    %vm151 = vcmask 785408
    %v153 = vsel %vm151, %v109, 0
    %v156 = vsel %vm151, %v110, 0
    %v159 = vsel %vm151, %v111, 0
    %v162 = vsel %vm151, %v112, 0
    %v165 = vsel %vm151, %v113, 0
    %v168 = vsel %vm151, %v114, 0
    %v171 = vsel %vm151, %v115, 0
    %v174 = vsel %vm151, %v116, 0
    %176 = vmatprep.subr.bf16.mxu0 0
    %177 = vmatpush1.bf16.msra.mxu0 %v145
    %178 = vmatprep.subr.bf16.mxu0 0
    %179 = vmatpush1.bf16.msra.mxu0 %v146
    %180 = vmatprep.subr.bf16.mxu0 0
    %181 = vmatpush1.bf16.msra.mxu0 %v147
    %182 = vmatprep.subr.bf16.mxu0 0
    %183 = vmatpush1.bf16.msra.mxu0 %v148
    %184 = vmatprep.subr.bf16.mxu0 0
    %185 = vmatpush1.bf16.msra.mxu0 %v149
    %186 = vmatprep.subr.bf16.mxu0 0
    %187 = vmatpush1.bf16.msra.mxu0 %v150
    %188 = vmatprep.subr.bf16.mxu0 0
    %189 = vmatpush1.bf16.msra.mxu0 0
    %190 = vmatprep.subr.bf16.mxu0 0
    %191 = vmatpush1.bf16.msra.mxu0 0
    %192 = vmatprep.subr.bf16.mxu0 0
    %193 = vmatpush1.bf16.msra.mxu0 0
    %194 = vmatprep.subr.bf16.mxu0 0
    %195 = vmatpush1.bf16.msra.mxu0 0
    %196 = vmatprep.subr.bf16.mxu0 0
    %197 = vmatpush1.bf16.msra.mxu0 0
    %198 = vmatprep.subr.bf16.mxu0 0
    %199 = vmatpush1.bf16.msra.mxu0 0
    %200 = vmatprep.subr.bf16.mxu0 0
    %201 = vmatpush1.bf16.msra.mxu0 0
    %202 = vmatprep.subr.bf16.mxu0 0
    %203 = vmatpush1.bf16.msra.mxu0 0
    %204 = vmatprep.subr.bf16.mxu0 0
    %205 = vmatpush1.bf16.msra.mxu0 0
    %206 = vmatprep.subr.bf16.mxu0 0
    %207 = vmatpush1.bf16.msra.mxu0 0
    %208 = vmatprep.mubr.bf16.mxu0 0
    %209 = vmatmul.mubr.bf16.gmra.mrb[0].mxu0 %v153
    %v210 = vpop.f32.mrb[0].mxu0
    %v211 = vadd.f32 0.0, %v210
    %v212 = vpop.f32.mrb[0].mxu0
    %v213 = vpop.f32.mrb[0].mxu0
    %v214 = vadd.f32 0.0, %v213
    %v215 = vpop.f32.mrb[0].mxu0
    %216 = vmatprep.mubr.bf16.mxu0 0
    %217 = vmatmul.mubr.bf16.gmra.mrb[0].mxu0 %v156
    %v218 = vpop.f32.mrb[0].mxu0
    %v219 = vadd.f32 0.0, %v218
    %v220 = vpop.f32.mrb[0].mxu0
    %v221 = vpop.f32.mrb[0].mxu0
    %v222 = vadd.f32 0.0, %v221
    %v223 = vpop.f32.mrb[0].mxu0
    %224 = vmatprep.mubr.bf16.mxu0 0
    %225 = vmatmul.mubr.bf16.gmra.mrb[0].mxu0 %v159
    %v226 = vpop.f32.mrb[0].mxu0
    %v227 = vadd.f32 0.0, %v226
    %v228 = vpop.f32.mrb[0].mxu0
    %v229 = vpop.f32.mrb[0].mxu0
    %v230 = vadd.f32 0.0, %v229
    %v231 = vpop.f32.mrb[0].mxu0
    %232 = vmatprep.mubr.bf16.mxu0 0
    %233 = vmatmul.mubr.bf16.gmra.mrb[0].mxu0 %v162
    %v234 = vpop.f32.mrb[0].mxu0
    %v235 = vadd.f32 0.0, %v234
    %v236 = vpop.f32.mrb[0].mxu0
    %v237 = vpop.f32.mrb[0].mxu0
    %v238 = vadd.f32 0.0, %v237
    %v239 = vpop.f32.mrb[0].mxu0
    %240 = vmatprep.mubr.bf16.mxu0 0
    %241 = vmatmul.mubr.bf16.gmra.mrb[0].mxu0 %v165
    %v242 = vpop.f32.mrb[0].mxu0
    %v243 = vadd.f32 0.0, %v242
    %v244 = vpop.f32.mrb[0].mxu0
    %v245 = vpop.f32.mrb[0].mxu0
    %v246 = vadd.f32 0.0, %v245
    %v247 = vpop.f32.mrb[0].mxu0
    %248 = vmatprep.mubr.bf16.mxu0 0
    %249 = vmatmul.mubr.bf16.gmra.mrb[0].mxu0 %v168
    %v250 = vpop.f32.mrb[0].mxu0
    %v251 = vadd.f32 0.0, %v250
    %v252 = vpop.f32.mrb[0].mxu0
    %v253 = vpop.f32.mrb[0].mxu0
    %v254 = vadd.f32 0.0, %v253
    %v255 = vpop.f32.mrb[0].mxu0
    %256 = vmatprep.mubr.bf16.mxu0 0
    %257 = vmatmul.mubr.bf16.gmra.mrb[0].mxu0 %v171
    %v258 = vpop.f32.mrb[0].mxu0
    %v259 = vadd.f32 0.0, %v258
    %v260 = vpop.f32.mrb[0].mxu0
    %v261 = vpop.f32.mrb[0].mxu0
    %v262 = vadd.f32 0.0, %v261
    %v263 = vpop.f32.mrb[0].mxu0
    %264 = vmatprep.mubr.bf16.mxu0 0
    %265 = vmatmul.mubr.bf16.gmra.mrb[0].mxu0 %v174
    %v266 = vpop.f32.mrb[0].mxu0
    %v267 = vadd.f32 0.0, %v266
    %v268 = vpop.f32.mrb[0].mxu0
    %v269 = vpop.f32.mrb[0].mxu0
    %v270 = vadd.f32 0.0, %v269
    %v271 = vpop.f32.mrb[0].mxu0
    %272 = vdwg.mxu0
    %v273 = vadd.f32 %v117, %v211
    %v274 = vadd.f32 %v118, %v214
    %v275 = vadd.f32 %v119, %v219
    %v276 = vadd.f32 %v120, %v222
    %v277 = vadd.f32 %v121, %v227
    %v278 = vadd.f32 %v122, %v230
    %v279 = vadd.f32 %v123, %v235
    %v280 = vadd.f32 %v124, %v238
    %v281 = vadd.f32 %v125, %v243
    %v282 = vadd.f32 %v126, %v246
    %v283 = vadd.f32 %v127, %v251
    %v284 = vadd.f32 %v128, %v254
    %v285 = vadd.f32 %v129, %v259
    %v286 = vadd.f32 %v130, %v262
    %v287 = vadd.f32 %v131, %v267
    %v288 = vadd.f32 %v132, %v270
    %vm289 = vcmask 261120
    %290 = vst.msk [vmem:[#allocation2] sm:$0xff] %vm289, %v273
    %291 = vst.msk [vmem:[#allocation2 + $0x8] sm:$0xff] %vm289, %v274
    %292 = vst.msk [vmem:[#allocation2 + $0x10] sm:$0xff] %vm289, %v275
    %293 = vst.msk [vmem:[#allocation2 + $0x18] sm:$0xff] %vm289, %v276
    %294 = vst.msk [vmem:[#allocation2 + $0x20] sm:$0xff] %vm289, %v277
    %295 = vst.msk [vmem:[#allocation2 + $0x28] sm:$0xff] %vm289, %v278
    %296 = vst.msk [vmem:[#allocation2 + $0x30] sm:$0xff] %vm289, %v279
    %297 = vst.msk [vmem:[#allocation2 + $0x38] sm:$0xff] %vm289, %v280
    %298 = vst.msk [vmem:[#allocation2 + $0x40] sm:$0xff] %vm289, %v281
    %299 = vst.msk [vmem:[#allocation2 + $0x48] sm:$0xff] %vm289, %v282
    %300 = vst.msk [vmem:[#allocation2 + $0x50] sm:$0xff] %vm289, %v283
    %301 = vst.msk [vmem:[#allocation2 + $0x58] sm:$0xff] %vm289, %v284
    %302 = vst.msk [vmem:[#allocation2 + $0x60] sm:$0xff] %vm289, %v285
    %303 = vst.msk [vmem:[#allocation2 + $0x68] sm:$0xff] %vm289, %v286
    %304 = vst.msk [vmem:[#allocation2 + $0x70] sm:$0xff] %vm289, %v287
    %305 = vst.msk [vmem:[#allocation2 + $0x78] sm:$0xff] %vm289, %v288
    // Predicated region
    $region38: #{mhca_encoder.20} parent=1 // pred_check
      %p306 = pneg %p72
    $region39: #{mhca_encoder.20} parent=1 // pred_check_branch
      %308 = sbr.rel (%p306) target = $region41
    $region40: #{mhca_encoder.20} parent=1 // pred_region
      %v309 = vld [vmem:[#allocation2] sm:$0xff]
      %v310 = vld [vmem:[#allocation2 + $0x8] sm:$0xff]
      %v311 = vld [vmem:[#allocation2 + $0x10] sm:$0xff]
      %v312 = vld [vmem:[#allocation2 + $0x18] sm:$0xff]
      %v313 = vld [vmem:[#allocation2 + $0x20] sm:$0xff]
      %v314 = vld [vmem:[#allocation2 + $0x28] sm:$0xff]
      %v315 = vld [vmem:[#allocation2 + $0x30] sm:$0xff]
      %v316 = vld [vmem:[#allocation2 + $0x38] sm:$0xff]
      %v317 = vld [vmem:[#allocation2 + $0x40] sm:$0xff]
      %v318 = vld [vmem:[#allocation2 + $0x48] sm:$0xff]
      %v319 = vld [vmem:[#allocation2 + $0x50] sm:$0xff]
      %v320 = vld [vmem:[#allocation2 + $0x58] sm:$0xff]
      %v321 = vld [vmem:[#allocation2 + $0x60] sm:$0xff]
      %v322 = vld [vmem:[#allocation2 + $0x68] sm:$0xff]
      %v323 = vld [vmem:[#allocation2 + $0x70] sm:$0xff]
      %v324 = vld [vmem:[#allocation2 + $0x78] sm:$0xff]
      %v325 = vld [vmem:[#allocation8] sm:$0x1]
      %v327 = vlaneseq
      %v328 = vshrl.u32 %v327, 7
      %v329 = vsub.s32 0, %v328
      %v330 = vrot.slane %v325, %v329
      %v332 = vadd.f32 %v309, %v330
      %v333 = vadd.f32 %v310, %v330
      %v334 = vadd.f32 %v311, %v330
      %v335 = vadd.f32 %v312, %v330
      %v336 = vadd.f32 %v313, %v330
      %v337 = vadd.f32 %v314, %v330
      %v338 = vadd.f32 %v315, %v330
      %v339 = vadd.f32 %v316, %v330
      %v340 = vadd.f32 %v317, %v330
      %v341 = vadd.f32 %v318, %v330
      %v342 = vadd.f32 %v319, %v330
      %v343 = vadd.f32 %v320, %v330
      %v344 = vadd.f32 %v321, %v330
      %v345 = vadd.f32 %v322, %v330
      %v346 = vadd.f32 %v323, %v330
      %v347 = vadd.f32 %v324, %v330
      %v348 = vld [vmem:[#allocation9] sm:$0xff]
      %v349 = vld [vmem:[#allocation9 + $0x8] sm:$0xff]
      %v350 = vld [vmem:[#allocation9 + $0x10] sm:$0xff]
      %v351 = vld [vmem:[#allocation9 + $0x18] sm:$0xff]
      %v352 = vld [vmem:[#allocation9 + $0x20] sm:$0xff]
      %v353 = vld [vmem:[#allocation9 + $0x28] sm:$0xff]
      %v354 = vld [vmem:[#allocation9 + $0x30] sm:$0xff]
      %v355 = vld [vmem:[#allocation9 + $0x38] sm:$0xff]
      %v356 = vld [vmem:[#allocation9 + $0x40] sm:$0xff]
      %v357 = vld [vmem:[#allocation9 + $0x48] sm:$0xff]
      %v358 = vld [vmem:[#allocation9 + $0x50] sm:$0xff]
      %v359 = vld [vmem:[#allocation9 + $0x58] sm:$0xff]
      %v360 = vld [vmem:[#allocation9 + $0x60] sm:$0xff]
      %v361 = vld [vmem:[#allocation9 + $0x68] sm:$0xff]
      %v362 = vld [vmem:[#allocation9 + $0x70] sm:$0xff]
      %v363 = vld [vmem:[#allocation9 + $0x78] sm:$0xff]
      %v364 = vadd.f32 %v332, %v348
      %v365 = vadd.f32 %v333, %v349
      %v366 = vadd.f32 %v334, %v350
      %v367 = vadd.f32 %v335, %v351
      %v368 = vadd.f32 %v336, %v352
      %v369 = vadd.f32 %v337, %v353
      %v370 = vadd.f32 %v338, %v354
      %v371 = vadd.f32 %v339, %v355
      %v372 = vadd.f32 %v340, %v356
      %v373 = vadd.f32 %v341, %v357
      %v374 = vadd.f32 %v342, %v358
      %v375 = vadd.f32 %v343, %v359
      %v376 = vadd.f32 %v344, %v360
      %v377 = vadd.f32 %v345, %v361
      %v378 = vadd.f32 %v346, %v362
      %v379 = vadd.f32 %v347, %v363
      %380 = vst.msk [vmem:[#allocation11] sm:$0xff] %vm289, %v364
      %381 = vst.msk [vmem:[#allocation11 + $0x8] sm:$0xff] %vm289, %v365
      %382 = vst.msk [vmem:[#allocation11 + $0x10] sm:$0xff] %vm289, %v366
      %383 = vst.msk [vmem:[#allocation11 + $0x18] sm:$0xff] %vm289, %v367
      %384 = vst.msk [vmem:[#allocation11 + $0x20] sm:$0xff] %vm289, %v368
      %385 = vst.msk [vmem:[#allocation11 + $0x28] sm:$0xff] %vm289, %v369
      %386 = vst.msk [vmem:[#allocation11 + $0x30] sm:$0xff] %vm289, %v370
      %387 = vst.msk [vmem:[#allocation11 + $0x38] sm:$0xff] %vm289, %v371
      %388 = vst.msk [vmem:[#allocation11 + $0x40] sm:$0xff] %vm289, %v372
      %389 = vst.msk [vmem:[#allocation11 + $0x48] sm:$0xff] %vm289, %v373
      %390 = vst.msk [vmem:[#allocation11 + $0x50] sm:$0xff] %vm289, %v374
      %391 = vst.msk [vmem:[#allocation11 + $0x58] sm:$0xff] %vm289, %v375
      %392 = vst.msk [vmem:[#allocation11 + $0x60] sm:$0xff] %vm289, %v376
      %393 = vst.msk [vmem:[#allocation11 + $0x68] sm:$0xff] %vm289, %v377
      %394 = vst.msk [vmem:[#allocation11 + $0x70] sm:$0xff] %vm289, %v378
      %395 = vst.msk [vmem:[#allocation11 + $0x78] sm:$0xff] %vm289, %v379
    $region41: #{mhca_encoder.20} parent=1 // pred_fallthru
      _
    // Predicated region
    $region42: #{mhca_encoder.20} parent=1 // pred_check
      _
    $region43: #{mhca_encoder.20} parent=1 // pred_check_branch
      %397 = sbr.rel (0) target = $region45
    $region44: #{mhca_encoder.20} parent=1 // pred_region
      %s399 = ssub.s32 2048, 2048
      %400 = vsyncadd [#allocation5], %s399
      %s401 = sshll.u32 [#allocation11], 4
      %s402 = int_to_ptr.vmem [resolvable:$true] %s401
      %407 = dma.vmem_to_hbm [thread:$0]  %s402, 2048, %s4, [#allocation5], 128, 128, 8
    $region45: #{mhca_encoder.20} parent=1 // pred_fallthru
      _
    // Predicated region
    $region46: #{mhca_encoder.20} parent=1 // pred_check
      _
    $region47: #{mhca_encoder.20} parent=1 // pred_check_branch
      %409 = sbr.rel (0) target = $region49
    $region48: #{mhca_encoder.20} parent=1 // pred_region
      %410 = dma.done [#allocation5], 2048
    $region49: #{mhca_encoder.20} parent=1 // pred_fallthru
      _
    %411 = vsyncpa [#allocation4], 1
    %412 = vsyncpa [#allocation7], 1
    %413 = vsyncpa [#allocation10], 1
    %414 = vsyncpa [#allocation5], 1

// kernel: mhca_encoder.19
$region0: #{mhca_encoder.19}
  #allocation0 [shape = 'u32[]', space=smem, size = 0x4, offset = 0x4, fixed_abs, tag = 'smem constant byte address 0x4 - core index']
  #allocation1 [shape = 'u32[144,128]{1,0:T(1,128)}', space=vmem, size = 0x12000, scoped, tag = 'internal scratch']
  #allocation2 [shape = 'f32[128,96]{1,0:T(8,128)}', space=vmem, size = 0x10000, scoped, tag = 'scratch operand']
  #allocation3 [shape = 'bf16[128,32]{1,0:T(16,128)(2,1)}', space=vmem, size = 0x8000, scoped, tag = 'scratch operand']
  %s0 = inlined_call_operand.hbm [shape: f32[128,32], index: 0, kind: input, shape index: {}]
  %s1 = inlined_call_operand.hbm [shape: f32[32,96], index: 1, kind: input, shape index: {}]
  %s2 = inlined_call_operand.hbm [shape: f32[1,96], index: 2, kind: input, shape index: {}]
  %s3 = inlined_call_operand.hbm [shape: f32[1,32], index: 3, kind: input, shape index: {}]
  %s4 = inlined_call_operand.hbm [shape: f32[1,32], index: 4, kind: input, shape index: {}]
  %s5 = inlined_call_operand.hbm [shape: f32[128,96], index: 5, kind: output, shape index: {}]
  %s6 = sld [smem:[#allocation0]]
  $region62: #{mhca_encoder.19} parent=0
    _
  %s8 = ssub.s32 1, %s6
  %s9 = scalar_select 0, %s8, %s6
  $region1: #{mhca_encoder.19} parent=0
    #allocation4 [shape = 'u8[65536]{0}', space=vmem, size = 0x10000, scoped, tag = 'input window, operand 0, single buffered']
    #allocation5 [shape = 's32[1]{0}', space=sflag, size = 0x4, scoped, tag = 'scoped memory for mhca_encoder.19']
    #allocation6 [shape = 's32[1]{0}', space=sflag, size = 0x4, scoped, tag = 'scoped memory for mhca_encoder.19']
    #allocation7 [shape = 'u8[16384]{0}', space=vmem, size = 0x4000, scoped, tag = 'input window, operand 1, single buffered']
    #allocation8 [shape = 's32[1]{0}', space=sflag, size = 0x4, scoped, tag = 'scoped memory for mhca_encoder.19']
    #allocation9 [shape = 'u8[512]{0}', space=vmem, size = 0x400, scoped, tag = 'input window, operand 2, single buffered']
    #allocation10 [shape = 'u8[512]{0}', space=vmem, size = 0x400, scoped, tag = 'input window, operand 3, single buffered']
    #allocation11 [shape = 's32[1]{0}', space=sflag, size = 0x4, scoped, tag = 'scoped memory for mhca_encoder.19']
    #allocation12 [shape = 'u8[512]{0}', space=vmem, size = 0x400, scoped, tag = 'input window, operand 4, single buffered']
    #allocation13 [shape = 'u8[65536]{0}', space=vmem, size = 0x10000, scoped, tag = 'output window, operand 0, single buffered']
    %10 = vsyncpa [#allocation5], 0
    %11 = vsyncpa [#allocation8], 0
    %12 = vsyncpa [#allocation11], 0
    %13 = vsyncpa [#allocation6], 0
    // Predicated region
    $region2: #{mhca_encoder.19} parent=1 // pred_check
      _
    $region3: #{mhca_encoder.19} parent=1 // pred_check_branch
      %15 = sbr.rel (0) target = $region5
    $region4: #{mhca_encoder.19} parent=1 // pred_region
      %s17 = ssub.s32 2048, 2048
      %18 = vsyncadd [#allocation5], %s17
      %s19 = sshll.u32 [#allocation4], 4
      %s20 = int_to_ptr.vmem [resolvable:$true] %s19
      %25 = dma.hbm_to_vmem [thread:$0]  %s0, 2048, %s20, [#allocation5], 128, 128, 8
    $region5: #{mhca_encoder.19} parent=1 // pred_fallthru
      _
    // Predicated region
    $region6: #{mhca_encoder.19} parent=1 // pred_check
      _
    $region7: #{mhca_encoder.19} parent=1 // pred_check_branch
      %27 = sbr.rel (0) target = $region9
    $region8: #{mhca_encoder.19} parent=1 // pred_region
      %s29 = ssub.s32 512, 512
      %30 = vsyncadd [#allocation8], %s29
      %s31 = sshll.u32 [#allocation7], 4
      %s32 = int_to_ptr.vmem [resolvable:$true] %s31
      %37 = dma.hbm_to_vmem [thread:$0]  %s1, 512, %s32, [#allocation8], 128, 128, 8
    $region9: #{mhca_encoder.19} parent=1 // pred_fallthru
      _
    // Predicated region
    $region10: #{mhca_encoder.19} parent=1 // pred_check
      _
    $region11: #{mhca_encoder.19} parent=1 // pred_check_branch
      %39 = sbr.rel (0) target = $region13
    $region12: #{mhca_encoder.19} parent=1 // pred_region
      %s41 = ssub.s32 16, 16
      %42 = vsyncadd [#allocation8], %s41
      %s44 = sshll.u32 [#allocation9], 4
      %s45 = int_to_ptr.vmem [resolvable:$true] %s44
      %47 = dma.hbm_to_vmem [thread:$0]  %s2, 16, %s45, [#allocation8]
    $region13: #{mhca_encoder.19} parent=1 // pred_fallthru
      _
    // Predicated region
    $region14: #{mhca_encoder.19} parent=1 // pred_check
      _
    $region15: #{mhca_encoder.19} parent=1 // pred_check_branch
      %49 = sbr.rel (0) target = $region17
    $region16: #{mhca_encoder.19} parent=1 // pred_region
      %s51 = ssub.s32 16, 16
      %52 = vsyncadd [#allocation11], %s51
      %s54 = sshll.u32 [#allocation10], 4
      %s55 = int_to_ptr.vmem [resolvable:$true] %s54
      %57 = dma.hbm_to_vmem [thread:$0]  %s3, 16, %s55, [#allocation11]
    $region17: #{mhca_encoder.19} parent=1 // pred_fallthru
      _
    // Predicated region
    $region18: #{mhca_encoder.19} parent=1 // pred_check
      _
    $region19: #{mhca_encoder.19} parent=1 // pred_check_branch
      %59 = sbr.rel (0) target = $region21
    $region20: #{mhca_encoder.19} parent=1 // pred_region
      %s61 = ssub.s32 16, 16
      %62 = vsyncadd [#allocation11], %s61
      %s64 = sshll.u32 [#allocation12], 4
      %s65 = int_to_ptr.vmem [resolvable:$true] %s64
      %67 = dma.hbm_to_vmem [thread:$0]  %s4, 16, %s65, [#allocation11]
    $region21: #{mhca_encoder.19} parent=1 // pred_fallthru
      _
    // Predicated region
    $region22: #{mhca_encoder.19} parent=1 // pred_check
      _
    $region23: #{mhca_encoder.19} parent=1 // pred_check_branch
      %69 = sbr.rel (0) target = $region25
    $region24: #{mhca_encoder.19} parent=1 // pred_region
      %70 = dma.done [#allocation5], 2048
    $region25: #{mhca_encoder.19} parent=1 // pred_fallthru
      _
    // Predicated region
    $region26: #{mhca_encoder.19} parent=1 // pred_check
      _
    $region27: #{mhca_encoder.19} parent=1 // pred_check_branch
      %72 = sbr.rel (0) target = $region29
    $region28: #{mhca_encoder.19} parent=1 // pred_region
      %73 = dma.done [#allocation8], 512
    $region29: #{mhca_encoder.19} parent=1 // pred_fallthru
      _
    // Predicated region
    $region30: #{mhca_encoder.19} parent=1 // pred_check
      _
    $region31: #{mhca_encoder.19} parent=1 // pred_check_branch
      %75 = sbr.rel (0) target = $region33
    $region32: #{mhca_encoder.19} parent=1 // pred_region
      %76 = dma.done [#allocation8], 16
    $region33: #{mhca_encoder.19} parent=1 // pred_fallthru
      _
    // Predicated region
    $region34: #{mhca_encoder.19} parent=1 // pred_check
      _
    $region35: #{mhca_encoder.19} parent=1 // pred_check_branch
      %78 = sbr.rel (0) target = $region37
    $region36: #{mhca_encoder.19} parent=1 // pred_region
      %79 = dma.done [#allocation11], 16
    $region37: #{mhca_encoder.19} parent=1 // pred_fallthru
      _
    // Predicated region
    $region38: #{mhca_encoder.19} parent=1 // pred_check
      _
    $region39: #{mhca_encoder.19} parent=1 // pred_check_branch
      %81 = sbr.rel (0) target = $region41
    $region40: #{mhca_encoder.19} parent=1 // pred_region
      %82 = dma.done [#allocation11], 16
    $region41: #{mhca_encoder.19} parent=1 // pred_fallthru
      _
    %p84 = scmp.eq.s32.totalorder 0, 0
    // Predicated region
    $region42: #{mhca_encoder.19} parent=1 // pred_check
      %p85 = pneg %p84
    $region43: #{mhca_encoder.19} parent=1 // pred_check_branch
      %87 = sbr.rel (%p85) target = $region45
    $region44: #{mhca_encoder.19} parent=1 // pred_region
      %vm88 = vcmask 785408
      %89 = vst.msk [vmem:[#allocation2] sm:$0xff] %vm88, 0.0
      %90 = vst.msk [vmem:[#allocation2 + $0x8] sm:$0xff] %vm88, 0.0
      %91 = vst.msk [vmem:[#allocation2 + $0x10] sm:$0xff] %vm88, 0.0
      %92 = vst.msk [vmem:[#allocation2 + $0x18] sm:$0xff] %vm88, 0.0
      %93 = vst.msk [vmem:[#allocation2 + $0x20] sm:$0xff] %vm88, 0.0
      %94 = vst.msk [vmem:[#allocation2 + $0x28] sm:$0xff] %vm88, 0.0
      %95 = vst.msk [vmem:[#allocation2 + $0x30] sm:$0xff] %vm88, 0.0
      %96 = vst.msk [vmem:[#allocation2 + $0x38] sm:$0xff] %vm88, 0.0
      %97 = vst.msk [vmem:[#allocation2 + $0x40] sm:$0xff] %vm88, 0.0
      %98 = vst.msk [vmem:[#allocation2 + $0x48] sm:$0xff] %vm88, 0.0
      %99 = vst.msk [vmem:[#allocation2 + $0x50] sm:$0xff] %vm88, 0.0
      %100 = vst.msk [vmem:[#allocation2 + $0x58] sm:$0xff] %vm88, 0.0
      %101 = vst.msk [vmem:[#allocation2 + $0x60] sm:$0xff] %vm88, 0.0
      %102 = vst.msk [vmem:[#allocation2 + $0x68] sm:$0xff] %vm88, 0.0
      %103 = vst.msk [vmem:[#allocation2 + $0x70] sm:$0xff] %vm88, 0.0
      %104 = vst.msk [vmem:[#allocation2 + $0x78] sm:$0xff] %vm88, 0.0
    $region45: #{mhca_encoder.19} parent=1 // pred_fallthru
      _
    %p105 = scmp.eq.s32.totalorder 0, 0
    // Predicated region
    $region46: #{mhca_encoder.19} parent=1 // pred_check
      %p106 = pneg %p105
    $region47: #{mhca_encoder.19} parent=1 // pred_check_branch
      %108 = sbr.rel (%p106) target = $region49
    $region48: #{mhca_encoder.19} parent=1 // pred_region
      %v109 = vld [vmem:[#allocation4] sm:$0xff]
      %v110 = vld [vmem:[#allocation4 + $0x8] sm:$0xff]
      %v111 = vld [vmem:[#allocation4 + $0x10] sm:$0xff]
      %v112 = vld [vmem:[#allocation4 + $0x18] sm:$0xff]
      %v113 = vld [vmem:[#allocation4 + $0x20] sm:$0xff]
      %v114 = vld [vmem:[#allocation4 + $0x28] sm:$0xff]
      %v115 = vld [vmem:[#allocation4 + $0x30] sm:$0xff]
      %v116 = vld [vmem:[#allocation4 + $0x38] sm:$0xff]
      %v117 = vld [vmem:[#allocation4 + $0x40] sm:$0xff]
      %v118 = vld [vmem:[#allocation4 + $0x48] sm:$0xff]
      %v119 = vld [vmem:[#allocation4 + $0x50] sm:$0xff]
      %v120 = vld [vmem:[#allocation4 + $0x58] sm:$0xff]
      %v121 = vld [vmem:[#allocation4 + $0x60] sm:$0xff]
      %v122 = vld [vmem:[#allocation4 + $0x68] sm:$0xff]
      %v123 = vld [vmem:[#allocation4 + $0x70] sm:$0xff]
      %v124 = vld [vmem:[#allocation4 + $0x78] sm:$0xff]
      %vm125 = vcmask 261120
      %v126 = vsel %vm125, %v109, 0.0
      %127 = vadd.xlane.f32.xlu0 %v126
      %v128 = vpop.xlane.xlu0 %127
      %v129 = vsel %vm125, %v110, 0.0
      %130 = vadd.xlane.f32.xlu0 %v129
      %v131 = vpop.xlane.xlu0 %130
      %v132 = vsel %vm125, %v111, 0.0
      %133 = vadd.xlane.f32.xlu0 %v132
      %v134 = vpop.xlane.xlu0 %133
      %v135 = vsel %vm125, %v112, 0.0
      %136 = vadd.xlane.f32.xlu0 %v135
      %v137 = vpop.xlane.xlu0 %136
      %v138 = vsel %vm125, %v113, 0.0
      %139 = vadd.xlane.f32.xlu0 %v138
      %v140 = vpop.xlane.xlu0 %139
      %v141 = vsel %vm125, %v114, 0.0
      %142 = vadd.xlane.f32.xlu0 %v141
      %v143 = vpop.xlane.xlu0 %142
      %v144 = vsel %vm125, %v115, 0.0
      %145 = vadd.xlane.f32.xlu0 %v144
      %v146 = vpop.xlane.xlu0 %145
      %v147 = vsel %vm125, %v116, 0.0
      %148 = vadd.xlane.f32.xlu0 %v147
      %v149 = vpop.xlane.xlu0 %148
      %v150 = vsel %vm125, %v117, 0.0
      %151 = vadd.xlane.f32.xlu0 %v150
      %v152 = vpop.xlane.xlu0 %151
      %v153 = vsel %vm125, %v118, 0.0
      %154 = vadd.xlane.f32.xlu0 %v153
      %v155 = vpop.xlane.xlu0 %154
      %v156 = vsel %vm125, %v119, 0.0
      %157 = vadd.xlane.f32.xlu0 %v156
      %v158 = vpop.xlane.xlu0 %157
      %v159 = vsel %vm125, %v120, 0.0
      %160 = vadd.xlane.f32.xlu0 %v159
      %v161 = vpop.xlane.xlu0 %160
      %v162 = vsel %vm125, %v121, 0.0
      %163 = vadd.xlane.f32.xlu0 %v162
      %v164 = vpop.xlane.xlu0 %163
      %v165 = vsel %vm125, %v122, 0.0
      %166 = vadd.xlane.f32.xlu0 %v165
      %v167 = vpop.xlane.xlu0 %166
      %v168 = vsel %vm125, %v123, 0.0
      %169 = vadd.xlane.f32.xlu0 %v168
      %v170 = vpop.xlane.xlu0 %169
      %v171 = vsel %vm125, %v124, 0.0
      %172 = vadd.xlane.f32.xlu0 %v171
      %v173 = vpop.xlane.xlu0 %172
      %v174 = vrcp.pop 32.0
      %v175 = vmul.f32 %v128, %v174
      %v176 = vmul.f32 %v131, %v174
      %v177 = vmul.f32 %v134, %v174
      %v178 = vmul.f32 %v137, %v174
      %v179 = vmul.f32 %v140, %v174
      %v180 = vmul.f32 %v143, %v174
      %v181 = vmul.f32 %v146, %v174
      %v182 = vmul.f32 %v149, %v174
      %v183 = vmul.f32 %v152, %v174
      %v184 = vmul.f32 %v155, %v174
      %v185 = vmul.f32 %v158, %v174
      %v186 = vmul.f32 %v161, %v174
      %v187 = vmul.f32 %v164, %v174
      %v188 = vmul.f32 %v167, %v174
      %v189 = vmul.f32 %v170, %v174
      %v190 = vmul.f32 %v173, %v174
      %v191 = vsub.f32 %v109, %v175
      %v192 = vsub.f32 %v110, %v176
      %v193 = vsub.f32 %v111, %v177
      %v194 = vsub.f32 %v112, %v178
      %v195 = vsub.f32 %v113, %v179
      %v196 = vsub.f32 %v114, %v180
      %v197 = vsub.f32 %v115, %v181
      %v198 = vsub.f32 %v116, %v182
      %v199 = vsub.f32 %v117, %v183
      %v200 = vsub.f32 %v118, %v184
      %v201 = vsub.f32 %v119, %v185
      %v202 = vsub.f32 %v120, %v186
      %v203 = vsub.f32 %v121, %v187
      %v204 = vsub.f32 %v122, %v188
      %v205 = vsub.f32 %v123, %v189
      %v206 = vsub.f32 %v124, %v190
      %v207 = vmul.f32 %v191, %v191
      %v208 = vmul.f32 %v192, %v192
      %v209 = vmul.f32 %v193, %v193
      %v210 = vmul.f32 %v194, %v194
      %v211 = vmul.f32 %v195, %v195
      %v212 = vmul.f32 %v196, %v196
      %v213 = vmul.f32 %v197, %v197
      %v214 = vmul.f32 %v198, %v198
      %v215 = vmul.f32 %v199, %v199
      %v216 = vmul.f32 %v200, %v200
      %v217 = vmul.f32 %v201, %v201
      %v218 = vmul.f32 %v202, %v202
      %v219 = vmul.f32 %v203, %v203
      %v220 = vmul.f32 %v204, %v204
      %v221 = vmul.f32 %v205, %v205
      %v222 = vmul.f32 %v206, %v206
      %v223 = vsel %vm125, %v207, 0.0
      %224 = vadd.xlane.f32.xlu0 %v223
      %v225 = vpop.xlane.xlu0 %224
      %v226 = vsel %vm125, %v208, 0.0
      %227 = vadd.xlane.f32.xlu0 %v226
      %v228 = vpop.xlane.xlu0 %227
      %v229 = vsel %vm125, %v209, 0.0
      %230 = vadd.xlane.f32.xlu0 %v229
      %v231 = vpop.xlane.xlu0 %230
      %v232 = vsel %vm125, %v210, 0.0
      %233 = vadd.xlane.f32.xlu0 %v232
      %v234 = vpop.xlane.xlu0 %233
      %v235 = vsel %vm125, %v211, 0.0
      %236 = vadd.xlane.f32.xlu0 %v235
      %v237 = vpop.xlane.xlu0 %236
      %v238 = vsel %vm125, %v212, 0.0
      %239 = vadd.xlane.f32.xlu0 %v238
      %v240 = vpop.xlane.xlu0 %239
      %v241 = vsel %vm125, %v213, 0.0
      %242 = vadd.xlane.f32.xlu0 %v241
      %v243 = vpop.xlane.xlu0 %242
      %v244 = vsel %vm125, %v214, 0.0
      %245 = vadd.xlane.f32.xlu0 %v244
      %v246 = vpop.xlane.xlu0 %245
      %v247 = vsel %vm125, %v215, 0.0
      %248 = vadd.xlane.f32.xlu0 %v247
      %v249 = vpop.xlane.xlu0 %248
      %v250 = vsel %vm125, %v216, 0.0
      %251 = vadd.xlane.f32.xlu0 %v250
      %v252 = vpop.xlane.xlu0 %251
      %v253 = vsel %vm125, %v217, 0.0
      %254 = vadd.xlane.f32.xlu0 %v253
      %v255 = vpop.xlane.xlu0 %254
      %v256 = vsel %vm125, %v218, 0.0
      %257 = vadd.xlane.f32.xlu0 %v256
      %v258 = vpop.xlane.xlu0 %257
      %v259 = vsel %vm125, %v219, 0.0
      %260 = vadd.xlane.f32.xlu0 %v259
      %v261 = vpop.xlane.xlu0 %260
      %v262 = vsel %vm125, %v220, 0.0
      %263 = vadd.xlane.f32.xlu0 %v262
      %v264 = vpop.xlane.xlu0 %263
      %v265 = vsel %vm125, %v221, 0.0
      %266 = vadd.xlane.f32.xlu0 %v265
      %v267 = vpop.xlane.xlu0 %266
      %v268 = vsel %vm125, %v222, 0.0
      %269 = vadd.xlane.f32.xlu0 %v268
      %v270 = vpop.xlane.xlu0 %269
      %v271 = vmul.f32 %v225, %v174
      %v272 = vmul.f32 %v228, %v174
      %v273 = vmul.f32 %v231, %v174
      %v274 = vmul.f32 %v234, %v174
      %v275 = vmul.f32 %v237, %v174
      %v276 = vmul.f32 %v240, %v174
      %v277 = vmul.f32 %v243, %v174
      %v278 = vmul.f32 %v246, %v174
      %v279 = vmul.f32 %v249, %v174
      %v280 = vmul.f32 %v252, %v174
      %v281 = vmul.f32 %v255, %v174
      %v282 = vmul.f32 %v258, %v174
      %v283 = vmul.f32 %v261, %v174
      %v284 = vmul.f32 %v264, %v174
      %v285 = vmul.f32 %v267, %v174
      %v286 = vmul.f32 %v270, %v174
      %v287 = vadd.f32 %v271, 1e-06
      %v288 = vadd.f32 %v272, 1e-06
      %v289 = vadd.f32 %v273, 1e-06
      %v290 = vadd.f32 %v274, 1e-06
      %v291 = vadd.f32 %v275, 1e-06
      %v292 = vadd.f32 %v276, 1e-06
      %v293 = vadd.f32 %v277, 1e-06
      %v294 = vadd.f32 %v278, 1e-06
      %v295 = vadd.f32 %v279, 1e-06
      %v296 = vadd.f32 %v280, 1e-06
      %v297 = vadd.f32 %v281, 1e-06
      %v298 = vadd.f32 %v282, 1e-06
      %v299 = vadd.f32 %v283, 1e-06
      %v300 = vadd.f32 %v284, 1e-06
      %v301 = vadd.f32 %v285, 1e-06
      %v302 = vadd.f32 %v286, 1e-06
      %v303 = vrsqrt.pop %v287
      %v304 = vrsqrt.pop %v288
      %v305 = vrsqrt.pop %v289
      %v306 = vrsqrt.pop %v290
      %v307 = vrsqrt.pop %v291
      %v308 = vrsqrt.pop %v292
      %v309 = vrsqrt.pop %v293
      %v310 = vrsqrt.pop %v294
      %v311 = vrsqrt.pop %v295
      %v312 = vrsqrt.pop %v296
      %v313 = vrsqrt.pop %v297
      %v314 = vrsqrt.pop %v298
      %v315 = vrsqrt.pop %v299
      %v316 = vrsqrt.pop %v300
      %v317 = vrsqrt.pop %v301
      %v318 = vrsqrt.pop %v302
      %v319 = vmul.f32 %v191, %v303
      %v320 = vmul.f32 %v192, %v304
      %v321 = vmul.f32 %v193, %v305
      %v322 = vmul.f32 %v194, %v306
      %v323 = vmul.f32 %v195, %v307
      %v324 = vmul.f32 %v196, %v308
      %v325 = vmul.f32 %v197, %v309
      %v326 = vmul.f32 %v198, %v310
      %v327 = vmul.f32 %v199, %v311
      %v328 = vmul.f32 %v200, %v312
      %v329 = vmul.f32 %v201, %v313
      %v330 = vmul.f32 %v202, %v314
      %v331 = vmul.f32 %v203, %v315
      %v332 = vmul.f32 %v204, %v316
      %v333 = vmul.f32 %v205, %v317
      %v334 = vmul.f32 %v206, %v318
      %v335 = vld [vmem:[#allocation10] sm:$0x1]
      %v337 = vlaneseq
      %v338 = vshrl.u32 %v337, 7
      %v339 = vsub.s32 0, %v338
      %v340 = vrot.slane %v335, %v339
      %v342 = vmul.f32 %v319, %v340
      %v343 = vmul.f32 %v320, %v340
      %v344 = vmul.f32 %v321, %v340
      %v345 = vmul.f32 %v322, %v340
      %v346 = vmul.f32 %v323, %v340
      %v347 = vmul.f32 %v324, %v340
      %v348 = vmul.f32 %v325, %v340
      %v349 = vmul.f32 %v326, %v340
      %v350 = vmul.f32 %v327, %v340
      %v351 = vmul.f32 %v328, %v340
      %v352 = vmul.f32 %v329, %v340
      %v353 = vmul.f32 %v330, %v340
      %v354 = vmul.f32 %v331, %v340
      %v355 = vmul.f32 %v332, %v340
      %v356 = vmul.f32 %v333, %v340
      %v357 = vmul.f32 %v334, %v340
      %v358 = vld [vmem:[#allocation12] sm:$0x1]
      %v360 = vlaneseq
      %v361 = vshrl.u32 %v360, 7
      %v362 = vsub.s32 0, %v361
      %v363 = vrot.slane %v358, %v362
      %v365 = vadd.f32 %v342, %v363
      %v366 = vadd.f32 %v343, %v363
      %v367 = vadd.f32 %v344, %v363
      %v368 = vadd.f32 %v345, %v363
      %v369 = vadd.f32 %v346, %v363
      %v370 = vadd.f32 %v347, %v363
      %v371 = vadd.f32 %v348, %v363
      %v372 = vadd.f32 %v349, %v363
      %v373 = vadd.f32 %v350, %v363
      %v374 = vadd.f32 %v351, %v363
      %v375 = vadd.f32 %v352, %v363
      %v376 = vadd.f32 %v353, %v363
      %v377 = vadd.f32 %v354, %v363
      %v378 = vadd.f32 %v355, %v363
      %v379 = vadd.f32 %v356, %v363
      %v380 = vadd.f32 %v357, %v363
      %v381 = vpack.c.bf16 %v366, %v365
      %v382 = vpack.c.bf16 %v368, %v367
      %v383 = vpack.c.bf16 %v370, %v369
      %v384 = vpack.c.bf16 %v372, %v371
      %v385 = vpack.c.bf16 %v374, %v373
      %v386 = vpack.c.bf16 %v376, %v375
      %v387 = vpack.c.bf16 %v378, %v377
      %v388 = vpack.c.bf16 %v380, %v379
      %389 = vst.msk [vmem:[#allocation3] sm:$0xff] %vm125, %v381
      %390 = vst.msk [vmem:[#allocation3 + $0x8] sm:$0xff] %vm125, %v382
      %391 = vst.msk [vmem:[#allocation3 + $0x10] sm:$0xff] %vm125, %v383
      %392 = vst.msk [vmem:[#allocation3 + $0x18] sm:$0xff] %vm125, %v384
      %393 = vst.msk [vmem:[#allocation3 + $0x20] sm:$0xff] %vm125, %v385
      %394 = vst.msk [vmem:[#allocation3 + $0x28] sm:$0xff] %vm125, %v386
      %395 = vst.msk [vmem:[#allocation3 + $0x30] sm:$0xff] %vm125, %v387
      %396 = vst.msk [vmem:[#allocation3 + $0x38] sm:$0xff] %vm125, %v388
    $region49: #{mhca_encoder.19} parent=1 // pred_fallthru
      _
    %v397 = vld [vmem:[#allocation3] sm:$0xff]
    %v398 = vld [vmem:[#allocation3 + $0x8] sm:$0xff]
    %v399 = vld [vmem:[#allocation3 + $0x10] sm:$0xff]
    %v400 = vld [vmem:[#allocation3 + $0x18] sm:$0xff]
    %v401 = vld [vmem:[#allocation3 + $0x20] sm:$0xff]
    %v402 = vld [vmem:[#allocation3 + $0x28] sm:$0xff]
    %v403 = vld [vmem:[#allocation3 + $0x30] sm:$0xff]
    %v404 = vld [vmem:[#allocation3 + $0x38] sm:$0xff]
    %v405 = vld [vmem:[#allocation2] sm:$0xff]
    %v406 = vld [vmem:[#allocation2 + $0x8] sm:$0xff]
    %v407 = vld [vmem:[#allocation2 + $0x10] sm:$0xff]
    %v408 = vld [vmem:[#allocation2 + $0x18] sm:$0xff]
    %v409 = vld [vmem:[#allocation2 + $0x20] sm:$0xff]
    %v410 = vld [vmem:[#allocation2 + $0x28] sm:$0xff]
    %v411 = vld [vmem:[#allocation2 + $0x30] sm:$0xff]
    %v412 = vld [vmem:[#allocation2 + $0x38] sm:$0xff]
    %v413 = vld [vmem:[#allocation2 + $0x40] sm:$0xff]
    %v414 = vld [vmem:[#allocation2 + $0x48] sm:$0xff]
    %v415 = vld [vmem:[#allocation2 + $0x50] sm:$0xff]
    %v416 = vld [vmem:[#allocation2 + $0x58] sm:$0xff]
    %v417 = vld [vmem:[#allocation2 + $0x60] sm:$0xff]
    %v418 = vld [vmem:[#allocation2 + $0x68] sm:$0xff]
    %v419 = vld [vmem:[#allocation2 + $0x70] sm:$0xff]
    %v420 = vld [vmem:[#allocation2 + $0x78] sm:$0xff]
    %v421 = vld [vmem:[#allocation7] sm:$0xff]
    %v422 = vld [vmem:[#allocation7 + $0x8] sm:$0xff]
    %v423 = vld [vmem:[#allocation7 + $0x10] sm:$0xff]
    %v424 = vld [vmem:[#allocation7 + $0x18] sm:$0xff]
    %v425 = vpack.c.bf16 %v422, %v421
    %v426 = vpack.c.bf16 %v424, %v423
    %vm427 = vcmask 261120
    %v429 = vsel %vm427, %v397, 0
    %v432 = vsel %vm427, %v398, 0
    %v435 = vsel %vm427, %v399, 0
    %v438 = vsel %vm427, %v400, 0
    %v441 = vsel %vm427, %v401, 0
    %v444 = vsel %vm427, %v402, 0
    %v447 = vsel %vm427, %v403, 0
    %v450 = vsel %vm427, %v404, 0
    %452 = vmatprep.subr.bf16.mxu0 0
    %453 = vmatpush1.bf16.msra.mxu0 %v425
    %454 = vmatprep.subr.bf16.mxu0 0
    %455 = vmatpush1.bf16.msra.mxu0 %v426
    %456 = vmatprep.subr.bf16.mxu0 0
    %457 = vmatpush1.bf16.msra.mxu0 0
    %458 = vmatprep.subr.bf16.mxu0 0
    %459 = vmatpush1.bf16.msra.mxu0 0
    %460 = vmatprep.subr.bf16.mxu0 0
    %461 = vmatpush1.bf16.msra.mxu0 0
    %462 = vmatprep.subr.bf16.mxu0 0
    %463 = vmatpush1.bf16.msra.mxu0 0
    %464 = vmatprep.subr.bf16.mxu0 0
    %465 = vmatpush1.bf16.msra.mxu0 0
    %466 = vmatprep.subr.bf16.mxu0 0
    %467 = vmatpush1.bf16.msra.mxu0 0
    %468 = vmatprep.subr.bf16.mxu0 0
    %469 = vmatpush1.bf16.msra.mxu0 0
    %470 = vmatprep.subr.bf16.mxu0 0
    %471 = vmatpush1.bf16.msra.mxu0 0
    %472 = vmatprep.subr.bf16.mxu0 0
    %473 = vmatpush1.bf16.msra.mxu0 0
    %474 = vmatprep.subr.bf16.mxu0 0
    %475 = vmatpush1.bf16.msra.mxu0 0
    %476 = vmatprep.subr.bf16.mxu0 0
    %477 = vmatpush1.bf16.msra.mxu0 0
    %478 = vmatprep.subr.bf16.mxu0 0
    %479 = vmatpush1.bf16.msra.mxu0 0
    %480 = vmatprep.subr.bf16.mxu0 0
    %481 = vmatpush1.bf16.msra.mxu0 0
    %482 = vmatprep.subr.bf16.mxu0 0
    %483 = vmatpush1.bf16.msra.mxu0 0
    %484 = vmatprep.mubr.bf16.mxu0 0
    %485 = vmatmul.mubr.bf16.gmra.mrb[0].mxu0 %v429
    %v486 = vpop.f32.mrb[0].mxu0
    %v487 = vadd.f32 0.0, %v486
    %v488 = vpop.f32.mrb[0].mxu0
    %v489 = vpop.f32.mrb[0].mxu0
    %v490 = vadd.f32 0.0, %v489
    %v491 = vpop.f32.mrb[0].mxu0
    %492 = vmatprep.mubr.bf16.mxu0 0
    %493 = vmatmul.mubr.bf16.gmra.mrb[0].mxu0 %v432
    %v494 = vpop.f32.mrb[0].mxu0
    %v495 = vadd.f32 0.0, %v494
    %v496 = vpop.f32.mrb[0].mxu0
    %v497 = vpop.f32.mrb[0].mxu0
    %v498 = vadd.f32 0.0, %v497
    %v499 = vpop.f32.mrb[0].mxu0
    %500 = vmatprep.mubr.bf16.mxu0 0
    %501 = vmatmul.mubr.bf16.gmra.mrb[0].mxu0 %v435
    %v502 = vpop.f32.mrb[0].mxu0
    %v503 = vadd.f32 0.0, %v502
    %v504 = vpop.f32.mrb[0].mxu0
    %v505 = vpop.f32.mrb[0].mxu0
    %v506 = vadd.f32 0.0, %v505
    %v507 = vpop.f32.mrb[0].mxu0
    %508 = vmatprep.mubr.bf16.mxu0 0
    %509 = vmatmul.mubr.bf16.gmra.mrb[0].mxu0 %v438
    %v510 = vpop.f32.mrb[0].mxu0
    %v511 = vadd.f32 0.0, %v510
    %v512 = vpop.f32.mrb[0].mxu0
    %v513 = vpop.f32.mrb[0].mxu0
    %v514 = vadd.f32 0.0, %v513
    %v515 = vpop.f32.mrb[0].mxu0
    %516 = vmatprep.mubr.bf16.mxu0 0
    %517 = vmatmul.mubr.bf16.gmra.mrb[0].mxu0 %v441
    %v518 = vpop.f32.mrb[0].mxu0
    %v519 = vadd.f32 0.0, %v518
    %v520 = vpop.f32.mrb[0].mxu0
    %v521 = vpop.f32.mrb[0].mxu0
    %v522 = vadd.f32 0.0, %v521
    %v523 = vpop.f32.mrb[0].mxu0
    %524 = vmatprep.mubr.bf16.mxu0 0
    %525 = vmatmul.mubr.bf16.gmra.mrb[0].mxu0 %v444
    %v526 = vpop.f32.mrb[0].mxu0
    %v527 = vadd.f32 0.0, %v526
    %v528 = vpop.f32.mrb[0].mxu0
    %v529 = vpop.f32.mrb[0].mxu0
    %v530 = vadd.f32 0.0, %v529
    %v531 = vpop.f32.mrb[0].mxu0
    %532 = vmatprep.mubr.bf16.mxu0 0
    %533 = vmatmul.mubr.bf16.gmra.mrb[0].mxu0 %v447
    %v534 = vpop.f32.mrb[0].mxu0
    %v535 = vadd.f32 0.0, %v534
    %v536 = vpop.f32.mrb[0].mxu0
    %v537 = vpop.f32.mrb[0].mxu0
    %v538 = vadd.f32 0.0, %v537
    %v539 = vpop.f32.mrb[0].mxu0
    %540 = vmatprep.mubr.bf16.mxu0 0
    %541 = vmatmul.mubr.bf16.gmra.mrb[0].mxu0 %v450
    %v542 = vpop.f32.mrb[0].mxu0
    %v543 = vadd.f32 0.0, %v542
    %v544 = vpop.f32.mrb[0].mxu0
    %v545 = vpop.f32.mrb[0].mxu0
    %v546 = vadd.f32 0.0, %v545
    %v547 = vpop.f32.mrb[0].mxu0
    %548 = vdwg.mxu0
    %v549 = vadd.f32 %v405, %v487
    %v550 = vadd.f32 %v406, %v490
    %v551 = vadd.f32 %v407, %v495
    %v552 = vadd.f32 %v408, %v498
    %v553 = vadd.f32 %v409, %v503
    %v554 = vadd.f32 %v410, %v506
    %v555 = vadd.f32 %v411, %v511
    %v556 = vadd.f32 %v412, %v514
    %v557 = vadd.f32 %v413, %v519
    %v558 = vadd.f32 %v414, %v522
    %v559 = vadd.f32 %v415, %v527
    %v560 = vadd.f32 %v416, %v530
    %v561 = vadd.f32 %v417, %v535
    %v562 = vadd.f32 %v418, %v538
    %v563 = vadd.f32 %v419, %v543
    %v564 = vadd.f32 %v420, %v546
    %vm565 = vcmask 785408
    %566 = vst.msk [vmem:[#allocation2] sm:$0xff] %vm565, %v549
    %567 = vst.msk [vmem:[#allocation2 + $0x8] sm:$0xff] %vm565, %v550
    %568 = vst.msk [vmem:[#allocation2 + $0x10] sm:$0xff] %vm565, %v551
    %569 = vst.msk [vmem:[#allocation2 + $0x18] sm:$0xff] %vm565, %v552
    %570 = vst.msk [vmem:[#allocation2 + $0x20] sm:$0xff] %vm565, %v553
    %571 = vst.msk [vmem:[#allocation2 + $0x28] sm:$0xff] %vm565, %v554
    %572 = vst.msk [vmem:[#allocation2 + $0x30] sm:$0xff] %vm565, %v555
    %573 = vst.msk [vmem:[#allocation2 + $0x38] sm:$0xff] %vm565, %v556
    %574 = vst.msk [vmem:[#allocation2 + $0x40] sm:$0xff] %vm565, %v557
    %575 = vst.msk [vmem:[#allocation2 + $0x48] sm:$0xff] %vm565, %v558
    %576 = vst.msk [vmem:[#allocation2 + $0x50] sm:$0xff] %vm565, %v559
    %577 = vst.msk [vmem:[#allocation2 + $0x58] sm:$0xff] %vm565, %v560
    %578 = vst.msk [vmem:[#allocation2 + $0x60] sm:$0xff] %vm565, %v561
    %579 = vst.msk [vmem:[#allocation2 + $0x68] sm:$0xff] %vm565, %v562
    %580 = vst.msk [vmem:[#allocation2 + $0x70] sm:$0xff] %vm565, %v563
    %581 = vst.msk [vmem:[#allocation2 + $0x78] sm:$0xff] %vm565, %v564
    // Predicated region
    $region50: #{mhca_encoder.19} parent=1 // pred_check
      %p582 = pneg %p84
    $region51: #{mhca_encoder.19} parent=1 // pred_check_branch
      %584 = sbr.rel (%p582) target = $region53
    $region52: #{mhca_encoder.19} parent=1 // pred_region
      %v585 = vld [vmem:[#allocation2] sm:$0xff]
      %v586 = vld [vmem:[#allocation2 + $0x8] sm:$0xff]
      %v587 = vld [vmem:[#allocation2 + $0x10] sm:$0xff]
      %v588 = vld [vmem:[#allocation2 + $0x18] sm:$0xff]
      %v589 = vld [vmem:[#allocation2 + $0x20] sm:$0xff]
      %v590 = vld [vmem:[#allocation2 + $0x28] sm:$0xff]
      %v591 = vld [vmem:[#allocation2 + $0x30] sm:$0xff]
      %v592 = vld [vmem:[#allocation2 + $0x38] sm:$0xff]
      %v593 = vld [vmem:[#allocation2 + $0x40] sm:$0xff]
      %v594 = vld [vmem:[#allocation2 + $0x48] sm:$0xff]
      %v595 = vld [vmem:[#allocation2 + $0x50] sm:$0xff]
      %v596 = vld [vmem:[#allocation2 + $0x58] sm:$0xff]
      %v597 = vld [vmem:[#allocation2 + $0x60] sm:$0xff]
      %v598 = vld [vmem:[#allocation2 + $0x68] sm:$0xff]
      %v599 = vld [vmem:[#allocation2 + $0x70] sm:$0xff]
      %v600 = vld [vmem:[#allocation2 + $0x78] sm:$0xff]
      %v601 = vld [vmem:[#allocation9] sm:$0x1]
      %v603 = vlaneseq
      %v604 = vshrl.u32 %v603, 7
      %v605 = vsub.s32 0, %v604
      %v606 = vrot.slane %v601, %v605
      %v608 = vadd.f32 %v585, %v606
      %v609 = vadd.f32 %v586, %v606
      %v610 = vadd.f32 %v587, %v606
      %v611 = vadd.f32 %v588, %v606
      %v612 = vadd.f32 %v589, %v606
      %v613 = vadd.f32 %v590, %v606
      %v614 = vadd.f32 %v591, %v606
      %v615 = vadd.f32 %v592, %v606
      %v616 = vadd.f32 %v593, %v606
      %v617 = vadd.f32 %v594, %v606
      %v618 = vadd.f32 %v595, %v606
      %v619 = vadd.f32 %v596, %v606
      %v620 = vadd.f32 %v597, %v606
      %v621 = vadd.f32 %v598, %v606
      %v622 = vadd.f32 %v599, %v606
      %v623 = vadd.f32 %v600, %v606
      %v624 = vmul.f32 %v608, 0.70710677
      %v625 = vmul.f32 %v609, 0.70710677
      %v626 = vmul.f32 %v610, 0.70710677
      %v627 = vmul.f32 %v611, 0.70710677
      %v628 = vmul.f32 %v612, 0.70710677
      %v629 = vmul.f32 %v613, 0.70710677
      %v630 = vmul.f32 %v614, 0.70710677
      %v631 = vmul.f32 %v615, 0.70710677
      %v632 = vmul.f32 %v616, 0.70710677
      %v633 = vmul.f32 %v617, 0.70710677
      %v634 = vmul.f32 %v618, 0.70710677
      %v635 = vmul.f32 %v619, 0.70710677
      %v636 = vmul.f32 %v620, 0.70710677
      %v637 = vmul.f32 %v621, 0.70710677
      %v638 = vmul.f32 %v622, 0.70710677
      %v639 = vmul.f32 %v623, 0.70710677
      %v640 = vand.u32 2147483647, %v624
      %v641 = vand.u32 2147483647, %v625
      %v642 = vand.u32 2147483647, %v626
      %v643 = vand.u32 2147483647, %v627
      %v644 = vand.u32 2147483647, %v628
      %v645 = vand.u32 2147483647, %v629
      %v646 = vand.u32 2147483647, %v630
      %v647 = vand.u32 2147483647, %v631
      %v648 = vand.u32 2147483647, %v632
      %v649 = vand.u32 2147483647, %v633
      %v650 = vand.u32 2147483647, %v634
      %v651 = vand.u32 2147483647, %v635
      %v652 = vand.u32 2147483647, %v636
      %v653 = vand.u32 2147483647, %v637
      %v654 = vand.u32 2147483647, %v638
      %v655 = vand.u32 2147483647, %v639
      %v656 = vmul.f32 %v640, 0.3275911
      %v657 = vmul.f32 %v641, 0.3275911
      %v658 = vmul.f32 %v642, 0.3275911
      %v659 = vmul.f32 %v643, 0.3275911
      %v660 = vmul.f32 %v644, 0.3275911
      %v661 = vmul.f32 %v645, 0.3275911
      %v662 = vmul.f32 %v646, 0.3275911
      %v663 = vmul.f32 %v647, 0.3275911
      %v664 = vmul.f32 %v648, 0.3275911
      %v665 = vmul.f32 %v649, 0.3275911
      %v666 = vmul.f32 %v650, 0.3275911
      %v667 = vmul.f32 %v651, 0.3275911
      %v668 = vmul.f32 %v652, 0.3275911
      %v669 = vmul.f32 %v653, 0.3275911
      %v670 = vmul.f32 %v654, 0.3275911
      %v671 = vmul.f32 %v655, 0.3275911
      %v672 = vadd.f32 %v656, 1.0
      %v673 = vadd.f32 %v657, 1.0
      %v674 = vadd.f32 %v658, 1.0
      %v675 = vadd.f32 %v659, 1.0
      %v676 = vadd.f32 %v660, 1.0
      %v677 = vadd.f32 %v661, 1.0
      %v678 = vadd.f32 %v662, 1.0
      %v679 = vadd.f32 %v663, 1.0
      %v680 = vadd.f32 %v664, 1.0
      %v681 = vadd.f32 %v665, 1.0
      %v682 = vadd.f32 %v666, 1.0
      %v683 = vadd.f32 %v667, 1.0
      %v684 = vadd.f32 %v668, 1.0
      %v685 = vadd.f32 %v669, 1.0
      %v686 = vadd.f32 %v670, 1.0
      %v687 = vadd.f32 %v671, 1.0
      %v688 = vrcp.pop %v672
      %v689 = vmul.f32 1.0, %v688
      %v690 = vrcp.pop %v673
      %v691 = vmul.f32 1.0, %v690
      %v692 = vrcp.pop %v674
      %v693 = vmul.f32 1.0, %v692
      %v694 = vrcp.pop %v675
      %v695 = vmul.f32 1.0, %v694
      %v696 = vrcp.pop %v676
      %v697 = vmul.f32 1.0, %v696
      %v698 = vrcp.pop %v677
      %v699 = vmul.f32 1.0, %v698
      %v700 = vrcp.pop %v678
      %v701 = vmul.f32 1.0, %v700
      %v702 = vrcp.pop %v679
      %v703 = vmul.f32 1.0, %v702
      %v704 = vrcp.pop %v680
      %v705 = vmul.f32 1.0, %v704
      %v706 = vrcp.pop %v681
      %v707 = vmul.f32 1.0, %v706
      %v708 = vrcp.pop %v682
      %v709 = vmul.f32 1.0, %v708
      %v710 = vrcp.pop %v683
      %v711 = vmul.f32 1.0, %v710
      %v712 = vrcp.pop %v684
      %v713 = vmul.f32 1.0, %v712
      %v714 = vrcp.pop %v685
      %v715 = vmul.f32 1.0, %v714
      %v716 = vrcp.pop %v686
      %v717 = vmul.f32 1.0, %v716
      %v718 = vrcp.pop %v687
      %v719 = vmul.f32 1.0, %v718
      %v720 = vmul.f32 %v689, 1.0614054
      %v721 = vmul.f32 %v691, 1.0614054
      %v722 = vmul.f32 %v693, 1.0614054
      %v723 = vmul.f32 %v695, 1.0614054
      %v724 = vmul.f32 %v697, 1.0614054
      %v725 = vmul.f32 %v699, 1.0614054
      %v726 = vmul.f32 %v701, 1.0614054
      %v727 = vmul.f32 %v703, 1.0614054
      %v728 = vmul.f32 %v705, 1.0614054
      %v729 = vmul.f32 %v707, 1.0614054
      %v730 = vmul.f32 %v709, 1.0614054
      %v731 = vmul.f32 %v711, 1.0614054
      %v732 = vmul.f32 %v713, 1.0614054
      %v733 = vmul.f32 %v715, 1.0614054
      %v734 = vmul.f32 %v717, 1.0614054
      %v735 = vmul.f32 %v719, 1.0614054
      %v736 = vsub.f32 %v720, 1.4531521
      %v737 = vsub.f32 %v721, 1.4531521
      %v738 = vsub.f32 %v722, 1.4531521
      %v739 = vsub.f32 %v723, 1.4531521
      %v740 = vsub.f32 %v724, 1.4531521
      %v741 = vsub.f32 %v725, 1.4531521
      %v742 = vsub.f32 %v726, 1.4531521
      %v743 = vsub.f32 %v727, 1.4531521
      %v744 = vsub.f32 %v728, 1.4531521
      %v745 = vsub.f32 %v729, 1.4531521
      %v746 = vsub.f32 %v730, 1.4531521
      %v747 = vsub.f32 %v731, 1.4531521
      %v748 = vsub.f32 %v732, 1.4531521
      %v749 = vsub.f32 %v733, 1.4531521
      %v750 = vsub.f32 %v734, 1.4531521
      %v751 = vsub.f32 %v735, 1.4531521
      %v752 = vmul.f32 %v736, %v689
      %v753 = vmul.f32 %v737, %v691
      %v754 = vmul.f32 %v738, %v693
      %v755 = vmul.f32 %v739, %v695
      %v756 = vmul.f32 %v740, %v697
      %v757 = vmul.f32 %v741, %v699
      %v758 = vmul.f32 %v742, %v701
      %v759 = vmul.f32 %v743, %v703
      %v760 = vmul.f32 %v744, %v705
      %v761 = vmul.f32 %v745, %v707
      %v762 = vmul.f32 %v746, %v709
      %v763 = vmul.f32 %v747, %v711
      %v764 = vmul.f32 %v748, %v713
      %v765 = vmul.f32 %v749, %v715
      %v766 = vmul.f32 %v750, %v717
      %v767 = vmul.f32 %v751, %v719
      %v768 = vadd.f32 %v752, 1.4214138
      %v769 = vadd.f32 %v753, 1.4214138
      %v770 = vadd.f32 %v754, 1.4214138
      %v771 = vadd.f32 %v755, 1.4214138
      %v772 = vadd.f32 %v756, 1.4214138
      %v773 = vadd.f32 %v757, 1.4214138
      %v774 = vadd.f32 %v758, 1.4214138
      %v775 = vadd.f32 %v759, 1.4214138
      %v776 = vadd.f32 %v760, 1.4214138
      %v777 = vadd.f32 %v761, 1.4214138
      %v778 = vadd.f32 %v762, 1.4214138
      %v779 = vadd.f32 %v763, 1.4214138
      %v780 = vadd.f32 %v764, 1.4214138
      %v781 = vadd.f32 %v765, 1.4214138
      %v782 = vadd.f32 %v766, 1.4214138
      %v783 = vadd.f32 %v767, 1.4214138
      %v784 = vmul.f32 %v768, %v689
      %v785 = vmul.f32 %v769, %v691
      %v786 = vmul.f32 %v770, %v693
      %v787 = vmul.f32 %v771, %v695
      %v788 = vmul.f32 %v772, %v697
      %v789 = vmul.f32 %v773, %v699
      %v790 = vmul.f32 %v774, %v701
      %v791 = vmul.f32 %v775, %v703
      %v792 = vmul.f32 %v776, %v705
      %v793 = vmul.f32 %v777, %v707
      %v794 = vmul.f32 %v778, %v709
      %v795 = vmul.f32 %v779, %v711
      %v796 = vmul.f32 %v780, %v713
      %v797 = vmul.f32 %v781, %v715
      %v798 = vmul.f32 %v782, %v717
      %v799 = vmul.f32 %v783, %v719
      %v800 = vsub.f32 %v784, 0.28449672
      %v801 = vsub.f32 %v785, 0.28449672
      %v802 = vsub.f32 %v786, 0.28449672
      %v803 = vsub.f32 %v787, 0.28449672
      %v804 = vsub.f32 %v788, 0.28449672
      %v805 = vsub.f32 %v789, 0.28449672
      %v806 = vsub.f32 %v790, 0.28449672
      %v807 = vsub.f32 %v791, 0.28449672
      %v808 = vsub.f32 %v792, 0.28449672
      %v809 = vsub.f32 %v793, 0.28449672
      %v810 = vsub.f32 %v794, 0.28449672
      %v811 = vsub.f32 %v795, 0.28449672
      %v812 = vsub.f32 %v796, 0.28449672
      %v813 = vsub.f32 %v797, 0.28449672
      %v814 = vsub.f32 %v798, 0.28449672
      %v815 = vsub.f32 %v799, 0.28449672
      %v816 = vmul.f32 %v800, %v689
      %v817 = vmul.f32 %v801, %v691
      %v818 = vmul.f32 %v802, %v693
      %v819 = vmul.f32 %v803, %v695
      %v820 = vmul.f32 %v804, %v697
      %v821 = vmul.f32 %v805, %v699
      %v822 = vmul.f32 %v806, %v701
      %v823 = vmul.f32 %v807, %v703
      %v824 = vmul.f32 %v808, %v705
      %v825 = vmul.f32 %v809, %v707
      %v826 = vmul.f32 %v810, %v709
      %v827 = vmul.f32 %v811, %v711
      %v828 = vmul.f32 %v812, %v713
      %v829 = vmul.f32 %v813, %v715
      %v830 = vmul.f32 %v814, %v717
      %v831 = vmul.f32 %v815, %v719
      %v832 = vadd.f32 %v816, 0.2548296
      %v833 = vadd.f32 %v817, 0.2548296
      %v834 = vadd.f32 %v818, 0.2548296
      %v835 = vadd.f32 %v819, 0.2548296
      %v836 = vadd.f32 %v820, 0.2548296
      %v837 = vadd.f32 %v821, 0.2548296
      %v838 = vadd.f32 %v822, 0.2548296
      %v839 = vadd.f32 %v823, 0.2548296
      %v840 = vadd.f32 %v824, 0.2548296
      %v841 = vadd.f32 %v825, 0.2548296
      %v842 = vadd.f32 %v826, 0.2548296
      %v843 = vadd.f32 %v827, 0.2548296
      %v844 = vadd.f32 %v828, 0.2548296
      %v845 = vadd.f32 %v829, 0.2548296
      %v846 = vadd.f32 %v830, 0.2548296
      %v847 = vadd.f32 %v831, 0.2548296
      %v848 = vmul.f32 %v832, %v689
      %v849 = vmul.f32 %v833, %v691
      %v850 = vmul.f32 %v834, %v693
      %v851 = vmul.f32 %v835, %v695
      %v852 = vmul.f32 %v836, %v697
      %v853 = vmul.f32 %v837, %v699
      %v854 = vmul.f32 %v838, %v701
      %v855 = vmul.f32 %v839, %v703
      %v856 = vmul.f32 %v840, %v705
      %v857 = vmul.f32 %v841, %v707
      %v858 = vmul.f32 %v842, %v709
      %v859 = vmul.f32 %v843, %v711
      %v860 = vmul.f32 %v844, %v713
      %v861 = vmul.f32 %v845, %v715
      %v862 = vmul.f32 %v846, %v717
      %v863 = vmul.f32 %v847, %v719
      %v864 = vsub.f32 0.0, %v640
      %v865 = vsub.f32 0.0, %v641
      %v866 = vsub.f32 0.0, %v642
      %v867 = vsub.f32 0.0, %v643
      %v868 = vsub.f32 0.0, %v644
      %v869 = vsub.f32 0.0, %v645
      %v870 = vsub.f32 0.0, %v646
      %v871 = vsub.f32 0.0, %v647
      %v872 = vsub.f32 0.0, %v648
      %v873 = vsub.f32 0.0, %v649
      %v874 = vsub.f32 0.0, %v650
      %v875 = vsub.f32 0.0, %v651
      %v876 = vsub.f32 0.0, %v652
      %v877 = vsub.f32 0.0, %v653
      %v878 = vsub.f32 0.0, %v654
      %v879 = vsub.f32 0.0, %v655
      %v880 = vmul.f32 %v864, %v640
      %v881 = vmul.f32 %v865, %v641
      %v882 = vmul.f32 %v866, %v642
      %v883 = vmul.f32 %v867, %v643
      %v884 = vmul.f32 %v868, %v644
      %v885 = vmul.f32 %v869, %v645
      %v886 = vmul.f32 %v870, %v646
      %v887 = vmul.f32 %v871, %v647
      %v888 = vmul.f32 %v872, %v648
      %v889 = vmul.f32 %v873, %v649
      %v890 = vmul.f32 %v874, %v650
      %v891 = vmul.f32 %v875, %v651
      %v892 = vmul.f32 %v876, %v652
      %v893 = vmul.f32 %v877, %v653
      %v894 = vmul.f32 %v878, %v654
      %v895 = vmul.f32 %v879, %v655
      %v896 = vmul.f32 %v880, 1.442695
      %v897 = vpow.pop %v896
      %v898 = vmul.f32 %v881, 1.442695
      %v899 = vpow.pop %v898
      %v900 = vmul.f32 %v882, 1.442695
      %v901 = vpow.pop %v900
      %v902 = vmul.f32 %v883, 1.442695
      %v903 = vpow.pop %v902
      %v904 = vmul.f32 %v884, 1.442695
      %v905 = vpow.pop %v904
      %v906 = vmul.f32 %v885, 1.442695
      %v907 = vpow.pop %v906
      %v908 = vmul.f32 %v886, 1.442695
      %v909 = vpow.pop %v908
      %v910 = vmul.f32 %v887, 1.442695
      %v911 = vpow.pop %v910
      %v912 = vmul.f32 %v888, 1.442695
      %v913 = vpow.pop %v912
      %v914 = vmul.f32 %v889, 1.442695
      %v915 = vpow.pop %v914
      %v916 = vmul.f32 %v890, 1.442695
      %v917 = vpow.pop %v916
      %v918 = vmul.f32 %v891, 1.442695
      %v919 = vpow.pop %v918
      %v920 = vmul.f32 %v892, 1.442695
      %v921 = vpow.pop %v920
      %v922 = vmul.f32 %v893, 1.442695
      %v923 = vpow.pop %v922
      %v924 = vmul.f32 %v894, 1.442695
      %v925 = vpow.pop %v924
      %v926 = vmul.f32 %v895, 1.442695
      %v927 = vpow.pop %v926
      %v928 = vmul.f32 %v848, %v897
      %v929 = vmul.f32 %v849, %v899
      %v930 = vmul.f32 %v850, %v901
      %v931 = vmul.f32 %v851, %v903
      %v932 = vmul.f32 %v852, %v905
      %v933 = vmul.f32 %v853, %v907
      %v934 = vmul.f32 %v854, %v909
      %v935 = vmul.f32 %v855, %v911
      %v936 = vmul.f32 %v856, %v913
      %v937 = vmul.f32 %v857, %v915
      %v938 = vmul.f32 %v858, %v917
      %v939 = vmul.f32 %v859, %v919
      %v940 = vmul.f32 %v860, %v921
      %v941 = vmul.f32 %v861, %v923
      %v942 = vmul.f32 %v862, %v925
      %v943 = vmul.f32 %v863, %v927
      %v944 = vsub.f32 1.0, %v928
      %v945 = vsub.f32 1.0, %v929
      %v946 = vsub.f32 1.0, %v930
      %v947 = vsub.f32 1.0, %v931
      %v948 = vsub.f32 1.0, %v932
      %v949 = vsub.f32 1.0, %v933
      %v950 = vsub.f32 1.0, %v934
      %v951 = vsub.f32 1.0, %v935
      %v952 = vsub.f32 1.0, %v936
      %v953 = vsub.f32 1.0, %v937
      %v954 = vsub.f32 1.0, %v938
      %v955 = vsub.f32 1.0, %v939
      %v956 = vsub.f32 1.0, %v940
      %v957 = vsub.f32 1.0, %v941
      %v958 = vsub.f32 1.0, %v942
      %v959 = vsub.f32 1.0, %v943
      %vm960 = vcmp.ge.f32.partialorder %v624, 0.0
      %vm961 = vcmp.ge.f32.partialorder %v625, 0.0
      %vm962 = vcmp.ge.f32.partialorder %v626, 0.0
      %vm963 = vcmp.ge.f32.partialorder %v627, 0.0
      %vm964 = vcmp.ge.f32.partialorder %v628, 0.0
      %vm965 = vcmp.ge.f32.partialorder %v629, 0.0
      %vm966 = vcmp.ge.f32.partialorder %v630, 0.0
      %vm967 = vcmp.ge.f32.partialorder %v631, 0.0
      %vm968 = vcmp.ge.f32.partialorder %v632, 0.0
      %vm969 = vcmp.ge.f32.partialorder %v633, 0.0
      %vm970 = vcmp.ge.f32.partialorder %v634, 0.0
      %vm971 = vcmp.ge.f32.partialorder %v635, 0.0
      %vm972 = vcmp.ge.f32.partialorder %v636, 0.0
      %vm973 = vcmp.ge.f32.partialorder %v637, 0.0
      %vm974 = vcmp.ge.f32.partialorder %v638, 0.0
      %vm975 = vcmp.ge.f32.partialorder %v639, 0.0
      %v976 = vsub.f32 0.0, %v944
      %v977 = vsub.f32 0.0, %v945
      %v978 = vsub.f32 0.0, %v946
      %v979 = vsub.f32 0.0, %v947
      %v980 = vsub.f32 0.0, %v948
      %v981 = vsub.f32 0.0, %v949
      %v982 = vsub.f32 0.0, %v950
      %v983 = vsub.f32 0.0, %v951
      %v984 = vsub.f32 0.0, %v952
      %v985 = vsub.f32 0.0, %v953
      %v986 = vsub.f32 0.0, %v954
      %v987 = vsub.f32 0.0, %v955
      %v988 = vsub.f32 0.0, %v956
      %v989 = vsub.f32 0.0, %v957
      %v990 = vsub.f32 0.0, %v958
      %v991 = vsub.f32 0.0, %v959
      %v992 = vsel %vm960, %v944, %v976
      %v993 = vsel %vm961, %v945, %v977
      %v994 = vsel %vm962, %v946, %v978
      %v995 = vsel %vm963, %v947, %v979
      %v996 = vsel %vm964, %v948, %v980
      %v997 = vsel %vm965, %v949, %v981
      %v998 = vsel %vm966, %v950, %v982
      %v999 = vsel %vm967, %v951, %v983
      %v1000 = vsel %vm968, %v952, %v984
      %v1001 = vsel %vm969, %v953, %v985
      %v1002 = vsel %vm970, %v954, %v986
      %v1003 = vsel %vm971, %v955, %v987
      %v1004 = vsel %vm972, %v956, %v988
      %v1005 = vsel %vm973, %v957, %v989
      %v1006 = vsel %vm974, %v958, %v990
      %v1007 = vsel %vm975, %v959, %v991
      %v1008 = vmul.f32 %v608, 0.5
      %v1009 = vmul.f32 %v609, 0.5
      %v1010 = vmul.f32 %v610, 0.5
      %v1011 = vmul.f32 %v611, 0.5
      %v1012 = vmul.f32 %v612, 0.5
      %v1013 = vmul.f32 %v613, 0.5
      %v1014 = vmul.f32 %v614, 0.5
      %v1015 = vmul.f32 %v615, 0.5
      %v1016 = vmul.f32 %v616, 0.5
      %v1017 = vmul.f32 %v617, 0.5
      %v1018 = vmul.f32 %v618, 0.5
      %v1019 = vmul.f32 %v619, 0.5
      %v1020 = vmul.f32 %v620, 0.5
      %v1021 = vmul.f32 %v621, 0.5
      %v1022 = vmul.f32 %v622, 0.5
      %v1023 = vmul.f32 %v623, 0.5
      %v1024 = vadd.f32 %v992, 1.0
      %v1025 = vadd.f32 %v993, 1.0
      %v1026 = vadd.f32 %v994, 1.0
      %v1027 = vadd.f32 %v995, 1.0
      %v1028 = vadd.f32 %v996, 1.0
      %v1029 = vadd.f32 %v997, 1.0
      %v1030 = vadd.f32 %v998, 1.0
      %v1031 = vadd.f32 %v999, 1.0
      %v1032 = vadd.f32 %v1000, 1.0
      %v1033 = vadd.f32 %v1001, 1.0
      %v1034 = vadd.f32 %v1002, 1.0
      %v1035 = vadd.f32 %v1003, 1.0
      %v1036 = vadd.f32 %v1004, 1.0
      %v1037 = vadd.f32 %v1005, 1.0
      %v1038 = vadd.f32 %v1006, 1.0
      %v1039 = vadd.f32 %v1007, 1.0
      %v1040 = vmul.f32 %v1008, %v1024
      %v1041 = vmul.f32 %v1009, %v1025
      %v1042 = vmul.f32 %v1010, %v1026
      %v1043 = vmul.f32 %v1011, %v1027
      %v1044 = vmul.f32 %v1012, %v1028
      %v1045 = vmul.f32 %v1013, %v1029
      %v1046 = vmul.f32 %v1014, %v1030
      %v1047 = vmul.f32 %v1015, %v1031
      %v1048 = vmul.f32 %v1016, %v1032
      %v1049 = vmul.f32 %v1017, %v1033
      %v1050 = vmul.f32 %v1018, %v1034
      %v1051 = vmul.f32 %v1019, %v1035
      %v1052 = vmul.f32 %v1020, %v1036
      %v1053 = vmul.f32 %v1021, %v1037
      %v1054 = vmul.f32 %v1022, %v1038
      %v1055 = vmul.f32 %v1023, %v1039
      %1056 = vst.msk [vmem:[#allocation13] sm:$0xff] %vm565, %v1040
      %1057 = vst.msk [vmem:[#allocation13 + $0x8] sm:$0xff] %vm565, %v1041
      %1058 = vst.msk [vmem:[#allocation13 + $0x10] sm:$0xff] %vm565, %v1042
      %1059 = vst.msk [vmem:[#allocation13 + $0x18] sm:$0xff] %vm565, %v1043
      %1060 = vst.msk [vmem:[#allocation13 + $0x20] sm:$0xff] %vm565, %v1044
      %1061 = vst.msk [vmem:[#allocation13 + $0x28] sm:$0xff] %vm565, %v1045
      %1062 = vst.msk [vmem:[#allocation13 + $0x30] sm:$0xff] %vm565, %v1046
      %1063 = vst.msk [vmem:[#allocation13 + $0x38] sm:$0xff] %vm565, %v1047
      %1064 = vst.msk [vmem:[#allocation13 + $0x40] sm:$0xff] %vm565, %v1048
      %1065 = vst.msk [vmem:[#allocation13 + $0x48] sm:$0xff] %vm565, %v1049
      %1066 = vst.msk [vmem:[#allocation13 + $0x50] sm:$0xff] %vm565, %v1050
      %1067 = vst.msk [vmem:[#allocation13 + $0x58] sm:$0xff] %vm565, %v1051
      %1068 = vst.msk [vmem:[#allocation13 + $0x60] sm:$0xff] %vm565, %v1052
      %1069 = vst.msk [vmem:[#allocation13 + $0x68] sm:$0xff] %vm565, %v1053
      %1070 = vst.msk [vmem:[#allocation13 + $0x70] sm:$0xff] %vm565, %v1054
      %1071 = vst.msk [vmem:[#allocation13 + $0x78] sm:$0xff] %vm565, %v1055
    $region53: #{mhca_encoder.19} parent=1 // pred_fallthru
      _
    // Predicated region
    $region54: #{mhca_encoder.19} parent=1 // pred_check
      _
    $region55: #{mhca_encoder.19} parent=1 // pred_check_branch
      %1073 = sbr.rel (0) target = $region57
    $region56: #{mhca_encoder.19} parent=1 // pred_region
      %s1075 = ssub.s32 2048, 2048
      %1076 = vsyncadd [#allocation6], %s1075
      %s1077 = sshll.u32 [#allocation13], 4
      %s1078 = int_to_ptr.vmem [resolvable:$true] %s1077
      %1083 = dma.vmem_to_hbm [thread:$0]  %s1078, 2048, %s5, [#allocation6], 128, 128, 8
    $region57: #{mhca_encoder.19} parent=1 // pred_fallthru
      _
    // Predicated region
    $region58: #{mhca_encoder.19} parent=1 // pred_check
      _
    $region59: #{mhca_encoder.19} parent=1 // pred_check_branch
      %1085 = sbr.rel (0) target = $region61
    $region60: #{mhca_encoder.19} parent=1 // pred_region
      %1086 = dma.done [#allocation6], 2048
    $region61: #{mhca_encoder.19} parent=1 // pred_fallthru
      _
    %1087 = vsyncpa [#allocation5], 1
    %1088 = vsyncpa [#allocation8], 1
    %1089 = vsyncpa [#allocation11], 1
    %1090 = vsyncpa [#allocation6], 1

</llo_original>
